<compile_context>
chip_gen: v7x
topology: tpu7x:2x2x1
jax: 0.10.0
libtpu: 0.0.40
codegen_flags: <defaults>
</compile_context>

<pallas_src>
import functools
import math

import numpy as np
import jax
import jax.numpy as jnp
from jax import lax
from jax.experimental import pallas as pl
from jax.experimental.pallas import tpu as pltpu

EPS = 1e-5
_VMEM_LIMIT = 32 * 1024 * 1024   # safe on v5e (16 MiB default) .. v6e/v7x


def _round_up(n, m):
    return ((n + m - 1) // m) * m


def _tile_m(m):
    if m >= 1024:
        tm = 512
    elif m > 256:
        tm = 256
    else:
        tm = _round_up(m, 8)
    return tm, _round_up(m, tm)


def _tile_k(k, cap=1024):
    # Contraction dim: full-extent block when it fits (no zero padding);
    # otherwise pad to a multiple of 128 and pick the largest dividing tile.
    if k <= cap:
        return k, k
    kp = _round_up(k, 128)
    best, t = 128, 256
    while t <= cap:
        if kp % t == 0:
            best = t
        t += 128
    return best, kp


def _tile_n(n, cap=512):
    # Output lane dim: always pad up to a multiple of 128 (lane-dense stores).
    np_ = _round_up(n, 128)
    if np_ <= cap:
        return np_, np_
    best, t = 128, 256
    while t <= cap:
        if np_ % t == 0:
            best = t
        t += 128
    return best, np_


def _maybe_split_for_megacore(tm, mp, n_blocks):
    # Ensure >= 2 parallel grid blocks so both TensorCores (v7x) get work.
    while (mp // tm) * n_blocks < 2 and tm > 8 and (tm // 2) % 8 == 0:
        tm //= 2
    return tm


def _pad2(a, rp, cp):
    r, c = a.shape
    if r == rp and c == cp:
        return a
    return jnp.pad(a, ((0, rp - r), (0, cp - c)))


# ----------------------------------------------------------------------------
# Fused matmul (+ folded BN affine + optional residual + optional ReLU)
# ----------------------------------------------------------------------------
def _mm_epilogue(acc, sb_ref, r_ref, relu, out_dtype):
    out = acc * sb_ref[0:1, :] + sb_ref[1:2, :]
    if r_ref is not None:
        # TODO(synk): residual is added in bf16 (one extra rounding step vs the
        #             f32 reference); well within the 5% tolerance.
        out = out + r_ref[...].astype(jnp.float32)
    if relu:
        out = jnp.maximum(out, 0.0)
    return out.astype(out_dtype)


def _mm_kernel_single(*refs, has_residual, relu):
    # Single K step: no scratch accumulator round trip, no pl.when branches.
    if has_residual:
        x_ref, w_ref, sb_ref, r_ref, o_ref = refs
    else:
        x_ref, w_ref, sb_ref, o_ref = refs
        r_ref = None
    acc = jnp.dot(x_ref[...], w_ref[...], preferred_element_type=jnp.float32)
    o_ref[...] = _mm_epilogue(acc, sb_ref, r_ref, relu, o_ref.dtype)


def _mm_kernel_multi(*refs, has_residual, relu):
    if has_residual:
        x_ref, w_ref, sb_ref, r_ref, o_ref, acc_ref = refs
    else:
        x_ref, w_ref, sb_ref, o_ref, acc_ref = refs
        r_ref = None
    k = pl.program_id(2)

    @pl.when(k == 0)
    def _():
        acc_ref[...] = jnp.zeros_like(acc_ref)

    acc_ref[...] += jnp.dot(x_ref[...], w_ref[...],
                            preferred_element_type=jnp.float32)

    @pl.when(k == pl.num_programs(2) - 1)
    def _():
        o_ref[...] = _mm_epilogue(acc_ref[...], sb_ref, r_ref, relu, o_ref.dtype)


def matmul_bn_act(x, w, scale, bias, residual=None, relu=True,
                  out_dtype=jnp.bfloat16):
    """out = relu_opt((x @ w) * scale + bias [+ residual]).

    Returns (M, Np) with Np = N rounded up to a multiple of 128; the padded
    output channels are exactly zero (zero weight/scale/bias columns).
    """
    M, K = x.shape
    K2, N = w.shape
    assert K == K2, (K, K2)

    x = x.astype(jnp.bfloat16)
    w = w.astype(jnp.bfloat16)
    sb = jnp.stack([scale.astype(jnp.float32), bias.astype(jnp.float32)])  # (2,N)

    TK, Kp = _tile_k(K)
    TN, Np = _tile_n(N)
    TM, Mp = _tile_m(M)
    TM = _maybe_split_for_megacore(TM, Mp, Np // TN)

    xp = _pad2(x, Mp, Kp)
    wp = _pad2(w, Kp, Np)
    sbp = _pad2(sb, 2, Np)

    has_residual = residual is not None
    nk, nm, nn = Kp // TK, Mp // TM, Np // TN
    operands = [xp, wp, sbp]

    if nk == 1:
        grid = (nm, nn)
        in_specs = [
            pl.BlockSpec((TM, TK), lambda i, j: (i, 0)),
            pl.BlockSpec((TK, TN), lambda i, j: (0, j)),
            pl.BlockSpec((2, TN), lambda i, j: (0, j)),
        ]
        r_spec = pl.BlockSpec((TM, TN), lambda i, j: (i, j))
        out_spec = pl.BlockSpec((TM, TN), lambda i, j: (i, j))
        scratch = []
        dims = ("parallel", "parallel")
        kernel = functools.partial(_mm_kernel_single,
                                   has_residual=has_residual, relu=relu)
    else:
        grid = (nm, nn, nk)
        in_specs = [
            pl.BlockSpec((TM, TK), lambda i, j, k: (i, k)),
            pl.BlockSpec((TK, TN), lambda i, j, k: (k, j)),
            pl.BlockSpec((2, TN), lambda i, j, k: (0, j)),
        ]
        r_spec = pl.BlockSpec((TM, TN), lambda i, j, k: (i, j))
        out_spec = pl.BlockSpec((TM, TN), lambda i, j, k: (i, j))
        scratch = [pltpu.VMEM((TM, TN), jnp.float32)]
        dims = ("parallel", "parallel", "arbitrary")
        kernel = functools.partial(_mm_kernel_multi,
                                   has_residual=has_residual, relu=relu)

    if has_residual:
        rp = _pad2(residual.reshape(M, -1).astype(jnp.bfloat16), Mp, Np)
        in_specs.append(r_spec)
        operands.append(rp)

    out_itemsize = np.dtype(out_dtype).itemsize
    bytes_accessed = int(xp.size * 2 * nn + wp.size * 2 * nm + sbp.size * 4 * nm
                         + Mp * Np * out_itemsize
                         + (Mp * Np * 2 if has_residual else 0))

    out = pl.pallas_call(
        kernel,
        out_shape=jax.ShapeDtypeStruct((Mp, Np), out_dtype),
        grid=grid,
        in_specs=in_specs,
        out_specs=out_spec,
        scratch_shapes=scratch,
        compiler_params=pltpu.CompilerParams(
            dimension_semantics=dims, vmem_limit_bytes=_VMEM_LIMIT),
        cost_estimate=pl.CostEstimate(flops=2 * M * K * N, transcendentals=0,
                                      bytes_accessed=bytes_accessed),
    )(*operands)

    if Mp != M:
        out = out[:M]
    return out


# ----------------------------------------------------------------------------
# Spatial conv kernel: kh x kw conv + folded BN + optional ReLU, taps
# accumulated in-kernel from shifted/strided VMEM windows (no HBM im2col).
# ----------------------------------------------------------------------------
def _spatial_conv_kernel(x_ref, w_ref, sb_ref, o_ref, *, kh, kw, stride, relu):
    # x_ref : (Hp, Wp, Cin)     one batch element, spatially padded, bf16
    # w_ref : (kh*kw, Cin, TN)  bf16
    # sb_ref: (2, TN)           f32 (row 0 = scale, row 1 = bias)
    # o_ref : (Ho, Wo, TN)
    ho, wo, tn = o_ref.shape
    cin = x_ref.shape[-1]
    acc = jnp.zeros((ho * wo, tn), jnp.float32)
    for ki in range(kh):
        for kj in range(kw):
            if stride == 1:
                win = x_ref[pl.ds(ki, ho), pl.ds(kj, wo), :]
            else:
                win = x_ref[pl.ds(ki, ho, stride=stride),
                            pl.ds(kj, wo, stride=stride), :]
            acc = acc + jnp.dot(win.reshape(ho * wo, cin),
                                w_ref[ki * kw + kj],
                                preferred_element_type=jnp.float32)
    out = acc * sb_ref[0:1, :] + sb_ref[1:2, :]
    if relu:
        out = jnp.maximum(out, 0.0)
    o_ref[...] = out.astype(o_ref.dtype).reshape(ho, wo, tn)


def conv_spatial_bn(x, w, scale, bias, stride=1, pad=0, relu=True,
                    out_dtype=jnp.bfloat16):
    """kh x kw conv (stride, symmetric zero padding) + folded BN + optional ReLU.

    w: (kh, kw, cin_w, cout); x may carry zero-padded channels wider than
    cin_w.  Returns NHWC with cout padded to a multiple of 128 (extras = 0).
    """
    B, H, W, C = x.shape
    kh, kw, cin_w, cout = w.shape
    x = x.astype(jnp.bfloat16)
    w = w.astype(jnp.bfloat16)
    if cin_w < C:   # activation carries zero channels -> zero weight rows
        w = jnp.pad(w, ((0, 0), (0, 0), (0, C - cin_w), (0, 0)))

    TN, Np = _tile_n(cout, cap=256)
    wp = jnp.pad(w, ((0, 0), (0, 0), (0, 0), (0, Np - cout))).reshape(kh * kw, C, Np)
    sb = jnp.stack([scale.astype(jnp.float32), bias.astype(jnp.float32)])
    sbp = _pad2(sb, 2, Np)

    if pad:
        x = jnp.pad(x, ((0, 0), (pad, pad), (pad, pad), (0, 0)))
    Hp, Wp = H + 2 * pad, W + 2 * pad
    Ho = (Hp - kh) // stride + 1
    Wo = (Wp - kw) // stride + 1
    ncb = Np // TN

    bytes_accessed = int(B * Hp * Wp * C * 2 * ncb + wp.size * 2 * B
                         + sbp.size * 4 * B
                         + B * Ho * Wo * Np * np.dtype(out_dtype).itemsize)

    return pl.pallas_call(
        functools.partial(_spatial_conv_kernel, kh=kh, kw=kw, stride=stride,
                          relu=relu),
        out_shape=jax.ShapeDtypeStruct((B, Ho, Wo, Np), out_dtype),
        grid=(B, ncb),
        in_specs=[
            pl.BlockSpec((None, Hp, Wp, C), lambda b, n: (b, 0, 0, 0)),
            pl.BlockSpec((kh * kw, C, TN), lambda b, n: (0, 0, n)),
            pl.BlockSpec((2, TN), lambda b, n: (0, n)),
        ],
        out_specs=pl.BlockSpec((None, Ho, Wo, TN), lambda b, n: (b, 0, 0, n)),
        compiler_params=pltpu.CompilerParams(
            dimension_semantics=("parallel", "parallel"),
            vmem_limit_bytes=_VMEM_LIMIT),
        cost_estimate=pl.CostEstimate(
            flops=2 * B * Ho * Wo * kh * kw * C * Np, transcendentals=0,
            bytes_accessed=bytes_accessed),
    )(x, wp, sbp)


# ----------------------------------------------------------------------------
# Conv wrappers (NHWC activations, channel dims possibly zero-padded to 128s)
# ----------------------------------------------------------------------------
def conv1x1_bn(x, w, scale, bias, relu=True, residual=None,
               out_dtype=jnp.bfloat16):
    """1x1 stride-1 conv + folded BN (+ residual, + ReLU) via the matmul path."""
    B, H, W, C = x.shape
    kin = w.shape[0]
    if kin < C:   # activation carries zero-padded channels -> zero weight rows
        w = jnp.pad(w, ((0, C - kin), (0, 0)))
    r2d = residual.reshape(B * H * W, -1) if residual is not None else None
    out = matmul_bn_act(x.reshape(B * H * W, C), w, scale, bias,
                        residual=r2d, relu=relu, out_dtype=out_dtype)
    return out.reshape(B, H, W, -1)


# ----------------------------------------------------------------------------
# Bottleneck forward (matches the PyTorch module's forward, eval-mode BN)
# ----------------------------------------------------------------------------
def bottleneck_forward(x_nchw, p):
    # conv1x1-bn-relu -> conv3x3(stride)-bn-relu -> conv1x1-bn
    # -> (+ identity | downsample(x)) -> relu.  NCHW in / NCHW out.
    x = jnp.transpose(x_nchw, (0, 2, 3, 1)).astype(jnp.bfloat16)   # NHWC bf16
    stride = p['stride']
    out_ch = p['w3'].shape[1]

    out = conv1x1_bn(x, p['w1'], *p['bn1'], relu=True)
    out = conv_spatial_bn(out, p['w2'], *p['bn2'], stride=stride, pad=1,
                          relu=True)

    if p['downsample'] is not None:
        dw, (ds_s, ds_b) = p['downsample']
        identity = conv_spatial_bn(x, dw.reshape(1, 1, *dw.shape), ds_s, ds_b,
                                   stride=stride, pad=0, relu=False)
    else:
        identity = x   # no downsample => inplanes == planes*4 and stride == 1

    # conv3 -> bn3 -> (+identity) -> relu, all fused in one kernel epilogue.
    out = conv1x1_bn(out, p['w3'], *p['bn3'], relu=True, residual=identity)
    out = out[..., :out_ch]
    return jnp.transpose(out, (0, 3, 1, 2)).astype(jnp.float32)


# ----------------------------------------------------------------------------
# Deterministic parameters
# ----------------------------------------------------------------------------
def fold_bn(gamma, beta, mean, var):
    scale = gamma / jnp.sqrt(var + EPS)
    return scale, beta - mean * scale


class ParamGen:
    def __init__(self, seed=0):
        self.key = jax.random.PRNGKey(seed)
        self.n = 0

    def _k(self):
        self.n += 1
        return jax.random.fold_in(self.key, self.n)

    def conv(self, kh, kw, cin, cout):
        # kaiming_normal_(mode='fan_out', nonlinearity='relu')
        std = math.sqrt(2.0 / (cout * kh * kw))
        w = jax.random.normal(self._k(), (kh, kw, cin, cout), jnp.float32) * std
        return w.reshape(cin, cout) if kh == 1 and kw == 1 else w

    def bn(self, c):
        gamma = jax.random.uniform(self._k(), (c,), jnp.float32, 0.5, 1.5)
        beta = jax.random.normal(self._k(), (c,), jnp.float32) * 0.1
        mean = jax.random.normal(self._k(), (c,), jnp.float32) * 0.1
        var = jax.random.uniform(self._k(), (c,), jnp.float32, 0.5, 1.5)
        return gamma, beta, mean, var


def build_bottleneck_params(pg, inplanes, planes, stride=1,
                            base_width=64, groups=1):
    width = int(planes * (base_width / 64.0)) * groups
    out_ch = planes * 4   # expansion = 4
    p = {'stride': stride}
    p['w1'] = pg.conv(1, 1, inplanes, width)
    p['bn1'] = fold_bn(*pg.bn(width))
    p['w2'] = pg.conv(3, 3, width, width)
    p['bn2'] = fold_bn(*pg.bn(width))
    p['w3'] = pg.conv(1, 1, width, out_ch)
    p['bn3'] = fold_bn(*pg.bn(out_ch))
    if stride != 1 or inplanes != out_ch:
        dw = pg.conv(1, 1, inplanes, out_ch)
        p['downsample'] = (dw, fold_bn(*pg.bn(out_ch)))
    else:
        p['downsample'] = None
    return p


# ----------------------------------------------------------------------------
# Pure-JAX f32 reference (eval-mode BN == folded affine)
# ----------------------------------------------------------------------------
def bottleneck_ref(x_nchw, p):
    x = jnp.transpose(x_nchw, (0, 2, 3, 1)).astype(jnp.float32)
    s = p['stride']

    def conv(a, w, stride, pad):
        if w.ndim == 2:
            w = w.reshape(1, 1, *w.shape)
        return lax.conv_general_dilated(
            a, w, window_strides=(stride, stride),
            padding=[(pad, pad), (pad, pad)],
            dimension_numbers=('NHWC', 'HWIO', 'NHWC'))

    def bn(a, sb):
        return a * sb[0] + sb[1]

    out = jax.nn.relu(bn(conv(x, p['w1'], 1, 0), p['bn1']))
    out = jax.nn.relu(bn(conv(out, p['w2'], s, 1), p['bn2']))
    out = bn(conv(out, p['w3'], 1, 0), p['bn3'])
    if p['downsample'] is not None:
        dw, dsb = p['downsample']
        identity = bn(conv(x, dw, s, 0), dsb)
    else:
        identity = x
    out = jax.nn.relu(out + identity)
    return jnp.transpose(out, (0, 3, 1, 2))


if __name__ == "__main__":
    pg = ParamGen(0)
    # Case 1: stride=1, inplanes == planes*4 -> identity skip (no downsample).
    p1 = build_bottleneck_params(pg, inplanes=64, planes=16, stride=1)
    # Case 2: stride=2 -> conv1x1(stride 2) + bn downsample on the skip path.
    p2 = build_bottleneck_params(pg, inplanes=64, planes=32, stride=2)

    x = jax.random.normal(jax.random.PRNGKey(0), (2, 64, 16, 16), jnp.float32)

    fwd1 = jax.jit(lambda a: bottleneck_forward(a, p1))
    fwd2 = jax.jit(lambda a: bottleneck_forward(a, p2))
    y1 = fwd1(x)
    y2 = fwd2(x)
    jax.block_until_ready((y1, y2))

    r1 = bottleneck_ref(x, p1)
    r2 = bottleneck_ref(x, p2)

    assert y1.shape == (2, 64, 16, 16), y1.shape
    assert y2.shape == (2, 128, 8, 8), y2.shape
    for y, r in ((y1, r1), (y2, r2)):
        assert bool(jnp.all(jnp.isfinite(y)))
        rel = jnp.linalg.norm(y.astype(jnp.float32) - r) / jnp.maximum(
            jnp.linalg.norm(r), 1e-6)
        assert float(rel) < 0.05, f"relative error too large: {float(rel)}"
    print("KERNEL_OK")
</pallas_src>

<mosaic_0001>
module attributes {stable_mosaic.version = 11 : i64} {
  func.func @_mm_kernel_single(%arg0: i32, %arg1: i32, %arg2: memref<256x64xbf16, #tpu.memory_space<vmem>>, %arg3: memref<64x128xbf16, #tpu.memory_space<vmem>>, %arg4: memref<2x128xf32, #tpu.memory_space<vmem>>, %arg5: memref<256x128xbf16, #tpu.memory_space<vmem>>) attributes {dimension_semantics = [#tpu.dimension_semantics<parallel>, #tpu.dimension_semantics<parallel>], iteration_bounds = array<i64: 2, 1>, scalar_prefetch = 0 : i64, scratch_operands = 0 : i64, tpu.core_type = #tpu.core_type<tc>, window_params = [{transform_indices = @transform_0, window_bounds = array<i64: 256, 64>}, {transform_indices = @transform_1, window_bounds = array<i64: 64, 128>}, {transform_indices = @transform_2, window_bounds = array<i64: 2, 128>}, {transform_indices = @transform_3, window_bounds = array<i64: 256, 128>}]} {
    %c0 = arith.constant 0 : index
    %c0_0 = arith.constant 0 : index
    %0 = vector.load %arg2[%c0, %c0_0] : memref<256x64xbf16, #tpu.memory_space<vmem>>, vector<256x64xbf16>
    %c0_1 = arith.constant 0 : index
    %c0_2 = arith.constant 0 : index
    %1 = vector.load %arg3[%c0_1, %c0_2] : memref<64x128xbf16, #tpu.memory_space<vmem>>, vector<64x128xbf16>
    %cst = arith.constant dense<0.000000e+00> : vector<256x128xf32>
    %2 = tpu.matmul %0, %1, %cst {dimension_numbers = #tpu.dot_dimension_numbers<[1], [0], [0], [1], [0, 0, 1, 1], [], []>} : vector<256x64xbf16>, vector<64x128xbf16>, vector<256x128xf32> -> vector<256x128xf32>
    %c0_3 = arith.constant 0 : index
    %c0_4 = arith.constant 0 : index
    %3 = vector.load %arg4[%c0_3, %c0_4] : memref<2x128xf32, #tpu.memory_space<vmem>>, vector<1x128xf32>
    %4 = vector.broadcast %3 : vector<1x128xf32> to vector<256x128xf32>
    %5 = arith.mulf %2, %4 : vector<256x128xf32>
    %c1 = arith.constant 1 : index
    %c0_5 = arith.constant 0 : index
    %6 = vector.load %arg4[%c1, %c0_5] : memref<2x128xf32, #tpu.memory_space<vmem>>, vector<1x128xf32>
    %7 = vector.broadcast %6 : vector<1x128xf32> to vector<256x128xf32>
    %8 = arith.addf %5, %7 : vector<256x128xf32>
    %cst_6 = arith.constant 0.000000e+00 : f32
    %9 = vector.broadcast %cst_6 : f32 to vector<256x128xf32>
    %10 = arith.maximumf %8, %9 : vector<256x128xf32>
    %11 = arith.truncf %10 : vector<256x128xf32> to vector<256x128xbf16>
    %c0_7 = arith.constant 0 : index
    %c0_8 = arith.constant 0 : index
    %12 = vector.load %arg5[%c0_7, %c0_8] : memref<256x128xbf16, #tpu.memory_space<vmem>>, vector<256x128xbf16>
    tpu.vector_store %arg5[%c0_7, %c0_8], %11 {strides = array<i32>} : memref<256x128xbf16, #tpu.memory_space<vmem>>, vector<256x128xbf16>,
    return
  }
  func.func @transform_0(%arg0: i32, %arg1: i32) -> (i32, i32) {
    %c0_i32 = arith.constant 0 : i32
    %c0_i32_0 = arith.constant 0 : i32
    return %arg0, %c0_i32 : i32, i32
  }
  func.func @transform_1(%arg0: i32, %arg1: i32) -> (i32, i32) {
    %c0_i32 = arith.constant 0 : i32
    %c0_i32_0 = arith.constant 0 : i32
    return %c0_i32, %arg1 : i32, i32
  }
  func.func @transform_2(%arg0: i32, %arg1: i32) -> (i32, i32) {
    %c0_i32 = arith.constant 0 : i32
    %c0_i32_0 = arith.constant 0 : i32
    return %c0_i32, %arg1 : i32, i32
  }
  func.func @transform_3(%arg0: i32, %arg1: i32) -> (i32, i32) {
    %c0_i32 = arith.constant 0 : i32
    return %arg0, %arg1 : i32, i32
  }
}

module attributes {stable_mosaic.version = 11 : i64} {
  func.func @_mm_kernel_single(%arg0: i32, %arg1: i32, %arg2: memref<256x128xbf16, #tpu.memory_space<vmem>>, %arg3: memref<128x128xbf16, #tpu.memory_space<vmem>>, %arg4: memref<2x128xf32, #tpu.memory_space<vmem>>, %arg5: memref<256x128xbf16, #tpu.memory_space<vmem>>, %arg6: memref<256x128xbf16, #tpu.memory_space<vmem>>) attributes {dimension_semantics = [#tpu.dimension_semantics<parallel>, #tpu.dimension_semantics<parallel>], iteration_bounds = array<i64: 2, 1>, scalar_prefetch = 0 : i64, scratch_operands = 0 : i64, tpu.core_type = #tpu.core_type<tc>, window_params = [{transform_indices = @transform_0, window_bounds = array<i64: 256, 128>}, {transform_indices = @transform_1, window_bounds = array<i64: 128, 128>}, {transform_indices = @transform_2, window_bounds = array<i64: 2, 128>}, {transform_indices = @transform_3, window_bounds = array<i64: 256, 128>}, {transform_indices = @transform_4, window_bounds = array<i64: 256, 128>}]} {
    %c0 = arith.constant 0 : index
    %c0_0 = arith.constant 0 : index
    %0 = vector.load %arg2[%c0, %c0_0] : memref<256x128xbf16, #tpu.memory_space<vmem>>, vector<256x128xbf16>
    %c0_1 = arith.constant 0 : index
    %c0_2 = arith.constant 0 : index
    %1 = vector.load %arg3[%c0_1, %c0_2] : memref<128x128xbf16, #tpu.memory_space<vmem>>, vector<128x128xbf16>
    %cst = arith.constant dense<0.000000e+00> : vector<256x128xf32>
    %2 = tpu.matmul %0, %1, %cst {dimension_numbers = #tpu.dot_dimension_numbers<[1], [0], [0], [1], [0, 0, 1, 1], [], []>} : vector<256x128xbf16>, vector<128x128xbf16>, vector<256x128xf32> -> vector<256x128xf32>
    %c0_3 = arith.constant 0 : index
    %c0_4 = arith.constant 0 : index
    %3 = vector.load %arg4[%c0_3, %c0_4] : memref<2x128xf32, #tpu.memory_space<vmem>>, vector<1x128xf32>
    %4 = vector.broadcast %3 : vector<1x128xf32> to vector<256x128xf32>
    %5 = arith.mulf %2, %4 : vector<256x128xf32>
    %c1 = arith.constant 1 : index
    %c0_5 = arith.constant 0 : index
    %6 = vector.load %arg4[%c1, %c0_5] : memref<2x128xf32, #tpu.memory_space<vmem>>, vector<1x128xf32>
    %7 = vector.broadcast %6 : vector<1x128xf32> to vector<256x128xf32>
    %8 = arith.addf %5, %7 : vector<256x128xf32>
    %c0_6 = arith.constant 0 : index
    %c0_7 = arith.constant 0 : index
    %9 = vector.load %arg5[%c0_6, %c0_7] : memref<256x128xbf16, #tpu.memory_space<vmem>>, vector<256x128xbf16>
    %10 = arith.extf %9 : vector<256x128xbf16> to vector<256x128xf32>
    %11 = arith.addf %8, %10 : vector<256x128xf32>
    %cst_8 = arith.constant 0.000000e+00 : f32
    %12 = vector.broadcast %cst_8 : f32 to vector<256x128xf32>
    %13 = arith.maximumf %11, %12 : vector<256x128xf32>
    %14 = arith.truncf %13 : vector<256x128xf32> to vector<256x128xbf16>
    %c0_9 = arith.constant 0 : index
    %c0_10 = arith.constant 0 : index
    %15 = vector.load %arg6[%c0_9, %c0_10] : memref<256x128xbf16, #tpu.memory_space<vmem>>, vector<256x128xbf16>
    tpu.vector_store %arg6[%c0_9, %c0_10], %14 {strides = array<i32>} : memref<256x128xbf16, #tpu.memory_space<vmem>>, vector<256x128xbf16>,
    return
  }
  func.func @transform_0(%arg0: i32, %arg1: i32) -> (i32, i32) {
    %c0_i32 = arith.constant 0 : i32
    %c0_i32_0 = arith.constant 0 : i32
    return %arg0, %c0_i32 : i32, i32
  }
  func.func @transform_1(%arg0: i32, %arg1: i32) -> (i32, i32) {
    %c0_i32 = arith.constant 0 : i32
    %c0_i32_0 = arith.constant 0 : i32
    return %c0_i32, %arg1 : i32, i32
  }
  func.func @transform_2(%arg0: i32, %arg1: i32) -> (i32, i32) {
    %c0_i32 = arith.constant 0 : i32
    %c0_i32_0 = arith.constant 0 : i32
    return %c0_i32, %arg1 : i32, i32
  }
  func.func @transform_3(%arg0: i32, %arg1: i32) -> (i32, i32) {
    %c0_i32 = arith.constant 0 : i32
    return %arg0, %arg1 : i32, i32
  }
  func.func @transform_4(%arg0: i32, %arg1: i32) -> (i32, i32) {
    %c0_i32 = arith.constant 0 : i32
    return %arg0, %arg1 : i32, i32
  }
}

module attributes {stable_mosaic.version = 11 : i64} {
  func.func @_spatial_conv_kernel(%arg0: i32, %arg1: i32, %arg2: memref<1x18x18x128xbf16, #tpu.memory_space<vmem>>, %arg3: memref<9x128x128xbf16, #tpu.memory_space<vmem>>, %arg4: memref<2x128xf32, #tpu.memory_space<vmem>>, %arg5: memref<1x16x16x128xbf16, #tpu.memory_space<vmem>>) attributes {dimension_semantics = [#tpu.dimension_semantics<parallel>, #tpu.dimension_semantics<parallel>], iteration_bounds = array<i64: 2, 1>, scalar_prefetch = 0 : i64, scratch_operands = 0 : i64, tpu.core_type = #tpu.core_type<tc>, window_params = [{transform_indices = @transform_0, window_bounds = array<i64: 1, 18, 18, 128>}, {transform_indices = @transform_1, window_bounds = array<i64: 9, 128, 128>}, {transform_indices = @transform_2, window_bounds = array<i64: 2, 128>}, {transform_indices = @transform_3, window_bounds = array<i64: 1, 16, 16, 128>}]} {
    %cst = arith.constant 0.000000e+00 : f32
    %0 = vector.broadcast %cst : f32 to vector<256x128xf32>
    %c0 = arith.constant 0 : index
    %c0_0 = arith.constant 0 : index
    %c0_1 = arith.constant 0 : index
    %c0_2 = arith.constant 0 : index
    %1 = vector.load %arg2[%c0, %c0_0, %c0_1, %c0_2] : memref<1x18x18x128xbf16, #tpu.memory_space<vmem>>, vector<1x16x16x128xbf16>
    %2 = vector.shape_cast %1 : vector<1x16x16x128xbf16> to vector<16x16x128xbf16>
    %3 = vector.shape_cast %2 : vector<16x16x128xbf16> to vector<256x128xbf16>
    %c0_3 = arith.constant 0 : index
    %c0_4 = arith.constant 0 : index
    %c0_5 = arith.constant 0 : index
    %4 = vector.load %arg3[%c0_3, %c0_4, %c0_5] : memref<9x128x128xbf16, #tpu.memory_space<vmem>>, vector<1x128x128xbf16>
    %5 = vector.shape_cast %4 : vector<1x128x128xbf16> to vector<128x128xbf16>
    %cst_6 = arith.constant dense<0.000000e+00> : vector<256x128xf32>
    %6 = tpu.matmul %3, %5, %cst_6 {dimension_numbers = #tpu.dot_dimension_numbers<[1], [0], [0], [1], [0, 0, 1, 1], [], []>} : vector<256x128xbf16>, vector<128x128xbf16>, vector<256x128xf32> -> vector<256x128xf32>
    %7 = arith.addf %0, %6 : vector<256x128xf32>
    %c0_7 = arith.constant 0 : index
    %c0_8 = arith.constant 0 : index
    %c1 = arith.constant 1 : index
    %c0_9 = arith.constant 0 : index
    %8 = vector.load %arg2[%c0_7, %c0_8, %c1, %c0_9] : memref<1x18x18x128xbf16, #tpu.memory_space<vmem>>, vector<1x16x16x128xbf16>
    %9 = vector.shape_cast %8 : vector<1x16x16x128xbf16> to vector<16x16x128xbf16>
    %10 = vector.shape_cast %9 : vector<16x16x128xbf16> to vector<256x128xbf16>
    %c1_10 = arith.constant 1 : index
    %c0_11 = arith.constant 0 : index
    %c0_12 = arith.constant 0 : index
    %11 = vector.load %arg3[%c1_10, %c0_11, %c0_12] : memref<9x128x128xbf16, #tpu.memory_space<vmem>>, vector<1x128x128xbf16>
    %12 = vector.shape_cast %11 : vector<1x128x128xbf16> to vector<128x128xbf16>
    %cst_13 = arith.constant dense<0.000000e+00> : vector<256x128xf32>
    %13 = tpu.matmul %10, %12, %cst_13 {dimension_numbers = #tpu.dot_dimension_numbers<[1], [0], [0], [1], [0, 0, 1, 1], [], []>} : vector<256x128xbf16>, vector<128x128xbf16>, vector<256x128xf32> -> vector<256x128xf32>
    %14 = arith.addf %7, %13 : vector<256x128xf32>
    %c0_14 = arith.constant 0 : index
    %c0_15 = arith.constant 0 : index
    %c2 = arith.constant 2 : index
    %c0_16 = arith.constant 0 : index
    %15 = vector.load %arg2[%c0_14, %c0_15, %c2, %c0_16] : memref<1x18x18x128xbf16, #tpu.memory_space<vmem>>, vector<1x16x16x128xbf16>
    %16 = vector.shape_cast %15 : vector<1x16x16x128xbf16> to vector<16x16x128xbf16>
    %17 = vector.shape_cast %16 : vector<16x16x128xbf16> to vector<256x128xbf16>
    %c2_17 = arith.constant 2 : index
    %c0_18 = arith.constant 0 : index
    %c0_19 = arith.constant 0 : index
    %18 = vector.load %arg3[%c2_17, %c0_18, %c0_19] : memref<9x128x128xbf16, #tpu.memory_space<vmem>>, vector<1x128x128xbf16>
    %19 = vector.shape_cast %18 : vector<1x128x128xbf16> to vector<128x128xbf16>
    %cst_20 = arith.constant dense<0.000000e+00> : vector<256x128xf32>
    %20 = tpu.matmul %17, %19, %cst_20 {dimension_numbers = #tpu.dot_dimension_numbers<[1], [0], [0], [1], [0, 0, 1, 1], [], []>} : vector<256x128xbf16>, vector<128x128xbf16>, vector<256x128xf32> -> vector<256x128xf32>
    %21 = arith.addf %14, %20 : vector<256x128xf32>
    %c0_21 = arith.constant 0 : index
    %c1_22 = arith.constant 1 : index
    %c0_23 = arith.constant 0 : index
    %c0_24 = arith.constant 0 : index
    %22 = vector.load %arg2[%c0_21, %c1_22, %c0_23, %c0_24] : memref<1x18x18x128xbf16, #tpu.memory_space<vmem>>, vector<1x16x16x128xbf16>
    %23 = vector.shape_cast %22 : vector<1x16x16x128xbf16> to vector<16x16x128xbf16>
    %24 = vector.shape_cast %23 : vector<16x16x128xbf16> to vector<256x128xbf16>
    %c3 = arith.constant 3 : index
    %c0_25 = arith.constant 0 : index
    %c0_26 = arith.constant 0 : index
    %25 = vector.load %arg3[%c3, %c0_25, %c0_26] : memref<9x128x128xbf16, #tpu.memory_space<vmem>>, vector<1x128x128xbf16>
    %26 = vector.shape_cast %25 : vector<1x128x128xbf16> to vector<128x128xbf16>
    %cst_27 = arith.constant dense<0.000000e+00> : vector<256x128xf32>
    %27 = tpu.matmul %24, %26, %cst_27 {dimension_numbers = #tpu.dot_dimension_numbers<[1], [0], [0], [1], [0, 0, 1, 1], [], []>} : vector<256x128xbf16>, vector<128x128xbf16>, vector<256x128xf32> -> vector<256x128xf32>
    %28 = arith.addf %21, %27 : vector<256x128xf32>
    %c0_28 = arith.constant 0 : index
    %c1_29 = arith.constant 1 : index
    %c1_30 = arith.constant 1 : index
    %c0_31 = arith.constant 0 : index
    %29 = vector.load %arg2[%c0_28, %c1_29, %c1_30, %c0_31] : memref<1x18x18x128xbf16, #tpu.memory_space<vmem>>, vector<1x16x16x128xbf16>
    %30 = vector.shape_cast %29 : vector<1x16x16x128xbf16> to vector<16x16x128xbf16>
    %31 = vector.shape_cast %30 : vector<16x16x128xbf16> to vector<256x128xbf16>
    %c4 = arith.constant 4 : index
    %c0_32 = arith.constant 0 : index
    %c0_33 = arith.constant 0 : index
    %32 = vector.load %arg3[%c4, %c0_32, %c0_33] : memref<9x128x128xbf16, #tpu.memory_space<vmem>>, vector<1x128x128xbf16>
    %33 = vector.shape_cast %32 : vector<1x128x128xbf16> to vector<128x128xbf16>
    %cst_34 = arith.constant dense<0.000000e+00> : vector<256x128xf32>
    %34 = tpu.matmul %31, %33, %cst_34 {dimension_numbers = #tpu.dot_dimension_numbers<[1], [0], [0], [1], [0, 0, 1, 1], [], []>} : vector<256x128xbf16>, vector<128x128xbf16>, vector<256x128xf32> -> vector<256x128xf32>
    %35 = arith.addf %28, %34 : vector<256x128xf32>
    %c0_35 = arith.constant 0 : index
    %c1_36 = arith.constant 1 : index
    %c2_37 = arith.constant 2 : index
    %c0_38 = arith.constant 0 : index
    %36 = vector.load %arg2[%c0_35, %c1_36, %c2_37, %c0_38] : memref<1x18x18x128xbf16, #tpu.memory_space<vmem>>, vector<1x16x16x128xbf16>
    %37 = vector.shape_cast %36 : vector<1x16x16x128xbf16> to vector<16x16x128xbf16>
    %38 = vector.shape_cast %37 : vector<16x16x128xbf16> to vector<256x128xbf16>
    %c5 = arith.constant 5 : index
    %c0_39 = arith.constant 0 : index
    %c0_40 = arith.constant 0 : index
    %39 = vector.load %arg3[%c5, %c0_39, %c0_40] : memref<9x128x128xbf16, #tpu.memory_space<vmem>>, vector<1x128x128xbf16>
    %40 = vector.shape_cast %39 : vector<1x128x128xbf16> to vector<128x128xbf16>
    %cst_41 = arith.constant dense<0.000000e+00> : vector<256x128xf32>
    %41 = tpu.matmul %38, %40, %cst_41 {dimension_numbers = #tpu.dot_dimension_numbers<[1], [0], [0], [1], [0, 0, 1, 1], [], []>} : vector<256x128xbf16>, vector<128x128xbf16>, vector<256x128xf32> -> vector<256x128xf32>
    %42 = arith.addf %35, %41 : vector<256x128xf32>
    %c0_42 = arith.constant 0 : index
    %c2_43 = arith.constant 2 : index
    %c0_44 = arith.constant 0 : index
    %c0_45 = arith.constant 0 : index
    %43 = vector.load %arg2[%c0_42, %c2_43, %c0_44, %c0_45] : memref<1x18x18x128xbf16, #tpu.memory_space<vmem>>, vector<1x16x16x128xbf16>
    %44 = vector.shape_cast %43 : vector<1x16x16x128xbf16> to vector<16x16x128xbf16>
    %45 = vector.shape_cast %44 : vector<16x16x128xbf16> to vector<256x128xbf16>
    %c6 = arith.constant 6 : index
    %c0_46 = arith.constant 0 : index
    %c0_47 = arith.constant 0 : index
    %46 = vector.load %arg3[%c6, %c0_46, %c0_47] : memref<9x128x128xbf16, #tpu.memory_space<vmem>>, vector<1x128x128xbf16>
    %47 = vector.shape_cast %46 : vector<1x128x128xbf16> to vector<128x128xbf16>
    %cst_48 = arith.constant dense<0.000000e+00> : vector<256x128xf32>
    %48 = tpu.matmul %45, %47, %cst_48 {dimension_numbers = #tpu.dot_dimension_numbers<[1], [0], [0], [1], [0, 0, 1, 1], [], []>} : vector<256x128xbf16>, vector<128x128xbf16>, vector<256x128xf32> -> vector<256x128xf32>
    %49 = arith.addf %42, %48 : vector<256x128xf32>
    %c0_49 = arith.constant 0 : index
    %c2_50 = arith.constant 2 : index
    %c1_51 = arith.constant 1 : index
    %c0_52 = arith.constant 0 : index
    %50 = vector.load %arg2[%c0_49, %c2_50, %c1_51, %c0_52] : memref<1x18x18x128xbf16, #tpu.memory_space<vmem>>, vector<1x16x16x128xbf16>
    %51 = vector.shape_cast %50 : vector<1x16x16x128xbf16> to vector<16x16x128xbf16>
    %52 = vector.shape_cast %51 : vector<16x16x128xbf16> to vector<256x128xbf16>
    %c7 = arith.constant 7 : index
    %c0_53 = arith.constant 0 : index
    %c0_54 = arith.constant 0 : index
    %53 = vector.load %arg3[%c7, %c0_53, %c0_54] : memref<9x128x128xbf16, #tpu.memory_space<vmem>>, vector<1x128x128xbf16>
    %54 = vector.shape_cast %53 : vector<1x128x128xbf16> to vector<128x128xbf16>
    %cst_55 = arith.constant dense<0.000000e+00> : vector<256x128xf32>
    %55 = tpu.matmul %52, %54, %cst_55 {dimension_numbers = #tpu.dot_dimension_numbers<[1], [0], [0], [1], [0, 0, 1, 1], [], []>} : vector<256x128xbf16>, vector<128x128xbf16>, vector<256x128xf32> -> vector<256x128xf32>
    %56 = arith.addf %49, %55 : vector<256x128xf32>
    %c0_56 = arith.constant 0 : index
    %c2_57 = arith.constant 2 : index
    %c2_58 = arith.constant 2 : index
    %c0_59 = arith.constant 0 : index
    %57 = vector.load %arg2[%c0_56, %c2_57, %c2_58, %c0_59] : memref<1x18x18x128xbf16, #tpu.memory_space<vmem>>, vector<1x16x16x128xbf16>
    %58 = vector.shape_cast %57 : vector<1x16x16x128xbf16> to vector<16x16x128xbf16>
    %59 = vector.shape_cast %58 : vector<16x16x128xbf16> to vector<256x128xbf16>
    %c8 = arith.constant 8 : index
    %c0_60 = arith.constant 0 : index
    %c0_61 = arith.constant 0 : index
    %60 = vector.load %arg3[%c8, %c0_60, %c0_61] : memref<9x128x128xbf16, #tpu.memory_space<vmem>>, vector<1x128x128xbf16>
    %61 = vector.shape_cast %60 : vector<1x128x128xbf16> to vector<128x128xbf16>
    %cst_62 = arith.constant dense<0.000000e+00> : vector<256x128xf32>
    %62 = tpu.matmul %59, %61, %cst_62 {dimension_numbers = #tpu.dot_dimension_numbers<[1], [0], [0], [1], [0, 0, 1, 1], [], []>} : vector<256x128xbf16>, vector<128x128xbf16>, vector<256x128xf32> -> vector<256x128xf32>
    %63 = arith.addf %56, %62 : vector<256x128xf32>
    %c0_63 = arith.constant 0 : index
    %c0_64 = arith.constant 0 : index
    %64 = vector.load %arg4[%c0_63, %c0_64] : memref<2x128xf32, #tpu.memory_space<vmem>>, vector<1x128xf32>
    %65 = vector.broadcast %64 : vector<1x128xf32> to vector<256x128xf32>
    %66 = arith.mulf %63, %65 : vector<256x128xf32>
    %c1_65 = arith.constant 1 : index
    %c0_66 = arith.constant 0 : index
    %67 = vector.load %arg4[%c1_65, %c0_66] : memref<2x128xf32, #tpu.memory_space<vmem>>, vector<1x128xf32>
    %68 = vector.broadcast %67 : vector<1x128xf32> to vector<256x128xf32>
    %69 = arith.addf %66, %68 : vector<256x128xf32>
    %cst_67 = arith.constant 0.000000e+00 : f32
    %70 = vector.broadcast %cst_67 : f32 to vector<256x128xf32>
    %71 = arith.maximumf %69, %70 : vector<256x128xf32>
    %72 = arith.truncf %71 : vector<256x128xf32> to vector<256x128xbf16>
    %73 = vector.shape_cast %72 : vector<256x128xbf16> to vector<16x16x128xbf16>
    %c0_68 = arith.constant 0 : index
    %c0_69 = arith.constant 0 : index
    %c0_70 = arith.constant 0 : index
    %c0_71 = arith.constant 0 : index
    %74 = vector.load %arg5[%c0_68, %c0_69, %c0_70, %c0_71] : memref<1x16x16x128xbf16, #tpu.memory_space<vmem>>, vector<1x16x16x128xbf16>
    %75 = vector.shape_cast %74 : vector<1x16x16x128xbf16> to vector<16x16x128xbf16>
    %76 = vector.shape_cast %73 : vector<16x16x128xbf16> to vector<1x16x16x128xbf16>
    tpu.vector_store %arg5[%c0_68, %c0_69, %c0_70, %c0_71], %76 {strides = array<i32>} : memref<1x16x16x128xbf16, #tpu.memory_space<vmem>>, vector<1x16x16x128xbf16>,
    return
  }
  func.func @transform_0(%arg0: i32, %arg1: i32) -> (i32, i32, i32, i32) {
    %c0_i32 = arith.constant 0 : i32
    %c0_i32_0 = arith.constant 0 : i32
    %c0_i32_1 = arith.constant 0 : i32
    %c0_i32_2 = arith.constant 0 : i32
    return %arg0, %c0_i32, %c0_i32_0, %c0_i32_1 : i32, i32, i32, i32
  }
  func.func @transform_1(%arg0: i32, %arg1: i32) -> (i32, i32, i32) {
    %c0_i32 = arith.constant 0 : i32
    %c0_i32_0 = arith.constant 0 : i32
    %c0_i32_1 = arith.constant 0 : i32
    return %c0_i32, %c0_i32_0, %arg1 : i32, i32, i32
  }
  func.func @transform_2(%arg0: i32, %arg1: i32) -> (i32, i32) {
    %c0_i32 = arith.constant 0 : i32
    %c0_i32_0 = arith.constant 0 : i32
    return %c0_i32, %arg1 : i32, i32
  }
  func.func @transform_3(%arg0: i32, %arg1: i32) -> (i32, i32, i32, i32) {
    %c0_i32 = arith.constant 0 : i32
    %c0_i32_0 = arith.constant 0 : i32
    %c0_i32_1 = arith.constant 0 : i32
    return %arg0, %c0_i32, %c0_i32_0, %arg1 : i32, i32, i32, i32
  }
}

</mosaic_0001>

<llo_original>
// kernel: _lambda_.3
$region0: #{_lambda_.3}
  #allocation0 [shape = 'u32[]', space=smem, size = 0x4, offset = 0x4, fixed_abs, tag = 'smem constant byte address 0x4 - core index']
  #allocation1 [shape = 'u32[144,128]{1,0:T(1,128)}', space=vmem, size = 0x12000, scoped, tag = 'internal scratch']
  %s0 = inlined_call_operand.vmem [shape: bf16[512,64], index: 0, kind: input, shape index: {}]
  %s1 = inlined_call_operand.vmem [shape: bf16[64,128], index: 1, kind: input, shape index: {}]
  %s2 = inlined_call_operand.vmem [shape: f32[2,128], index: 2, kind: input, shape index: {}]
  %s3 = inlined_call_operand.vmem [shape: bf16[512,128], index: 3, kind: output, shape index: {}]
  %s4 = sld [smem:[#allocation0]]
  $region45: #{_lambda_.3} parent=0
    _
  %s6 = ssub.s32 1, %s4
  %s7 = scalar_select 0, %s6, %s4
  loop: start=0, step=1, limit=4
  $region2: #{_lambda_.3} parent=0 // loop_pre_header
    _
  $region3: #{_lambda_.3} parent=0 // loop_header
    %s9 = sphi 0, %s13
    %p10 = scmp.ge.s32.totalorder %s9, 4
    %s16 = sphi 0, %s28
    %s17 = sphi 0, %s24
    %s18 = sphi 0, %s16
    %s19 = sphi 0, %s17
    %s20 = sphi 0, %s18
    %s21 = sphi 0, %s19
    %s31 = sphi 0, %s33
    %s34 = sphi 0, %s31
    %s35 = sphi 0, %s34
    %s51 = sphi 0, %s35
    %s57 = sphi 0, %s59
    %s60 = sphi 0, %s57
    %s61 = sphi 0, %s60
    %s77 = sphi 0, %s61
    %s83 = sphi 0, %s85
    %s86 = sphi 0, %s83
    %s87 = sphi 0, %s86
    %s103 = sphi 0, %s87
    %s111 = sphi 0, %s113
    %s114 = sphi 0, %s111
    %s115 = sphi 0, %s114
    %s131 = sphi 0, %s115
  $region4: #{_lambda_.3} parent=0 // loop_header_branch
    %12 = sbr.rel (%p10) target = $region8
  $region5: #{_lambda_.3} parent=0 // loop_body
    %s14 = ssub.s32 %s9, 1
    %s15 = ssub.s32 %s9, 2
    %s22 = sadd.s32 1, %s17
    %p23 = scmp.ge.s32.totalorder %s22, 1
    %s24 = scalar_select %p23, 0, %s22
    %s25 = sadd.s32 1, %s16
    %s26 = scalar_select %p23, %s25, %s16
    %p27 = scmp.ge.s32.totalorder %s26, 2
    %s28 = scalar_select %p27, 0, %s26
    %s29 = ssub.s32 %s16, %s28
    %p30 = scmp.eq.s32.totalorder %s29, 0
    %s32 = sadd.s32 %s31, 1
    %s33 = scalar_select %p30, %s31, %s32
    %p36 = pneg %p30
    %p37 = scmp.eq.s32.totalorder %s9, 1
    %p38 = por %p36, %p37
    %p39 = scmp.ne.s32.totalorder %s31, %s34
    %p40 = scmp.eq.s32.totalorder %s9, 0
    %p41 = por %p39, %p40
    %p42 = scmp.ne.s32.totalorder %s31, %s34
    %p43 = scmp.eq.s32.totalorder %s14, 1
    %p44 = por %p42, %p43
    %p45 = scmp.ne.s32.totalorder %s34, %s35
    %p46 = scmp.eq.s32.totalorder %s14, 0
    %p47 = por %p45, %p46
    %p48 = scmp.ne.s32.totalorder %s34, %s35
    %p49 = scmp.eq.s32.totalorder %s15, 1
    %p50 = por %p48, %p49
    %p52 = scmp.ne.s32.totalorder %s35, %s51
    %p53 = scmp.eq.s32.totalorder %s15, 0
    %p54 = por %p52, %p53
    %s55 = ssub.s32 %s17, %s24
    %p56 = scmp.eq.s32.totalorder %s55, 0
    %s58 = sadd.s32 %s57, 1
    %s59 = scalar_select %p56, %s57, %s58
    %p62 = pneg %p56
    %p63 = scmp.eq.s32.totalorder %s9, 1
    %p64 = por %p62, %p63
    %p65 = scmp.ne.s32.totalorder %s57, %s60
    %p66 = scmp.eq.s32.totalorder %s9, 0
    %p67 = por %p65, %p66
    %p68 = scmp.ne.s32.totalorder %s57, %s60
    %p69 = scmp.eq.s32.totalorder %s14, 1
    %p70 = por %p68, %p69
    %p71 = scmp.ne.s32.totalorder %s60, %s61
    %p72 = scmp.eq.s32.totalorder %s14, 0
    %p73 = por %p71, %p72
    %p74 = scmp.ne.s32.totalorder %s60, %s61
    %p75 = scmp.eq.s32.totalorder %s15, 1
    %p76 = por %p74, %p75
    %p78 = scmp.ne.s32.totalorder %s61, %s77
    %p79 = scmp.eq.s32.totalorder %s15, 0
    %p80 = por %p78, %p79
    %s81 = ssub.s32 %s17, %s24
    %p82 = scmp.eq.s32.totalorder %s81, 0
    %s84 = sadd.s32 %s83, 1
    %s85 = scalar_select %p82, %s83, %s84
    %p88 = pneg %p82
    %p89 = scmp.eq.s32.totalorder %s9, 1
    %p90 = por %p88, %p89
    %p91 = scmp.ne.s32.totalorder %s83, %s86
    %p92 = scmp.eq.s32.totalorder %s9, 0
    %p93 = por %p91, %p92
    %p94 = scmp.ne.s32.totalorder %s83, %s86
    %p95 = scmp.eq.s32.totalorder %s14, 1
    %p96 = por %p94, %p95
    %p97 = scmp.ne.s32.totalorder %s86, %s87
    %p98 = scmp.eq.s32.totalorder %s14, 0
    %p99 = por %p97, %p98
    %p100 = scmp.ne.s32.totalorder %s86, %s87
    %p101 = scmp.eq.s32.totalorder %s15, 1
    %p102 = por %p100, %p101
    %p104 = scmp.ne.s32.totalorder %s87, %s103
    %p105 = scmp.eq.s32.totalorder %s15, 0
    %p106 = por %p104, %p105
    %s107 = ssub.s32 %s16, %s28
    %s108 = ssub.s32 %s17, %s24
    %s109 = sor.u32 %s107, %s108
    %p110 = scmp.eq.s32.totalorder %s109, 0
    %s112 = sadd.s32 %s111, 1
    %s113 = scalar_select %p110, %s111, %s112
    %p116 = pneg %p110
    %p117 = scmp.eq.s32.totalorder %s9, 1
    %p118 = por %p116, %p117
    %p119 = scmp.ne.s32.totalorder %s111, %s114
    %p120 = scmp.eq.s32.totalorder %s9, 0
    %p121 = por %p119, %p120
    %p122 = scmp.ne.s32.totalorder %s111, %s114
    %p123 = scmp.eq.s32.totalorder %s14, 1
    %p124 = por %p122, %p123
    %p125 = scmp.ne.s32.totalorder %s114, %s115
    %p126 = scmp.eq.s32.totalorder %s14, 0
    %p127 = por %p125, %p126
    %p128 = scmp.ne.s32.totalorder %s114, %s115
    %p129 = scmp.eq.s32.totalorder %s15, 1
    %p130 = por %p128, %p129
    %p132 = scmp.ne.s32.totalorder %s115, %s131
    %p133 = scmp.eq.s32.totalorder %s15, 0
    %p134 = por %p132, %p133
    %p135 = scmp.le.s32.totalorder 1, %s9
    %p136 = scmp.lt.s32.totalorder %s9, 3
    %p137 = pnand %p135, %p136
    %p138 = pneg %p137
    // Predicated region
    $region9: #{_lambda_.3} parent=5 // pred_check
      _
    $region10: #{_lambda_.3} parent=5 // pred_check_branch
      %140 = sbr.rel (%p137) target = $region12
    $region11: #{_lambda_.3} parent=5 // pred_region
      %s141 = ssub.s32 %s9, 1
      // Predicated region
      $region13: #{_lambda_.3} parent=11 // pred_check
        %p142 = pneg %p73
      $region14: #{_lambda_.3} parent=11 // pred_check_branch
        %144 = sbr.rel (%p142) target = $region16
      $region15: #{_lambda_.3} parent=11 // pred_region
        %p145 = scmp.lt.s32.totalorder %s19, 0
        %s146 = scalar_select %p145, %s19, 0
        %s147 = smul.addr %s146, 4
        %s148 = scalar_lea.vmem %s1, %s147
      $region16: #{_lambda_.3} parent=11 // pred_fallthru
        _
      // Predicated region
      $region17: #{_lambda_.3} parent=11 // pred_check
        %p149 = pneg %p99
      $region18: #{_lambda_.3} parent=11 // pred_check_branch
        %151 = sbr.rel (%p149) target = $region20
      $region19: #{_lambda_.3} parent=11 // pred_region
        %p152 = scmp.lt.s32.totalorder %s19, 0
        %s153 = scalar_select %p152, %s19, 0
        %s154 = smul.addr %s153, 2
        %s155 = scalar_lea.vmem %s2, %s154
      $region20: #{_lambda_.3} parent=11 // pred_fallthru
        _
    $region12: #{_lambda_.3} parent=5 // pred_fallthru
      _
    %p156 = scmp.lt.s32.totalorder %s9, 2
    // Predicated region
    $region21: #{_lambda_.3} parent=5 // pred_check
      %p157 = pneg %p156
    $region22: #{_lambda_.3} parent=5 // pred_check_branch
      %159 = sbr.rel (%p157) target = $region24
    $region23: #{_lambda_.3} parent=5 // pred_region
      // Predicated region
      $region25: #{_lambda_.3} parent=23 // pred_check
        %p160 = pneg %p41
      $region26: #{_lambda_.3} parent=23 // pred_check_branch
        %162 = sbr.rel (%p160) target = $region28
      $region27: #{_lambda_.3} parent=23 // pred_region
        %s163 = smul.u32 32, %s16
        %p164 = scmp.lt.s32.totalorder %s163, 63
        %s165 = scalar_select %p164, %s163, 63
        %s166 = smul.addr %s165, 4
        %s167 = scalar_lea.vmem %s0, %s166
        %s168 = smul.u32 32, %s16
      $region28: #{_lambda_.3} parent=23 // pred_fallthru
        _
    $region24: #{_lambda_.3} parent=5 // pred_fallthru
      _
    %p169 = scmp.le.s32.totalorder 1, %s9
    %p170 = scmp.lt.s32.totalorder %s9, 3
    %p171 = pnand %p169, %p170
    %p172 = pneg %p171
    // Predicated region
    $region29: #{_lambda_.3} parent=5 // pred_check
      _
    $region30: #{_lambda_.3} parent=5 // pred_check_branch
      %174 = sbr.rel (%p171) target = $region32
    $region31: #{_lambda_.3} parent=5 // pred_region
      %s175 = ssub.s32 %s9, 1
      %s176 = smul.u32 32, %s18
      %p177 = scmp.lt.s32.totalorder %s176, 63
      %s178 = scalar_select %p177, %s176, 63
      %s179 = smul.addr %s178, 4
      %s180 = scalar_lea.vmem %s0, %s179
      %p181 = pneg %p47
      %p182 = pneg %p44
      %p183 = scmp.lt.s32.totalorder %s19, 0
      %s184 = scalar_select %p183, %s19, 0
      %s185 = smul.addr %s184, 4
      %s186 = scalar_lea.vmem %s1, %s185
      %p187 = pneg %p73
      %p188 = pneg %p70
      %p189 = scmp.lt.s32.totalorder %s19, 0
      %s190 = scalar_select %p189, %s19, 0
      %s191 = smul.addr %s190, 2
      %s192 = scalar_lea.vmem %s2, %s191
      %p193 = pneg %p99
      %p194 = pneg %p96
      %p195 = pneg %p127
      %p196 = pneg %p124
      %s197 = smul.u32 32, %s18
      %p198 = scmp.lt.s32.totalorder %s197, 63
      %s199 = scalar_select %p198, %s197, 63
      %p200 = scmp.lt.s32.totalorder %s19, 0
      %s201 = scalar_select %p200, %s19, 0
      %s202 = sadd.s32 %s201, %s199
      %s203 = smul.addr %s202, 4
      %s204 = scalar_lea.vmem %s3, %s203
      %s205 = smul.u32 32, %s18
      %p206 = scmp.lt.s32.totalorder %s205, 63
      %s207 = scalar_select %p206, %s205, 63
      %s208 = smul.addr %s207, 4
      %s209 = scalar_lea.vmem %s0, %s208
      %s210 = smul.u32 32, %s18
      %p211 = scmp.lt.s32.totalorder %s19, 0
      %s212 = scalar_select %p211, %s19, 0
      %s213 = smul.addr %s212, 4
      %s214 = scalar_lea.vmem %s1, %s213
      %p215 = scmp.lt.s32.totalorder %s19, 0
      %s216 = scalar_select %p215, %s19, 0
      %s217 = smul.addr %s216, 2
      %s218 = scalar_lea.vmem %s2, %s217
      %s219 = smul.u32 32, %s18
      %p220 = scmp.lt.s32.totalorder %s219, 63
      %s221 = scalar_select %p220, %s219, 63
      %p222 = scmp.lt.s32.totalorder %s19, 0
      %s223 = scalar_select %p222, %s19, 0
      %s224 = sadd.s32 %s223, %s221
      %s225 = smul.addr %s224, 4
      %s226 = scalar_lea.vmem %s3, %s225
      %s227 = smul.u32 32, %s18
      %v229 = vld [vmem:[%s209] sm:$0xf]
      %v230 = vld [vmem:[%s209 + $0x4] sm:$0xf]
      %v231 = vld [vmem:[%s209 + $0x8] sm:$0xf]
      %v232 = vld [vmem:[%s209 + $0xc] sm:$0xf]
      %v233 = vld [vmem:[%s209 + $0x10] sm:$0xf]
      %v234 = vld [vmem:[%s209 + $0x14] sm:$0xf]
      %v235 = vld [vmem:[%s209 + $0x18] sm:$0xf]
      %v236 = vld [vmem:[%s209 + $0x1c] sm:$0xf]
      %v237 = vld [vmem:[%s209 + $0x20] sm:$0xf]
      %v238 = vld [vmem:[%s209 + $0x24] sm:$0xf]
      %v239 = vld [vmem:[%s209 + $0x28] sm:$0xf]
      %v240 = vld [vmem:[%s209 + $0x2c] sm:$0xf]
      %v241 = vld [vmem:[%s209 + $0x30] sm:$0xf]
      %v242 = vld [vmem:[%s209 + $0x34] sm:$0xf]
      %v243 = vld [vmem:[%s209 + $0x38] sm:$0xf]
      %v244 = vld [vmem:[%s209 + $0x3c] sm:$0xf]
      %v245 = vld [vmem:[%s209 + $0x40] sm:$0xf]
      %v246 = vld [vmem:[%s209 + $0x44] sm:$0xf]
      %v247 = vld [vmem:[%s209 + $0x48] sm:$0xf]
      %v248 = vld [vmem:[%s209 + $0x4c] sm:$0xf]
      %v249 = vld [vmem:[%s209 + $0x50] sm:$0xf]
      %v250 = vld [vmem:[%s209 + $0x54] sm:$0xf]
      %v251 = vld [vmem:[%s209 + $0x58] sm:$0xf]
      %v252 = vld [vmem:[%s209 + $0x5c] sm:$0xf]
      %v253 = vld [vmem:[%s209 + $0x60] sm:$0xf]
      %v254 = vld [vmem:[%s209 + $0x64] sm:$0xf]
      %v255 = vld [vmem:[%s209 + $0x68] sm:$0xf]
      %v256 = vld [vmem:[%s209 + $0x6c] sm:$0xf]
      %v257 = vld [vmem:[%s209 + $0x70] sm:$0xf]
      %v258 = vld [vmem:[%s209 + $0x74] sm:$0xf]
      %v259 = vld [vmem:[%s209 + $0x78] sm:$0xf]
      %v260 = vld [vmem:[%s209 + $0x7c] sm:$0xf]
      %v261 = vld [vmem:[%s214] sm:$0xf]
      %v262 = vld [vmem:[%s214 + $0x4] sm:$0xf]
      %v263 = vld [vmem:[%s214 + $0x8] sm:$0xf]
      %v264 = vld [vmem:[%s214 + $0xc] sm:$0xf]
      %v265 = vld [vmem:[%s214 + $0x10] sm:$0xf]
      %v266 = vld [vmem:[%s214 + $0x14] sm:$0xf]
      %v267 = vld [vmem:[%s214 + $0x18] sm:$0xf]
      %v268 = vld [vmem:[%s214 + $0x1c] sm:$0xf]
      %v301 = vunpack.c.l.b16 %v229
      %v302 = vunpack.c.l.b16 %v230
      %v303 = vunpack.c.l.b16 %v231
      %v304 = vunpack.c.l.b16 %v232
      %v305 = vunpack.c.l.b16 %v233
      %v306 = vunpack.c.l.b16 %v234
      %v307 = vunpack.c.l.b16 %v235
      %v308 = vunpack.c.l.b16 %v236
      %v309 = vunpack.c.l.b16 %v237
      %v310 = vunpack.c.l.b16 %v238
      %v311 = vunpack.c.l.b16 %v239
      %v312 = vunpack.c.l.b16 %v240
      %v313 = vunpack.c.l.b16 %v241
      %v314 = vunpack.c.l.b16 %v242
      %v315 = vunpack.c.l.b16 %v243
      %v316 = vunpack.c.l.b16 %v244
      %v317 = vunpack.c.l.b16 %v245
      %v318 = vunpack.c.l.b16 %v246
      %v319 = vunpack.c.l.b16 %v247
      %v320 = vunpack.c.l.b16 %v248
      %v321 = vunpack.c.l.b16 %v249
      %v322 = vunpack.c.l.b16 %v250
      %v323 = vunpack.c.l.b16 %v251
      %v324 = vunpack.c.l.b16 %v252
      %v325 = vunpack.c.l.b16 %v253
      %v326 = vunpack.c.l.b16 %v254
      %v327 = vunpack.c.l.b16 %v255
      %v328 = vunpack.c.l.b16 %v256
      %v329 = vunpack.c.l.b16 %v257
      %v330 = vunpack.c.l.b16 %v258
      %v331 = vunpack.c.l.b16 %v259
      %v332 = vunpack.c.l.b16 %v260
      %v333 = vpack.c.b16 %v302, %v301
      %v334 = vpack.c.b16 %v304, %v303
      %v335 = vpack.c.b16 %v306, %v305
      %v336 = vpack.c.b16 %v308, %v307
      %v337 = vpack.c.b16 %v310, %v309
      %v338 = vpack.c.b16 %v312, %v311
      %v339 = vpack.c.b16 %v314, %v313
      %v340 = vpack.c.b16 %v316, %v315
      %v341 = vpack.c.b16 %v318, %v317
      %v342 = vpack.c.b16 %v320, %v319
      %v343 = vpack.c.b16 %v322, %v321
      %v344 = vpack.c.b16 %v324, %v323
      %v345 = vpack.c.b16 %v326, %v325
      %v346 = vpack.c.b16 %v328, %v327
      %v347 = vpack.c.b16 %v330, %v329
      %v348 = vpack.c.b16 %v332, %v331
      %v357 = vunpack.c.l.b16 %v261
      %v358 = vunpack.c.l.b16 %v262
      %v359 = vunpack.c.l.b16 %v263
      %v360 = vunpack.c.l.b16 %v264
      %v361 = vunpack.c.l.b16 %v265
      %v362 = vunpack.c.l.b16 %v266
      %v363 = vunpack.c.l.b16 %v267
      %v364 = vunpack.c.l.b16 %v268
      %v365 = vpack.c.b16 %v358, %v357
      %v366 = vpack.c.b16 %v360, %v359
      %v367 = vpack.c.b16 %v362, %v361
      %v368 = vpack.c.b16 %v364, %v363
      %vm373 = vcmask 523264
      %v375 = vsel %vm373, %v333, 0
      %v378 = vsel %vm373, %v334, 0
      %v381 = vsel %vm373, %v335, 0
      %v384 = vsel %vm373, %v336, 0
      %v387 = vsel %vm373, %v337, 0
      %v390 = vsel %vm373, %v338, 0
      %v393 = vsel %vm373, %v339, 0
      %v396 = vsel %vm373, %v340, 0
      %v399 = vsel %vm373, %v341, 0
      %v402 = vsel %vm373, %v342, 0
      %v405 = vsel %vm373, %v343, 0
      %v408 = vsel %vm373, %v344, 0
      %v411 = vsel %vm373, %v345, 0
      %v414 = vsel %vm373, %v346, 0
      %v417 = vsel %vm373, %v347, 0
      %v420 = vsel %vm373, %v348, 0
      %422 = vmatprep.subr.bf16.mxu0 0
      %423 = vmatpush1.bf16.msra.mxu0 %v365
      %424 = vmatprep.subr.bf16.mxu0 0
      %425 = vmatpush1.bf16.msra.mxu0 %v366
      %426 = vmatprep.subr.bf16.mxu0 0
      %427 = vmatpush1.bf16.msra.mxu0 %v367
      %428 = vmatprep.subr.bf16.mxu0 0
      %429 = vmatpush1.bf16.msra.mxu0 %v368
      %430 = vmatprep.subr.bf16.mxu0 0
      %431 = vmatpush1.bf16.msra.mxu0 0
      %432 = vmatprep.subr.bf16.mxu0 0
      %433 = vmatpush1.bf16.msra.mxu0 0
      %434 = vmatprep.subr.bf16.mxu0 0
      %435 = vmatpush1.bf16.msra.mxu0 0
      %436 = vmatprep.subr.bf16.mxu0 0
      %437 = vmatpush1.bf16.msra.mxu0 0
      %438 = vmatprep.subr.bf16.mxu0 0
      %439 = vmatpush1.bf16.msra.mxu0 0
      %440 = vmatprep.subr.bf16.mxu0 0
      %441 = vmatpush1.bf16.msra.mxu0 0
      %442 = vmatprep.subr.bf16.mxu0 0
      %443 = vmatpush1.bf16.msra.mxu0 0
      %444 = vmatprep.subr.bf16.mxu0 0
      %445 = vmatpush1.bf16.msra.mxu0 0
      %446 = vmatprep.subr.bf16.mxu0 0
      %447 = vmatpush1.bf16.msra.mxu0 0
      %448 = vmatprep.subr.bf16.mxu0 0
      %449 = vmatpush1.bf16.msra.mxu0 0
      %450 = vmatprep.subr.bf16.mxu0 0
      %451 = vmatpush1.bf16.msra.mxu0 0
      %452 = vmatprep.subr.bf16.mxu0 0
      %453 = vmatpush1.bf16.msra.mxu0 0
      %454 = vmatprep.mubr.bf16.mxu0 0
      %455 = vmatmul.mubr.bf16.gmra.mrb[0].mxu0 %v375
      %v456 = vpop.f32.mrb[0].mxu0
      %v457 = vadd.f32 0.0, %v456
      %v458 = vpop.f32.mrb[0].mxu0
      %v459 = vpop.f32.mrb[0].mxu0
      %v460 = vadd.f32 0.0, %v459
      %v461 = vpop.f32.mrb[0].mxu0
      %462 = vmatprep.mubr.bf16.mxu0 0
      %463 = vmatmul.mubr.bf16.gmra.mrb[0].mxu0 %v378
      %v464 = vpop.f32.mrb[0].mxu0
      %v465 = vadd.f32 0.0, %v464
      %v466 = vpop.f32.mrb[0].mxu0
      %v467 = vpop.f32.mrb[0].mxu0
      %v468 = vadd.f32 0.0, %v467
      %v469 = vpop.f32.mrb[0].mxu0
      %470 = vmatprep.mubr.bf16.mxu0 0
      %471 = vmatmul.mubr.bf16.gmra.mrb[0].mxu0 %v381
      %v472 = vpop.f32.mrb[0].mxu0
      %v473 = vadd.f32 0.0, %v472
      %v474 = vpop.f32.mrb[0].mxu0
      %v475 = vpop.f32.mrb[0].mxu0
      %v476 = vadd.f32 0.0, %v475
      %v477 = vpop.f32.mrb[0].mxu0
      %478 = vmatprep.mubr.bf16.mxu0 0
      %479 = vmatmul.mubr.bf16.gmra.mrb[0].mxu0 %v384
      %v480 = vpop.f32.mrb[0].mxu0
      %v481 = vadd.f32 0.0, %v480
      %v482 = vpop.f32.mrb[0].mxu0
      %v483 = vpop.f32.mrb[0].mxu0
      %v484 = vadd.f32 0.0, %v483
      %v485 = vpop.f32.mrb[0].mxu0
      %486 = vmatprep.mubr.bf16.mxu0 0
      %487 = vmatmul.mubr.bf16.gmra.mrb[0].mxu0 %v387
      %v488 = vpop.f32.mrb[0].mxu0
      %v489 = vadd.f32 0.0, %v488
      %v490 = vpop.f32.mrb[0].mxu0
      %v491 = vpop.f32.mrb[0].mxu0
      %v492 = vadd.f32 0.0, %v491
      %v493 = vpop.f32.mrb[0].mxu0
      %494 = vmatprep.mubr.bf16.mxu0 0
      %495 = vmatmul.mubr.bf16.gmra.mrb[0].mxu0 %v390
      %v496 = vpop.f32.mrb[0].mxu0
      %v497 = vadd.f32 0.0, %v496
      %v498 = vpop.f32.mrb[0].mxu0
      %v499 = vpop.f32.mrb[0].mxu0
      %v500 = vadd.f32 0.0, %v499
      %v501 = vpop.f32.mrb[0].mxu0
      %502 = vmatprep.mubr.bf16.mxu0 0
      %503 = vmatmul.mubr.bf16.gmra.mrb[0].mxu0 %v393
      %v504 = vpop.f32.mrb[0].mxu0
      %v505 = vadd.f32 0.0, %v504
      %v506 = vpop.f32.mrb[0].mxu0
      %v507 = vpop.f32.mrb[0].mxu0
      %v508 = vadd.f32 0.0, %v507
      %v509 = vpop.f32.mrb[0].mxu0
      %510 = vmatprep.mubr.bf16.mxu0 0
      %511 = vmatmul.mubr.bf16.gmra.mrb[0].mxu0 %v396
      %v512 = vpop.f32.mrb[0].mxu0
      %v513 = vadd.f32 0.0, %v512
      %v514 = vpop.f32.mrb[0].mxu0
      %v515 = vpop.f32.mrb[0].mxu0
      %v516 = vadd.f32 0.0, %v515
      %v517 = vpop.f32.mrb[0].mxu0
      %518 = vmatprep.mubr.bf16.mxu0 0
      %519 = vmatmul.mubr.bf16.gmra.mrb[0].mxu0 %v399
      %v520 = vpop.f32.mrb[0].mxu0
      %v521 = vadd.f32 0.0, %v520
      %v522 = vpop.f32.mrb[0].mxu0
      %v523 = vpop.f32.mrb[0].mxu0
      %v524 = vadd.f32 0.0, %v523
      %v525 = vpop.f32.mrb[0].mxu0
      %526 = vmatprep.mubr.bf16.mxu0 0
      %527 = vmatmul.mubr.bf16.gmra.mrb[0].mxu0 %v402
      %v528 = vpop.f32.mrb[0].mxu0
      %v529 = vadd.f32 0.0, %v528
      %v530 = vpop.f32.mrb[0].mxu0
      %v531 = vpop.f32.mrb[0].mxu0
      %v532 = vadd.f32 0.0, %v531
      %v533 = vpop.f32.mrb[0].mxu0
      %534 = vmatprep.mubr.bf16.mxu0 0
      %535 = vmatmul.mubr.bf16.gmra.mrb[0].mxu0 %v405
      %v536 = vpop.f32.mrb[0].mxu0
      %v537 = vadd.f32 0.0, %v536
      %v538 = vpop.f32.mrb[0].mxu0
      %v539 = vpop.f32.mrb[0].mxu0
      %v540 = vadd.f32 0.0, %v539
      %v541 = vpop.f32.mrb[0].mxu0
      %542 = vmatprep.mubr.bf16.mxu0 0
      %543 = vmatmul.mubr.bf16.gmra.mrb[0].mxu0 %v408
      %v544 = vpop.f32.mrb[0].mxu0
      %v545 = vadd.f32 0.0, %v544
      %v546 = vpop.f32.mrb[0].mxu0
      %v547 = vpop.f32.mrb[0].mxu0
      %v548 = vadd.f32 0.0, %v547
      %v549 = vpop.f32.mrb[0].mxu0
      %550 = vmatprep.mubr.bf16.mxu0 0
      %551 = vmatmul.mubr.bf16.gmra.mrb[0].mxu0 %v411
      %v552 = vpop.f32.mrb[0].mxu0
      %v553 = vadd.f32 0.0, %v552
      %v554 = vpop.f32.mrb[0].mxu0
      %v555 = vpop.f32.mrb[0].mxu0
      %v556 = vadd.f32 0.0, %v555
      %v557 = vpop.f32.mrb[0].mxu0
      %558 = vmatprep.mubr.bf16.mxu0 0
      %559 = vmatmul.mubr.bf16.gmra.mrb[0].mxu0 %v414
      %v560 = vpop.f32.mrb[0].mxu0
      %v561 = vadd.f32 0.0, %v560
      %v562 = vpop.f32.mrb[0].mxu0
      %v563 = vpop.f32.mrb[0].mxu0
      %v564 = vadd.f32 0.0, %v563
      %v565 = vpop.f32.mrb[0].mxu0
      %566 = vmatprep.mubr.bf16.mxu0 0
      %567 = vmatmul.mubr.bf16.gmra.mrb[0].mxu0 %v417
      %v568 = vpop.f32.mrb[0].mxu0
      %v569 = vadd.f32 0.0, %v568
      %v570 = vpop.f32.mrb[0].mxu0
      %v571 = vpop.f32.mrb[0].mxu0
      %v572 = vadd.f32 0.0, %v571
      %v573 = vpop.f32.mrb[0].mxu0
      %574 = vmatprep.mubr.bf16.mxu0 0
      %575 = vmatmul.mubr.bf16.gmra.mrb[0].mxu0 %v420
      %v576 = vpop.f32.mrb[0].mxu0
      %v577 = vadd.f32 0.0, %v576
      %v578 = vpop.f32.mrb[0].mxu0
      %v579 = vpop.f32.mrb[0].mxu0
      %v580 = vadd.f32 0.0, %v579
      %v581 = vpop.f32.mrb[0].mxu0
      %582 = vdwg.mxu0
      %v583 = vld [vmem:[%s218] sm:$0x1]
      %v584 = vlaneseq
      %v585 = vshrl.u32 %v584, 7
      %v586 = vsub.s32 0, %v585
      %v587 = vrot.slane %v583, %v586
      %v588 = vmul.f32 %v457, %v587
      %v589 = vmul.f32 %v460, %v587
      %v590 = vmul.f32 %v465, %v587
      %v591 = vmul.f32 %v468, %v587
      %v592 = vmul.f32 %v473, %v587
      %v593 = vmul.f32 %v476, %v587
      %v594 = vmul.f32 %v481, %v587
      %v595 = vmul.f32 %v484, %v587
      %v596 = vmul.f32 %v489, %v587
      %v597 = vmul.f32 %v492, %v587
      %v598 = vmul.f32 %v497, %v587
      %v599 = vmul.f32 %v500, %v587
      %v600 = vmul.f32 %v505, %v587
      %v601 = vmul.f32 %v508, %v587
      %v602 = vmul.f32 %v513, %v587
      %v603 = vmul.f32 %v516, %v587
      %v604 = vmul.f32 %v521, %v587
      %v605 = vmul.f32 %v524, %v587
      %v606 = vmul.f32 %v529, %v587
      %v607 = vmul.f32 %v532, %v587
      %v608 = vmul.f32 %v537, %v587
      %v609 = vmul.f32 %v540, %v587
      %v610 = vmul.f32 %v545, %v587
      %v611 = vmul.f32 %v548, %v587
      %v612 = vmul.f32 %v553, %v587
      %v613 = vmul.f32 %v556, %v587
      %v614 = vmul.f32 %v561, %v587
      %v615 = vmul.f32 %v564, %v587
      %v616 = vmul.f32 %v569, %v587
      %v617 = vmul.f32 %v572, %v587
      %v618 = vmul.f32 %v577, %v587
      %v619 = vmul.f32 %v580, %v587
      %v620 = vld [vmem:[%s218 + $0x1] sm:$0x1]
      %v621 = vlaneseq
      %v622 = vshrl.u32 %v621, 7
      %v623 = vsub.s32 0, %v622
      %v624 = vrot.slane %v620, %v623
      %v625 = vadd.f32 %v588, %v624
      %v626 = vadd.f32 %v589, %v624
      %v627 = vadd.f32 %v590, %v624
      %v628 = vadd.f32 %v591, %v624
      %v629 = vadd.f32 %v592, %v624
      %v630 = vadd.f32 %v593, %v624
      %v631 = vadd.f32 %v594, %v624
      %v632 = vadd.f32 %v595, %v624
      %v633 = vadd.f32 %v596, %v624
      %v634 = vadd.f32 %v597, %v624
      %v635 = vadd.f32 %v598, %v624
      %v636 = vadd.f32 %v599, %v624
      %v637 = vadd.f32 %v600, %v624
      %v638 = vadd.f32 %v601, %v624
      %v639 = vadd.f32 %v602, %v624
      %v640 = vadd.f32 %v603, %v624
      %v641 = vadd.f32 %v604, %v624
      %v642 = vadd.f32 %v605, %v624
      %v643 = vadd.f32 %v606, %v624
      %v644 = vadd.f32 %v607, %v624
      %v645 = vadd.f32 %v608, %v624
      %v646 = vadd.f32 %v609, %v624
      %v647 = vadd.f32 %v610, %v624
      %v648 = vadd.f32 %v611, %v624
      %v649 = vadd.f32 %v612, %v624
      %v650 = vadd.f32 %v613, %v624
      %v651 = vadd.f32 %v614, %v624
      %v652 = vadd.f32 %v615, %v624
      %v653 = vadd.f32 %v616, %v624
      %v654 = vadd.f32 %v617, %v624
      %v655 = vadd.f32 %v618, %v624
      %v656 = vadd.f32 %v619, %v624
      %v657 = vmax.f32 %v625, 0.0
      %v658 = vmax.f32 %v626, 0.0
      %v659 = vmax.f32 %v627, 0.0
      %v660 = vmax.f32 %v628, 0.0
      %v661 = vmax.f32 %v629, 0.0
      %v662 = vmax.f32 %v630, 0.0
      %v663 = vmax.f32 %v631, 0.0
      %v664 = vmax.f32 %v632, 0.0
      %v665 = vmax.f32 %v633, 0.0
      %v666 = vmax.f32 %v634, 0.0
      %v667 = vmax.f32 %v635, 0.0
      %v668 = vmax.f32 %v636, 0.0
      %v669 = vmax.f32 %v637, 0.0
      %v670 = vmax.f32 %v638, 0.0
      %v671 = vmax.f32 %v639, 0.0
      %v672 = vmax.f32 %v640, 0.0
      %v673 = vmax.f32 %v641, 0.0
      %v674 = vmax.f32 %v642, 0.0
      %v675 = vmax.f32 %v643, 0.0
      %v676 = vmax.f32 %v644, 0.0
      %v677 = vmax.f32 %v645, 0.0
      %v678 = vmax.f32 %v646, 0.0
      %v679 = vmax.f32 %v647, 0.0
      %v680 = vmax.f32 %v648, 0.0
      %v681 = vmax.f32 %v649, 0.0
      %v682 = vmax.f32 %v650, 0.0
      %v683 = vmax.f32 %v651, 0.0
      %v684 = vmax.f32 %v652, 0.0
      %v685 = vmax.f32 %v653, 0.0
      %v686 = vmax.f32 %v654, 0.0
      %v687 = vmax.f32 %v655, 0.0
      %v688 = vmax.f32 %v656, 0.0
      %v689 = vpack.c.bf16 %v658, %v657
      %v690 = vpack.c.bf16 %v660, %v659
      %v691 = vpack.c.bf16 %v662, %v661
      %v692 = vpack.c.bf16 %v664, %v663
      %v693 = vpack.c.bf16 %v666, %v665
      %v694 = vpack.c.bf16 %v668, %v667
      %v695 = vpack.c.bf16 %v670, %v669
      %v696 = vpack.c.bf16 %v672, %v671
      %v697 = vpack.c.bf16 %v674, %v673
      %v698 = vpack.c.bf16 %v676, %v675
      %v699 = vpack.c.bf16 %v678, %v677
      %v700 = vpack.c.bf16 %v680, %v679
      %v701 = vpack.c.bf16 %v682, %v681
      %v702 = vpack.c.bf16 %v684, %v683
      %v703 = vpack.c.bf16 %v686, %v685
      %v704 = vpack.c.bf16 %v688, %v687
      %v721 = vunpack.c.l.b16 %v689
      %v722 = vunpack.c.h.b16 %v689
      %v723 = vunpack.c.l.b16 %v690
      %v724 = vunpack.c.h.b16 %v690
      %v725 = vunpack.c.l.b16 %v691
      %v726 = vunpack.c.h.b16 %v691
      %v727 = vunpack.c.l.b16 %v692
      %v728 = vunpack.c.h.b16 %v692
      %v729 = vunpack.c.l.b16 %v693
      %v730 = vunpack.c.h.b16 %v693
      %v731 = vunpack.c.l.b16 %v694
      %v732 = vunpack.c.h.b16 %v694
      %v733 = vunpack.c.l.b16 %v695
      %v734 = vunpack.c.h.b16 %v695
      %v735 = vunpack.c.l.b16 %v696
      %v736 = vunpack.c.h.b16 %v696
      %v737 = vunpack.c.l.b16 %v697
      %v738 = vunpack.c.h.b16 %v697
      %v739 = vunpack.c.l.b16 %v698
      %v740 = vunpack.c.h.b16 %v698
      %v741 = vunpack.c.l.b16 %v699
      %v742 = vunpack.c.h.b16 %v699
      %v743 = vunpack.c.l.b16 %v700
      %v744 = vunpack.c.h.b16 %v700
      %v745 = vunpack.c.l.b16 %v701
      %v746 = vunpack.c.h.b16 %v701
      %v747 = vunpack.c.l.b16 %v702
      %v748 = vunpack.c.h.b16 %v702
      %v749 = vunpack.c.l.b16 %v703
      %v750 = vunpack.c.h.b16 %v703
      %v751 = vunpack.c.l.b16 %v704
      %v752 = vunpack.c.h.b16 %v704
      %v753 = vpack.c.b16 %v721, %v721
      %v754 = vpack.c.b16 %v722, %v722
      %v755 = vpack.c.b16 %v723, %v723
      %v756 = vpack.c.b16 %v724, %v724
      %v757 = vpack.c.b16 %v725, %v725
      %v758 = vpack.c.b16 %v726, %v726
      %v759 = vpack.c.b16 %v727, %v727
      %v760 = vpack.c.b16 %v728, %v728
      %v761 = vpack.c.b16 %v729, %v729
      %v762 = vpack.c.b16 %v730, %v730
      %v763 = vpack.c.b16 %v731, %v731
      %v764 = vpack.c.b16 %v732, %v732
      %v765 = vpack.c.b16 %v733, %v733
      %v766 = vpack.c.b16 %v734, %v734
      %v767 = vpack.c.b16 %v735, %v735
      %v768 = vpack.c.b16 %v736, %v736
      %v769 = vpack.c.b16 %v737, %v737
      %v770 = vpack.c.b16 %v738, %v738
      %v771 = vpack.c.b16 %v739, %v739
      %v772 = vpack.c.b16 %v740, %v740
      %v773 = vpack.c.b16 %v741, %v741
      %v774 = vpack.c.b16 %v742, %v742
      %v775 = vpack.c.b16 %v743, %v743
      %v776 = vpack.c.b16 %v744, %v744
      %v777 = vpack.c.b16 %v745, %v745
      %v778 = vpack.c.b16 %v746, %v746
      %v779 = vpack.c.b16 %v747, %v747
      %v780 = vpack.c.b16 %v748, %v748
      %v781 = vpack.c.b16 %v749, %v749
      %v782 = vpack.c.b16 %v750, %v750
      %v783 = vpack.c.b16 %v751, %v751
      %v784 = vpack.c.b16 %v752, %v752
      %817 = vst [vmem:[%s226] sm:$0xf] %v753
      %818 = vst [vmem:[%s226 + $0x4] sm:$0xf] %v754
      %819 = vst [vmem:[%s226 + $0x8] sm:$0xf] %v755
      %820 = vst [vmem:[%s226 + $0xc] sm:$0xf] %v756
      %821 = vst [vmem:[%s226 + $0x10] sm:$0xf] %v757
      %822 = vst [vmem:[%s226 + $0x14] sm:$0xf] %v758
      %823 = vst [vmem:[%s226 + $0x18] sm:$0xf] %v759
      %824 = vst [vmem:[%s226 + $0x1c] sm:$0xf] %v760
      %825 = vst [vmem:[%s226 + $0x20] sm:$0xf] %v761
      %826 = vst [vmem:[%s226 + $0x24] sm:$0xf] %v762
      %827 = vst [vmem:[%s226 + $0x28] sm:$0xf] %v763
      %828 = vst [vmem:[%s226 + $0x2c] sm:$0xf] %v764
      %829 = vst [vmem:[%s226 + $0x30] sm:$0xf] %v765
      %830 = vst [vmem:[%s226 + $0x34] sm:$0xf] %v766
      %831 = vst [vmem:[%s226 + $0x38] sm:$0xf] %v767
      %832 = vst [vmem:[%s226 + $0x3c] sm:$0xf] %v768
      %833 = vst [vmem:[%s226 + $0x40] sm:$0xf] %v769
      %834 = vst [vmem:[%s226 + $0x44] sm:$0xf] %v770
      %835 = vst [vmem:[%s226 + $0x48] sm:$0xf] %v771
      %836 = vst [vmem:[%s226 + $0x4c] sm:$0xf] %v772
      %837 = vst [vmem:[%s226 + $0x50] sm:$0xf] %v773
      %838 = vst [vmem:[%s226 + $0x54] sm:$0xf] %v774
      %839 = vst [vmem:[%s226 + $0x58] sm:$0xf] %v775
      %840 = vst [vmem:[%s226 + $0x5c] sm:$0xf] %v776
      %841 = vst [vmem:[%s226 + $0x60] sm:$0xf] %v777
      %842 = vst [vmem:[%s226 + $0x64] sm:$0xf] %v778
      %843 = vst [vmem:[%s226 + $0x68] sm:$0xf] %v779
      %844 = vst [vmem:[%s226 + $0x6c] sm:$0xf] %v780
      %845 = vst [vmem:[%s226 + $0x70] sm:$0xf] %v781
      %846 = vst [vmem:[%s226 + $0x74] sm:$0xf] %v782
      %847 = vst [vmem:[%s226 + $0x78] sm:$0xf] %v783
      %848 = vst [vmem:[%s226 + $0x7c] sm:$0xf] %v784
      %s849 = smul.u32 32, %s18
      %p850 = scmp.lt.s32.totalorder %s849, 63
      %s851 = scalar_select %p850, %s849, 63
      %p852 = scmp.lt.s32.totalorder %s19, 0
      %s853 = scalar_select %p852, %s19, 0
      %s854 = sadd.s32 %s853, %s851
      %s855 = smul.addr %s854, 4
      %s856 = scalar_lea.vmem %s3, %s855
      // Predicated region
      $region33: #{_lambda_.3} parent=31 // pred_check
        %p857 = pneg %p124
      $region34: #{_lambda_.3} parent=31 // pred_check_branch
        %859 = sbr.rel (%p857) target = $region36
      $region35: #{_lambda_.3} parent=31 // pred_region
        %s860 = smul.u32 32, %s18
      $region36: #{_lambda_.3} parent=31 // pred_fallthru
        _
    $region32: #{_lambda_.3} parent=5 // pred_fallthru
      _
    %p861 = scmp.le.s32.totalorder 2, %s9
    // Predicated region
    $region37: #{_lambda_.3} parent=5 // pred_check
      %p862 = pneg %p861
    $region38: #{_lambda_.3} parent=5 // pred_check_branch
      %864 = sbr.rel (%p862) target = $region40
    $region39: #{_lambda_.3} parent=5 // pred_region
      %s865 = ssub.s32 %s9, 2
      // Predicated region
      $region41: #{_lambda_.3} parent=39 // pred_check
        %p866 = pneg %p130
      $region42: #{_lambda_.3} parent=39 // pred_check_branch
        %868 = sbr.rel (%p866) target = $region44
      $region43: #{_lambda_.3} parent=39 // pred_region
        %s869 = smul.u32 32, %s20
        %p870 = scmp.lt.s32.totalorder %s869, 63
        %s871 = scalar_select %p870, %s869, 63
        %p872 = scmp.lt.s32.totalorder %s21, 0
        %s873 = scalar_select %p872, %s21, 0
        %s874 = sadd.s32 %s873, %s871
        %s875 = smul.addr %s874, 4
        %s876 = scalar_lea.vmem %s3, %s875
      $region44: #{_lambda_.3} parent=39 // pred_fallthru
        _
    $region40: #{_lambda_.3} parent=5 // pred_fallthru
      _
  $region6: #{_lambda_.3} parent=0 // loop_footer
    %s13 = sadd.s32 1, %s9
  $region7: #{_lambda_.3} parent=0 // loop_footer_branch
    %8 = sbr.rel target = $region3
  $region8: #{_lambda_.3} parent=0 // loop_exit
    _

// kernel: _lambda_.5
$region0: #{_lambda_.5}
  #allocation0 [shape = 'u32[]', space=smem, size = 0x4, offset = 0x4, fixed_abs, tag = 'smem constant byte address 0x4 - core index']
  #allocation1 [shape = 'u32[144,128]{1,0:T(1,128)}', space=vmem, size = 0x12000, scoped, tag = 'internal scratch']
  %s0 = inlined_call_operand.vmem [shape: bf16[512,128], index: 0, kind: input, shape index: {}]
  %s1 = inlined_call_operand.vmem [shape: bf16[128,128], index: 1, kind: input, shape index: {}]
  %s2 = inlined_call_operand.vmem [shape: f32[2,128], index: 2, kind: input, shape index: {}]
  %s3 = inlined_call_operand.vmem [shape: bf16[512,128], index: 3, kind: input, shape index: {}]
  %s4 = inlined_call_operand.vmem [shape: bf16[512,128], index: 4, kind: output, shape index: {}]
  %s5 = sld [smem:[#allocation0]]
  $region49: #{_lambda_.5} parent=0
    _
  %s7 = ssub.s32 1, %s5
  %s8 = scalar_select 0, %s7, %s5
  loop: start=0, step=1, limit=4
  $region2: #{_lambda_.5} parent=0 // loop_pre_header
    _
  $region3: #{_lambda_.5} parent=0 // loop_header
    %s10 = sphi 0, %s14
    %p11 = scmp.ge.s32.totalorder %s10, 4
    %s17 = sphi 0, %s29
    %s18 = sphi 0, %s25
    %s19 = sphi 0, %s17
    %s20 = sphi 0, %s18
    %s21 = sphi 0, %s19
    %s22 = sphi 0, %s20
    %s32 = sphi 0, %s34
    %s35 = sphi 0, %s32
    %s36 = sphi 0, %s35
    %s52 = sphi 0, %s36
    %s58 = sphi 0, %s60
    %s61 = sphi 0, %s58
    %s62 = sphi 0, %s61
    %s78 = sphi 0, %s62
    %s84 = sphi 0, %s86
    %s87 = sphi 0, %s84
    %s88 = sphi 0, %s87
    %s104 = sphi 0, %s88
    %s112 = sphi 0, %s114
    %s115 = sphi 0, %s112
    %s116 = sphi 0, %s115
    %s132 = sphi 0, %s116
    %s140 = sphi 0, %s142
    %s143 = sphi 0, %s140
    %s144 = sphi 0, %s143
    %s160 = sphi 0, %s144
  $region4: #{_lambda_.5} parent=0 // loop_header_branch
    %13 = sbr.rel (%p11) target = $region8
  $region5: #{_lambda_.5} parent=0 // loop_body
    %s15 = ssub.s32 %s10, 1
    %s16 = ssub.s32 %s10, 2
    %s23 = sadd.s32 1, %s18
    %p24 = scmp.ge.s32.totalorder %s23, 1
    %s25 = scalar_select %p24, 0, %s23
    %s26 = sadd.s32 1, %s17
    %s27 = scalar_select %p24, %s26, %s17
    %p28 = scmp.ge.s32.totalorder %s27, 2
    %s29 = scalar_select %p28, 0, %s27
    %s30 = ssub.s32 %s17, %s29
    %p31 = scmp.eq.s32.totalorder %s30, 0
    %s33 = sadd.s32 %s32, 1
    %s34 = scalar_select %p31, %s32, %s33
    %p37 = pneg %p31
    %p38 = scmp.eq.s32.totalorder %s10, 1
    %p39 = por %p37, %p38
    %p40 = scmp.ne.s32.totalorder %s32, %s35
    %p41 = scmp.eq.s32.totalorder %s10, 0
    %p42 = por %p40, %p41
    %p43 = scmp.ne.s32.totalorder %s32, %s35
    %p44 = scmp.eq.s32.totalorder %s15, 1
    %p45 = por %p43, %p44
    %p46 = scmp.ne.s32.totalorder %s35, %s36
    %p47 = scmp.eq.s32.totalorder %s15, 0
    %p48 = por %p46, %p47
    %p49 = scmp.ne.s32.totalorder %s35, %s36
    %p50 = scmp.eq.s32.totalorder %s16, 1
    %p51 = por %p49, %p50
    %p53 = scmp.ne.s32.totalorder %s36, %s52
    %p54 = scmp.eq.s32.totalorder %s16, 0
    %p55 = por %p53, %p54
    %s56 = ssub.s32 %s18, %s25
    %p57 = scmp.eq.s32.totalorder %s56, 0
    %s59 = sadd.s32 %s58, 1
    %s60 = scalar_select %p57, %s58, %s59
    %p63 = pneg %p57
    %p64 = scmp.eq.s32.totalorder %s10, 1
    %p65 = por %p63, %p64
    %p66 = scmp.ne.s32.totalorder %s58, %s61
    %p67 = scmp.eq.s32.totalorder %s10, 0
    %p68 = por %p66, %p67
    %p69 = scmp.ne.s32.totalorder %s58, %s61
    %p70 = scmp.eq.s32.totalorder %s15, 1
    %p71 = por %p69, %p70
    %p72 = scmp.ne.s32.totalorder %s61, %s62
    %p73 = scmp.eq.s32.totalorder %s15, 0
    %p74 = por %p72, %p73
    %p75 = scmp.ne.s32.totalorder %s61, %s62
    %p76 = scmp.eq.s32.totalorder %s16, 1
    %p77 = por %p75, %p76
    %p79 = scmp.ne.s32.totalorder %s62, %s78
    %p80 = scmp.eq.s32.totalorder %s16, 0
    %p81 = por %p79, %p80
    %s82 = ssub.s32 %s18, %s25
    %p83 = scmp.eq.s32.totalorder %s82, 0
    %s85 = sadd.s32 %s84, 1
    %s86 = scalar_select %p83, %s84, %s85
    %p89 = pneg %p83
    %p90 = scmp.eq.s32.totalorder %s10, 1
    %p91 = por %p89, %p90
    %p92 = scmp.ne.s32.totalorder %s84, %s87
    %p93 = scmp.eq.s32.totalorder %s10, 0
    %p94 = por %p92, %p93
    %p95 = scmp.ne.s32.totalorder %s84, %s87
    %p96 = scmp.eq.s32.totalorder %s15, 1
    %p97 = por %p95, %p96
    %p98 = scmp.ne.s32.totalorder %s87, %s88
    %p99 = scmp.eq.s32.totalorder %s15, 0
    %p100 = por %p98, %p99
    %p101 = scmp.ne.s32.totalorder %s87, %s88
    %p102 = scmp.eq.s32.totalorder %s16, 1
    %p103 = por %p101, %p102
    %p105 = scmp.ne.s32.totalorder %s88, %s104
    %p106 = scmp.eq.s32.totalorder %s16, 0
    %p107 = por %p105, %p106
    %s108 = ssub.s32 %s17, %s29
    %s109 = ssub.s32 %s18, %s25
    %s110 = sor.u32 %s108, %s109
    %p111 = scmp.eq.s32.totalorder %s110, 0
    %s113 = sadd.s32 %s112, 1
    %s114 = scalar_select %p111, %s112, %s113
    %p117 = pneg %p111
    %p118 = scmp.eq.s32.totalorder %s10, 1
    %p119 = por %p117, %p118
    %p120 = scmp.ne.s32.totalorder %s112, %s115
    %p121 = scmp.eq.s32.totalorder %s10, 0
    %p122 = por %p120, %p121
    %p123 = scmp.ne.s32.totalorder %s112, %s115
    %p124 = scmp.eq.s32.totalorder %s15, 1
    %p125 = por %p123, %p124
    %p126 = scmp.ne.s32.totalorder %s115, %s116
    %p127 = scmp.eq.s32.totalorder %s15, 0
    %p128 = por %p126, %p127
    %p129 = scmp.ne.s32.totalorder %s115, %s116
    %p130 = scmp.eq.s32.totalorder %s16, 1
    %p131 = por %p129, %p130
    %p133 = scmp.ne.s32.totalorder %s116, %s132
    %p134 = scmp.eq.s32.totalorder %s16, 0
    %p135 = por %p133, %p134
    %s136 = ssub.s32 %s17, %s29
    %s137 = ssub.s32 %s18, %s25
    %s138 = sor.u32 %s136, %s137
    %p139 = scmp.eq.s32.totalorder %s138, 0
    %s141 = sadd.s32 %s140, 1
    %s142 = scalar_select %p139, %s140, %s141
    %p145 = pneg %p139
    %p146 = scmp.eq.s32.totalorder %s10, 1
    %p147 = por %p145, %p146
    %p148 = scmp.ne.s32.totalorder %s140, %s143
    %p149 = scmp.eq.s32.totalorder %s10, 0
    %p150 = por %p148, %p149
    %p151 = scmp.ne.s32.totalorder %s140, %s143
    %p152 = scmp.eq.s32.totalorder %s15, 1
    %p153 = por %p151, %p152
    %p154 = scmp.ne.s32.totalorder %s143, %s144
    %p155 = scmp.eq.s32.totalorder %s15, 0
    %p156 = por %p154, %p155
    %p157 = scmp.ne.s32.totalorder %s143, %s144
    %p158 = scmp.eq.s32.totalorder %s16, 1
    %p159 = por %p157, %p158
    %p161 = scmp.ne.s32.totalorder %s144, %s160
    %p162 = scmp.eq.s32.totalorder %s16, 0
    %p163 = por %p161, %p162
    %p164 = scmp.le.s32.totalorder 1, %s10
    %p165 = scmp.lt.s32.totalorder %s10, 3
    %p166 = pnand %p164, %p165
    %p167 = pneg %p166
    // Predicated region
    $region9: #{_lambda_.5} parent=5 // pred_check
      _
    $region10: #{_lambda_.5} parent=5 // pred_check_branch
      %169 = sbr.rel (%p166) target = $region12
    $region11: #{_lambda_.5} parent=5 // pred_region
      %s170 = ssub.s32 %s10, 1
      // Predicated region
      $region13: #{_lambda_.5} parent=11 // pred_check
        %p171 = pneg %p74
      $region14: #{_lambda_.5} parent=11 // pred_check_branch
        %173 = sbr.rel (%p171) target = $region16
      $region15: #{_lambda_.5} parent=11 // pred_region
        %p174 = scmp.lt.s32.totalorder %s20, 0
        %s175 = scalar_select %p174, %s20, 0
        %s176 = smul.addr %s175, 4
        %s177 = scalar_lea.vmem %s1, %s176
      $region16: #{_lambda_.5} parent=11 // pred_fallthru
        _
      // Predicated region
      $region17: #{_lambda_.5} parent=11 // pred_check
        %p178 = pneg %p100
      $region18: #{_lambda_.5} parent=11 // pred_check_branch
        %180 = sbr.rel (%p178) target = $region20
      $region19: #{_lambda_.5} parent=11 // pred_region
        %p181 = scmp.lt.s32.totalorder %s20, 0
        %s182 = scalar_select %p181, %s20, 0
        %s183 = smul.addr %s182, 2
        %s184 = scalar_lea.vmem %s2, %s183
      $region20: #{_lambda_.5} parent=11 // pred_fallthru
        _
    $region12: #{_lambda_.5} parent=5 // pred_fallthru
      _
    %p185 = scmp.lt.s32.totalorder %s10, 2
    // Predicated region
    $region21: #{_lambda_.5} parent=5 // pred_check
      %p186 = pneg %p185
    $region22: #{_lambda_.5} parent=5 // pred_check_branch
      %188 = sbr.rel (%p186) target = $region24
    $region23: #{_lambda_.5} parent=5 // pred_region
      // Predicated region
      $region25: #{_lambda_.5} parent=23 // pred_check
        %p189 = pneg %p42
      $region26: #{_lambda_.5} parent=23 // pred_check_branch
        %191 = sbr.rel (%p189) target = $region28
      $region27: #{_lambda_.5} parent=23 // pred_region
        %s192 = smul.u32 32, %s17
        %p193 = scmp.lt.s32.totalorder %s192, 63
        %s194 = scalar_select %p193, %s192, 63
        %s195 = smul.addr %s194, 4
        %s196 = scalar_lea.vmem %s0, %s195
        %s197 = smul.u32 32, %s17
      $region28: #{_lambda_.5} parent=23 // pred_fallthru
        _
      // Predicated region
      $region29: #{_lambda_.5} parent=23 // pred_check
        %p198 = pneg %p122
      $region30: #{_lambda_.5} parent=23 // pred_check_branch
        %200 = sbr.rel (%p198) target = $region32
      $region31: #{_lambda_.5} parent=23 // pred_region
        %s201 = smul.u32 32, %s17
        %p202 = scmp.lt.s32.totalorder %s201, 63
        %s203 = scalar_select %p202, %s201, 63
        %p204 = scmp.lt.s32.totalorder %s18, 0
        %s205 = scalar_select %p204, %s18, 0
        %s206 = sadd.s32 %s205, %s203
        %s207 = smul.addr %s206, 4
        %s208 = scalar_lea.vmem %s3, %s207
        %s209 = smul.u32 32, %s17
      $region32: #{_lambda_.5} parent=23 // pred_fallthru
        _
    $region24: #{_lambda_.5} parent=5 // pred_fallthru
      _
    %p210 = scmp.le.s32.totalorder 1, %s10
    %p211 = scmp.lt.s32.totalorder %s10, 3
    %p212 = pnand %p210, %p211
    %p213 = pneg %p212
    // Predicated region
    $region33: #{_lambda_.5} parent=5 // pred_check
      _
    $region34: #{_lambda_.5} parent=5 // pred_check_branch
      %215 = sbr.rel (%p212) target = $region36
    $region35: #{_lambda_.5} parent=5 // pred_region
      %s216 = ssub.s32 %s10, 1
      %s217 = smul.u32 32, %s19
      %p218 = scmp.lt.s32.totalorder %s217, 63
      %s219 = scalar_select %p218, %s217, 63
      %s220 = smul.addr %s219, 4
      %s221 = scalar_lea.vmem %s0, %s220
      %p222 = pneg %p48
      %p223 = pneg %p45
      %p224 = scmp.lt.s32.totalorder %s20, 0
      %s225 = scalar_select %p224, %s20, 0
      %s226 = smul.addr %s225, 4
      %s227 = scalar_lea.vmem %s1, %s226
      %p228 = pneg %p74
      %p229 = pneg %p71
      %p230 = scmp.lt.s32.totalorder %s20, 0
      %s231 = scalar_select %p230, %s20, 0
      %s232 = smul.addr %s231, 2
      %s233 = scalar_lea.vmem %s2, %s232
      %p234 = pneg %p100
      %p235 = pneg %p97
      %s236 = smul.u32 32, %s19
      %p237 = scmp.lt.s32.totalorder %s236, 63
      %s238 = scalar_select %p237, %s236, 63
      %p239 = scmp.lt.s32.totalorder %s20, 0
      %s240 = scalar_select %p239, %s20, 0
      %s241 = sadd.s32 %s240, %s238
      %s242 = smul.addr %s241, 4
      %s243 = scalar_lea.vmem %s3, %s242
      %p244 = pneg %p128
      %p245 = pneg %p125
      %p246 = pneg %p156
      %p247 = pneg %p153
      %s248 = smul.u32 32, %s19
      %p249 = scmp.lt.s32.totalorder %s248, 63
      %s250 = scalar_select %p249, %s248, 63
      %p251 = scmp.lt.s32.totalorder %s20, 0
      %s252 = scalar_select %p251, %s20, 0
      %s253 = sadd.s32 %s252, %s250
      %s254 = smul.addr %s253, 4
      %s255 = scalar_lea.vmem %s4, %s254
      %s256 = smul.u32 32, %s19
      %p257 = scmp.lt.s32.totalorder %s256, 63
      %s258 = scalar_select %p257, %s256, 63
      %s259 = smul.addr %s258, 4
      %s260 = scalar_lea.vmem %s0, %s259
      %s261 = smul.u32 32, %s19
      %p262 = scmp.lt.s32.totalorder %s20, 0
      %s263 = scalar_select %p262, %s20, 0
      %s264 = smul.addr %s263, 4
      %s265 = scalar_lea.vmem %s1, %s264
      %p266 = scmp.lt.s32.totalorder %s20, 0
      %s267 = scalar_select %p266, %s20, 0
      %s268 = smul.addr %s267, 2
      %s269 = scalar_lea.vmem %s2, %s268
      %s270 = smul.u32 32, %s19
      %p271 = scmp.lt.s32.totalorder %s270, 63
      %s272 = scalar_select %p271, %s270, 63
      %p273 = scmp.lt.s32.totalorder %s20, 0
      %s274 = scalar_select %p273, %s20, 0
      %s275 = sadd.s32 %s274, %s272
      %s276 = smul.addr %s275, 4
      %s277 = scalar_lea.vmem %s3, %s276
      %s278 = smul.u32 32, %s19
      %s279 = smul.u32 32, %s19
      %p280 = scmp.lt.s32.totalorder %s279, 63
      %s281 = scalar_select %p280, %s279, 63
      %p282 = scmp.lt.s32.totalorder %s20, 0
      %s283 = scalar_select %p282, %s20, 0
      %s284 = sadd.s32 %s283, %s281
      %s285 = smul.addr %s284, 4
      %s286 = scalar_lea.vmem %s4, %s285
      %s287 = smul.u32 32, %s19
      %v289 = vld [vmem:[%s260] sm:$0xf]
      %v290 = vld [vmem:[%s260 + $0x4] sm:$0xf]
      %v291 = vld [vmem:[%s260 + $0x8] sm:$0xf]
      %v292 = vld [vmem:[%s260 + $0xc] sm:$0xf]
      %v293 = vld [vmem:[%s260 + $0x10] sm:$0xf]
      %v294 = vld [vmem:[%s260 + $0x14] sm:$0xf]
      %v295 = vld [vmem:[%s260 + $0x18] sm:$0xf]
      %v296 = vld [vmem:[%s260 + $0x1c] sm:$0xf]
      %v297 = vld [vmem:[%s260 + $0x20] sm:$0xf]
      %v298 = vld [vmem:[%s260 + $0x24] sm:$0xf]
      %v299 = vld [vmem:[%s260 + $0x28] sm:$0xf]
      %v300 = vld [vmem:[%s260 + $0x2c] sm:$0xf]
      %v301 = vld [vmem:[%s260 + $0x30] sm:$0xf]
      %v302 = vld [vmem:[%s260 + $0x34] sm:$0xf]
      %v303 = vld [vmem:[%s260 + $0x38] sm:$0xf]
      %v304 = vld [vmem:[%s260 + $0x3c] sm:$0xf]
      %v305 = vld [vmem:[%s260 + $0x40] sm:$0xf]
      %v306 = vld [vmem:[%s260 + $0x44] sm:$0xf]
      %v307 = vld [vmem:[%s260 + $0x48] sm:$0xf]
      %v308 = vld [vmem:[%s260 + $0x4c] sm:$0xf]
      %v309 = vld [vmem:[%s260 + $0x50] sm:$0xf]
      %v310 = vld [vmem:[%s260 + $0x54] sm:$0xf]
      %v311 = vld [vmem:[%s260 + $0x58] sm:$0xf]
      %v312 = vld [vmem:[%s260 + $0x5c] sm:$0xf]
      %v313 = vld [vmem:[%s260 + $0x60] sm:$0xf]
      %v314 = vld [vmem:[%s260 + $0x64] sm:$0xf]
      %v315 = vld [vmem:[%s260 + $0x68] sm:$0xf]
      %v316 = vld [vmem:[%s260 + $0x6c] sm:$0xf]
      %v317 = vld [vmem:[%s260 + $0x70] sm:$0xf]
      %v318 = vld [vmem:[%s260 + $0x74] sm:$0xf]
      %v319 = vld [vmem:[%s260 + $0x78] sm:$0xf]
      %v320 = vld [vmem:[%s260 + $0x7c] sm:$0xf]
      %v321 = vld [vmem:[%s265] sm:$0xf]
      %v322 = vld [vmem:[%s265 + $0x4] sm:$0xf]
      %v323 = vld [vmem:[%s265 + $0x8] sm:$0xf]
      %v324 = vld [vmem:[%s265 + $0xc] sm:$0xf]
      %v325 = vld [vmem:[%s265 + $0x10] sm:$0xf]
      %v326 = vld [vmem:[%s265 + $0x14] sm:$0xf]
      %v327 = vld [vmem:[%s265 + $0x18] sm:$0xf]
      %v328 = vld [vmem:[%s265 + $0x1c] sm:$0xf]
      %v329 = vld [vmem:[%s265 + $0x20] sm:$0xf]
      %v330 = vld [vmem:[%s265 + $0x24] sm:$0xf]
      %v331 = vld [vmem:[%s265 + $0x28] sm:$0xf]
      %v332 = vld [vmem:[%s265 + $0x2c] sm:$0xf]
      %v333 = vld [vmem:[%s265 + $0x30] sm:$0xf]
      %v334 = vld [vmem:[%s265 + $0x34] sm:$0xf]
      %v335 = vld [vmem:[%s265 + $0x38] sm:$0xf]
      %v336 = vld [vmem:[%s265 + $0x3c] sm:$0xf]
      %v369 = vunpack.c.l.b16 %v289
      %v370 = vunpack.c.l.b16 %v290
      %v371 = vunpack.c.l.b16 %v291
      %v372 = vunpack.c.l.b16 %v292
      %v373 = vunpack.c.l.b16 %v293
      %v374 = vunpack.c.l.b16 %v294
      %v375 = vunpack.c.l.b16 %v295
      %v376 = vunpack.c.l.b16 %v296
      %v377 = vunpack.c.l.b16 %v297
      %v378 = vunpack.c.l.b16 %v298
      %v379 = vunpack.c.l.b16 %v299
      %v380 = vunpack.c.l.b16 %v300
      %v381 = vunpack.c.l.b16 %v301
      %v382 = vunpack.c.l.b16 %v302
      %v383 = vunpack.c.l.b16 %v303
      %v384 = vunpack.c.l.b16 %v304
      %v385 = vunpack.c.l.b16 %v305
      %v386 = vunpack.c.l.b16 %v306
      %v387 = vunpack.c.l.b16 %v307
      %v388 = vunpack.c.l.b16 %v308
      %v389 = vunpack.c.l.b16 %v309
      %v390 = vunpack.c.l.b16 %v310
      %v391 = vunpack.c.l.b16 %v311
      %v392 = vunpack.c.l.b16 %v312
      %v393 = vunpack.c.l.b16 %v313
      %v394 = vunpack.c.l.b16 %v314
      %v395 = vunpack.c.l.b16 %v315
      %v396 = vunpack.c.l.b16 %v316
      %v397 = vunpack.c.l.b16 %v317
      %v398 = vunpack.c.l.b16 %v318
      %v399 = vunpack.c.l.b16 %v319
      %v400 = vunpack.c.l.b16 %v320
      %v401 = vpack.c.b16 %v370, %v369
      %v402 = vpack.c.b16 %v372, %v371
      %v403 = vpack.c.b16 %v374, %v373
      %v404 = vpack.c.b16 %v376, %v375
      %v405 = vpack.c.b16 %v378, %v377
      %v406 = vpack.c.b16 %v380, %v379
      %v407 = vpack.c.b16 %v382, %v381
      %v408 = vpack.c.b16 %v384, %v383
      %v409 = vpack.c.b16 %v386, %v385
      %v410 = vpack.c.b16 %v388, %v387
      %v411 = vpack.c.b16 %v390, %v389
      %v412 = vpack.c.b16 %v392, %v391
      %v413 = vpack.c.b16 %v394, %v393
      %v414 = vpack.c.b16 %v396, %v395
      %v415 = vpack.c.b16 %v398, %v397
      %v416 = vpack.c.b16 %v400, %v399
      %v449 = vunpack.c.l.b16 %v321
      %v450 = vunpack.c.l.b16 %v322
      %v451 = vunpack.c.l.b16 %v323
      %v452 = vunpack.c.l.b16 %v324
      %v453 = vunpack.c.l.b16 %v325
      %v454 = vunpack.c.l.b16 %v326
      %v455 = vunpack.c.l.b16 %v327
      %v456 = vunpack.c.l.b16 %v328
      %v457 = vunpack.c.l.b16 %v329
      %v458 = vunpack.c.l.b16 %v330
      %v459 = vunpack.c.l.b16 %v331
      %v460 = vunpack.c.l.b16 %v332
      %v461 = vunpack.c.l.b16 %v333
      %v462 = vunpack.c.l.b16 %v334
      %v463 = vunpack.c.l.b16 %v335
      %v464 = vunpack.c.l.b16 %v336
      %v465 = vpack.c.b16 %v450, %v449
      %v466 = vpack.c.b16 %v452, %v451
      %v467 = vpack.c.b16 %v454, %v453
      %v468 = vpack.c.b16 %v456, %v455
      %v469 = vpack.c.b16 %v458, %v457
      %v470 = vpack.c.b16 %v460, %v459
      %v471 = vpack.c.b16 %v462, %v461
      %v472 = vpack.c.b16 %v464, %v463
      %481 = vmatprep.subr.bf16.mxu0 0
      %482 = vmatpush1.bf16.msra.mxu0 %v465
      %483 = vmatprep.subr.bf16.mxu0 0
      %484 = vmatpush1.bf16.msra.mxu0 %v466
      %485 = vmatprep.subr.bf16.mxu0 0
      %486 = vmatpush1.bf16.msra.mxu0 %v467
      %487 = vmatprep.subr.bf16.mxu0 0
      %488 = vmatpush1.bf16.msra.mxu0 %v468
      %489 = vmatprep.subr.bf16.mxu0 0
      %490 = vmatpush1.bf16.msra.mxu0 %v469
      %491 = vmatprep.subr.bf16.mxu0 0
      %492 = vmatpush1.bf16.msra.mxu0 %v470
      %493 = vmatprep.subr.bf16.mxu0 0
      %494 = vmatpush1.bf16.msra.mxu0 %v471
      %495 = vmatprep.subr.bf16.mxu0 0
      %496 = vmatpush1.bf16.msra.mxu0 %v472
      %497 = vmatprep.subr.bf16.mxu0 0
      %498 = vmatpush1.bf16.msra.mxu0 0
      %499 = vmatprep.subr.bf16.mxu0 0
      %500 = vmatpush1.bf16.msra.mxu0 0
      %501 = vmatprep.subr.bf16.mxu0 0
      %502 = vmatpush1.bf16.msra.mxu0 0
      %503 = vmatprep.subr.bf16.mxu0 0
      %504 = vmatpush1.bf16.msra.mxu0 0
      %505 = vmatprep.subr.bf16.mxu0 0
      %506 = vmatpush1.bf16.msra.mxu0 0
      %507 = vmatprep.subr.bf16.mxu0 0
      %508 = vmatpush1.bf16.msra.mxu0 0
      %509 = vmatprep.subr.bf16.mxu0 0
      %510 = vmatpush1.bf16.msra.mxu0 0
      %511 = vmatprep.subr.bf16.mxu0 0
      %512 = vmatpush1.bf16.msra.mxu0 0
      %513 = vmatprep.mubr.bf16.mxu0 0
      %514 = vmatmul.mubr.bf16.gmra.mrb[0].mxu0 %v401
      %v515 = vpop.f32.mrb[0].mxu0
      %v516 = vadd.f32 0.0, %v515
      %v517 = vpop.f32.mrb[0].mxu0
      %v518 = vpop.f32.mrb[0].mxu0
      %v519 = vadd.f32 0.0, %v518
      %v520 = vpop.f32.mrb[0].mxu0
      %521 = vmatprep.mubr.bf16.mxu0 0
      %522 = vmatmul.mubr.bf16.gmra.mrb[0].mxu0 %v402
      %v523 = vpop.f32.mrb[0].mxu0
      %v524 = vadd.f32 0.0, %v523
      %v525 = vpop.f32.mrb[0].mxu0
      %v526 = vpop.f32.mrb[0].mxu0
      %v527 = vadd.f32 0.0, %v526
      %v528 = vpop.f32.mrb[0].mxu0
      %529 = vmatprep.mubr.bf16.mxu0 0
      %530 = vmatmul.mubr.bf16.gmra.mrb[0].mxu0 %v403
      %v531 = vpop.f32.mrb[0].mxu0
      %v532 = vadd.f32 0.0, %v531
      %v533 = vpop.f32.mrb[0].mxu0
      %v534 = vpop.f32.mrb[0].mxu0
      %v535 = vadd.f32 0.0, %v534
      %v536 = vpop.f32.mrb[0].mxu0
      %537 = vmatprep.mubr.bf16.mxu0 0
      %538 = vmatmul.mubr.bf16.gmra.mrb[0].mxu0 %v404
      %v539 = vpop.f32.mrb[0].mxu0
      %v540 = vadd.f32 0.0, %v539
      %v541 = vpop.f32.mrb[0].mxu0
      %v542 = vpop.f32.mrb[0].mxu0
      %v543 = vadd.f32 0.0, %v542
      %v544 = vpop.f32.mrb[0].mxu0
      %545 = vmatprep.mubr.bf16.mxu0 0
      %546 = vmatmul.mubr.bf16.gmra.mrb[0].mxu0 %v405
      %v547 = vpop.f32.mrb[0].mxu0
      %v548 = vadd.f32 0.0, %v547
      %v549 = vpop.f32.mrb[0].mxu0
      %v550 = vpop.f32.mrb[0].mxu0
      %v551 = vadd.f32 0.0, %v550
      %v552 = vpop.f32.mrb[0].mxu0
      %553 = vmatprep.mubr.bf16.mxu0 0
      %554 = vmatmul.mubr.bf16.gmra.mrb[0].mxu0 %v406
      %v555 = vpop.f32.mrb[0].mxu0
      %v556 = vadd.f32 0.0, %v555
      %v557 = vpop.f32.mrb[0].mxu0
      %v558 = vpop.f32.mrb[0].mxu0
      %v559 = vadd.f32 0.0, %v558
      %v560 = vpop.f32.mrb[0].mxu0
      %561 = vmatprep.mubr.bf16.mxu0 0
      %562 = vmatmul.mubr.bf16.gmra.mrb[0].mxu0 %v407
      %v563 = vpop.f32.mrb[0].mxu0
      %v564 = vadd.f32 0.0, %v563
      %v565 = vpop.f32.mrb[0].mxu0
      %v566 = vpop.f32.mrb[0].mxu0
      %v567 = vadd.f32 0.0, %v566
      %v568 = vpop.f32.mrb[0].mxu0
      %569 = vmatprep.mubr.bf16.mxu0 0
      %570 = vmatmul.mubr.bf16.gmra.mrb[0].mxu0 %v408
      %v571 = vpop.f32.mrb[0].mxu0
      %v572 = vadd.f32 0.0, %v571
      %v573 = vpop.f32.mrb[0].mxu0
      %v574 = vpop.f32.mrb[0].mxu0
      %v575 = vadd.f32 0.0, %v574
      %v576 = vpop.f32.mrb[0].mxu0
      %577 = vmatprep.mubr.bf16.mxu0 0
      %578 = vmatmul.mubr.bf16.gmra.mrb[0].mxu0 %v409
      %v579 = vpop.f32.mrb[0].mxu0
      %v580 = vadd.f32 0.0, %v579
      %v581 = vpop.f32.mrb[0].mxu0
      %v582 = vpop.f32.mrb[0].mxu0
      %v583 = vadd.f32 0.0, %v582
      %v584 = vpop.f32.mrb[0].mxu0
      %585 = vmatprep.mubr.bf16.mxu0 0
      %586 = vmatmul.mubr.bf16.gmra.mrb[0].mxu0 %v410
      %v587 = vpop.f32.mrb[0].mxu0
      %v588 = vadd.f32 0.0, %v587
      %v589 = vpop.f32.mrb[0].mxu0
      %v590 = vpop.f32.mrb[0].mxu0
      %v591 = vadd.f32 0.0, %v590
      %v592 = vpop.f32.mrb[0].mxu0
      %593 = vmatprep.mubr.bf16.mxu0 0
      %594 = vmatmul.mubr.bf16.gmra.mrb[0].mxu0 %v411
      %v595 = vpop.f32.mrb[0].mxu0
      %v596 = vadd.f32 0.0, %v595
      %v597 = vpop.f32.mrb[0].mxu0
      %v598 = vpop.f32.mrb[0].mxu0
      %v599 = vadd.f32 0.0, %v598
      %v600 = vpop.f32.mrb[0].mxu0
      %601 = vmatprep.mubr.bf16.mxu0 0
      %602 = vmatmul.mubr.bf16.gmra.mrb[0].mxu0 %v412
      %v603 = vpop.f32.mrb[0].mxu0
      %v604 = vadd.f32 0.0, %v603
      %v605 = vpop.f32.mrb[0].mxu0
      %v606 = vpop.f32.mrb[0].mxu0
      %v607 = vadd.f32 0.0, %v606
      %v608 = vpop.f32.mrb[0].mxu0
      %609 = vmatprep.mubr.bf16.mxu0 0
      %610 = vmatmul.mubr.bf16.gmra.mrb[0].mxu0 %v413
      %v611 = vpop.f32.mrb[0].mxu0
      %v612 = vadd.f32 0.0, %v611
      %v613 = vpop.f32.mrb[0].mxu0
      %v614 = vpop.f32.mrb[0].mxu0
      %v615 = vadd.f32 0.0, %v614
      %v616 = vpop.f32.mrb[0].mxu0
      %617 = vmatprep.mubr.bf16.mxu0 0
      %618 = vmatmul.mubr.bf16.gmra.mrb[0].mxu0 %v414
      %v619 = vpop.f32.mrb[0].mxu0
      %v620 = vadd.f32 0.0, %v619
      %v621 = vpop.f32.mrb[0].mxu0
      %v622 = vpop.f32.mrb[0].mxu0
      %v623 = vadd.f32 0.0, %v622
      %v624 = vpop.f32.mrb[0].mxu0
      %625 = vmatprep.mubr.bf16.mxu0 0
      %626 = vmatmul.mubr.bf16.gmra.mrb[0].mxu0 %v415
      %v627 = vpop.f32.mrb[0].mxu0
      %v628 = vadd.f32 0.0, %v627
      %v629 = vpop.f32.mrb[0].mxu0
      %v630 = vpop.f32.mrb[0].mxu0
      %v631 = vadd.f32 0.0, %v630
      %v632 = vpop.f32.mrb[0].mxu0
      %633 = vmatprep.mubr.bf16.mxu0 0
      %634 = vmatmul.mubr.bf16.gmra.mrb[0].mxu0 %v416
      %v635 = vpop.f32.mrb[0].mxu0
      %v636 = vadd.f32 0.0, %v635
      %v637 = vpop.f32.mrb[0].mxu0
      %v638 = vpop.f32.mrb[0].mxu0
      %v639 = vadd.f32 0.0, %v638
      %v640 = vpop.f32.mrb[0].mxu0
      %641 = vdwg.mxu0
      %v642 = vld [vmem:[%s269] sm:$0x1]
      %v643 = vlaneseq
      %v644 = vshrl.u32 %v643, 7
      %v645 = vsub.s32 0, %v644
      %v646 = vrot.slane %v642, %v645
      %v647 = vmul.f32 %v516, %v646
      %v648 = vmul.f32 %v519, %v646
      %v649 = vmul.f32 %v524, %v646
      %v650 = vmul.f32 %v527, %v646
      %v651 = vmul.f32 %v532, %v646
      %v652 = vmul.f32 %v535, %v646
      %v653 = vmul.f32 %v540, %v646
      %v654 = vmul.f32 %v543, %v646
      %v655 = vmul.f32 %v548, %v646
      %v656 = vmul.f32 %v551, %v646
      %v657 = vmul.f32 %v556, %v646
      %v658 = vmul.f32 %v559, %v646
      %v659 = vmul.f32 %v564, %v646
      %v660 = vmul.f32 %v567, %v646
      %v661 = vmul.f32 %v572, %v646
      %v662 = vmul.f32 %v575, %v646
      %v663 = vmul.f32 %v580, %v646
      %v664 = vmul.f32 %v583, %v646
      %v665 = vmul.f32 %v588, %v646
      %v666 = vmul.f32 %v591, %v646
      %v667 = vmul.f32 %v596, %v646
      %v668 = vmul.f32 %v599, %v646
      %v669 = vmul.f32 %v604, %v646
      %v670 = vmul.f32 %v607, %v646
      %v671 = vmul.f32 %v612, %v646
      %v672 = vmul.f32 %v615, %v646
      %v673 = vmul.f32 %v620, %v646
      %v674 = vmul.f32 %v623, %v646
      %v675 = vmul.f32 %v628, %v646
      %v676 = vmul.f32 %v631, %v646
      %v677 = vmul.f32 %v636, %v646
      %v678 = vmul.f32 %v639, %v646
      %v679 = vld [vmem:[%s269 + $0x1] sm:$0x1]
      %v680 = vlaneseq
      %v681 = vshrl.u32 %v680, 7
      %v682 = vsub.s32 0, %v681
      %v683 = vrot.slane %v679, %v682
      %v684 = vadd.f32 %v647, %v683
      %v685 = vadd.f32 %v648, %v683
      %v686 = vadd.f32 %v649, %v683
      %v687 = vadd.f32 %v650, %v683
      %v688 = vadd.f32 %v651, %v683
      %v689 = vadd.f32 %v652, %v683
      %v690 = vadd.f32 %v653, %v683
      %v691 = vadd.f32 %v654, %v683
      %v692 = vadd.f32 %v655, %v683
      %v693 = vadd.f32 %v656, %v683
      %v694 = vadd.f32 %v657, %v683
      %v695 = vadd.f32 %v658, %v683
      %v696 = vadd.f32 %v659, %v683
      %v697 = vadd.f32 %v660, %v683
      %v698 = vadd.f32 %v661, %v683
      %v699 = vadd.f32 %v662, %v683
      %v700 = vadd.f32 %v663, %v683
      %v701 = vadd.f32 %v664, %v683
      %v702 = vadd.f32 %v665, %v683
      %v703 = vadd.f32 %v666, %v683
      %v704 = vadd.f32 %v667, %v683
      %v705 = vadd.f32 %v668, %v683
      %v706 = vadd.f32 %v669, %v683
      %v707 = vadd.f32 %v670, %v683
      %v708 = vadd.f32 %v671, %v683
      %v709 = vadd.f32 %v672, %v683
      %v710 = vadd.f32 %v673, %v683
      %v711 = vadd.f32 %v674, %v683
      %v712 = vadd.f32 %v675, %v683
      %v713 = vadd.f32 %v676, %v683
      %v714 = vadd.f32 %v677, %v683
      %v715 = vadd.f32 %v678, %v683
      %v716 = vld [vmem:[%s277] sm:$0xf]
      %v717 = vld [vmem:[%s277 + $0x4] sm:$0xf]
      %v718 = vld [vmem:[%s277 + $0x8] sm:$0xf]
      %v719 = vld [vmem:[%s277 + $0xc] sm:$0xf]
      %v720 = vld [vmem:[%s277 + $0x10] sm:$0xf]
      %v721 = vld [vmem:[%s277 + $0x14] sm:$0xf]
      %v722 = vld [vmem:[%s277 + $0x18] sm:$0xf]
      %v723 = vld [vmem:[%s277 + $0x1c] sm:$0xf]
      %v724 = vld [vmem:[%s277 + $0x20] sm:$0xf]
      %v725 = vld [vmem:[%s277 + $0x24] sm:$0xf]
      %v726 = vld [vmem:[%s277 + $0x28] sm:$0xf]
      %v727 = vld [vmem:[%s277 + $0x2c] sm:$0xf]
      %v728 = vld [vmem:[%s277 + $0x30] sm:$0xf]
      %v729 = vld [vmem:[%s277 + $0x34] sm:$0xf]
      %v730 = vld [vmem:[%s277 + $0x38] sm:$0xf]
      %v731 = vld [vmem:[%s277 + $0x3c] sm:$0xf]
      %v732 = vld [vmem:[%s277 + $0x40] sm:$0xf]
      %v733 = vld [vmem:[%s277 + $0x44] sm:$0xf]
      %v734 = vld [vmem:[%s277 + $0x48] sm:$0xf]
      %v735 = vld [vmem:[%s277 + $0x4c] sm:$0xf]
      %v736 = vld [vmem:[%s277 + $0x50] sm:$0xf]
      %v737 = vld [vmem:[%s277 + $0x54] sm:$0xf]
      %v738 = vld [vmem:[%s277 + $0x58] sm:$0xf]
      %v739 = vld [vmem:[%s277 + $0x5c] sm:$0xf]
      %v740 = vld [vmem:[%s277 + $0x60] sm:$0xf]
      %v741 = vld [vmem:[%s277 + $0x64] sm:$0xf]
      %v742 = vld [vmem:[%s277 + $0x68] sm:$0xf]
      %v743 = vld [vmem:[%s277 + $0x6c] sm:$0xf]
      %v744 = vld [vmem:[%s277 + $0x70] sm:$0xf]
      %v745 = vld [vmem:[%s277 + $0x74] sm:$0xf]
      %v746 = vld [vmem:[%s277 + $0x78] sm:$0xf]
      %v747 = vld [vmem:[%s277 + $0x7c] sm:$0xf]
      %v748 = vunpack.c.l.bf16 %v716
      %v749 = vunpack.c.l.bf16 %v717
      %v750 = vunpack.c.l.bf16 %v718
      %v751 = vunpack.c.l.bf16 %v719
      %v752 = vunpack.c.l.bf16 %v720
      %v753 = vunpack.c.l.bf16 %v721
      %v754 = vunpack.c.l.bf16 %v722
      %v755 = vunpack.c.l.bf16 %v723
      %v756 = vunpack.c.l.bf16 %v724
      %v757 = vunpack.c.l.bf16 %v725
      %v758 = vunpack.c.l.bf16 %v726
      %v759 = vunpack.c.l.bf16 %v727
      %v760 = vunpack.c.l.bf16 %v728
      %v761 = vunpack.c.l.bf16 %v729
      %v762 = vunpack.c.l.bf16 %v730
      %v763 = vunpack.c.l.bf16 %v731
      %v764 = vunpack.c.l.bf16 %v732
      %v765 = vunpack.c.l.bf16 %v733
      %v766 = vunpack.c.l.bf16 %v734
      %v767 = vunpack.c.l.bf16 %v735
      %v768 = vunpack.c.l.bf16 %v736
      %v769 = vunpack.c.l.bf16 %v737
      %v770 = vunpack.c.l.bf16 %v738
      %v771 = vunpack.c.l.bf16 %v739
      %v772 = vunpack.c.l.bf16 %v740
      %v773 = vunpack.c.l.bf16 %v741
      %v774 = vunpack.c.l.bf16 %v742
      %v775 = vunpack.c.l.bf16 %v743
      %v776 = vunpack.c.l.bf16 %v744
      %v777 = vunpack.c.l.bf16 %v745
      %v778 = vunpack.c.l.bf16 %v746
      %v779 = vunpack.c.l.bf16 %v747
      %v780 = vadd.f32 %v684, %v748
      %v781 = vadd.f32 %v685, %v749
      %v782 = vadd.f32 %v686, %v750
      %v783 = vadd.f32 %v687, %v751
      %v784 = vadd.f32 %v688, %v752
      %v785 = vadd.f32 %v689, %v753
      %v786 = vadd.f32 %v690, %v754
      %v787 = vadd.f32 %v691, %v755
      %v788 = vadd.f32 %v692, %v756
      %v789 = vadd.f32 %v693, %v757
      %v790 = vadd.f32 %v694, %v758
      %v791 = vadd.f32 %v695, %v759
      %v792 = vadd.f32 %v696, %v760
      %v793 = vadd.f32 %v697, %v761
      %v794 = vadd.f32 %v698, %v762
      %v795 = vadd.f32 %v699, %v763
      %v796 = vadd.f32 %v700, %v764
      %v797 = vadd.f32 %v701, %v765
      %v798 = vadd.f32 %v702, %v766
      %v799 = vadd.f32 %v703, %v767
      %v800 = vadd.f32 %v704, %v768
      %v801 = vadd.f32 %v705, %v769
      %v802 = vadd.f32 %v706, %v770
      %v803 = vadd.f32 %v707, %v771
      %v804 = vadd.f32 %v708, %v772
      %v805 = vadd.f32 %v709, %v773
      %v806 = vadd.f32 %v710, %v774
      %v807 = vadd.f32 %v711, %v775
      %v808 = vadd.f32 %v712, %v776
      %v809 = vadd.f32 %v713, %v777
      %v810 = vadd.f32 %v714, %v778
      %v811 = vadd.f32 %v715, %v779
      %v812 = vmax.f32 %v780, 0.0
      %v813 = vmax.f32 %v781, 0.0
      %v814 = vmax.f32 %v782, 0.0
      %v815 = vmax.f32 %v783, 0.0
      %v816 = vmax.f32 %v784, 0.0
      %v817 = vmax.f32 %v785, 0.0
      %v818 = vmax.f32 %v786, 0.0
      %v819 = vmax.f32 %v787, 0.0
      %v820 = vmax.f32 %v788, 0.0
      %v821 = vmax.f32 %v789, 0.0
      %v822 = vmax.f32 %v790, 0.0
      %v823 = vmax.f32 %v791, 0.0
      %v824 = vmax.f32 %v792, 0.0
      %v825 = vmax.f32 %v793, 0.0
      %v826 = vmax.f32 %v794, 0.0
      %v827 = vmax.f32 %v795, 0.0
      %v828 = vmax.f32 %v796, 0.0
      %v829 = vmax.f32 %v797, 0.0
      %v830 = vmax.f32 %v798, 0.0
      %v831 = vmax.f32 %v799, 0.0
      %v832 = vmax.f32 %v800, 0.0
      %v833 = vmax.f32 %v801, 0.0
      %v834 = vmax.f32 %v802, 0.0
      %v835 = vmax.f32 %v803, 0.0
      %v836 = vmax.f32 %v804, 0.0
      %v837 = vmax.f32 %v805, 0.0
      %v838 = vmax.f32 %v806, 0.0
      %v839 = vmax.f32 %v807, 0.0
      %v840 = vmax.f32 %v808, 0.0
      %v841 = vmax.f32 %v809, 0.0
      %v842 = vmax.f32 %v810, 0.0
      %v843 = vmax.f32 %v811, 0.0
      %v844 = vpack.c.bf16 %v813, %v812
      %v845 = vpack.c.bf16 %v815, %v814
      %v846 = vpack.c.bf16 %v817, %v816
      %v847 = vpack.c.bf16 %v819, %v818
      %v848 = vpack.c.bf16 %v821, %v820
      %v849 = vpack.c.bf16 %v823, %v822
      %v850 = vpack.c.bf16 %v825, %v824
      %v851 = vpack.c.bf16 %v827, %v826
      %v852 = vpack.c.bf16 %v829, %v828
      %v853 = vpack.c.bf16 %v831, %v830
      %v854 = vpack.c.bf16 %v833, %v832
      %v855 = vpack.c.bf16 %v835, %v834
      %v856 = vpack.c.bf16 %v837, %v836
      %v857 = vpack.c.bf16 %v839, %v838
      %v858 = vpack.c.bf16 %v841, %v840
      %v859 = vpack.c.bf16 %v843, %v842
      %v876 = vunpack.c.l.b16 %v844
      %v877 = vunpack.c.h.b16 %v844
      %v878 = vunpack.c.l.b16 %v845
      %v879 = vunpack.c.h.b16 %v845
      %v880 = vunpack.c.l.b16 %v846
      %v881 = vunpack.c.h.b16 %v846
      %v882 = vunpack.c.l.b16 %v847
      %v883 = vunpack.c.h.b16 %v847
      %v884 = vunpack.c.l.b16 %v848
      %v885 = vunpack.c.h.b16 %v848
      %v886 = vunpack.c.l.b16 %v849
      %v887 = vunpack.c.h.b16 %v849
      %v888 = vunpack.c.l.b16 %v850
      %v889 = vunpack.c.h.b16 %v850
      %v890 = vunpack.c.l.b16 %v851
      %v891 = vunpack.c.h.b16 %v851
      %v892 = vunpack.c.l.b16 %v852
      %v893 = vunpack.c.h.b16 %v852
      %v894 = vunpack.c.l.b16 %v853
      %v895 = vunpack.c.h.b16 %v853
      %v896 = vunpack.c.l.b16 %v854
      %v897 = vunpack.c.h.b16 %v854
      %v898 = vunpack.c.l.b16 %v855
      %v899 = vunpack.c.h.b16 %v855
      %v900 = vunpack.c.l.b16 %v856
      %v901 = vunpack.c.h.b16 %v856
      %v902 = vunpack.c.l.b16 %v857
      %v903 = vunpack.c.h.b16 %v857
      %v904 = vunpack.c.l.b16 %v858
      %v905 = vunpack.c.h.b16 %v858
      %v906 = vunpack.c.l.b16 %v859
      %v907 = vunpack.c.h.b16 %v859
      %v908 = vpack.c.b16 %v876, %v876
      %v909 = vpack.c.b16 %v877, %v877
      %v910 = vpack.c.b16 %v878, %v878
      %v911 = vpack.c.b16 %v879, %v879
      %v912 = vpack.c.b16 %v880, %v880
      %v913 = vpack.c.b16 %v881, %v881
      %v914 = vpack.c.b16 %v882, %v882
      %v915 = vpack.c.b16 %v883, %v883
      %v916 = vpack.c.b16 %v884, %v884
      %v917 = vpack.c.b16 %v885, %v885
      %v918 = vpack.c.b16 %v886, %v886
      %v919 = vpack.c.b16 %v887, %v887
      %v920 = vpack.c.b16 %v888, %v888
      %v921 = vpack.c.b16 %v889, %v889
      %v922 = vpack.c.b16 %v890, %v890
      %v923 = vpack.c.b16 %v891, %v891
      %v924 = vpack.c.b16 %v892, %v892
      %v925 = vpack.c.b16 %v893, %v893
      %v926 = vpack.c.b16 %v894, %v894
      %v927 = vpack.c.b16 %v895, %v895
      %v928 = vpack.c.b16 %v896, %v896
      %v929 = vpack.c.b16 %v897, %v897
      %v930 = vpack.c.b16 %v898, %v898
      %v931 = vpack.c.b16 %v899, %v899
      %v932 = vpack.c.b16 %v900, %v900
      %v933 = vpack.c.b16 %v901, %v901
      %v934 = vpack.c.b16 %v902, %v902
      %v935 = vpack.c.b16 %v903, %v903
      %v936 = vpack.c.b16 %v904, %v904
      %v937 = vpack.c.b16 %v905, %v905
      %v938 = vpack.c.b16 %v906, %v906
      %v939 = vpack.c.b16 %v907, %v907
      %972 = vst [vmem:[%s286] sm:$0xf] %v908
      %973 = vst [vmem:[%s286 + $0x4] sm:$0xf] %v909
      %974 = vst [vmem:[%s286 + $0x8] sm:$0xf] %v910
      %975 = vst [vmem:[%s286 + $0xc] sm:$0xf] %v911
      %976 = vst [vmem:[%s286 + $0x10] sm:$0xf] %v912
      %977 = vst [vmem:[%s286 + $0x14] sm:$0xf] %v913
      %978 = vst [vmem:[%s286 + $0x18] sm:$0xf] %v914
      %979 = vst [vmem:[%s286 + $0x1c] sm:$0xf] %v915
      %980 = vst [vmem:[%s286 + $0x20] sm:$0xf] %v916
      %981 = vst [vmem:[%s286 + $0x24] sm:$0xf] %v917
      %982 = vst [vmem:[%s286 + $0x28] sm:$0xf] %v918
      %983 = vst [vmem:[%s286 + $0x2c] sm:$0xf] %v919
      %984 = vst [vmem:[%s286 + $0x30] sm:$0xf] %v920
      %985 = vst [vmem:[%s286 + $0x34] sm:$0xf] %v921
      %986 = vst [vmem:[%s286 + $0x38] sm:$0xf] %v922
      %987 = vst [vmem:[%s286 + $0x3c] sm:$0xf] %v923
      %988 = vst [vmem:[%s286 + $0x40] sm:$0xf] %v924
      %989 = vst [vmem:[%s286 + $0x44] sm:$0xf] %v925
      %990 = vst [vmem:[%s286 + $0x48] sm:$0xf] %v926
      %991 = vst [vmem:[%s286 + $0x4c] sm:$0xf] %v927
      %992 = vst [vmem:[%s286 + $0x50] sm:$0xf] %v928
      %993 = vst [vmem:[%s286 + $0x54] sm:$0xf] %v929
      %994 = vst [vmem:[%s286 + $0x58] sm:$0xf] %v930
      %995 = vst [vmem:[%s286 + $0x5c] sm:$0xf] %v931
      %996 = vst [vmem:[%s286 + $0x60] sm:$0xf] %v932
      %997 = vst [vmem:[%s286 + $0x64] sm:$0xf] %v933
      %998 = vst [vmem:[%s286 + $0x68] sm:$0xf] %v934
      %999 = vst [vmem:[%s286 + $0x6c] sm:$0xf] %v935
      %1000 = vst [vmem:[%s286 + $0x70] sm:$0xf] %v936
      %1001 = vst [vmem:[%s286 + $0x74] sm:$0xf] %v937
      %1002 = vst [vmem:[%s286 + $0x78] sm:$0xf] %v938
      %1003 = vst [vmem:[%s286 + $0x7c] sm:$0xf] %v939
      %s1004 = smul.u32 32, %s19
      %p1005 = scmp.lt.s32.totalorder %s1004, 63
      %s1006 = scalar_select %p1005, %s1004, 63
      %p1007 = scmp.lt.s32.totalorder %s20, 0
      %s1008 = scalar_select %p1007, %s20, 0
      %s1009 = sadd.s32 %s1008, %s1006
      %s1010 = smul.addr %s1009, 4
      %s1011 = scalar_lea.vmem %s4, %s1010
      // Predicated region
      $region37: #{_lambda_.5} parent=35 // pred_check
        %p1012 = pneg %p153
      $region38: #{_lambda_.5} parent=35 // pred_check_branch
        %1014 = sbr.rel (%p1012) target = $region40
      $region39: #{_lambda_.5} parent=35 // pred_region
        %s1015 = smul.u32 32, %s19
      $region40: #{_lambda_.5} parent=35 // pred_fallthru
        _
    $region36: #{_lambda_.5} parent=5 // pred_fallthru
      _
    %p1016 = scmp.le.s32.totalorder 2, %s10
    // Predicated region
    $region41: #{_lambda_.5} parent=5 // pred_check
      %p1017 = pneg %p1016
    $region42: #{_lambda_.5} parent=5 // pred_check_branch
      %1019 = sbr.rel (%p1017) target = $region44
    $region43: #{_lambda_.5} parent=5 // pred_region
      %s1020 = ssub.s32 %s10, 2
      // Predicated region
      $region45: #{_lambda_.5} parent=43 // pred_check
        %p1021 = pneg %p159
      $region46: #{_lambda_.5} parent=43 // pred_check_branch
        %1023 = sbr.rel (%p1021) target = $region48
      $region47: #{_lambda_.5} parent=43 // pred_region
        %s1024 = smul.u32 32, %s21
        %p1025 = scmp.lt.s32.totalorder %s1024, 63
        %s1026 = scalar_select %p1025, %s1024, 63
        %p1027 = scmp.lt.s32.totalorder %s22, 0
        %s1028 = scalar_select %p1027, %s22, 0
        %s1029 = sadd.s32 %s1028, %s1026
        %s1030 = smul.addr %s1029, 4
        %s1031 = scalar_lea.vmem %s4, %s1030
      $region48: #{_lambda_.5} parent=43 // pred_fallthru
        _
    $region44: #{_lambda_.5} parent=5 // pred_fallthru
      _
  $region6: #{_lambda_.5} parent=0 // loop_footer
    %s14 = sadd.s32 1, %s10
  $region7: #{_lambda_.5} parent=0 // loop_footer_branch
    %9 = sbr.rel target = $region3
  $region8: #{_lambda_.5} parent=0 // loop_exit
    _

// kernel: _lambda_.4
$region0: #{_lambda_.4}
  #allocation0 [shape = 'u32[]', space=smem, size = 0x4, offset = 0x4, fixed_abs, tag = 'smem constant byte address 0x4 - core index']
  #allocation1 [shape = 'u32[144,128]{1,0:T(1,128)}', space=vmem, size = 0x12000, scoped, tag = 'internal scratch']
  %s0 = inlined_call_operand.vmem [shape: bf16[2,18,18,128], index: 0, kind: input, shape index: {}]
  %s1 = inlined_call_operand.vmem [shape: bf16[9,128,128], index: 1, kind: input, shape index: {}]
  %s2 = inlined_call_operand.vmem [shape: f32[2,128], index: 2, kind: input, shape index: {}]
  %s3 = inlined_call_operand.vmem [shape: bf16[2,16,16,128], index: 3, kind: output, shape index: {}]
  %s4 = sld [smem:[#allocation0]]
  $region45: #{_lambda_.4} parent=0
    _
  %s6 = ssub.s32 1, %s4
  %s7 = scalar_select 0, %s6, %s4
  loop: start=0, step=1, limit=4
  $region2: #{_lambda_.4} parent=0 // loop_pre_header
    _
  $region3: #{_lambda_.4} parent=0 // loop_header
    %s9 = sphi 0, %s13
    %p10 = scmp.ge.s32.totalorder %s9, 4
    %s16 = sphi 0, %s28
    %s17 = sphi 0, %s24
    %s18 = sphi 0, %s16
    %s19 = sphi 0, %s17
    %s20 = sphi 0, %s18
    %s21 = sphi 0, %s19
    %s31 = sphi 0, %s33
    %s34 = sphi 0, %s31
    %s35 = sphi 0, %s34
    %s51 = sphi 0, %s35
    %s57 = sphi 0, %s59
    %s60 = sphi 0, %s57
    %s61 = sphi 0, %s60
    %s77 = sphi 0, %s61
    %s83 = sphi 0, %s85
    %s86 = sphi 0, %s83
    %s87 = sphi 0, %s86
    %s103 = sphi 0, %s87
    %s111 = sphi 0, %s113
    %s114 = sphi 0, %s111
    %s115 = sphi 0, %s114
    %s131 = sphi 0, %s115
  $region4: #{_lambda_.4} parent=0 // loop_header_branch
    %12 = sbr.rel (%p10) target = $region8
  $region5: #{_lambda_.4} parent=0 // loop_body
    %s14 = ssub.s32 %s9, 1
    %s15 = ssub.s32 %s9, 2
    %s22 = sadd.s32 1, %s17
    %p23 = scmp.ge.s32.totalorder %s22, 1
    %s24 = scalar_select %p23, 0, %s22
    %s25 = sadd.s32 1, %s16
    %s26 = scalar_select %p23, %s25, %s16
    %p27 = scmp.ge.s32.totalorder %s26, 2
    %s28 = scalar_select %p27, 0, %s26
    %s29 = ssub.s32 %s16, %s28
    %p30 = scmp.eq.s32.totalorder %s29, 0
    %s32 = sadd.s32 %s31, 1
    %s33 = scalar_select %p30, %s31, %s32
    %p36 = pneg %p30
    %p37 = scmp.eq.s32.totalorder %s9, 1
    %p38 = por %p36, %p37
    %p39 = scmp.ne.s32.totalorder %s31, %s34
    %p40 = scmp.eq.s32.totalorder %s9, 0
    %p41 = por %p39, %p40
    %p42 = scmp.ne.s32.totalorder %s31, %s34
    %p43 = scmp.eq.s32.totalorder %s14, 1
    %p44 = por %p42, %p43
    %p45 = scmp.ne.s32.totalorder %s34, %s35
    %p46 = scmp.eq.s32.totalorder %s14, 0
    %p47 = por %p45, %p46
    %p48 = scmp.ne.s32.totalorder %s34, %s35
    %p49 = scmp.eq.s32.totalorder %s15, 1
    %p50 = por %p48, %p49
    %p52 = scmp.ne.s32.totalorder %s35, %s51
    %p53 = scmp.eq.s32.totalorder %s15, 0
    %p54 = por %p52, %p53
    %s55 = ssub.s32 %s17, %s24
    %p56 = scmp.eq.s32.totalorder %s55, 0
    %s58 = sadd.s32 %s57, 1
    %s59 = scalar_select %p56, %s57, %s58
    %p62 = pneg %p56
    %p63 = scmp.eq.s32.totalorder %s9, 1
    %p64 = por %p62, %p63
    %p65 = scmp.ne.s32.totalorder %s57, %s60
    %p66 = scmp.eq.s32.totalorder %s9, 0
    %p67 = por %p65, %p66
    %p68 = scmp.ne.s32.totalorder %s57, %s60
    %p69 = scmp.eq.s32.totalorder %s14, 1
    %p70 = por %p68, %p69
    %p71 = scmp.ne.s32.totalorder %s60, %s61
    %p72 = scmp.eq.s32.totalorder %s14, 0
    %p73 = por %p71, %p72
    %p74 = scmp.ne.s32.totalorder %s60, %s61
    %p75 = scmp.eq.s32.totalorder %s15, 1
    %p76 = por %p74, %p75
    %p78 = scmp.ne.s32.totalorder %s61, %s77
    %p79 = scmp.eq.s32.totalorder %s15, 0
    %p80 = por %p78, %p79
    %s81 = ssub.s32 %s17, %s24
    %p82 = scmp.eq.s32.totalorder %s81, 0
    %s84 = sadd.s32 %s83, 1
    %s85 = scalar_select %p82, %s83, %s84
    %p88 = pneg %p82
    %p89 = scmp.eq.s32.totalorder %s9, 1
    %p90 = por %p88, %p89
    %p91 = scmp.ne.s32.totalorder %s83, %s86
    %p92 = scmp.eq.s32.totalorder %s9, 0
    %p93 = por %p91, %p92
    %p94 = scmp.ne.s32.totalorder %s83, %s86
    %p95 = scmp.eq.s32.totalorder %s14, 1
    %p96 = por %p94, %p95
    %p97 = scmp.ne.s32.totalorder %s86, %s87
    %p98 = scmp.eq.s32.totalorder %s14, 0
    %p99 = por %p97, %p98
    %p100 = scmp.ne.s32.totalorder %s86, %s87
    %p101 = scmp.eq.s32.totalorder %s15, 1
    %p102 = por %p100, %p101
    %p104 = scmp.ne.s32.totalorder %s87, %s103
    %p105 = scmp.eq.s32.totalorder %s15, 0
    %p106 = por %p104, %p105
    %s107 = ssub.s32 %s16, %s28
    %s108 = ssub.s32 %s17, %s24
    %s109 = sor.u32 %s107, %s108
    %p110 = scmp.eq.s32.totalorder %s109, 0
    %s112 = sadd.s32 %s111, 1
    %s113 = scalar_select %p110, %s111, %s112
    %p116 = pneg %p110
    %p117 = scmp.eq.s32.totalorder %s9, 1
    %p118 = por %p116, %p117
    %p119 = scmp.ne.s32.totalorder %s111, %s114
    %p120 = scmp.eq.s32.totalorder %s9, 0
    %p121 = por %p119, %p120
    %p122 = scmp.ne.s32.totalorder %s111, %s114
    %p123 = scmp.eq.s32.totalorder %s14, 1
    %p124 = por %p122, %p123
    %p125 = scmp.ne.s32.totalorder %s114, %s115
    %p126 = scmp.eq.s32.totalorder %s14, 0
    %p127 = por %p125, %p126
    %p128 = scmp.ne.s32.totalorder %s114, %s115
    %p129 = scmp.eq.s32.totalorder %s15, 1
    %p130 = por %p128, %p129
    %p132 = scmp.ne.s32.totalorder %s115, %s131
    %p133 = scmp.eq.s32.totalorder %s15, 0
    %p134 = por %p132, %p133
    %p135 = scmp.le.s32.totalorder 1, %s9
    %p136 = scmp.lt.s32.totalorder %s9, 3
    %p137 = pnand %p135, %p136
    %p138 = pneg %p137
    // Predicated region
    $region9: #{_lambda_.4} parent=5 // pred_check
      _
    $region10: #{_lambda_.4} parent=5 // pred_check_branch
      %140 = sbr.rel (%p137) target = $region12
    $region11: #{_lambda_.4} parent=5 // pred_region
      %s141 = ssub.s32 %s9, 1
      // Predicated region
      $region13: #{_lambda_.4} parent=11 // pred_check
        %p142 = pneg %p73
      $region14: #{_lambda_.4} parent=11 // pred_check_branch
        %144 = sbr.rel (%p142) target = $region16
      $region15: #{_lambda_.4} parent=11 // pred_region
        %p145 = scmp.lt.s32.totalorder %s19, 0
        %s146 = scalar_select %p145, %s19, 0
        %s147 = smul.addr %s146, 4
        %s148 = scalar_lea.vmem %s1, %s147
      $region16: #{_lambda_.4} parent=11 // pred_fallthru
        _
      // Predicated region
      $region17: #{_lambda_.4} parent=11 // pred_check
        %p149 = pneg %p99
      $region18: #{_lambda_.4} parent=11 // pred_check_branch
        %151 = sbr.rel (%p149) target = $region20
      $region19: #{_lambda_.4} parent=11 // pred_region
        %p152 = scmp.lt.s32.totalorder %s19, 0
        %s153 = scalar_select %p152, %s19, 0
        %s154 = smul.addr %s153, 2
        %s155 = scalar_lea.vmem %s2, %s154
      $region20: #{_lambda_.4} parent=11 // pred_fallthru
        _
    $region12: #{_lambda_.4} parent=5 // pred_fallthru
      _
    %p156 = scmp.lt.s32.totalorder %s9, 2
    // Predicated region
    $region21: #{_lambda_.4} parent=5 // pred_check
      %p157 = pneg %p156
    $region22: #{_lambda_.4} parent=5 // pred_check_branch
      %159 = sbr.rel (%p157) target = $region24
    $region23: #{_lambda_.4} parent=5 // pred_region
      // Predicated region
      $region25: #{_lambda_.4} parent=23 // pred_check
        %p160 = pneg %p41
      $region26: #{_lambda_.4} parent=23 // pred_check_branch
        %162 = sbr.rel (%p160) target = $region28
      $region27: #{_lambda_.4} parent=23 // pred_region
        %p163 = scmp.lt.s32.totalorder %s16, 1
        %s164 = scalar_select %p163, %s16, 1
        %s165 = smul.addr %s164, 54
        %s166 = smul.addr %s165, 4
        %s167 = scalar_lea.vmem %s0, %s166
      $region28: #{_lambda_.4} parent=23 // pred_fallthru
        _
    $region24: #{_lambda_.4} parent=5 // pred_fallthru
      _
    %p168 = scmp.le.s32.totalorder 1, %s9
    %p169 = scmp.lt.s32.totalorder %s9, 3
    %p170 = pnand %p168, %p169
    %p171 = pneg %p170
    // Predicated region
    $region29: #{_lambda_.4} parent=5 // pred_check
      _
    $region30: #{_lambda_.4} parent=5 // pred_check_branch
      %173 = sbr.rel (%p170) target = $region32
    $region31: #{_lambda_.4} parent=5 // pred_region
      %s174 = ssub.s32 %s9, 1
      %p175 = scmp.lt.s32.totalorder %s18, 1
      %s176 = scalar_select %p175, %s18, 1
      %s177 = smul.addr %s176, 54
      %s178 = smul.addr %s177, 4
      %s179 = scalar_lea.vmem %s0, %s178
      %p180 = pneg %p47
      %p181 = pneg %p44
      %p182 = scmp.lt.s32.totalorder %s19, 0
      %s183 = scalar_select %p182, %s19, 0
      %s184 = smul.addr %s183, 4
      %s185 = scalar_lea.vmem %s1, %s184
      %p186 = pneg %p73
      %p187 = pneg %p70
      %p188 = scmp.lt.s32.totalorder %s19, 0
      %s189 = scalar_select %p188, %s19, 0
      %s190 = smul.addr %s189, 2
      %s191 = scalar_lea.vmem %s2, %s190
      %p192 = pneg %p99
      %p193 = pneg %p96
      %p194 = pneg %p127
      %p195 = pneg %p124
      %p196 = scmp.lt.s32.totalorder %s18, 1
      %s197 = scalar_select %p196, %s18, 1
      %p198 = scmp.lt.s32.totalorder %s19, 0
      %s199 = scalar_select %p198, %s19, 0
      %s200 = smul.addr %s197, 32
      %s201 = sadd.s32 %s199, %s200
      %s202 = smul.addr %s201, 4
      %s203 = scalar_lea.vmem %s3, %s202
      %p204 = scmp.lt.s32.totalorder %s18, 1
      %s205 = scalar_select %p204, %s18, 1
      %s206 = smul.addr %s205, 54
      %s207 = smul.addr %s206, 4
      %s208 = scalar_lea.vmem %s0, %s207
      %p209 = scmp.lt.s32.totalorder %s19, 0
      %s210 = scalar_select %p209, %s19, 0
      %s211 = smul.addr %s210, 4
      %s212 = scalar_lea.vmem %s1, %s211
      %p213 = scmp.lt.s32.totalorder %s19, 0
      %s214 = scalar_select %p213, %s19, 0
      %s215 = smul.addr %s214, 2
      %s216 = scalar_lea.vmem %s2, %s215
      %p217 = scmp.lt.s32.totalorder %s18, 1
      %s218 = scalar_select %p217, %s18, 1
      %p219 = scmp.lt.s32.totalorder %s19, 0
      %s220 = scalar_select %p219, %s19, 0
      %s221 = smul.addr %s218, 32
      %s222 = sadd.s32 %s220, %s221
      %s223 = smul.addr %s222, 4
      %s224 = scalar_lea.vmem %s3, %s223
      %v226 = vld [vmem:[%s208] sm:$0xf]
      %v227 = vld [vmem:[%s208 + $0x4] sm:$0xf]
      %v228 = vld [vmem:[%s208 + $0xc] sm:$0xf]
      %v229 = vld [vmem:[%s208 + $0x10] sm:$0xf]
      %v230 = vld [vmem:[%s208 + $0x18] sm:$0xf]
      %v231 = vld [vmem:[%s208 + $0x1c] sm:$0xf]
      %v232 = vld [vmem:[%s208 + $0x24] sm:$0xf]
      %v233 = vld [vmem:[%s208 + $0x28] sm:$0xf]
      %v234 = vld [vmem:[%s208 + $0x30] sm:$0xf]
      %v235 = vld [vmem:[%s208 + $0x34] sm:$0xf]
      %v236 = vld [vmem:[%s208 + $0x3c] sm:$0xf]
      %v237 = vld [vmem:[%s208 + $0x40] sm:$0xf]
      %v238 = vld [vmem:[%s208 + $0x48] sm:$0xf]
      %v239 = vld [vmem:[%s208 + $0x4c] sm:$0xf]
      %v240 = vld [vmem:[%s208 + $0x54] sm:$0xf]
      %v241 = vld [vmem:[%s208 + $0x58] sm:$0xf]
      %v242 = vld [vmem:[%s208 + $0x60] sm:$0xf]
      %v243 = vld [vmem:[%s208 + $0x64] sm:$0xf]
      %v244 = vld [vmem:[%s208 + $0x6c] sm:$0xf]
      %v245 = vld [vmem:[%s208 + $0x70] sm:$0xf]
      %v246 = vld [vmem:[%s208 + $0x78] sm:$0xf]
      %v247 = vld [vmem:[%s208 + $0x7c] sm:$0xf]
      %v248 = vld [vmem:[%s208 + $0x84] sm:$0xf]
      %v249 = vld [vmem:[%s208 + $0x88] sm:$0xf]
      %v250 = vld [vmem:[%s208 + $0x90] sm:$0xf]
      %v251 = vld [vmem:[%s208 + $0x94] sm:$0xf]
      %v252 = vld [vmem:[%s208 + $0x9c] sm:$0xf]
      %v253 = vld [vmem:[%s208 + $0xa0] sm:$0xf]
      %v254 = vld [vmem:[%s208 + $0xa8] sm:$0xf]
      %v255 = vld [vmem:[%s208 + $0xac] sm:$0xf]
      %v256 = vld [vmem:[%s208 + $0xb4] sm:$0xf]
      %v257 = vld [vmem:[%s208 + $0xb8] sm:$0xf]
      %v258 = vld [vmem:[%s212] sm:$0xf]
      %v259 = vld [vmem:[%s212 + $0x4] sm:$0xf]
      %v260 = vld [vmem:[%s212 + $0x8] sm:$0xf]
      %v261 = vld [vmem:[%s212 + $0xc] sm:$0xf]
      %v262 = vld [vmem:[%s212 + $0x10] sm:$0xf]
      %v263 = vld [vmem:[%s212 + $0x14] sm:$0xf]
      %v264 = vld [vmem:[%s212 + $0x18] sm:$0xf]
      %v265 = vld [vmem:[%s212 + $0x1c] sm:$0xf]
      %v266 = vld [vmem:[%s212 + $0x20] sm:$0xf]
      %v267 = vld [vmem:[%s212 + $0x24] sm:$0xf]
      %v268 = vld [vmem:[%s212 + $0x28] sm:$0xf]
      %v269 = vld [vmem:[%s212 + $0x2c] sm:$0xf]
      %v270 = vld [vmem:[%s212 + $0x30] sm:$0xf]
      %v271 = vld [vmem:[%s212 + $0x34] sm:$0xf]
      %v272 = vld [vmem:[%s212 + $0x38] sm:$0xf]
      %v273 = vld [vmem:[%s212 + $0x3c] sm:$0xf]
      %v274 = vld [vmem:[%s208 + $0x8] sm:$0x1]
      %v275 = vld [vmem:[%s208 + $0x14] sm:$0x1]
      %v276 = vld [vmem:[%s208 + $0x20] sm:$0x1]
      %v277 = vld [vmem:[%s208 + $0x2c] sm:$0x1]
      %v278 = vld [vmem:[%s208 + $0x38] sm:$0x1]
      %v279 = vld [vmem:[%s208 + $0x44] sm:$0x1]
      %v280 = vld [vmem:[%s208 + $0x50] sm:$0x1]
      %v281 = vld [vmem:[%s208 + $0x5c] sm:$0x1]
      %v282 = vld [vmem:[%s208 + $0x68] sm:$0x1]
      %v283 = vld [vmem:[%s208 + $0x74] sm:$0x1]
      %v284 = vld [vmem:[%s208 + $0x80] sm:$0x1]
      %v285 = vld [vmem:[%s208 + $0x8c] sm:$0x1]
      %v286 = vld [vmem:[%s208 + $0x98] sm:$0x1]
      %v287 = vld [vmem:[%s208 + $0xa4] sm:$0x1]
      %v288 = vld [vmem:[%s208 + $0xb0] sm:$0x1]
      %v289 = vld [vmem:[%s208 + $0xbc] sm:$0x1]
      %vm290 = vsmask.f32 3328
      %vm291 = vsmask.f32 7440
      %vm292 = vmor %vm290, %vm291
      %v294 = vshrl.u32 %v226, 16
      %v296 = vrot.slane %v294, 4
      %v297 = vshll.u32 %v226, 16
      %v299 = vrot.slane %v297, 5
      %v300 = vor.u32 %v296, %v299
      %v301 = vrot.slane %v300, 4
      %v303 = vshll.u32 %v227, 16
      %v305 = vrot.slane %v303, 5
      %v306 = vsel %vm292, %v301, %v305
      %v307 = vshrl.u32 %v227, 16
      %v309 = vrot.slane %v307, 4
      %v310 = vor.u32 %v309, %v305
      %v311 = vrot.slane %v310, 4
      %v313 = vshll.u32 %v274, 16
      %v315 = vrot.slane %v313, 5
      %v316 = vsel %vm292, %v311, %v315
      %v318 = vshrl.u32 %v228, 16
      %v320 = vrot.slane %v318, 4
      %v321 = vshll.u32 %v228, 16
      %v323 = vrot.slane %v321, 5
      %v324 = vor.u32 %v320, %v323
      %v325 = vrot.slane %v324, 4
      %v327 = vshll.u32 %v229, 16
      %v329 = vrot.slane %v327, 5
      %v330 = vsel %vm292, %v325, %v329
      %v331 = vshrl.u32 %v229, 16
      %v333 = vrot.slane %v331, 4
      %v334 = vor.u32 %v333, %v329
      %v335 = vrot.slane %v334, 4
      %v337 = vshll.u32 %v275, 16
      %v339 = vrot.slane %v337, 5
      %v340 = vsel %vm292, %v335, %v339
      %v342 = vshrl.u32 %v230, 16
      %v344 = vrot.slane %v342, 4
      %v345 = vshll.u32 %v230, 16
      %v347 = vrot.slane %v345, 5
      %v348 = vor.u32 %v344, %v347
      %v349 = vrot.slane %v348, 4
      %v351 = vshll.u32 %v231, 16
      %v353 = vrot.slane %v351, 5
      %v354 = vsel %vm292, %v349, %v353
      %v355 = vshrl.u32 %v231, 16
      %v357 = vrot.slane %v355, 4
      %v358 = vor.u32 %v357, %v353
      %v359 = vrot.slane %v358, 4
      %v361 = vshll.u32 %v276, 16
      %v363 = vrot.slane %v361, 5
      %v364 = vsel %vm292, %v359, %v363
      %v366 = vshrl.u32 %v232, 16
      %v368 = vrot.slane %v366, 4
      %v369 = vshll.u32 %v232, 16
      %v371 = vrot.slane %v369, 5
      %v372 = vor.u32 %v368, %v371
      %v373 = vrot.slane %v372, 4
      %v375 = vshll.u32 %v233, 16
      %v377 = vrot.slane %v375, 5
      %v378 = vsel %vm292, %v373, %v377
      %v379 = vshrl.u32 %v233, 16
      %v381 = vrot.slane %v379, 4
      %v382 = vor.u32 %v381, %v377
      %v383 = vrot.slane %v382, 4
      %v385 = vshll.u32 %v277, 16
      %v387 = vrot.slane %v385, 5
      %v388 = vsel %vm292, %v383, %v387
      %v390 = vshrl.u32 %v234, 16
      %v392 = vrot.slane %v390, 4
      %v393 = vshll.u32 %v234, 16
      %v395 = vrot.slane %v393, 5
      %v396 = vor.u32 %v392, %v395
      %v397 = vrot.slane %v396, 4
      %v399 = vshll.u32 %v235, 16
      %v401 = vrot.slane %v399, 5
      %v402 = vsel %vm292, %v397, %v401
      %v403 = vshrl.u32 %v235, 16
      %v405 = vrot.slane %v403, 4
      %v406 = vor.u32 %v405, %v401
      %v407 = vrot.slane %v406, 4
      %v409 = vshll.u32 %v278, 16
      %v411 = vrot.slane %v409, 5
      %v412 = vsel %vm292, %v407, %v411
      %v414 = vshrl.u32 %v236, 16
      %v416 = vrot.slane %v414, 4
      %v417 = vshll.u32 %v236, 16
      %v419 = vrot.slane %v417, 5
      %v420 = vor.u32 %v416, %v419
      %v421 = vrot.slane %v420, 4
      %v423 = vshll.u32 %v237, 16
      %v425 = vrot.slane %v423, 5
      %v426 = vsel %vm292, %v421, %v425
      %v427 = vshrl.u32 %v237, 16
      %v429 = vrot.slane %v427, 4
      %v430 = vor.u32 %v429, %v425
      %v431 = vrot.slane %v430, 4
      %v433 = vshll.u32 %v279, 16
      %v435 = vrot.slane %v433, 5
      %v436 = vsel %vm292, %v431, %v435
      %v438 = vshrl.u32 %v238, 16
      %v440 = vrot.slane %v438, 4
      %v441 = vshll.u32 %v238, 16
      %v443 = vrot.slane %v441, 5
      %v444 = vor.u32 %v440, %v443
      %v445 = vrot.slane %v444, 4
      %v447 = vshll.u32 %v239, 16
      %v449 = vrot.slane %v447, 5
      %v450 = vsel %vm292, %v445, %v449
      %v451 = vshrl.u32 %v239, 16
      %v453 = vrot.slane %v451, 4
      %v454 = vor.u32 %v453, %v449
      %v455 = vrot.slane %v454, 4
      %v457 = vshll.u32 %v280, 16
      %v459 = vrot.slane %v457, 5
      %v460 = vsel %vm292, %v455, %v459
      %v462 = vshrl.u32 %v240, 16
      %v464 = vrot.slane %v462, 4
      %v465 = vshll.u32 %v240, 16
      %v467 = vrot.slane %v465, 5
      %v468 = vor.u32 %v464, %v467
      %v469 = vrot.slane %v468, 4
      %v471 = vshll.u32 %v241, 16
      %v473 = vrot.slane %v471, 5
      %v474 = vsel %vm292, %v469, %v473
      %v475 = vshrl.u32 %v241, 16
      %v477 = vrot.slane %v475, 4
      %v478 = vor.u32 %v477, %v473
      %v479 = vrot.slane %v478, 4
      %v481 = vshll.u32 %v281, 16
      %v483 = vrot.slane %v481, 5
      %v484 = vsel %vm292, %v479, %v483
      %v486 = vshrl.u32 %v242, 16
      %v488 = vrot.slane %v486, 4
      %v489 = vshll.u32 %v242, 16
      %v491 = vrot.slane %v489, 5
      %v492 = vor.u32 %v488, %v491
      %v493 = vrot.slane %v492, 4
      %v495 = vshll.u32 %v243, 16
      %v497 = vrot.slane %v495, 5
      %v498 = vsel %vm292, %v493, %v497
      %v499 = vshrl.u32 %v243, 16
      %v501 = vrot.slane %v499, 4
      %v502 = vor.u32 %v501, %v497
      %v503 = vrot.slane %v502, 4
      %v505 = vshll.u32 %v282, 16
      %v507 = vrot.slane %v505, 5
      %v508 = vsel %vm292, %v503, %v507
      %v510 = vshrl.u32 %v244, 16
      %v512 = vrot.slane %v510, 4
      %v513 = vshll.u32 %v244, 16
      %v515 = vrot.slane %v513, 5
      %v516 = vor.u32 %v512, %v515
      %v517 = vrot.slane %v516, 4
      %v519 = vshll.u32 %v245, 16
      %v521 = vrot.slane %v519, 5
      %v522 = vsel %vm292, %v517, %v521
      %v523 = vshrl.u32 %v245, 16
      %v525 = vrot.slane %v523, 4
      %v526 = vor.u32 %v525, %v521
      %v527 = vrot.slane %v526, 4
      %v529 = vshll.u32 %v283, 16
      %v531 = vrot.slane %v529, 5
      %v532 = vsel %vm292, %v527, %v531
      %v534 = vshrl.u32 %v246, 16
      %v536 = vrot.slane %v534, 4
      %v537 = vshll.u32 %v246, 16
      %v539 = vrot.slane %v537, 5
      %v540 = vor.u32 %v536, %v539
      %v541 = vrot.slane %v540, 4
      %v543 = vshll.u32 %v247, 16
      %v545 = vrot.slane %v543, 5
      %v546 = vsel %vm292, %v541, %v545
      %v547 = vshrl.u32 %v247, 16
      %v549 = vrot.slane %v547, 4
      %v550 = vor.u32 %v549, %v545
      %v551 = vrot.slane %v550, 4
      %v553 = vshll.u32 %v284, 16
      %v555 = vrot.slane %v553, 5
      %v556 = vsel %vm292, %v551, %v555
      %v558 = vshrl.u32 %v248, 16
      %v560 = vrot.slane %v558, 4
      %v561 = vshll.u32 %v248, 16
      %v563 = vrot.slane %v561, 5
      %v564 = vor.u32 %v560, %v563
      %v565 = vrot.slane %v564, 4
      %v567 = vshll.u32 %v249, 16
      %v569 = vrot.slane %v567, 5
      %v570 = vsel %vm292, %v565, %v569
      %v571 = vshrl.u32 %v249, 16
      %v573 = vrot.slane %v571, 4
      %v574 = vor.u32 %v573, %v569
      %v575 = vrot.slane %v574, 4
      %v577 = vshll.u32 %v285, 16
      %v579 = vrot.slane %v577, 5
      %v580 = vsel %vm292, %v575, %v579
      %v582 = vshrl.u32 %v250, 16
      %v584 = vrot.slane %v582, 4
      %v585 = vshll.u32 %v250, 16
      %v587 = vrot.slane %v585, 5
      %v588 = vor.u32 %v584, %v587
      %v589 = vrot.slane %v588, 4
      %v591 = vshll.u32 %v251, 16
      %v593 = vrot.slane %v591, 5
      %v594 = vsel %vm292, %v589, %v593
      %v595 = vshrl.u32 %v251, 16
      %v597 = vrot.slane %v595, 4
      %v598 = vor.u32 %v597, %v593
      %v599 = vrot.slane %v598, 4
      %v601 = vshll.u32 %v286, 16
      %v603 = vrot.slane %v601, 5
      %v604 = vsel %vm292, %v599, %v603
      %v606 = vshrl.u32 %v252, 16
      %v608 = vrot.slane %v606, 4
      %v609 = vshll.u32 %v252, 16
      %v611 = vrot.slane %v609, 5
      %v612 = vor.u32 %v608, %v611
      %v613 = vrot.slane %v612, 4
      %v615 = vshll.u32 %v253, 16
      %v617 = vrot.slane %v615, 5
      %v618 = vsel %vm292, %v613, %v617
      %v619 = vshrl.u32 %v253, 16
      %v621 = vrot.slane %v619, 4
      %v622 = vor.u32 %v621, %v617
      %v623 = vrot.slane %v622, 4
      %v625 = vshll.u32 %v287, 16
      %v627 = vrot.slane %v625, 5
      %v628 = vsel %vm292, %v623, %v627
      %v630 = vshrl.u32 %v254, 16
      %v632 = vrot.slane %v630, 4
      %v633 = vshll.u32 %v254, 16
      %v635 = vrot.slane %v633, 5
      %v636 = vor.u32 %v632, %v635
      %v637 = vrot.slane %v636, 4
      %v639 = vshll.u32 %v255, 16
      %v641 = vrot.slane %v639, 5
      %v642 = vsel %vm292, %v637, %v641
      %v643 = vshrl.u32 %v255, 16
      %v645 = vrot.slane %v643, 4
      %v646 = vor.u32 %v645, %v641
      %v647 = vrot.slane %v646, 4
      %v649 = vshll.u32 %v288, 16
      %v651 = vrot.slane %v649, 5
      %v652 = vsel %vm292, %v647, %v651
      %v654 = vshrl.u32 %v256, 16
      %v656 = vrot.slane %v654, 4
      %v657 = vshll.u32 %v256, 16
      %v659 = vrot.slane %v657, 5
      %v660 = vor.u32 %v656, %v659
      %v661 = vrot.slane %v660, 4
      %v663 = vshll.u32 %v257, 16
      %v665 = vrot.slane %v663, 5
      %v666 = vsel %vm292, %v661, %v665
      %v667 = vshrl.u32 %v257, 16
      %v669 = vrot.slane %v667, 4
      %v670 = vor.u32 %v669, %v665
      %v671 = vrot.slane %v670, 4
      %v673 = vshll.u32 %v289, 16
      %v675 = vrot.slane %v673, 5
      %v676 = vsel %vm292, %v671, %v675
      %s677 = scalar_lea.vmem %s212, 64
      %v678 = vld [vmem:[%s677] sm:$0xf]
      %v679 = vld [vmem:[%s677 + $0x4] sm:$0xf]
      %v680 = vld [vmem:[%s677 + $0x8] sm:$0xf]
      %v681 = vld [vmem:[%s677 + $0xc] sm:$0xf]
      %v682 = vld [vmem:[%s677 + $0x10] sm:$0xf]
      %v683 = vld [vmem:[%s677 + $0x14] sm:$0xf]
      %v684 = vld [vmem:[%s677 + $0x18] sm:$0xf]
      %v685 = vld [vmem:[%s677 + $0x1c] sm:$0xf]
      %v686 = vld [vmem:[%s677 + $0x20] sm:$0xf]
      %v687 = vld [vmem:[%s677 + $0x24] sm:$0xf]
      %v688 = vld [vmem:[%s677 + $0x28] sm:$0xf]
      %v689 = vld [vmem:[%s677 + $0x2c] sm:$0xf]
      %v690 = vld [vmem:[%s677 + $0x30] sm:$0xf]
      %v691 = vld [vmem:[%s677 + $0x34] sm:$0xf]
      %v692 = vld [vmem:[%s677 + $0x38] sm:$0xf]
      %v693 = vld [vmem:[%s677 + $0x3c] sm:$0xf]
      %v694 = vunpack.c.l.b16 %v306
      %v695 = vunpack.c.l.b16 %v316
      %v696 = vunpack.c.l.b16 %v330
      %v697 = vunpack.c.l.b16 %v340
      %v698 = vunpack.c.l.b16 %v354
      %v699 = vunpack.c.l.b16 %v364
      %v700 = vunpack.c.l.b16 %v378
      %v701 = vunpack.c.l.b16 %v388
      %v702 = vunpack.c.l.b16 %v402
      %v703 = vunpack.c.l.b16 %v412
      %v704 = vunpack.c.l.b16 %v426
      %v705 = vunpack.c.l.b16 %v436
      %v706 = vunpack.c.l.b16 %v450
      %v707 = vunpack.c.l.b16 %v460
      %v708 = vunpack.c.l.b16 %v474
      %v709 = vunpack.c.l.b16 %v484
      %v710 = vunpack.c.l.b16 %v498
      %v711 = vunpack.c.l.b16 %v508
      %v712 = vunpack.c.l.b16 %v522
      %v713 = vunpack.c.l.b16 %v532
      %v714 = vunpack.c.l.b16 %v546
      %v715 = vunpack.c.l.b16 %v556
      %v716 = vunpack.c.l.b16 %v570
      %v717 = vunpack.c.l.b16 %v580
      %v718 = vunpack.c.l.b16 %v594
      %v719 = vunpack.c.l.b16 %v604
      %v720 = vunpack.c.l.b16 %v618
      %v721 = vunpack.c.l.b16 %v628
      %v722 = vunpack.c.l.b16 %v642
      %v723 = vunpack.c.l.b16 %v652
      %v724 = vunpack.c.l.b16 %v666
      %v725 = vunpack.c.l.b16 %v676
      %v726 = vpack.c.b16 %v695, %v694
      %v727 = vpack.c.b16 %v697, %v696
      %v728 = vpack.c.b16 %v699, %v698
      %v729 = vpack.c.b16 %v701, %v700
      %v730 = vpack.c.b16 %v703, %v702
      %v731 = vpack.c.b16 %v705, %v704
      %v732 = vpack.c.b16 %v707, %v706
      %v733 = vpack.c.b16 %v709, %v708
      %v734 = vpack.c.b16 %v711, %v710
      %v735 = vpack.c.b16 %v713, %v712
      %v736 = vpack.c.b16 %v715, %v714
      %v737 = vpack.c.b16 %v717, %v716
      %v738 = vpack.c.b16 %v719, %v718
      %v739 = vpack.c.b16 %v721, %v720
      %v740 = vpack.c.b16 %v723, %v722
      %v741 = vpack.c.b16 %v725, %v724
      %v774 = vunpack.c.l.b16 %v678
      %v775 = vunpack.c.l.b16 %v679
      %v776 = vunpack.c.l.b16 %v680
      %v777 = vunpack.c.l.b16 %v681
      %v778 = vunpack.c.l.b16 %v682
      %v779 = vunpack.c.l.b16 %v683
      %v780 = vunpack.c.l.b16 %v684
      %v781 = vunpack.c.l.b16 %v685
      %v782 = vunpack.c.l.b16 %v686
      %v783 = vunpack.c.l.b16 %v687
      %v784 = vunpack.c.l.b16 %v688
      %v785 = vunpack.c.l.b16 %v689
      %v786 = vunpack.c.l.b16 %v690
      %v787 = vunpack.c.l.b16 %v691
      %v788 = vunpack.c.l.b16 %v692
      %v789 = vunpack.c.l.b16 %v693
      %v790 = vpack.c.b16 %v775, %v774
      %v791 = vpack.c.b16 %v777, %v776
      %v792 = vpack.c.b16 %v779, %v778
      %v793 = vpack.c.b16 %v781, %v780
      %v794 = vpack.c.b16 %v783, %v782
      %v795 = vpack.c.b16 %v785, %v784
      %v796 = vpack.c.b16 %v787, %v786
      %v797 = vpack.c.b16 %v789, %v788
      %806 = vmatprep.subr.bf16.mxu0 0
      %807 = vmatpush1.bf16.msra.mxu0 %v790
      %808 = vmatprep.subr.bf16.mxu0 0
      %809 = vmatpush1.bf16.msra.mxu0 %v791
      %810 = vmatprep.subr.bf16.mxu0 0
      %811 = vmatpush1.bf16.msra.mxu0 %v792
      %812 = vmatprep.subr.bf16.mxu0 0
      %813 = vmatpush1.bf16.msra.mxu0 %v793
      %814 = vmatprep.subr.bf16.mxu0 0
      %815 = vmatpush1.bf16.msra.mxu0 %v794
      %816 = vmatprep.subr.bf16.mxu0 0
      %817 = vmatpush1.bf16.msra.mxu0 %v795
      %818 = vmatprep.subr.bf16.mxu0 0
      %819 = vmatpush1.bf16.msra.mxu0 %v796
      %820 = vmatprep.subr.bf16.mxu0 0
      %821 = vmatpush1.bf16.msra.mxu0 %v797
      %822 = vmatprep.subr.bf16.mxu0 0
      %823 = vmatpush1.bf16.msra.mxu0 0
      %824 = vmatprep.subr.bf16.mxu0 0
      %825 = vmatpush1.bf16.msra.mxu0 0
      %826 = vmatprep.subr.bf16.mxu0 0
      %827 = vmatpush1.bf16.msra.mxu0 0
      %828 = vmatprep.subr.bf16.mxu0 0
      %829 = vmatpush1.bf16.msra.mxu0 0
      %830 = vmatprep.subr.bf16.mxu0 0
      %831 = vmatpush1.bf16.msra.mxu0 0
      %832 = vmatprep.subr.bf16.mxu0 0
      %833 = vmatpush1.bf16.msra.mxu0 0
      %834 = vmatprep.subr.bf16.mxu0 0
      %835 = vmatpush1.bf16.msra.mxu0 0
      %836 = vmatprep.subr.bf16.mxu0 0
      %837 = vmatpush1.bf16.msra.mxu0 0
      %838 = vmatprep.mubr.bf16.mxu0 0
      %839 = vmatmul.mubr.bf16.gmra.mrb[0].mxu0 %v726
      %v840 = vpop.f32.mrb[0].mxu0
      %v841 = vadd.f32 0.0, %v840
      %v842 = vpop.f32.mrb[0].mxu0
      %v843 = vpop.f32.mrb[0].mxu0
      %v844 = vadd.f32 0.0, %v843
      %v845 = vpop.f32.mrb[0].mxu0
      %846 = vmatprep.mubr.bf16.mxu0 0
      %847 = vmatmul.mubr.bf16.gmra.mrb[0].mxu0 %v727
      %v848 = vpop.f32.mrb[0].mxu0
      %v849 = vadd.f32 0.0, %v848
      %v850 = vpop.f32.mrb[0].mxu0
      %v851 = vpop.f32.mrb[0].mxu0
      %v852 = vadd.f32 0.0, %v851
      %v853 = vpop.f32.mrb[0].mxu0
      %854 = vmatprep.mubr.bf16.mxu0 0
      %855 = vmatmul.mubr.bf16.gmra.mrb[0].mxu0 %v728
      %v856 = vpop.f32.mrb[0].mxu0
      %v857 = vadd.f32 0.0, %v856
      %v858 = vpop.f32.mrb[0].mxu0
      %v859 = vpop.f32.mrb[0].mxu0
      %v860 = vadd.f32 0.0, %v859
      %v861 = vpop.f32.mrb[0].mxu0
      %862 = vmatprep.mubr.bf16.mxu0 0
      %863 = vmatmul.mubr.bf16.gmra.mrb[0].mxu0 %v729
      %v864 = vpop.f32.mrb[0].mxu0
      %v865 = vadd.f32 0.0, %v864
      %v866 = vpop.f32.mrb[0].mxu0
      %v867 = vpop.f32.mrb[0].mxu0
      %v868 = vadd.f32 0.0, %v867
      %v869 = vpop.f32.mrb[0].mxu0
      %870 = vmatprep.mubr.bf16.mxu0 0
      %871 = vmatmul.mubr.bf16.gmra.mrb[0].mxu0 %v730
      %v872 = vpop.f32.mrb[0].mxu0
      %v873 = vadd.f32 0.0, %v872
      %v874 = vpop.f32.mrb[0].mxu0
      %v875 = vpop.f32.mrb[0].mxu0
      %v876 = vadd.f32 0.0, %v875
      %v877 = vpop.f32.mrb[0].mxu0
      %878 = vmatprep.mubr.bf16.mxu0 0
      %879 = vmatmul.mubr.bf16.gmra.mrb[0].mxu0 %v731
      %v880 = vpop.f32.mrb[0].mxu0
      %v881 = vadd.f32 0.0, %v880
      %v882 = vpop.f32.mrb[0].mxu0
      %v883 = vpop.f32.mrb[0].mxu0
      %v884 = vadd.f32 0.0, %v883
      %v885 = vpop.f32.mrb[0].mxu0
      %886 = vmatprep.mubr.bf16.mxu0 0
      %887 = vmatmul.mubr.bf16.gmra.mrb[0].mxu0 %v732
      %v888 = vpop.f32.mrb[0].mxu0
      %v889 = vadd.f32 0.0, %v888
      %v890 = vpop.f32.mrb[0].mxu0
      %v891 = vpop.f32.mrb[0].mxu0
      %v892 = vadd.f32 0.0, %v891
      %v893 = vpop.f32.mrb[0].mxu0
      %894 = vmatprep.mubr.bf16.mxu0 0
      %895 = vmatmul.mubr.bf16.gmra.mrb[0].mxu0 %v733
      %v896 = vpop.f32.mrb[0].mxu0
      %v897 = vadd.f32 0.0, %v896
      %v898 = vpop.f32.mrb[0].mxu0
      %v899 = vpop.f32.mrb[0].mxu0
      %v900 = vadd.f32 0.0, %v899
      %v901 = vpop.f32.mrb[0].mxu0
      %902 = vmatprep.mubr.bf16.mxu0 0
      %903 = vmatmul.mubr.bf16.gmra.mrb[0].mxu0 %v734
      %v904 = vpop.f32.mrb[0].mxu0
      %v905 = vadd.f32 0.0, %v904
      %v906 = vpop.f32.mrb[0].mxu0
      %v907 = vpop.f32.mrb[0].mxu0
      %v908 = vadd.f32 0.0, %v907
      %v909 = vpop.f32.mrb[0].mxu0
      %910 = vmatprep.mubr.bf16.mxu0 0
      %911 = vmatmul.mubr.bf16.gmra.mrb[0].mxu0 %v735
      %v912 = vpop.f32.mrb[0].mxu0
      %v913 = vadd.f32 0.0, %v912
      %v914 = vpop.f32.mrb[0].mxu0
      %v915 = vpop.f32.mrb[0].mxu0
      %v916 = vadd.f32 0.0, %v915
      %v917 = vpop.f32.mrb[0].mxu0
      %918 = vmatprep.mubr.bf16.mxu0 0
      %919 = vmatmul.mubr.bf16.gmra.mrb[0].mxu0 %v736
      %v920 = vpop.f32.mrb[0].mxu0
      %v921 = vadd.f32 0.0, %v920
      %v922 = vpop.f32.mrb[0].mxu0
      %v923 = vpop.f32.mrb[0].mxu0
      %v924 = vadd.f32 0.0, %v923
      %v925 = vpop.f32.mrb[0].mxu0
      %926 = vmatprep.mubr.bf16.mxu0 0
      %927 = vmatmul.mubr.bf16.gmra.mrb[0].mxu0 %v737
      %v928 = vpop.f32.mrb[0].mxu0
      %v929 = vadd.f32 0.0, %v928
      %v930 = vpop.f32.mrb[0].mxu0
      %v931 = vpop.f32.mrb[0].mxu0
      %v932 = vadd.f32 0.0, %v931
      %v933 = vpop.f32.mrb[0].mxu0
      %934 = vmatprep.mubr.bf16.mxu0 0
      %935 = vmatmul.mubr.bf16.gmra.mrb[0].mxu0 %v738
      %v936 = vpop.f32.mrb[0].mxu0
      %v937 = vadd.f32 0.0, %v936
      %v938 = vpop.f32.mrb[0].mxu0
      %v939 = vpop.f32.mrb[0].mxu0
      %v940 = vadd.f32 0.0, %v939
      %v941 = vpop.f32.mrb[0].mxu0
      %942 = vmatprep.mubr.bf16.mxu0 0
      %943 = vmatmul.mubr.bf16.gmra.mrb[0].mxu0 %v739
      %v944 = vpop.f32.mrb[0].mxu0
      %v945 = vadd.f32 0.0, %v944
      %v946 = vpop.f32.mrb[0].mxu0
      %v947 = vpop.f32.mrb[0].mxu0
      %v948 = vadd.f32 0.0, %v947
      %v949 = vpop.f32.mrb[0].mxu0
      %950 = vmatprep.mubr.bf16.mxu0 0
      %951 = vmatmul.mubr.bf16.gmra.mrb[0].mxu0 %v740
      %v952 = vpop.f32.mrb[0].mxu0
      %v953 = vadd.f32 0.0, %v952
      %v954 = vpop.f32.mrb[0].mxu0
      %v955 = vpop.f32.mrb[0].mxu0
      %v956 = vadd.f32 0.0, %v955
      %v957 = vpop.f32.mrb[0].mxu0
      %958 = vmatprep.mubr.bf16.mxu0 0
      %959 = vmatmul.mubr.bf16.gmra.mrb[0].mxu0 %v741
      %v960 = vpop.f32.mrb[0].mxu0
      %v961 = vadd.f32 0.0, %v960
      %v962 = vpop.f32.mrb[0].mxu0
      %v963 = vpop.f32.mrb[0].mxu0
      %v964 = vadd.f32 0.0, %v963
      %v965 = vpop.f32.mrb[0].mxu0
      %966 = vdwg.mxu0
      %v999 = vunpack.c.l.b16 %v226
      %v1000 = vunpack.c.l.b16 %v227
      %v1001 = vunpack.c.l.b16 %v228
      %v1002 = vunpack.c.l.b16 %v229
      %v1003 = vunpack.c.l.b16 %v230
      %v1004 = vunpack.c.l.b16 %v231
      %v1005 = vunpack.c.l.b16 %v232
      %v1006 = vunpack.c.l.b16 %v233
      %v1007 = vunpack.c.l.b16 %v234
      %v1008 = vunpack.c.l.b16 %v235
      %v1009 = vunpack.c.l.b16 %v236
      %v1010 = vunpack.c.l.b16 %v237
      %v1011 = vunpack.c.l.b16 %v238
      %v1012 = vunpack.c.l.b16 %v239
      %v1013 = vunpack.c.l.b16 %v240
      %v1014 = vunpack.c.l.b16 %v241
      %v1015 = vunpack.c.l.b16 %v242
      %v1016 = vunpack.c.l.b16 %v243
      %v1017 = vunpack.c.l.b16 %v244
      %v1018 = vunpack.c.l.b16 %v245
      %v1019 = vunpack.c.l.b16 %v246
      %v1020 = vunpack.c.l.b16 %v247
      %v1021 = vunpack.c.l.b16 %v248
      %v1022 = vunpack.c.l.b16 %v249
      %v1023 = vunpack.c.l.b16 %v250
      %v1024 = vunpack.c.l.b16 %v251
      %v1025 = vunpack.c.l.b16 %v252
      %v1026 = vunpack.c.l.b16 %v253
      %v1027 = vunpack.c.l.b16 %v254
      %v1028 = vunpack.c.l.b16 %v255
      %v1029 = vunpack.c.l.b16 %v256
      %v1030 = vunpack.c.l.b16 %v257
      %v1031 = vpack.c.b16 %v1000, %v999
      %v1032 = vpack.c.b16 %v1002, %v1001
      %v1033 = vpack.c.b16 %v1004, %v1003
      %v1034 = vpack.c.b16 %v1006, %v1005
      %v1035 = vpack.c.b16 %v1008, %v1007
      %v1036 = vpack.c.b16 %v1010, %v1009
      %v1037 = vpack.c.b16 %v1012, %v1011
      %v1038 = vpack.c.b16 %v1014, %v1013
      %v1039 = vpack.c.b16 %v1016, %v1015
      %v1040 = vpack.c.b16 %v1018, %v1017
      %v1041 = vpack.c.b16 %v1020, %v1019
      %v1042 = vpack.c.b16 %v1022, %v1021
      %v1043 = vpack.c.b16 %v1024, %v1023
      %v1044 = vpack.c.b16 %v1026, %v1025
      %v1045 = vpack.c.b16 %v1028, %v1027
      %v1046 = vpack.c.b16 %v1030, %v1029
      %v1079 = vunpack.c.l.b16 %v258
      %v1080 = vunpack.c.l.b16 %v259
      %v1081 = vunpack.c.l.b16 %v260
      %v1082 = vunpack.c.l.b16 %v261
      %v1083 = vunpack.c.l.b16 %v262
      %v1084 = vunpack.c.l.b16 %v263
      %v1085 = vunpack.c.l.b16 %v264
      %v1086 = vunpack.c.l.b16 %v265
      %v1087 = vunpack.c.l.b16 %v266
      %v1088 = vunpack.c.l.b16 %v267
      %v1089 = vunpack.c.l.b16 %v268
      %v1090 = vunpack.c.l.b16 %v269
      %v1091 = vunpack.c.l.b16 %v270
      %v1092 = vunpack.c.l.b16 %v271
      %v1093 = vunpack.c.l.b16 %v272
      %v1094 = vunpack.c.l.b16 %v273
      %v1095 = vpack.c.b16 %v1080, %v1079
      %v1096 = vpack.c.b16 %v1082, %v1081
      %v1097 = vpack.c.b16 %v1084, %v1083
      %v1098 = vpack.c.b16 %v1086, %v1085
      %v1099 = vpack.c.b16 %v1088, %v1087
      %v1100 = vpack.c.b16 %v1090, %v1089
      %v1101 = vpack.c.b16 %v1092, %v1091
      %v1102 = vpack.c.b16 %v1094, %v1093
      %1111 = vmatprep.subr.bf16.mxu0 0
      %1112 = vmatpush1.bf16.msra.mxu0 %v1095
      %1113 = vmatprep.subr.bf16.mxu0 0
      %1114 = vmatpush1.bf16.msra.mxu0 %v1096
      %1115 = vmatprep.subr.bf16.mxu0 0
      %1116 = vmatpush1.bf16.msra.mxu0 %v1097
      %1117 = vmatprep.subr.bf16.mxu0 0
      %1118 = vmatpush1.bf16.msra.mxu0 %v1098
      %1119 = vmatprep.subr.bf16.mxu0 0
      %1120 = vmatpush1.bf16.msra.mxu0 %v1099
      %1121 = vmatprep.subr.bf16.mxu0 0
      %1122 = vmatpush1.bf16.msra.mxu0 %v1100
      %1123 = vmatprep.subr.bf16.mxu0 0
      %1124 = vmatpush1.bf16.msra.mxu0 %v1101
      %1125 = vmatprep.subr.bf16.mxu0 0
      %1126 = vmatpush1.bf16.msra.mxu0 %v1102
      %1127 = vmatprep.subr.bf16.mxu0 0
      %1128 = vmatpush1.bf16.msra.mxu0 0
      %1129 = vmatprep.subr.bf16.mxu0 0
      %1130 = vmatpush1.bf16.msra.mxu0 0
      %1131 = vmatprep.subr.bf16.mxu0 0
      %1132 = vmatpush1.bf16.msra.mxu0 0
      %1133 = vmatprep.subr.bf16.mxu0 0
      %1134 = vmatpush1.bf16.msra.mxu0 0
      %1135 = vmatprep.subr.bf16.mxu0 0
      %1136 = vmatpush1.bf16.msra.mxu0 0
      %1137 = vmatprep.subr.bf16.mxu0 0
      %1138 = vmatpush1.bf16.msra.mxu0 0
      %1139 = vmatprep.subr.bf16.mxu0 0
      %1140 = vmatpush1.bf16.msra.mxu0 0
      %1141 = vmatprep.subr.bf16.mxu0 0
      %1142 = vmatpush1.bf16.msra.mxu0 0
      %1143 = vmatprep.mubr.bf16.mxu0 0
      %1144 = vmatmul.mubr.bf16.gmra.mrb[0].mxu0 %v1031
      %v1145 = vpop.f32.mrb[0].mxu0
      %v1146 = vadd.f32 %v841, %v1145
      %v1147 = vpop.f32.mrb[0].mxu0
      %v1148 = vpop.f32.mrb[0].mxu0
      %v1149 = vadd.f32 %v844, %v1148
      %v1150 = vpop.f32.mrb[0].mxu0
      %1151 = vmatprep.mubr.bf16.mxu0 0
      %1152 = vmatmul.mubr.bf16.gmra.mrb[0].mxu0 %v1032
      %v1153 = vpop.f32.mrb[0].mxu0
      %v1154 = vadd.f32 %v849, %v1153
      %v1155 = vpop.f32.mrb[0].mxu0
      %v1156 = vpop.f32.mrb[0].mxu0
      %v1157 = vadd.f32 %v852, %v1156
      %v1158 = vpop.f32.mrb[0].mxu0
      %1159 = vmatprep.mubr.bf16.mxu0 0
      %1160 = vmatmul.mubr.bf16.gmra.mrb[0].mxu0 %v1033
      %v1161 = vpop.f32.mrb[0].mxu0
      %v1162 = vadd.f32 %v857, %v1161
      %v1163 = vpop.f32.mrb[0].mxu0
      %v1164 = vpop.f32.mrb[0].mxu0
      %v1165 = vadd.f32 %v860, %v1164
      %v1166 = vpop.f32.mrb[0].mxu0
      %1167 = vmatprep.mubr.bf16.mxu0 0
      %1168 = vmatmul.mubr.bf16.gmra.mrb[0].mxu0 %v1034
      %v1169 = vpop.f32.mrb[0].mxu0
      %v1170 = vadd.f32 %v865, %v1169
      %v1171 = vpop.f32.mrb[0].mxu0
      %v1172 = vpop.f32.mrb[0].mxu0
      %v1173 = vadd.f32 %v868, %v1172
      %v1174 = vpop.f32.mrb[0].mxu0
      %1175 = vmatprep.mubr.bf16.mxu0 0
      %1176 = vmatmul.mubr.bf16.gmra.mrb[0].mxu0 %v1035
      %v1177 = vpop.f32.mrb[0].mxu0
      %v1178 = vadd.f32 %v873, %v1177
      %v1179 = vpop.f32.mrb[0].mxu0
      %v1180 = vpop.f32.mrb[0].mxu0
      %v1181 = vadd.f32 %v876, %v1180
      %v1182 = vpop.f32.mrb[0].mxu0
      %1183 = vmatprep.mubr.bf16.mxu0 0
      %1184 = vmatmul.mubr.bf16.gmra.mrb[0].mxu0 %v1036
      %v1185 = vpop.f32.mrb[0].mxu0
      %v1186 = vadd.f32 %v881, %v1185
      %v1187 = vpop.f32.mrb[0].mxu0
      %v1188 = vpop.f32.mrb[0].mxu0
      %v1189 = vadd.f32 %v884, %v1188
      %v1190 = vpop.f32.mrb[0].mxu0
      %1191 = vmatprep.mubr.bf16.mxu0 0
      %1192 = vmatmul.mubr.bf16.gmra.mrb[0].mxu0 %v1037
      %v1193 = vpop.f32.mrb[0].mxu0
      %v1194 = vadd.f32 %v889, %v1193
      %v1195 = vpop.f32.mrb[0].mxu0
      %v1196 = vpop.f32.mrb[0].mxu0
      %v1197 = vadd.f32 %v892, %v1196
      %v1198 = vpop.f32.mrb[0].mxu0
      %1199 = vmatprep.mubr.bf16.mxu0 0
      %1200 = vmatmul.mubr.bf16.gmra.mrb[0].mxu0 %v1038
      %v1201 = vpop.f32.mrb[0].mxu0
      %v1202 = vadd.f32 %v897, %v1201
      %v1203 = vpop.f32.mrb[0].mxu0
      %v1204 = vpop.f32.mrb[0].mxu0
      %v1205 = vadd.f32 %v900, %v1204
      %v1206 = vpop.f32.mrb[0].mxu0
      %1207 = vmatprep.mubr.bf16.mxu0 0
      %1208 = vmatmul.mubr.bf16.gmra.mrb[0].mxu0 %v1039
      %v1209 = vpop.f32.mrb[0].mxu0
      %v1210 = vadd.f32 %v905, %v1209
      %v1211 = vpop.f32.mrb[0].mxu0
      %v1212 = vpop.f32.mrb[0].mxu0
      %v1213 = vadd.f32 %v908, %v1212
      %v1214 = vpop.f32.mrb[0].mxu0
      %1215 = vmatprep.mubr.bf16.mxu0 0
      %1216 = vmatmul.mubr.bf16.gmra.mrb[0].mxu0 %v1040
      %v1217 = vpop.f32.mrb[0].mxu0
      %v1218 = vadd.f32 %v913, %v1217
      %v1219 = vpop.f32.mrb[0].mxu0
      %v1220 = vpop.f32.mrb[0].mxu0
      %v1221 = vadd.f32 %v916, %v1220
      %v1222 = vpop.f32.mrb[0].mxu0
      %1223 = vmatprep.mubr.bf16.mxu0 0
      %1224 = vmatmul.mubr.bf16.gmra.mrb[0].mxu0 %v1041
      %v1225 = vpop.f32.mrb[0].mxu0
      %v1226 = vadd.f32 %v921, %v1225
      %v1227 = vpop.f32.mrb[0].mxu0
      %v1228 = vpop.f32.mrb[0].mxu0
      %v1229 = vadd.f32 %v924, %v1228
      %v1230 = vpop.f32.mrb[0].mxu0
      %1231 = vmatprep.mubr.bf16.mxu0 0
      %1232 = vmatmul.mubr.bf16.gmra.mrb[0].mxu0 %v1042
      %v1233 = vpop.f32.mrb[0].mxu0
      %v1234 = vadd.f32 %v929, %v1233
      %v1235 = vpop.f32.mrb[0].mxu0
      %v1236 = vpop.f32.mrb[0].mxu0
      %v1237 = vadd.f32 %v932, %v1236
      %v1238 = vpop.f32.mrb[0].mxu0
      %1239 = vmatprep.mubr.bf16.mxu0 0
      %1240 = vmatmul.mubr.bf16.gmra.mrb[0].mxu0 %v1043
      %v1241 = vpop.f32.mrb[0].mxu0
      %v1242 = vadd.f32 %v937, %v1241
      %v1243 = vpop.f32.mrb[0].mxu0
      %v1244 = vpop.f32.mrb[0].mxu0
      %v1245 = vadd.f32 %v940, %v1244
      %v1246 = vpop.f32.mrb[0].mxu0
      %1247 = vmatprep.mubr.bf16.mxu0 0
      %1248 = vmatmul.mubr.bf16.gmra.mrb[0].mxu0 %v1044
      %v1249 = vpop.f32.mrb[0].mxu0
      %v1250 = vadd.f32 %v945, %v1249
      %v1251 = vpop.f32.mrb[0].mxu0
      %v1252 = vpop.f32.mrb[0].mxu0
      %v1253 = vadd.f32 %v948, %v1252
      %v1254 = vpop.f32.mrb[0].mxu0
      %1255 = vmatprep.mubr.bf16.mxu0 0
      %1256 = vmatmul.mubr.bf16.gmra.mrb[0].mxu0 %v1045
      %v1257 = vpop.f32.mrb[0].mxu0
      %v1258 = vadd.f32 %v953, %v1257
      %v1259 = vpop.f32.mrb[0].mxu0
      %v1260 = vpop.f32.mrb[0].mxu0
      %v1261 = vadd.f32 %v956, %v1260
      %v1262 = vpop.f32.mrb[0].mxu0
      %1263 = vmatprep.mubr.bf16.mxu0 0
      %1264 = vmatmul.mubr.bf16.gmra.mrb[0].mxu0 %v1046
      %v1265 = vpop.f32.mrb[0].mxu0
      %v1266 = vadd.f32 %v961, %v1265
      %v1267 = vpop.f32.mrb[0].mxu0
      %v1268 = vpop.f32.mrb[0].mxu0
      %v1269 = vadd.f32 %v964, %v1268
      %v1270 = vpop.f32.mrb[0].mxu0
      %1271 = vdwg.mxu0
      %v1272 = vld [vmem:[%s208] sm:$0xe]
      %v1273 = vld [vmem:[%s208 + $0xc] sm:$0xe]
      %v1274 = vld [vmem:[%s208 + $0x18] sm:$0xe]
      %v1275 = vld [vmem:[%s208 + $0x24] sm:$0xe]
      %v1276 = vld [vmem:[%s208 + $0x30] sm:$0xe]
      %v1277 = vld [vmem:[%s208 + $0x3c] sm:$0xe]
      %v1278 = vld [vmem:[%s208 + $0x48] sm:$0xe]
      %v1279 = vld [vmem:[%s208 + $0x54] sm:$0xe]
      %v1280 = vld [vmem:[%s208 + $0x60] sm:$0xe]
      %v1281 = vld [vmem:[%s208 + $0x6c] sm:$0xe]
      %v1282 = vld [vmem:[%s208 + $0x78] sm:$0xe]
      %v1283 = vld [vmem:[%s208 + $0x84] sm:$0xe]
      %v1284 = vld [vmem:[%s208 + $0x90] sm:$0xe]
      %v1285 = vld [vmem:[%s208 + $0x9c] sm:$0xe]
      %v1286 = vld [vmem:[%s208 + $0xa8] sm:$0xe]
      %v1287 = vld [vmem:[%s208 + $0xb4] sm:$0xe]
      %vm1320 = vcmask 1042432
      %vm1321 = vcmask 1046532
      %vm1322 = vmor %vm1320, %vm1321
      %v1323 = vrot.slane %v1272, 5
      %v1324 = vrot.slane %v1323, 4
      %v1325 = vrot.slane %v227, 5
      %v1326 = vsel %vm1322, %v1324, %v1325
      %v1327 = vrot.slane %v1325, 4
      %v1328 = vrot.slane %v274, 5
      %v1329 = vsel %vm1322, %v1327, %v1328
      %v1330 = vrot.slane %v1273, 5
      %v1331 = vrot.slane %v1330, 4
      %v1332 = vrot.slane %v229, 5
      %v1333 = vsel %vm1322, %v1331, %v1332
      %v1334 = vrot.slane %v1332, 4
      %v1335 = vrot.slane %v275, 5
      %v1336 = vsel %vm1322, %v1334, %v1335
      %v1337 = vrot.slane %v1274, 5
      %v1338 = vrot.slane %v1337, 4
      %v1339 = vrot.slane %v231, 5
      %v1340 = vsel %vm1322, %v1338, %v1339
      %v1341 = vrot.slane %v1339, 4
      %v1342 = vrot.slane %v276, 5
      %v1343 = vsel %vm1322, %v1341, %v1342
      %v1344 = vrot.slane %v1275, 5
      %v1345 = vrot.slane %v1344, 4
      %v1346 = vrot.slane %v233, 5
      %v1347 = vsel %vm1322, %v1345, %v1346
      %v1348 = vrot.slane %v1346, 4
      %v1349 = vrot.slane %v277, 5
      %v1350 = vsel %vm1322, %v1348, %v1349
      %v1351 = vrot.slane %v1276, 5
      %v1352 = vrot.slane %v1351, 4
      %v1353 = vrot.slane %v235, 5
      %v1354 = vsel %vm1322, %v1352, %v1353
      %v1355 = vrot.slane %v1353, 4
      %v1356 = vrot.slane %v278, 5
      %v1357 = vsel %vm1322, %v1355, %v1356
      %v1358 = vrot.slane %v1277, 5
      %v1359 = vrot.slane %v1358, 4
      %v1360 = vrot.slane %v237, 5
      %v1361 = vsel %vm1322, %v1359, %v1360
      %v1362 = vrot.slane %v1360, 4
      %v1363 = vrot.slane %v279, 5
      %v1364 = vsel %vm1322, %v1362, %v1363
      %v1365 = vrot.slane %v1278, 5
      %v1366 = vrot.slane %v1365, 4
      %v1367 = vrot.slane %v239, 5
      %v1368 = vsel %vm1322, %v1366, %v1367
      %v1369 = vrot.slane %v1367, 4
      %v1370 = vrot.slane %v280, 5
      %v1371 = vsel %vm1322, %v1369, %v1370
      %v1372 = vrot.slane %v1279, 5
      %v1373 = vrot.slane %v1372, 4
      %v1374 = vrot.slane %v241, 5
      %v1375 = vsel %vm1322, %v1373, %v1374
      %v1376 = vrot.slane %v1374, 4
      %v1377 = vrot.slane %v281, 5
      %v1378 = vsel %vm1322, %v1376, %v1377
      %v1379 = vrot.slane %v1280, 5
      %v1380 = vrot.slane %v1379, 4
      %v1381 = vrot.slane %v243, 5
      %v1382 = vsel %vm1322, %v1380, %v1381
      %v1383 = vrot.slane %v1381, 4
      %v1384 = vrot.slane %v282, 5
      %v1385 = vsel %vm1322, %v1383, %v1384
      %v1386 = vrot.slane %v1281, 5
      %v1387 = vrot.slane %v1386, 4
      %v1388 = vrot.slane %v245, 5
      %v1389 = vsel %vm1322, %v1387, %v1388
      %v1390 = vrot.slane %v1388, 4
      %v1391 = vrot.slane %v283, 5
      %v1392 = vsel %vm1322, %v1390, %v1391
      %v1393 = vrot.slane %v1282, 5
      %v1394 = vrot.slane %v1393, 4
      %v1395 = vrot.slane %v247, 5
      %v1396 = vsel %vm1322, %v1394, %v1395
      %v1397 = vrot.slane %v1395, 4
      %v1398 = vrot.slane %v284, 5
      %v1399 = vsel %vm1322, %v1397, %v1398
      %v1400 = vrot.slane %v1283, 5
      %v1401 = vrot.slane %v1400, 4
      %v1402 = vrot.slane %v249, 5
      %v1403 = vsel %vm1322, %v1401, %v1402
      %v1404 = vrot.slane %v1402, 4
      %v1405 = vrot.slane %v285, 5
      %v1406 = vsel %vm1322, %v1404, %v1405
      %v1407 = vrot.slane %v1284, 5
      %v1408 = vrot.slane %v1407, 4
      %v1409 = vrot.slane %v251, 5
      %v1410 = vsel %vm1322, %v1408, %v1409
      %v1411 = vrot.slane %v1409, 4
      %v1412 = vrot.slane %v286, 5
      %v1413 = vsel %vm1322, %v1411, %v1412
      %v1414 = vrot.slane %v1285, 5
      %v1415 = vrot.slane %v1414, 4
      %v1416 = vrot.slane %v253, 5
      %v1417 = vsel %vm1322, %v1415, %v1416
      %v1418 = vrot.slane %v1416, 4
      %v1419 = vrot.slane %v287, 5
      %v1420 = vsel %vm1322, %v1418, %v1419
      %v1421 = vrot.slane %v1286, 5
      %v1422 = vrot.slane %v1421, 4
      %v1423 = vrot.slane %v255, 5
      %v1424 = vsel %vm1322, %v1422, %v1423
      %v1425 = vrot.slane %v1423, 4
      %v1426 = vrot.slane %v288, 5
      %v1427 = vsel %vm1322, %v1425, %v1426
      %v1428 = vrot.slane %v1287, 5
      %v1429 = vrot.slane %v1428, 4
      %v1430 = vrot.slane %v257, 5
      %v1431 = vsel %vm1322, %v1429, %v1430
      %v1432 = vrot.slane %v1430, 4
      %v1433 = vrot.slane %v289, 5
      %v1434 = vsel %vm1322, %v1432, %v1433
      %s1435 = scalar_lea.vmem %s212, 128
      %v1436 = vld [vmem:[%s1435] sm:$0xf]
      %v1437 = vld [vmem:[%s1435 + $0x4] sm:$0xf]
      %v1438 = vld [vmem:[%s1435 + $0x8] sm:$0xf]
      %v1439 = vld [vmem:[%s1435 + $0xc] sm:$0xf]
      %v1440 = vld [vmem:[%s1435 + $0x10] sm:$0xf]
      %v1441 = vld [vmem:[%s1435 + $0x14] sm:$0xf]
      %v1442 = vld [vmem:[%s1435 + $0x18] sm:$0xf]
      %v1443 = vld [vmem:[%s1435 + $0x1c] sm:$0xf]
      %v1444 = vld [vmem:[%s1435 + $0x20] sm:$0xf]
      %v1445 = vld [vmem:[%s1435 + $0x24] sm:$0xf]
      %v1446 = vld [vmem:[%s1435 + $0x28] sm:$0xf]
      %v1447 = vld [vmem:[%s1435 + $0x2c] sm:$0xf]
      %v1448 = vld [vmem:[%s1435 + $0x30] sm:$0xf]
      %v1449 = vld [vmem:[%s1435 + $0x34] sm:$0xf]
      %v1450 = vld [vmem:[%s1435 + $0x38] sm:$0xf]
      %v1451 = vld [vmem:[%s1435 + $0x3c] sm:$0xf]
      %v1452 = vunpack.c.l.b16 %v1326
      %v1453 = vunpack.c.l.b16 %v1329
      %v1454 = vunpack.c.l.b16 %v1333
      %v1455 = vunpack.c.l.b16 %v1336
      %v1456 = vunpack.c.l.b16 %v1340
      %v1457 = vunpack.c.l.b16 %v1343
      %v1458 = vunpack.c.l.b16 %v1347
      %v1459 = vunpack.c.l.b16 %v1350
      %v1460 = vunpack.c.l.b16 %v1354
      %v1461 = vunpack.c.l.b16 %v1357
      %v1462 = vunpack.c.l.b16 %v1361
      %v1463 = vunpack.c.l.b16 %v1364
      %v1464 = vunpack.c.l.b16 %v1368
      %v1465 = vunpack.c.l.b16 %v1371
      %v1466 = vunpack.c.l.b16 %v1375
      %v1467 = vunpack.c.l.b16 %v1378
      %v1468 = vunpack.c.l.b16 %v1382
      %v1469 = vunpack.c.l.b16 %v1385
      %v1470 = vunpack.c.l.b16 %v1389
      %v1471 = vunpack.c.l.b16 %v1392
      %v1472 = vunpack.c.l.b16 %v1396
      %v1473 = vunpack.c.l.b16 %v1399
      %v1474 = vunpack.c.l.b16 %v1403
      %v1475 = vunpack.c.l.b16 %v1406
      %v1476 = vunpack.c.l.b16 %v1410
      %v1477 = vunpack.c.l.b16 %v1413
      %v1478 = vunpack.c.l.b16 %v1417
      %v1479 = vunpack.c.l.b16 %v1420
      %v1480 = vunpack.c.l.b16 %v1424
      %v1481 = vunpack.c.l.b16 %v1427
      %v1482 = vunpack.c.l.b16 %v1431
      %v1483 = vunpack.c.l.b16 %v1434
      %v1484 = vpack.c.b16 %v1453, %v1452
      %v1485 = vpack.c.b16 %v1455, %v1454
      %v1486 = vpack.c.b16 %v1457, %v1456
      %v1487 = vpack.c.b16 %v1459, %v1458
      %v1488 = vpack.c.b16 %v1461, %v1460
      %v1489 = vpack.c.b16 %v1463, %v1462
      %v1490 = vpack.c.b16 %v1465, %v1464
      %v1491 = vpack.c.b16 %v1467, %v1466
      %v1492 = vpack.c.b16 %v1469, %v1468
      %v1493 = vpack.c.b16 %v1471, %v1470
      %v1494 = vpack.c.b16 %v1473, %v1472
      %v1495 = vpack.c.b16 %v1475, %v1474
      %v1496 = vpack.c.b16 %v1477, %v1476
      %v1497 = vpack.c.b16 %v1479, %v1478
      %v1498 = vpack.c.b16 %v1481, %v1480
      %v1499 = vpack.c.b16 %v1483, %v1482
      %v1532 = vunpack.c.l.b16 %v1436
      %v1533 = vunpack.c.l.b16 %v1437
      %v1534 = vunpack.c.l.b16 %v1438
      %v1535 = vunpack.c.l.b16 %v1439
      %v1536 = vunpack.c.l.b16 %v1440
      %v1537 = vunpack.c.l.b16 %v1441
      %v1538 = vunpack.c.l.b16 %v1442
      %v1539 = vunpack.c.l.b16 %v1443
      %v1540 = vunpack.c.l.b16 %v1444
      %v1541 = vunpack.c.l.b16 %v1445
      %v1542 = vunpack.c.l.b16 %v1446
      %v1543 = vunpack.c.l.b16 %v1447
      %v1544 = vunpack.c.l.b16 %v1448
      %v1545 = vunpack.c.l.b16 %v1449
      %v1546 = vunpack.c.l.b16 %v1450
      %v1547 = vunpack.c.l.b16 %v1451
      %v1548 = vpack.c.b16 %v1533, %v1532
      %v1549 = vpack.c.b16 %v1535, %v1534
      %v1550 = vpack.c.b16 %v1537, %v1536
      %v1551 = vpack.c.b16 %v1539, %v1538
      %v1552 = vpack.c.b16 %v1541, %v1540
      %v1553 = vpack.c.b16 %v1543, %v1542
      %v1554 = vpack.c.b16 %v1545, %v1544
      %v1555 = vpack.c.b16 %v1547, %v1546
      %1564 = vmatprep.subr.bf16.mxu0 0
      %1565 = vmatpush1.bf16.msra.mxu0 %v1548
      %1566 = vmatprep.subr.bf16.mxu0 0
      %1567 = vmatpush1.bf16.msra.mxu0 %v1549
      %1568 = vmatprep.subr.bf16.mxu0 0
      %1569 = vmatpush1.bf16.msra.mxu0 %v1550
      %1570 = vmatprep.subr.bf16.mxu0 0
      %1571 = vmatpush1.bf16.msra.mxu0 %v1551
      %1572 = vmatprep.subr.bf16.mxu0 0
      %1573 = vmatpush1.bf16.msra.mxu0 %v1552
      %1574 = vmatprep.subr.bf16.mxu0 0
      %1575 = vmatpush1.bf16.msra.mxu0 %v1553
      %1576 = vmatprep.subr.bf16.mxu0 0
      %1577 = vmatpush1.bf16.msra.mxu0 %v1554
      %1578 = vmatprep.subr.bf16.mxu0 0
      %1579 = vmatpush1.bf16.msra.mxu0 %v1555
      %1580 = vmatprep.subr.bf16.mxu0 0
      %1581 = vmatpush1.bf16.msra.mxu0 0
      %1582 = vmatprep.subr.bf16.mxu0 0
      %1583 = vmatpush1.bf16.msra.mxu0 0
      %1584 = vmatprep.subr.bf16.mxu0 0
      %1585 = vmatpush1.bf16.msra.mxu0 0
      %1586 = vmatprep.subr.bf16.mxu0 0
      %1587 = vmatpush1.bf16.msra.mxu0 0
      %1588 = vmatprep.subr.bf16.mxu0 0
      %1589 = vmatpush1.bf16.msra.mxu0 0
      %1590 = vmatprep.subr.bf16.mxu0 0
      %1591 = vmatpush1.bf16.msra.mxu0 0
      %1592 = vmatprep.subr.bf16.mxu0 0
      %1593 = vmatpush1.bf16.msra.mxu0 0
      %1594 = vmatprep.subr.bf16.mxu0 0
      %1595 = vmatpush1.bf16.msra.mxu0 0
      %1596 = vmatprep.mubr.bf16.mxu0 0
      %1597 = vmatmul.mubr.bf16.gmra.mrb[0].mxu0 %v1484
      %v1598 = vpop.f32.mrb[0].mxu0
      %v1599 = vadd.f32 0.0, %v1598
      %v1600 = vpop.f32.mrb[0].mxu0
      %v1601 = vpop.f32.mrb[0].mxu0
      %v1602 = vadd.f32 0.0, %v1601
      %v1603 = vpop.f32.mrb[0].mxu0
      %1604 = vmatprep.mubr.bf16.mxu0 0
      %1605 = vmatmul.mubr.bf16.gmra.mrb[0].mxu0 %v1485
      %v1606 = vpop.f32.mrb[0].mxu0
      %v1607 = vadd.f32 0.0, %v1606
      %v1608 = vpop.f32.mrb[0].mxu0
      %v1609 = vpop.f32.mrb[0].mxu0
      %v1610 = vadd.f32 0.0, %v1609
      %v1611 = vpop.f32.mrb[0].mxu0
      %1612 = vmatprep.mubr.bf16.mxu0 0
      %1613 = vmatmul.mubr.bf16.gmra.mrb[0].mxu0 %v1486
      %v1614 = vpop.f32.mrb[0].mxu0
      %v1615 = vadd.f32 0.0, %v1614
      %v1616 = vpop.f32.mrb[0].mxu0
      %v1617 = vpop.f32.mrb[0].mxu0
      %v1618 = vadd.f32 0.0, %v1617
      %v1619 = vpop.f32.mrb[0].mxu0
      %1620 = vmatprep.mubr.bf16.mxu0 0
      %1621 = vmatmul.mubr.bf16.gmra.mrb[0].mxu0 %v1487
      %v1622 = vpop.f32.mrb[0].mxu0
      %v1623 = vadd.f32 0.0, %v1622
      %v1624 = vpop.f32.mrb[0].mxu0
      %v1625 = vpop.f32.mrb[0].mxu0
      %v1626 = vadd.f32 0.0, %v1625
      %v1627 = vpop.f32.mrb[0].mxu0
      %1628 = vmatprep.mubr.bf16.mxu0 0
      %1629 = vmatmul.mubr.bf16.gmra.mrb[0].mxu0 %v1488
      %v1630 = vpop.f32.mrb[0].mxu0
      %v1631 = vadd.f32 0.0, %v1630
      %v1632 = vpop.f32.mrb[0].mxu0
      %v1633 = vpop.f32.mrb[0].mxu0
      %v1634 = vadd.f32 0.0, %v1633
      %v1635 = vpop.f32.mrb[0].mxu0
      %1636 = vmatprep.mubr.bf16.mxu0 0
      %1637 = vmatmul.mubr.bf16.gmra.mrb[0].mxu0 %v1489
      %v1638 = vpop.f32.mrb[0].mxu0
      %v1639 = vadd.f32 0.0, %v1638
      %v1640 = vpop.f32.mrb[0].mxu0
      %v1641 = vpop.f32.mrb[0].mxu0
      %v1642 = vadd.f32 0.0, %v1641
      %v1643 = vpop.f32.mrb[0].mxu0
      %1644 = vmatprep.mubr.bf16.mxu0 0
      %1645 = vmatmul.mubr.bf16.gmra.mrb[0].mxu0 %v1490
      %v1646 = vpop.f32.mrb[0].mxu0
      %v1647 = vadd.f32 0.0, %v1646
      %v1648 = vpop.f32.mrb[0].mxu0
      %v1649 = vpop.f32.mrb[0].mxu0
      %v1650 = vadd.f32 0.0, %v1649
      %v1651 = vpop.f32.mrb[0].mxu0
      %1652 = vmatprep.mubr.bf16.mxu0 0
      %1653 = vmatmul.mubr.bf16.gmra.mrb[0].mxu0 %v1491
      %v1654 = vpop.f32.mrb[0].mxu0
      %v1655 = vadd.f32 0.0, %v1654
      %v1656 = vpop.f32.mrb[0].mxu0
      %v1657 = vpop.f32.mrb[0].mxu0
      %v1658 = vadd.f32 0.0, %v1657
      %v1659 = vpop.f32.mrb[0].mxu0
      %1660 = vmatprep.mubr.bf16.mxu0 0
      %1661 = vmatmul.mubr.bf16.gmra.mrb[0].mxu0 %v1492
      %v1662 = vpop.f32.mrb[0].mxu0
      %v1663 = vadd.f32 0.0, %v1662
      %v1664 = vpop.f32.mrb[0].mxu0
      %v1665 = vpop.f32.mrb[0].mxu0
      %v1666 = vadd.f32 0.0, %v1665
      %v1667 = vpop.f32.mrb[0].mxu0
      %1668 = vmatprep.mubr.bf16.mxu0 0
      %1669 = vmatmul.mubr.bf16.gmra.mrb[0].mxu0 %v1493
      %v1670 = vpop.f32.mrb[0].mxu0
      %v1671 = vadd.f32 0.0, %v1670
      %v1672 = vpop.f32.mrb[0].mxu0
      %v1673 = vpop.f32.mrb[0].mxu0
      %v1674 = vadd.f32 0.0, %v1673
      %v1675 = vpop.f32.mrb[0].mxu0
      %1676 = vmatprep.mubr.bf16.mxu0 0
      %1677 = vmatmul.mubr.bf16.gmra.mrb[0].mxu0 %v1494
      %v1678 = vpop.f32.mrb[0].mxu0
      %v1679 = vadd.f32 0.0, %v1678
      %v1680 = vpop.f32.mrb[0].mxu0
      %v1681 = vpop.f32.mrb[0].mxu0
      %v1682 = vadd.f32 0.0, %v1681
      %v1683 = vpop.f32.mrb[0].mxu0
      %1684 = vmatprep.mubr.bf16.mxu0 0
      %1685 = vmatmul.mubr.bf16.gmra.mrb[0].mxu0 %v1495
      %v1686 = vpop.f32.mrb[0].mxu0
      %v1687 = vadd.f32 0.0, %v1686
      %v1688 = vpop.f32.mrb[0].mxu0
      %v1689 = vpop.f32.mrb[0].mxu0
      %v1690 = vadd.f32 0.0, %v1689
      %v1691 = vpop.f32.mrb[0].mxu0
      %1692 = vmatprep.mubr.bf16.mxu0 0
      %1693 = vmatmul.mubr.bf16.gmra.mrb[0].mxu0 %v1496
      %v1694 = vpop.f32.mrb[0].mxu0
      %v1695 = vadd.f32 0.0, %v1694
      %v1696 = vpop.f32.mrb[0].mxu0
      %v1697 = vpop.f32.mrb[0].mxu0
      %v1698 = vadd.f32 0.0, %v1697
      %v1699 = vpop.f32.mrb[0].mxu0
      %1700 = vmatprep.mubr.bf16.mxu0 0
      %1701 = vmatmul.mubr.bf16.gmra.mrb[0].mxu0 %v1497
      %v1702 = vpop.f32.mrb[0].mxu0
      %v1703 = vadd.f32 0.0, %v1702
      %v1704 = vpop.f32.mrb[0].mxu0
      %v1705 = vpop.f32.mrb[0].mxu0
      %v1706 = vadd.f32 0.0, %v1705
      %v1707 = vpop.f32.mrb[0].mxu0
      %1708 = vmatprep.mubr.bf16.mxu0 0
      %1709 = vmatmul.mubr.bf16.gmra.mrb[0].mxu0 %v1498
      %v1710 = vpop.f32.mrb[0].mxu0
      %v1711 = vadd.f32 0.0, %v1710
      %v1712 = vpop.f32.mrb[0].mxu0
      %v1713 = vpop.f32.mrb[0].mxu0
      %v1714 = vadd.f32 0.0, %v1713
      %v1715 = vpop.f32.mrb[0].mxu0
      %1716 = vmatprep.mubr.bf16.mxu0 0
      %1717 = vmatmul.mubr.bf16.gmra.mrb[0].mxu0 %v1499
      %v1718 = vpop.f32.mrb[0].mxu0
      %v1719 = vadd.f32 0.0, %v1718
      %v1720 = vpop.f32.mrb[0].mxu0
      %v1721 = vpop.f32.mrb[0].mxu0
      %v1722 = vadd.f32 0.0, %v1721
      %v1723 = vpop.f32.mrb[0].mxu0
      %1724 = vdwg.mxu0
      %v1725 = vadd.f32 %v1146, %v1599
      %v1726 = vadd.f32 %v1149, %v1602
      %v1727 = vadd.f32 %v1154, %v1607
      %v1728 = vadd.f32 %v1157, %v1610
      %v1729 = vadd.f32 %v1162, %v1615
      %v1730 = vadd.f32 %v1165, %v1618
      %v1731 = vadd.f32 %v1170, %v1623
      %v1732 = vadd.f32 %v1173, %v1626
      %v1733 = vadd.f32 %v1178, %v1631
      %v1734 = vadd.f32 %v1181, %v1634
      %v1735 = vadd.f32 %v1186, %v1639
      %v1736 = vadd.f32 %v1189, %v1642
      %v1737 = vadd.f32 %v1194, %v1647
      %v1738 = vadd.f32 %v1197, %v1650
      %v1739 = vadd.f32 %v1202, %v1655
      %v1740 = vadd.f32 %v1205, %v1658
      %v1741 = vadd.f32 %v1210, %v1663
      %v1742 = vadd.f32 %v1213, %v1666
      %v1743 = vadd.f32 %v1218, %v1671
      %v1744 = vadd.f32 %v1221, %v1674
      %v1745 = vadd.f32 %v1226, %v1679
      %v1746 = vadd.f32 %v1229, %v1682
      %v1747 = vadd.f32 %v1234, %v1687
      %v1748 = vadd.f32 %v1237, %v1690
      %v1749 = vadd.f32 %v1242, %v1695
      %v1750 = vadd.f32 %v1245, %v1698
      %v1751 = vadd.f32 %v1250, %v1703
      %v1752 = vadd.f32 %v1253, %v1706
      %v1753 = vadd.f32 %v1258, %v1711
      %v1754 = vadd.f32 %v1261, %v1714
      %v1755 = vadd.f32 %v1266, %v1719
      %v1756 = vadd.f32 %v1269, %v1722
      %s1757 = scalar_lea.vmem %s208, 12
      %v1758 = vld [vmem:[%s1757] sm:$0xf]
      %v1759 = vld [vmem:[%s1757 + $0x4] sm:$0xf]
      %v1760 = vld [vmem:[%s1757 + $0xc] sm:$0xf]
      %v1761 = vld [vmem:[%s1757 + $0x10] sm:$0xf]
      %v1762 = vld [vmem:[%s1757 + $0x18] sm:$0xf]
      %v1763 = vld [vmem:[%s1757 + $0x1c] sm:$0xf]
      %v1764 = vld [vmem:[%s1757 + $0x24] sm:$0xf]
      %v1765 = vld [vmem:[%s1757 + $0x28] sm:$0xf]
      %v1766 = vld [vmem:[%s1757 + $0x30] sm:$0xf]
      %v1767 = vld [vmem:[%s1757 + $0x34] sm:$0xf]
      %v1768 = vld [vmem:[%s1757 + $0x3c] sm:$0xf]
      %v1769 = vld [vmem:[%s1757 + $0x40] sm:$0xf]
      %v1770 = vld [vmem:[%s1757 + $0x48] sm:$0xf]
      %v1771 = vld [vmem:[%s1757 + $0x4c] sm:$0xf]
      %v1772 = vld [vmem:[%s1757 + $0x54] sm:$0xf]
      %v1773 = vld [vmem:[%s1757 + $0x58] sm:$0xf]
      %v1774 = vld [vmem:[%s1757 + $0x60] sm:$0xf]
      %v1775 = vld [vmem:[%s1757 + $0x64] sm:$0xf]
      %v1776 = vld [vmem:[%s1757 + $0x6c] sm:$0xf]
      %v1777 = vld [vmem:[%s1757 + $0x70] sm:$0xf]
      %v1778 = vld [vmem:[%s1757 + $0x78] sm:$0xf]
      %v1779 = vld [vmem:[%s1757 + $0x7c] sm:$0xf]
      %v1780 = vld [vmem:[%s1757 + $0x84] sm:$0xf]
      %v1781 = vld [vmem:[%s1757 + $0x88] sm:$0xf]
      %v1782 = vld [vmem:[%s1757 + $0x90] sm:$0xf]
      %v1783 = vld [vmem:[%s1757 + $0x94] sm:$0xf]
      %v1784 = vld [vmem:[%s1757 + $0x9c] sm:$0xf]
      %v1785 = vld [vmem:[%s1757 + $0xa0] sm:$0xf]
      %v1786 = vld [vmem:[%s1757 + $0xa8] sm:$0xf]
      %v1787 = vld [vmem:[%s1757 + $0xac] sm:$0xf]
      %v1788 = vld [vmem:[%s1757 + $0xb4] sm:$0xf]
      %v1789 = vld [vmem:[%s1757 + $0xb8] sm:$0xf]
      %s1790 = scalar_lea.vmem %s212, 192
      %v1791 = vld [vmem:[%s1790] sm:$0xf]
      %v1792 = vld [vmem:[%s1790 + $0x4] sm:$0xf]
      %v1793 = vld [vmem:[%s1790 + $0x8] sm:$0xf]
      %v1794 = vld [vmem:[%s1790 + $0xc] sm:$0xf]
      %v1795 = vld [vmem:[%s1790 + $0x10] sm:$0xf]
      %v1796 = vld [vmem:[%s1790 + $0x14] sm:$0xf]
      %v1797 = vld [vmem:[%s1790 + $0x18] sm:$0xf]
      %v1798 = vld [vmem:[%s1790 + $0x1c] sm:$0xf]
      %v1799 = vld [vmem:[%s1790 + $0x20] sm:$0xf]
      %v1800 = vld [vmem:[%s1790 + $0x24] sm:$0xf]
      %v1801 = vld [vmem:[%s1790 + $0x28] sm:$0xf]
      %v1802 = vld [vmem:[%s1790 + $0x2c] sm:$0xf]
      %v1803 = vld [vmem:[%s1790 + $0x30] sm:$0xf]
      %v1804 = vld [vmem:[%s1790 + $0x34] sm:$0xf]
      %v1805 = vld [vmem:[%s1790 + $0x38] sm:$0xf]
      %v1806 = vld [vmem:[%s1790 + $0x3c] sm:$0xf]
      %v1839 = vunpack.c.l.b16 %v1758
      %v1840 = vunpack.c.l.b16 %v1759
      %v1841 = vunpack.c.l.b16 %v1760
      %v1842 = vunpack.c.l.b16 %v1761
      %v1843 = vunpack.c.l.b16 %v1762
      %v1844 = vunpack.c.l.b16 %v1763
      %v1845 = vunpack.c.l.b16 %v1764
      %v1846 = vunpack.c.l.b16 %v1765
      %v1847 = vunpack.c.l.b16 %v1766
      %v1848 = vunpack.c.l.b16 %v1767
      %v1849 = vunpack.c.l.b16 %v1768
      %v1850 = vunpack.c.l.b16 %v1769
      %v1851 = vunpack.c.l.b16 %v1770
      %v1852 = vunpack.c.l.b16 %v1771
      %v1853 = vunpack.c.l.b16 %v1772
      %v1854 = vunpack.c.l.b16 %v1773
      %v1855 = vunpack.c.l.b16 %v1774
      %v1856 = vunpack.c.l.b16 %v1775
      %v1857 = vunpack.c.l.b16 %v1776
      %v1858 = vunpack.c.l.b16 %v1777
      %v1859 = vunpack.c.l.b16 %v1778
      %v1860 = vunpack.c.l.b16 %v1779
      %v1861 = vunpack.c.l.b16 %v1780
      %v1862 = vunpack.c.l.b16 %v1781
      %v1863 = vunpack.c.l.b16 %v1782
      %v1864 = vunpack.c.l.b16 %v1783
      %v1865 = vunpack.c.l.b16 %v1784
      %v1866 = vunpack.c.l.b16 %v1785
      %v1867 = vunpack.c.l.b16 %v1786
      %v1868 = vunpack.c.l.b16 %v1787
      %v1869 = vunpack.c.l.b16 %v1788
      %v1870 = vunpack.c.l.b16 %v1789
      %v1871 = vpack.c.b16 %v1840, %v1839
      %v1872 = vpack.c.b16 %v1842, %v1841
      %v1873 = vpack.c.b16 %v1844, %v1843
      %v1874 = vpack.c.b16 %v1846, %v1845
      %v1875 = vpack.c.b16 %v1848, %v1847
      %v1876 = vpack.c.b16 %v1850, %v1849
      %v1877 = vpack.c.b16 %v1852, %v1851
      %v1878 = vpack.c.b16 %v1854, %v1853
      %v1879 = vpack.c.b16 %v1856, %v1855
      %v1880 = vpack.c.b16 %v1858, %v1857
      %v1881 = vpack.c.b16 %v1860, %v1859
      %v1882 = vpack.c.b16 %v1862, %v1861
      %v1883 = vpack.c.b16 %v1864, %v1863
      %v1884 = vpack.c.b16 %v1866, %v1865
      %v1885 = vpack.c.b16 %v1868, %v1867
      %v1886 = vpack.c.b16 %v1870, %v1869
      %v1919 = vunpack.c.l.b16 %v1791
      %v1920 = vunpack.c.l.b16 %v1792
      %v1921 = vunpack.c.l.b16 %v1793
      %v1922 = vunpack.c.l.b16 %v1794
      %v1923 = vunpack.c.l.b16 %v1795
      %v1924 = vunpack.c.l.b16 %v1796
      %v1925 = vunpack.c.l.b16 %v1797
      %v1926 = vunpack.c.l.b16 %v1798
      %v1927 = vunpack.c.l.b16 %v1799
      %v1928 = vunpack.c.l.b16 %v1800
      %v1929 = vunpack.c.l.b16 %v1801
      %v1930 = vunpack.c.l.b16 %v1802
      %v1931 = vunpack.c.l.b16 %v1803
      %v1932 = vunpack.c.l.b16 %v1804
      %v1933 = vunpack.c.l.b16 %v1805
      %v1934 = vunpack.c.l.b16 %v1806
      %v1935 = vpack.c.b16 %v1920, %v1919
      %v1936 = vpack.c.b16 %v1922, %v1921
      %v1937 = vpack.c.b16 %v1924, %v1923
      %v1938 = vpack.c.b16 %v1926, %v1925
      %v1939 = vpack.c.b16 %v1928, %v1927
      %v1940 = vpack.c.b16 %v1930, %v1929
      %v1941 = vpack.c.b16 %v1932, %v1931
      %v1942 = vpack.c.b16 %v1934, %v1933
      %1951 = vmatprep.subr.bf16.mxu0 0
      %1952 = vmatpush1.bf16.msra.mxu0 %v1935
      %1953 = vmatprep.subr.bf16.mxu0 0
      %1954 = vmatpush1.bf16.msra.mxu0 %v1936
      %1955 = vmatprep.subr.bf16.mxu0 0
      %1956 = vmatpush1.bf16.msra.mxu0 %v1937
      %1957 = vmatprep.subr.bf16.mxu0 0
      %1958 = vmatpush1.bf16.msra.mxu0 %v1938
      %1959 = vmatprep.subr.bf16.mxu0 0
      %1960 = vmatpush1.bf16.msra.mxu0 %v1939
      %1961 = vmatprep.subr.bf16.mxu0 0
      %1962 = vmatpush1.bf16.msra.mxu0 %v1940
      %1963 = vmatprep.subr.bf16.mxu0 0
      %1964 = vmatpush1.bf16.msra.mxu0 %v1941
      %1965 = vmatprep.subr.bf16.mxu0 0
      %1966 = vmatpush1.bf16.msra.mxu0 %v1942
      %1967 = vmatprep.subr.bf16.mxu0 0
      %1968 = vmatpush1.bf16.msra.mxu0 0
      %1969 = vmatprep.subr.bf16.mxu0 0
      %1970 = vmatpush1.bf16.msra.mxu0 0
      %1971 = vmatprep.subr.bf16.mxu0 0
      %1972 = vmatpush1.bf16.msra.mxu0 0
      %1973 = vmatprep.subr.bf16.mxu0 0
      %1974 = vmatpush1.bf16.msra.mxu0 0
      %1975 = vmatprep.subr.bf16.mxu0 0
      %1976 = vmatpush1.bf16.msra.mxu0 0
      %1977 = vmatprep.subr.bf16.mxu0 0
      %1978 = vmatpush1.bf16.msra.mxu0 0
      %1979 = vmatprep.subr.bf16.mxu0 0
      %1980 = vmatpush1.bf16.msra.mxu0 0
      %1981 = vmatprep.subr.bf16.mxu0 0
      %1982 = vmatpush1.bf16.msra.mxu0 0
      %1983 = vmatprep.mubr.bf16.mxu0 0
      %1984 = vmatmul.mubr.bf16.gmra.mrb[0].mxu0 %v1871
      %v1985 = vpop.f32.mrb[0].mxu0
      %v1986 = vadd.f32 0.0, %v1985
      %v1987 = vpop.f32.mrb[0].mxu0
      %v1988 = vpop.f32.mrb[0].mxu0
      %v1989 = vadd.f32 0.0, %v1988
      %v1990 = vpop.f32.mrb[0].mxu0
      %1991 = vmatprep.mubr.bf16.mxu0 0
      %1992 = vmatmul.mubr.bf16.gmra.mrb[0].mxu0 %v1872
      %v1993 = vpop.f32.mrb[0].mxu0
      %v1994 = vadd.f32 0.0, %v1993
      %v1995 = vpop.f32.mrb[0].mxu0
      %v1996 = vpop.f32.mrb[0].mxu0
      %v1997 = vadd.f32 0.0, %v1996
      %v1998 = vpop.f32.mrb[0].mxu0
      %1999 = vmatprep.mubr.bf16.mxu0 0
      %2000 = vmatmul.mubr.bf16.gmra.mrb[0].mxu0 %v1873
      %v2001 = vpop.f32.mrb[0].mxu0
      %v2002 = vadd.f32 0.0, %v2001
      %v2003 = vpop.f32.mrb[0].mxu0
      %v2004 = vpop.f32.mrb[0].mxu0
      %v2005 = vadd.f32 0.0, %v2004
      %v2006 = vpop.f32.mrb[0].mxu0
      %2007 = vmatprep.mubr.bf16.mxu0 0
      %2008 = vmatmul.mubr.bf16.gmra.mrb[0].mxu0 %v1874
      %v2009 = vpop.f32.mrb[0].mxu0
      %v2010 = vadd.f32 0.0, %v2009
      %v2011 = vpop.f32.mrb[0].mxu0
      %v2012 = vpop.f32.mrb[0].mxu0
      %v2013 = vadd.f32 0.0, %v2012
      %v2014 = vpop.f32.mrb[0].mxu0
      %2015 = vmatprep.mubr.bf16.mxu0 0
      %2016 = vmatmul.mubr.bf16.gmra.mrb[0].mxu0 %v1875
      %v2017 = vpop.f32.mrb[0].mxu0
      %v2018 = vadd.f32 0.0, %v2017
      %v2019 = vpop.f32.mrb[0].mxu0
      %v2020 = vpop.f32.mrb[0].mxu0
      %v2021 = vadd.f32 0.0, %v2020
      %v2022 = vpop.f32.mrb[0].mxu0
      %2023 = vmatprep.mubr.bf16.mxu0 0
      %2024 = vmatmul.mubr.bf16.gmra.mrb[0].mxu0 %v1876
      %v2025 = vpop.f32.mrb[0].mxu0
      %v2026 = vadd.f32 0.0, %v2025
      %v2027 = vpop.f32.mrb[0].mxu0
      %v2028 = vpop.f32.mrb[0].mxu0
      %v2029 = vadd.f32 0.0, %v2028
      %v2030 = vpop.f32.mrb[0].mxu0
      %2031 = vmatprep.mubr.bf16.mxu0 0
      %2032 = vmatmul.mubr.bf16.gmra.mrb[0].mxu0 %v1877
      %v2033 = vpop.f32.mrb[0].mxu0
      %v2034 = vadd.f32 0.0, %v2033
      %v2035 = vpop.f32.mrb[0].mxu0
      %v2036 = vpop.f32.mrb[0].mxu0
      %v2037 = vadd.f32 0.0, %v2036
      %v2038 = vpop.f32.mrb[0].mxu0
      %2039 = vmatprep.mubr.bf16.mxu0 0
      %2040 = vmatmul.mubr.bf16.gmra.mrb[0].mxu0 %v1878
      %v2041 = vpop.f32.mrb[0].mxu0
      %v2042 = vadd.f32 0.0, %v2041
      %v2043 = vpop.f32.mrb[0].mxu0
      %v2044 = vpop.f32.mrb[0].mxu0
      %v2045 = vadd.f32 0.0, %v2044
      %v2046 = vpop.f32.mrb[0].mxu0
      %2047 = vmatprep.mubr.bf16.mxu0 0
      %2048 = vmatmul.mubr.bf16.gmra.mrb[0].mxu0 %v1879
      %v2049 = vpop.f32.mrb[0].mxu0
      %v2050 = vadd.f32 0.0, %v2049
      %v2051 = vpop.f32.mrb[0].mxu0
      %v2052 = vpop.f32.mrb[0].mxu0
      %v2053 = vadd.f32 0.0, %v2052
      %v2054 = vpop.f32.mrb[0].mxu0
      %2055 = vmatprep.mubr.bf16.mxu0 0
      %2056 = vmatmul.mubr.bf16.gmra.mrb[0].mxu0 %v1880
      %v2057 = vpop.f32.mrb[0].mxu0
      %v2058 = vadd.f32 0.0, %v2057
      %v2059 = vpop.f32.mrb[0].mxu0
      %v2060 = vpop.f32.mrb[0].mxu0
      %v2061 = vadd.f32 0.0, %v2060
      %v2062 = vpop.f32.mrb[0].mxu0
      %2063 = vmatprep.mubr.bf16.mxu0 0
      %2064 = vmatmul.mubr.bf16.gmra.mrb[0].mxu0 %v1881
      %v2065 = vpop.f32.mrb[0].mxu0
      %v2066 = vadd.f32 0.0, %v2065
      %v2067 = vpop.f32.mrb[0].mxu0
      %v2068 = vpop.f32.mrb[0].mxu0
      %v2069 = vadd.f32 0.0, %v2068
      %v2070 = vpop.f32.mrb[0].mxu0
      %2071 = vmatprep.mubr.bf16.mxu0 0
      %2072 = vmatmul.mubr.bf16.gmra.mrb[0].mxu0 %v1882
      %v2073 = vpop.f32.mrb[0].mxu0
      %v2074 = vadd.f32 0.0, %v2073
      %v2075 = vpop.f32.mrb[0].mxu0
      %v2076 = vpop.f32.mrb[0].mxu0
      %v2077 = vadd.f32 0.0, %v2076
      %v2078 = vpop.f32.mrb[0].mxu0
      %2079 = vmatprep.mubr.bf16.mxu0 0
      %2080 = vmatmul.mubr.bf16.gmra.mrb[0].mxu0 %v1883
      %v2081 = vpop.f32.mrb[0].mxu0
      %v2082 = vadd.f32 0.0, %v2081
      %v2083 = vpop.f32.mrb[0].mxu0
      %v2084 = vpop.f32.mrb[0].mxu0
      %v2085 = vadd.f32 0.0, %v2084
      %v2086 = vpop.f32.mrb[0].mxu0
      %2087 = vmatprep.mubr.bf16.mxu0 0
      %2088 = vmatmul.mubr.bf16.gmra.mrb[0].mxu0 %v1884
      %v2089 = vpop.f32.mrb[0].mxu0
      %v2090 = vadd.f32 0.0, %v2089
      %v2091 = vpop.f32.mrb[0].mxu0
      %v2092 = vpop.f32.mrb[0].mxu0
      %v2093 = vadd.f32 0.0, %v2092
      %v2094 = vpop.f32.mrb[0].mxu0
      %2095 = vmatprep.mubr.bf16.mxu0 0
      %2096 = vmatmul.mubr.bf16.gmra.mrb[0].mxu0 %v1885
      %v2097 = vpop.f32.mrb[0].mxu0
      %v2098 = vadd.f32 0.0, %v2097
      %v2099 = vpop.f32.mrb[0].mxu0
      %v2100 = vpop.f32.mrb[0].mxu0
      %v2101 = vadd.f32 0.0, %v2100
      %v2102 = vpop.f32.mrb[0].mxu0
      %2103 = vmatprep.mubr.bf16.mxu0 0
      %2104 = vmatmul.mubr.bf16.gmra.mrb[0].mxu0 %v1886
      %v2105 = vpop.f32.mrb[0].mxu0
      %v2106 = vadd.f32 0.0, %v2105
      %v2107 = vpop.f32.mrb[0].mxu0
      %v2108 = vpop.f32.mrb[0].mxu0
      %v2109 = vadd.f32 0.0, %v2108
      %v2110 = vpop.f32.mrb[0].mxu0
      %2111 = vdwg.mxu0
      %v2112 = vadd.f32 %v1725, %v1986
      %v2113 = vadd.f32 %v1726, %v1989
      %v2114 = vadd.f32 %v1727, %v1994
      %v2115 = vadd.f32 %v1728, %v1997
      %v2116 = vadd.f32 %v1729, %v2002
      %v2117 = vadd.f32 %v1730, %v2005
      %v2118 = vadd.f32 %v1731, %v2010
      %v2119 = vadd.f32 %v1732, %v2013
      %v2120 = vadd.f32 %v1733, %v2018
      %v2121 = vadd.f32 %v1734, %v2021
      %v2122 = vadd.f32 %v1735, %v2026
      %v2123 = vadd.f32 %v1736, %v2029
      %v2124 = vadd.f32 %v1737, %v2034
      %v2125 = vadd.f32 %v1738, %v2037
      %v2126 = vadd.f32 %v1739, %v2042
      %v2127 = vadd.f32 %v1740, %v2045
      %v2128 = vadd.f32 %v1741, %v2050
      %v2129 = vadd.f32 %v1742, %v2053
      %v2130 = vadd.f32 %v1743, %v2058
      %v2131 = vadd.f32 %v1744, %v2061
      %v2132 = vadd.f32 %v1745, %v2066
      %v2133 = vadd.f32 %v1746, %v2069
      %v2134 = vadd.f32 %v1747, %v2074
      %v2135 = vadd.f32 %v1748, %v2077
      %v2136 = vadd.f32 %v1749, %v2082
      %v2137 = vadd.f32 %v1750, %v2085
      %v2138 = vadd.f32 %v1751, %v2090
      %v2139 = vadd.f32 %v1752, %v2093
      %v2140 = vadd.f32 %v1753, %v2098
      %v2141 = vadd.f32 %v1754, %v2101
      %v2142 = vadd.f32 %v1755, %v2106
      %v2143 = vadd.f32 %v1756, %v2109
      %v2144 = vld [vmem:[%s1757] sm:$0xf]
      %v2145 = vld [vmem:[%s1757 + $0x4] sm:$0xf]
      %v2146 = vld [vmem:[%s1757 + $0x8] sm:$0x1]
      %v2147 = vld [vmem:[%s1757 + $0xc] sm:$0xf]
      %v2148 = vld [vmem:[%s1757 + $0x10] sm:$0xf]
      %v2149 = vld [vmem:[%s1757 + $0x14] sm:$0x1]
      %v2150 = vld [vmem:[%s1757 + $0x18] sm:$0xf]
      %v2151 = vld [vmem:[%s1757 + $0x1c] sm:$0xf]
      %v2152 = vld [vmem:[%s1757 + $0x20] sm:$0x1]
      %v2153 = vld [vmem:[%s1757 + $0x24] sm:$0xf]
      %v2154 = vld [vmem:[%s1757 + $0x28] sm:$0xf]
      %v2155 = vld [vmem:[%s1757 + $0x2c] sm:$0x1]
      %v2156 = vld [vmem:[%s1757 + $0x30] sm:$0xf]
      %v2157 = vld [vmem:[%s1757 + $0x34] sm:$0xf]
      %v2158 = vld [vmem:[%s1757 + $0x38] sm:$0x1]
      %v2159 = vld [vmem:[%s1757 + $0x3c] sm:$0xf]
      %v2160 = vld [vmem:[%s1757 + $0x40] sm:$0xf]
      %v2161 = vld [vmem:[%s1757 + $0x44] sm:$0x1]
      %v2162 = vld [vmem:[%s1757 + $0x48] sm:$0xf]
      %v2163 = vld [vmem:[%s1757 + $0x4c] sm:$0xf]
      %v2164 = vld [vmem:[%s1757 + $0x50] sm:$0x1]
      %v2165 = vld [vmem:[%s1757 + $0x54] sm:$0xf]
      %v2166 = vld [vmem:[%s1757 + $0x58] sm:$0xf]
      %v2167 = vld [vmem:[%s1757 + $0x5c] sm:$0x1]
      %v2168 = vld [vmem:[%s1757 + $0x60] sm:$0xf]
      %v2169 = vld [vmem:[%s1757 + $0x64] sm:$0xf]
      %v2170 = vld [vmem:[%s1757 + $0x68] sm:$0x1]
      %v2171 = vld [vmem:[%s1757 + $0x6c] sm:$0xf]
      %v2172 = vld [vmem:[%s1757 + $0x70] sm:$0xf]
      %v2173 = vld [vmem:[%s1757 + $0x74] sm:$0x1]
      %v2174 = vld [vmem:[%s1757 + $0x78] sm:$0xf]
      %v2175 = vld [vmem:[%s1757 + $0x7c] sm:$0xf]
      %v2176 = vld [vmem:[%s1757 + $0x80] sm:$0x1]
      %v2177 = vld [vmem:[%s1757 + $0x84] sm:$0xf]
      %v2178 = vld [vmem:[%s1757 + $0x88] sm:$0xf]
      %v2179 = vld [vmem:[%s1757 + $0x8c] sm:$0x1]
      %v2180 = vld [vmem:[%s1757 + $0x90] sm:$0xf]
      %v2181 = vld [vmem:[%s1757 + $0x94] sm:$0xf]
      %v2182 = vld [vmem:[%s1757 + $0x98] sm:$0x1]
      %v2183 = vld [vmem:[%s1757 + $0x9c] sm:$0xf]
      %v2184 = vld [vmem:[%s1757 + $0xa0] sm:$0xf]
      %v2185 = vld [vmem:[%s1757 + $0xa4] sm:$0x1]
      %v2186 = vld [vmem:[%s1757 + $0xa8] sm:$0xf]
      %v2187 = vld [vmem:[%s1757 + $0xac] sm:$0xf]
      %v2188 = vld [vmem:[%s1757 + $0xb0] sm:$0x1]
      %v2189 = vld [vmem:[%s1757 + $0xb4] sm:$0xf]
      %v2190 = vld [vmem:[%s1757 + $0xb8] sm:$0xf]
      %v2191 = vld [vmem:[%s1757 + $0xbc] sm:$0x1]
      %v2193 = vshrl.u32 %v2144, 16
      %v2195 = vrot.slane %v2193, 4
      %v2196 = vshll.u32 %v2144, 16
      %v2198 = vrot.slane %v2196, 5
      %v2199 = vor.u32 %v2195, %v2198
      %v2200 = vrot.slane %v2199, 4
      %v2202 = vshll.u32 %v2145, 16
      %v2204 = vrot.slane %v2202, 5
      %v2205 = vsel %vm292, %v2200, %v2204
      %v2206 = vshrl.u32 %v2145, 16
      %v2208 = vrot.slane %v2206, 4
      %v2209 = vor.u32 %v2208, %v2204
      %v2210 = vrot.slane %v2209, 4
      %v2212 = vshll.u32 %v2146, 16
      %v2214 = vrot.slane %v2212, 5
      %v2215 = vsel %vm292, %v2210, %v2214
      %v2217 = vshrl.u32 %v2147, 16
      %v2219 = vrot.slane %v2217, 4
      %v2220 = vshll.u32 %v2147, 16
      %v2222 = vrot.slane %v2220, 5
      %v2223 = vor.u32 %v2219, %v2222
      %v2224 = vrot.slane %v2223, 4
      %v2226 = vshll.u32 %v2148, 16
      %v2228 = vrot.slane %v2226, 5
      %v2229 = vsel %vm292, %v2224, %v2228
      %v2230 = vshrl.u32 %v2148, 16
      %v2232 = vrot.slane %v2230, 4
      %v2233 = vor.u32 %v2232, %v2228
      %v2234 = vrot.slane %v2233, 4
      %v2236 = vshll.u32 %v2149, 16
      %v2238 = vrot.slane %v2236, 5
      %v2239 = vsel %vm292, %v2234, %v2238
      %v2241 = vshrl.u32 %v2150, 16
      %v2243 = vrot.slane %v2241, 4
      %v2244 = vshll.u32 %v2150, 16
      %v2246 = vrot.slane %v2244, 5
      %v2247 = vor.u32 %v2243, %v2246
      %v2248 = vrot.slane %v2247, 4
      %v2250 = vshll.u32 %v2151, 16
      %v2252 = vrot.slane %v2250, 5
      %v2253 = vsel %vm292, %v2248, %v2252
      %v2254 = vshrl.u32 %v2151, 16
      %v2256 = vrot.slane %v2254, 4
      %v2257 = vor.u32 %v2256, %v2252
      %v2258 = vrot.slane %v2257, 4
      %v2260 = vshll.u32 %v2152, 16
      %v2262 = vrot.slane %v2260, 5
      %v2263 = vsel %vm292, %v2258, %v2262
      %v2265 = vshrl.u32 %v2153, 16
      %v2267 = vrot.slane %v2265, 4
      %v2268 = vshll.u32 %v2153, 16
      %v2270 = vrot.slane %v2268, 5
      %v2271 = vor.u32 %v2267, %v2270
      %v2272 = vrot.slane %v2271, 4
      %v2274 = vshll.u32 %v2154, 16
      %v2276 = vrot.slane %v2274, 5
      %v2277 = vsel %vm292, %v2272, %v2276
      %v2278 = vshrl.u32 %v2154, 16
      %v2280 = vrot.slane %v2278, 4
      %v2281 = vor.u32 %v2280, %v2276
      %v2282 = vrot.slane %v2281, 4
      %v2284 = vshll.u32 %v2155, 16
      %v2286 = vrot.slane %v2284, 5
      %v2287 = vsel %vm292, %v2282, %v2286
      %v2289 = vshrl.u32 %v2156, 16
      %v2291 = vrot.slane %v2289, 4
      %v2292 = vshll.u32 %v2156, 16
      %v2294 = vrot.slane %v2292, 5
      %v2295 = vor.u32 %v2291, %v2294
      %v2296 = vrot.slane %v2295, 4
      %v2298 = vshll.u32 %v2157, 16
      %v2300 = vrot.slane %v2298, 5
      %v2301 = vsel %vm292, %v2296, %v2300
      %v2302 = vshrl.u32 %v2157, 16
      %v2304 = vrot.slane %v2302, 4
      %v2305 = vor.u32 %v2304, %v2300
      %v2306 = vrot.slane %v2305, 4
      %v2308 = vshll.u32 %v2158, 16
      %v2310 = vrot.slane %v2308, 5
      %v2311 = vsel %vm292, %v2306, %v2310
      %v2313 = vshrl.u32 %v2159, 16
      %v2315 = vrot.slane %v2313, 4
      %v2316 = vshll.u32 %v2159, 16
      %v2318 = vrot.slane %v2316, 5
      %v2319 = vor.u32 %v2315, %v2318
      %v2320 = vrot.slane %v2319, 4
      %v2322 = vshll.u32 %v2160, 16
      %v2324 = vrot.slane %v2322, 5
      %v2325 = vsel %vm292, %v2320, %v2324
      %v2326 = vshrl.u32 %v2160, 16
      %v2328 = vrot.slane %v2326, 4
      %v2329 = vor.u32 %v2328, %v2324
      %v2330 = vrot.slane %v2329, 4
      %v2332 = vshll.u32 %v2161, 16
      %v2334 = vrot.slane %v2332, 5
      %v2335 = vsel %vm292, %v2330, %v2334
      %v2337 = vshrl.u32 %v2162, 16
      %v2339 = vrot.slane %v2337, 4
      %v2340 = vshll.u32 %v2162, 16
      %v2342 = vrot.slane %v2340, 5
      %v2343 = vor.u32 %v2339, %v2342
      %v2344 = vrot.slane %v2343, 4
      %v2346 = vshll.u32 %v2163, 16
      %v2348 = vrot.slane %v2346, 5
      %v2349 = vsel %vm292, %v2344, %v2348
      %v2350 = vshrl.u32 %v2163, 16
      %v2352 = vrot.slane %v2350, 4
      %v2353 = vor.u32 %v2352, %v2348
      %v2354 = vrot.slane %v2353, 4
      %v2356 = vshll.u32 %v2164, 16
      %v2358 = vrot.slane %v2356, 5
      %v2359 = vsel %vm292, %v2354, %v2358
      %v2361 = vshrl.u32 %v2165, 16
      %v2363 = vrot.slane %v2361, 4
      %v2364 = vshll.u32 %v2165, 16
      %v2366 = vrot.slane %v2364, 5
      %v2367 = vor.u32 %v2363, %v2366
      %v2368 = vrot.slane %v2367, 4
      %v2370 = vshll.u32 %v2166, 16
      %v2372 = vrot.slane %v2370, 5
      %v2373 = vsel %vm292, %v2368, %v2372
      %v2374 = vshrl.u32 %v2166, 16
      %v2376 = vrot.slane %v2374, 4
      %v2377 = vor.u32 %v2376, %v2372
      %v2378 = vrot.slane %v2377, 4
      %v2380 = vshll.u32 %v2167, 16
      %v2382 = vrot.slane %v2380, 5
      %v2383 = vsel %vm292, %v2378, %v2382
      %v2385 = vshrl.u32 %v2168, 16
      %v2387 = vrot.slane %v2385, 4
      %v2388 = vshll.u32 %v2168, 16
      %v2390 = vrot.slane %v2388, 5
      %v2391 = vor.u32 %v2387, %v2390
      %v2392 = vrot.slane %v2391, 4
      %v2394 = vshll.u32 %v2169, 16
      %v2396 = vrot.slane %v2394, 5
      %v2397 = vsel %vm292, %v2392, %v2396
      %v2398 = vshrl.u32 %v2169, 16
      %v2400 = vrot.slane %v2398, 4
      %v2401 = vor.u32 %v2400, %v2396
      %v2402 = vrot.slane %v2401, 4
      %v2404 = vshll.u32 %v2170, 16
      %v2406 = vrot.slane %v2404, 5
      %v2407 = vsel %vm292, %v2402, %v2406
      %v2409 = vshrl.u32 %v2171, 16
      %v2411 = vrot.slane %v2409, 4
      %v2412 = vshll.u32 %v2171, 16
      %v2414 = vrot.slane %v2412, 5
      %v2415 = vor.u32 %v2411, %v2414
      %v2416 = vrot.slane %v2415, 4
      %v2418 = vshll.u32 %v2172, 16
      %v2420 = vrot.slane %v2418, 5
      %v2421 = vsel %vm292, %v2416, %v2420
      %v2422 = vshrl.u32 %v2172, 16
      %v2424 = vrot.slane %v2422, 4
      %v2425 = vor.u32 %v2424, %v2420
      %v2426 = vrot.slane %v2425, 4
      %v2428 = vshll.u32 %v2173, 16
      %v2430 = vrot.slane %v2428, 5
      %v2431 = vsel %vm292, %v2426, %v2430
      %v2433 = vshrl.u32 %v2174, 16
      %v2435 = vrot.slane %v2433, 4
      %v2436 = vshll.u32 %v2174, 16
      %v2438 = vrot.slane %v2436, 5
      %v2439 = vor.u32 %v2435, %v2438
      %v2440 = vrot.slane %v2439, 4
      %v2442 = vshll.u32 %v2175, 16
      %v2444 = vrot.slane %v2442, 5
      %v2445 = vsel %vm292, %v2440, %v2444
      %v2446 = vshrl.u32 %v2175, 16
      %v2448 = vrot.slane %v2446, 4
      %v2449 = vor.u32 %v2448, %v2444
      %v2450 = vrot.slane %v2449, 4
      %v2452 = vshll.u32 %v2176, 16
      %v2454 = vrot.slane %v2452, 5
      %v2455 = vsel %vm292, %v2450, %v2454
      %v2457 = vshrl.u32 %v2177, 16
      %v2459 = vrot.slane %v2457, 4
      %v2460 = vshll.u32 %v2177, 16
      %v2462 = vrot.slane %v2460, 5
      %v2463 = vor.u32 %v2459, %v2462
      %v2464 = vrot.slane %v2463, 4
      %v2466 = vshll.u32 %v2178, 16
      %v2468 = vrot.slane %v2466, 5
      %v2469 = vsel %vm292, %v2464, %v2468
      %v2470 = vshrl.u32 %v2178, 16
      %v2472 = vrot.slane %v2470, 4
      %v2473 = vor.u32 %v2472, %v2468
      %v2474 = vrot.slane %v2473, 4
      %v2476 = vshll.u32 %v2179, 16
      %v2478 = vrot.slane %v2476, 5
      %v2479 = vsel %vm292, %v2474, %v2478
      %v2481 = vshrl.u32 %v2180, 16
      %v2483 = vrot.slane %v2481, 4
      %v2484 = vshll.u32 %v2180, 16
      %v2486 = vrot.slane %v2484, 5
      %v2487 = vor.u32 %v2483, %v2486
      %v2488 = vrot.slane %v2487, 4
      %v2490 = vshll.u32 %v2181, 16
      %v2492 = vrot.slane %v2490, 5
      %v2493 = vsel %vm292, %v2488, %v2492
      %v2494 = vshrl.u32 %v2181, 16
      %v2496 = vrot.slane %v2494, 4
      %v2497 = vor.u32 %v2496, %v2492
      %v2498 = vrot.slane %v2497, 4
      %v2500 = vshll.u32 %v2182, 16
      %v2502 = vrot.slane %v2500, 5
      %v2503 = vsel %vm292, %v2498, %v2502
      %v2505 = vshrl.u32 %v2183, 16
      %v2507 = vrot.slane %v2505, 4
      %v2508 = vshll.u32 %v2183, 16
      %v2510 = vrot.slane %v2508, 5
      %v2511 = vor.u32 %v2507, %v2510
      %v2512 = vrot.slane %v2511, 4
      %v2514 = vshll.u32 %v2184, 16
      %v2516 = vrot.slane %v2514, 5
      %v2517 = vsel %vm292, %v2512, %v2516
      %v2518 = vshrl.u32 %v2184, 16
      %v2520 = vrot.slane %v2518, 4
      %v2521 = vor.u32 %v2520, %v2516
      %v2522 = vrot.slane %v2521, 4
      %v2524 = vshll.u32 %v2185, 16
      %v2526 = vrot.slane %v2524, 5
      %v2527 = vsel %vm292, %v2522, %v2526
      %v2529 = vshrl.u32 %v2186, 16
      %v2531 = vrot.slane %v2529, 4
      %v2532 = vshll.u32 %v2186, 16
      %v2534 = vrot.slane %v2532, 5
      %v2535 = vor.u32 %v2531, %v2534
      %v2536 = vrot.slane %v2535, 4
      %v2538 = vshll.u32 %v2187, 16
      %v2540 = vrot.slane %v2538, 5
      %v2541 = vsel %vm292, %v2536, %v2540
      %v2542 = vshrl.u32 %v2187, 16
      %v2544 = vrot.slane %v2542, 4
      %v2545 = vor.u32 %v2544, %v2540
      %v2546 = vrot.slane %v2545, 4
      %v2548 = vshll.u32 %v2188, 16
      %v2550 = vrot.slane %v2548, 5
      %v2551 = vsel %vm292, %v2546, %v2550
      %v2553 = vshrl.u32 %v2189, 16
      %v2555 = vrot.slane %v2553, 4
      %v2556 = vshll.u32 %v2189, 16
      %v2558 = vrot.slane %v2556, 5
      %v2559 = vor.u32 %v2555, %v2558
      %v2560 = vrot.slane %v2559, 4
      %v2562 = vshll.u32 %v2190, 16
      %v2564 = vrot.slane %v2562, 5
      %v2565 = vsel %vm292, %v2560, %v2564
      %v2566 = vshrl.u32 %v2190, 16
      %v2568 = vrot.slane %v2566, 4
      %v2569 = vor.u32 %v2568, %v2564
      %v2570 = vrot.slane %v2569, 4
      %v2572 = vshll.u32 %v2191, 16
      %v2574 = vrot.slane %v2572, 5
      %v2575 = vsel %vm292, %v2570, %v2574
      %s2576 = scalar_lea.vmem %s212, 256
      %v2577 = vld [vmem:[%s2576] sm:$0xf]
      %v2578 = vld [vmem:[%s2576 + $0x4] sm:$0xf]
      %v2579 = vld [vmem:[%s2576 + $0x8] sm:$0xf]
      %v2580 = vld [vmem:[%s2576 + $0xc] sm:$0xf]
      %v2581 = vld [vmem:[%s2576 + $0x10] sm:$0xf]
      %v2582 = vld [vmem:[%s2576 + $0x14] sm:$0xf]
      %v2583 = vld [vmem:[%s2576 + $0x18] sm:$0xf]
      %v2584 = vld [vmem:[%s2576 + $0x1c] sm:$0xf]
      %v2585 = vld [vmem:[%s2576 + $0x20] sm:$0xf]
      %v2586 = vld [vmem:[%s2576 + $0x24] sm:$0xf]
      %v2587 = vld [vmem:[%s2576 + $0x28] sm:$0xf]
      %v2588 = vld [vmem:[%s2576 + $0x2c] sm:$0xf]
      %v2589 = vld [vmem:[%s2576 + $0x30] sm:$0xf]
      %v2590 = vld [vmem:[%s2576 + $0x34] sm:$0xf]
      %v2591 = vld [vmem:[%s2576 + $0x38] sm:$0xf]
      %v2592 = vld [vmem:[%s2576 + $0x3c] sm:$0xf]
      %v2593 = vunpack.c.l.b16 %v2205
      %v2594 = vunpack.c.l.b16 %v2215
      %v2595 = vunpack.c.l.b16 %v2229
      %v2596 = vunpack.c.l.b16 %v2239
      %v2597 = vunpack.c.l.b16 %v2253
      %v2598 = vunpack.c.l.b16 %v2263
      %v2599 = vunpack.c.l.b16 %v2277
      %v2600 = vunpack.c.l.b16 %v2287
      %v2601 = vunpack.c.l.b16 %v2301
      %v2602 = vunpack.c.l.b16 %v2311
      %v2603 = vunpack.c.l.b16 %v2325
      %v2604 = vunpack.c.l.b16 %v2335
      %v2605 = vunpack.c.l.b16 %v2349
      %v2606 = vunpack.c.l.b16 %v2359
      %v2607 = vunpack.c.l.b16 %v2373
      %v2608 = vunpack.c.l.b16 %v2383
      %v2609 = vunpack.c.l.b16 %v2397
      %v2610 = vunpack.c.l.b16 %v2407
      %v2611 = vunpack.c.l.b16 %v2421
      %v2612 = vunpack.c.l.b16 %v2431
      %v2613 = vunpack.c.l.b16 %v2445
      %v2614 = vunpack.c.l.b16 %v2455
      %v2615 = vunpack.c.l.b16 %v2469
      %v2616 = vunpack.c.l.b16 %v2479
      %v2617 = vunpack.c.l.b16 %v2493
      %v2618 = vunpack.c.l.b16 %v2503
      %v2619 = vunpack.c.l.b16 %v2517
      %v2620 = vunpack.c.l.b16 %v2527
      %v2621 = vunpack.c.l.b16 %v2541
      %v2622 = vunpack.c.l.b16 %v2551
      %v2623 = vunpack.c.l.b16 %v2565
      %v2624 = vunpack.c.l.b16 %v2575
      %v2625 = vpack.c.b16 %v2594, %v2593
      %v2626 = vpack.c.b16 %v2596, %v2595
      %v2627 = vpack.c.b16 %v2598, %v2597
      %v2628 = vpack.c.b16 %v2600, %v2599
      %v2629 = vpack.c.b16 %v2602, %v2601
      %v2630 = vpack.c.b16 %v2604, %v2603
      %v2631 = vpack.c.b16 %v2606, %v2605
      %v2632 = vpack.c.b16 %v2608, %v2607
      %v2633 = vpack.c.b16 %v2610, %v2609
      %v2634 = vpack.c.b16 %v2612, %v2611
      %v2635 = vpack.c.b16 %v2614, %v2613
      %v2636 = vpack.c.b16 %v2616, %v2615
      %v2637 = vpack.c.b16 %v2618, %v2617
      %v2638 = vpack.c.b16 %v2620, %v2619
      %v2639 = vpack.c.b16 %v2622, %v2621
      %v2640 = vpack.c.b16 %v2624, %v2623
      %v2673 = vunpack.c.l.b16 %v2577
      %v2674 = vunpack.c.l.b16 %v2578
      %v2675 = vunpack.c.l.b16 %v2579
      %v2676 = vunpack.c.l.b16 %v2580
      %v2677 = vunpack.c.l.b16 %v2581
      %v2678 = vunpack.c.l.b16 %v2582
      %v2679 = vunpack.c.l.b16 %v2583
      %v2680 = vunpack.c.l.b16 %v2584
      %v2681 = vunpack.c.l.b16 %v2585
      %v2682 = vunpack.c.l.b16 %v2586
      %v2683 = vunpack.c.l.b16 %v2587
      %v2684 = vunpack.c.l.b16 %v2588
      %v2685 = vunpack.c.l.b16 %v2589
      %v2686 = vunpack.c.l.b16 %v2590
      %v2687 = vunpack.c.l.b16 %v2591
      %v2688 = vunpack.c.l.b16 %v2592
      %v2689 = vpack.c.b16 %v2674, %v2673
      %v2690 = vpack.c.b16 %v2676, %v2675
      %v2691 = vpack.c.b16 %v2678, %v2677
      %v2692 = vpack.c.b16 %v2680, %v2679
      %v2693 = vpack.c.b16 %v2682, %v2681
      %v2694 = vpack.c.b16 %v2684, %v2683
      %v2695 = vpack.c.b16 %v2686, %v2685
      %v2696 = vpack.c.b16 %v2688, %v2687
      %2705 = vmatprep.subr.bf16.mxu0 0
      %2706 = vmatpush1.bf16.msra.mxu0 %v2689
      %2707 = vmatprep.subr.bf16.mxu0 0
      %2708 = vmatpush1.bf16.msra.mxu0 %v2690
      %2709 = vmatprep.subr.bf16.mxu0 0
      %2710 = vmatpush1.bf16.msra.mxu0 %v2691
      %2711 = vmatprep.subr.bf16.mxu0 0
      %2712 = vmatpush1.bf16.msra.mxu0 %v2692
      %2713 = vmatprep.subr.bf16.mxu0 0
      %2714 = vmatpush1.bf16.msra.mxu0 %v2693
      %2715 = vmatprep.subr.bf16.mxu0 0
      %2716 = vmatpush1.bf16.msra.mxu0 %v2694
      %2717 = vmatprep.subr.bf16.mxu0 0
      %2718 = vmatpush1.bf16.msra.mxu0 %v2695
      %2719 = vmatprep.subr.bf16.mxu0 0
      %2720 = vmatpush1.bf16.msra.mxu0 %v2696
      %2721 = vmatprep.subr.bf16.mxu0 0
      %2722 = vmatpush1.bf16.msra.mxu0 0
      %2723 = vmatprep.subr.bf16.mxu0 0
      %2724 = vmatpush1.bf16.msra.mxu0 0
      %2725 = vmatprep.subr.bf16.mxu0 0
      %2726 = vmatpush1.bf16.msra.mxu0 0
      %2727 = vmatprep.subr.bf16.mxu0 0
      %2728 = vmatpush1.bf16.msra.mxu0 0
      %2729 = vmatprep.subr.bf16.mxu0 0
      %2730 = vmatpush1.bf16.msra.mxu0 0
      %2731 = vmatprep.subr.bf16.mxu0 0
      %2732 = vmatpush1.bf16.msra.mxu0 0
      %2733 = vmatprep.subr.bf16.mxu0 0
      %2734 = vmatpush1.bf16.msra.mxu0 0
      %2735 = vmatprep.subr.bf16.mxu0 0
      %2736 = vmatpush1.bf16.msra.mxu0 0
      %2737 = vmatprep.mubr.bf16.mxu0 0
      %2738 = vmatmul.mubr.bf16.gmra.mrb[0].mxu0 %v2625
      %v2739 = vpop.f32.mrb[0].mxu0
      %v2740 = vadd.f32 0.0, %v2739
      %v2741 = vpop.f32.mrb[0].mxu0
      %v2742 = vpop.f32.mrb[0].mxu0
      %v2743 = vadd.f32 0.0, %v2742
      %v2744 = vpop.f32.mrb[0].mxu0
      %2745 = vmatprep.mubr.bf16.mxu0 0
      %2746 = vmatmul.mubr.bf16.gmra.mrb[0].mxu0 %v2626
      %v2747 = vpop.f32.mrb[0].mxu0
      %v2748 = vadd.f32 0.0, %v2747
      %v2749 = vpop.f32.mrb[0].mxu0
      %v2750 = vpop.f32.mrb[0].mxu0
      %v2751 = vadd.f32 0.0, %v2750
      %v2752 = vpop.f32.mrb[0].mxu0
      %2753 = vmatprep.mubr.bf16.mxu0 0
      %2754 = vmatmul.mubr.bf16.gmra.mrb[0].mxu0 %v2627
      %v2755 = vpop.f32.mrb[0].mxu0
      %v2756 = vadd.f32 0.0, %v2755
      %v2757 = vpop.f32.mrb[0].mxu0
      %v2758 = vpop.f32.mrb[0].mxu0
      %v2759 = vadd.f32 0.0, %v2758
      %v2760 = vpop.f32.mrb[0].mxu0
      %2761 = vmatprep.mubr.bf16.mxu0 0
      %2762 = vmatmul.mubr.bf16.gmra.mrb[0].mxu0 %v2628
      %v2763 = vpop.f32.mrb[0].mxu0
      %v2764 = vadd.f32 0.0, %v2763
      %v2765 = vpop.f32.mrb[0].mxu0
      %v2766 = vpop.f32.mrb[0].mxu0
      %v2767 = vadd.f32 0.0, %v2766
      %v2768 = vpop.f32.mrb[0].mxu0
      %2769 = vmatprep.mubr.bf16.mxu0 0
      %2770 = vmatmul.mubr.bf16.gmra.mrb[0].mxu0 %v2629
      %v2771 = vpop.f32.mrb[0].mxu0
      %v2772 = vadd.f32 0.0, %v2771
      %v2773 = vpop.f32.mrb[0].mxu0
      %v2774 = vpop.f32.mrb[0].mxu0
      %v2775 = vadd.f32 0.0, %v2774
      %v2776 = vpop.f32.mrb[0].mxu0
      %2777 = vmatprep.mubr.bf16.mxu0 0
      %2778 = vmatmul.mubr.bf16.gmra.mrb[0].mxu0 %v2630
      %v2779 = vpop.f32.mrb[0].mxu0
      %v2780 = vadd.f32 0.0, %v2779
      %v2781 = vpop.f32.mrb[0].mxu0
      %v2782 = vpop.f32.mrb[0].mxu0
      %v2783 = vadd.f32 0.0, %v2782
      %v2784 = vpop.f32.mrb[0].mxu0
      %2785 = vmatprep.mubr.bf16.mxu0 0
      %2786 = vmatmul.mubr.bf16.gmra.mrb[0].mxu0 %v2631
      %v2787 = vpop.f32.mrb[0].mxu0
      %v2788 = vadd.f32 0.0, %v2787
      %v2789 = vpop.f32.mrb[0].mxu0
      %v2790 = vpop.f32.mrb[0].mxu0
      %v2791 = vadd.f32 0.0, %v2790
      %v2792 = vpop.f32.mrb[0].mxu0
      %2793 = vmatprep.mubr.bf16.mxu0 0
      %2794 = vmatmul.mubr.bf16.gmra.mrb[0].mxu0 %v2632
      %v2795 = vpop.f32.mrb[0].mxu0
      %v2796 = vadd.f32 0.0, %v2795
      %v2797 = vpop.f32.mrb[0].mxu0
      %v2798 = vpop.f32.mrb[0].mxu0
      %v2799 = vadd.f32 0.0, %v2798
      %v2800 = vpop.f32.mrb[0].mxu0
      %2801 = vmatprep.mubr.bf16.mxu0 0
      %2802 = vmatmul.mubr.bf16.gmra.mrb[0].mxu0 %v2633
      %v2803 = vpop.f32.mrb[0].mxu0
      %v2804 = vadd.f32 0.0, %v2803
      %v2805 = vpop.f32.mrb[0].mxu0
      %v2806 = vpop.f32.mrb[0].mxu0
      %v2807 = vadd.f32 0.0, %v2806
      %v2808 = vpop.f32.mrb[0].mxu0
      %2809 = vmatprep.mubr.bf16.mxu0 0
      %2810 = vmatmul.mubr.bf16.gmra.mrb[0].mxu0 %v2634
      %v2811 = vpop.f32.mrb[0].mxu0
      %v2812 = vadd.f32 0.0, %v2811
      %v2813 = vpop.f32.mrb[0].mxu0
      %v2814 = vpop.f32.mrb[0].mxu0
      %v2815 = vadd.f32 0.0, %v2814
      %v2816 = vpop.f32.mrb[0].mxu0
      %2817 = vmatprep.mubr.bf16.mxu0 0
      %2818 = vmatmul.mubr.bf16.gmra.mrb[0].mxu0 %v2635
      %v2819 = vpop.f32.mrb[0].mxu0
      %v2820 = vadd.f32 0.0, %v2819
      %v2821 = vpop.f32.mrb[0].mxu0
      %v2822 = vpop.f32.mrb[0].mxu0
      %v2823 = vadd.f32 0.0, %v2822
      %v2824 = vpop.f32.mrb[0].mxu0
      %2825 = vmatprep.mubr.bf16.mxu0 0
      %2826 = vmatmul.mubr.bf16.gmra.mrb[0].mxu0 %v2636
      %v2827 = vpop.f32.mrb[0].mxu0
      %v2828 = vadd.f32 0.0, %v2827
      %v2829 = vpop.f32.mrb[0].mxu0
      %v2830 = vpop.f32.mrb[0].mxu0
      %v2831 = vadd.f32 0.0, %v2830
      %v2832 = vpop.f32.mrb[0].mxu0
      %2833 = vmatprep.mubr.bf16.mxu0 0
      %2834 = vmatmul.mubr.bf16.gmra.mrb[0].mxu0 %v2637
      %v2835 = vpop.f32.mrb[0].mxu0
      %v2836 = vadd.f32 0.0, %v2835
      %v2837 = vpop.f32.mrb[0].mxu0
      %v2838 = vpop.f32.mrb[0].mxu0
      %v2839 = vadd.f32 0.0, %v2838
      %v2840 = vpop.f32.mrb[0].mxu0
      %2841 = vmatprep.mubr.bf16.mxu0 0
      %2842 = vmatmul.mubr.bf16.gmra.mrb[0].mxu0 %v2638
      %v2843 = vpop.f32.mrb[0].mxu0
      %v2844 = vadd.f32 0.0, %v2843
      %v2845 = vpop.f32.mrb[0].mxu0
      %v2846 = vpop.f32.mrb[0].mxu0
      %v2847 = vadd.f32 0.0, %v2846
      %v2848 = vpop.f32.mrb[0].mxu0
      %2849 = vmatprep.mubr.bf16.mxu0 0
      %2850 = vmatmul.mubr.bf16.gmra.mrb[0].mxu0 %v2639
      %v2851 = vpop.f32.mrb[0].mxu0
      %v2852 = vadd.f32 0.0, %v2851
      %v2853 = vpop.f32.mrb[0].mxu0
      %v2854 = vpop.f32.mrb[0].mxu0
      %v2855 = vadd.f32 0.0, %v2854
      %v2856 = vpop.f32.mrb[0].mxu0
      %2857 = vmatprep.mubr.bf16.mxu0 0
      %2858 = vmatmul.mubr.bf16.gmra.mrb[0].mxu0 %v2640
      %v2859 = vpop.f32.mrb[0].mxu0
      %v2860 = vadd.f32 0.0, %v2859
      %v2861 = vpop.f32.mrb[0].mxu0
      %v2862 = vpop.f32.mrb[0].mxu0
      %v2863 = vadd.f32 0.0, %v2862
      %v2864 = vpop.f32.mrb[0].mxu0
      %2865 = vdwg.mxu0
      %v2866 = vadd.f32 %v2112, %v2740
      %v2867 = vadd.f32 %v2113, %v2743
      %v2868 = vadd.f32 %v2114, %v2748
      %v2869 = vadd.f32 %v2115, %v2751
      %v2870 = vadd.f32 %v2116, %v2756
      %v2871 = vadd.f32 %v2117, %v2759
      %v2872 = vadd.f32 %v2118, %v2764
      %v2873 = vadd.f32 %v2119, %v2767
      %v2874 = vadd.f32 %v2120, %v2772
      %v2875 = vadd.f32 %v2121, %v2775
      %v2876 = vadd.f32 %v2122, %v2780
      %v2877 = vadd.f32 %v2123, %v2783
      %v2878 = vadd.f32 %v2124, %v2788
      %v2879 = vadd.f32 %v2125, %v2791
      %v2880 = vadd.f32 %v2126, %v2796
      %v2881 = vadd.f32 %v2127, %v2799
      %v2882 = vadd.f32 %v2128, %v2804
      %v2883 = vadd.f32 %v2129, %v2807
      %v2884 = vadd.f32 %v2130, %v2812
      %v2885 = vadd.f32 %v2131, %v2815
      %v2886 = vadd.f32 %v2132, %v2820
      %v2887 = vadd.f32 %v2133, %v2823
      %v2888 = vadd.f32 %v2134, %v2828
      %v2889 = vadd.f32 %v2135, %v2831
      %v2890 = vadd.f32 %v2136, %v2836
      %v2891 = vadd.f32 %v2137, %v2839
      %v2892 = vadd.f32 %v2138, %v2844
      %v2893 = vadd.f32 %v2139, %v2847
      %v2894 = vadd.f32 %v2140, %v2852
      %v2895 = vadd.f32 %v2141, %v2855
      %v2896 = vadd.f32 %v2142, %v2860
      %v2897 = vadd.f32 %v2143, %v2863
      %v2898 = vld [vmem:[%s1757] sm:$0xe]
      %v2899 = vld [vmem:[%s1757 + $0xc] sm:$0xe]
      %v2900 = vld [vmem:[%s1757 + $0x18] sm:$0xe]
      %v2901 = vld [vmem:[%s1757 + $0x24] sm:$0xe]
      %v2902 = vld [vmem:[%s1757 + $0x30] sm:$0xe]
      %v2903 = vld [vmem:[%s1757 + $0x3c] sm:$0xe]
      %v2904 = vld [vmem:[%s1757 + $0x48] sm:$0xe]
      %v2905 = vld [vmem:[%s1757 + $0x54] sm:$0xe]
      %v2906 = vld [vmem:[%s1757 + $0x60] sm:$0xe]
      %v2907 = vld [vmem:[%s1757 + $0x6c] sm:$0xe]
      %v2908 = vld [vmem:[%s1757 + $0x78] sm:$0xe]
      %v2909 = vld [vmem:[%s1757 + $0x84] sm:$0xe]
      %v2910 = vld [vmem:[%s1757 + $0x90] sm:$0xe]
      %v2911 = vld [vmem:[%s1757 + $0x9c] sm:$0xe]
      %v2912 = vld [vmem:[%s1757 + $0xa8] sm:$0xe]
      %v2913 = vld [vmem:[%s1757 + $0xb4] sm:$0xe]
      %v2962 = vrot.slane %v2898, 5
      %v2963 = vrot.slane %v2962, 4
      %v2964 = vrot.slane %v2145, 5
      %v2965 = vsel %vm1322, %v2963, %v2964
      %v2966 = vrot.slane %v2964, 4
      %v2967 = vrot.slane %v2146, 5
      %v2968 = vsel %vm1322, %v2966, %v2967
      %v2969 = vrot.slane %v2899, 5
      %v2970 = vrot.slane %v2969, 4
      %v2971 = vrot.slane %v2148, 5
      %v2972 = vsel %vm1322, %v2970, %v2971
      %v2973 = vrot.slane %v2971, 4
      %v2974 = vrot.slane %v2149, 5
      %v2975 = vsel %vm1322, %v2973, %v2974
      %v2976 = vrot.slane %v2900, 5
      %v2977 = vrot.slane %v2976, 4
      %v2978 = vrot.slane %v2151, 5
      %v2979 = vsel %vm1322, %v2977, %v2978
      %v2980 = vrot.slane %v2978, 4
      %v2981 = vrot.slane %v2152, 5
      %v2982 = vsel %vm1322, %v2980, %v2981
      %v2983 = vrot.slane %v2901, 5
      %v2984 = vrot.slane %v2983, 4
      %v2985 = vrot.slane %v2154, 5
      %v2986 = vsel %vm1322, %v2984, %v2985
      %v2987 = vrot.slane %v2985, 4
      %v2988 = vrot.slane %v2155, 5
      %v2989 = vsel %vm1322, %v2987, %v2988
      %v2990 = vrot.slane %v2902, 5
      %v2991 = vrot.slane %v2990, 4
      %v2992 = vrot.slane %v2157, 5
      %v2993 = vsel %vm1322, %v2991, %v2992
      %v2994 = vrot.slane %v2992, 4
      %v2995 = vrot.slane %v2158, 5
      %v2996 = vsel %vm1322, %v2994, %v2995
      %v2997 = vrot.slane %v2903, 5
      %v2998 = vrot.slane %v2997, 4
      %v2999 = vrot.slane %v2160, 5
      %v3000 = vsel %vm1322, %v2998, %v2999
      %v3001 = vrot.slane %v2999, 4
      %v3002 = vrot.slane %v2161, 5
      %v3003 = vsel %vm1322, %v3001, %v3002
      %v3004 = vrot.slane %v2904, 5
      %v3005 = vrot.slane %v3004, 4
      %v3006 = vrot.slane %v2163, 5
      %v3007 = vsel %vm1322, %v3005, %v3006
      %v3008 = vrot.slane %v3006, 4
      %v3009 = vrot.slane %v2164, 5
      %v3010 = vsel %vm1322, %v3008, %v3009
      %v3011 = vrot.slane %v2905, 5
      %v3012 = vrot.slane %v3011, 4
      %v3013 = vrot.slane %v2166, 5
      %v3014 = vsel %vm1322, %v3012, %v3013
      %v3015 = vrot.slane %v3013, 4
      %v3016 = vrot.slane %v2167, 5
      %v3017 = vsel %vm1322, %v3015, %v3016
      %v3018 = vrot.slane %v2906, 5
      %v3019 = vrot.slane %v3018, 4
      %v3020 = vrot.slane %v2169, 5
      %v3021 = vsel %vm1322, %v3019, %v3020
      %v3022 = vrot.slane %v3020, 4
      %v3023 = vrot.slane %v2170, 5
      %v3024 = vsel %vm1322, %v3022, %v3023
      %v3025 = vrot.slane %v2907, 5
      %v3026 = vrot.slane %v3025, 4
      %v3027 = vrot.slane %v2172, 5
      %v3028 = vsel %vm1322, %v3026, %v3027
      %v3029 = vrot.slane %v3027, 4
      %v3030 = vrot.slane %v2173, 5
      %v3031 = vsel %vm1322, %v3029, %v3030
      %v3032 = vrot.slane %v2908, 5
      %v3033 = vrot.slane %v3032, 4
      %v3034 = vrot.slane %v2175, 5
      %v3035 = vsel %vm1322, %v3033, %v3034
      %v3036 = vrot.slane %v3034, 4
      %v3037 = vrot.slane %v2176, 5
      %v3038 = vsel %vm1322, %v3036, %v3037
      %v3039 = vrot.slane %v2909, 5
      %v3040 = vrot.slane %v3039, 4
      %v3041 = vrot.slane %v2178, 5
      %v3042 = vsel %vm1322, %v3040, %v3041
      %v3043 = vrot.slane %v3041, 4
      %v3044 = vrot.slane %v2179, 5
      %v3045 = vsel %vm1322, %v3043, %v3044
      %v3046 = vrot.slane %v2910, 5
      %v3047 = vrot.slane %v3046, 4
      %v3048 = vrot.slane %v2181, 5
      %v3049 = vsel %vm1322, %v3047, %v3048
      %v3050 = vrot.slane %v3048, 4
      %v3051 = vrot.slane %v2182, 5
      %v3052 = vsel %vm1322, %v3050, %v3051
      %v3053 = vrot.slane %v2911, 5
      %v3054 = vrot.slane %v3053, 4
      %v3055 = vrot.slane %v2184, 5
      %v3056 = vsel %vm1322, %v3054, %v3055
      %v3057 = vrot.slane %v3055, 4
      %v3058 = vrot.slane %v2185, 5
      %v3059 = vsel %vm1322, %v3057, %v3058
      %v3060 = vrot.slane %v2912, 5
      %v3061 = vrot.slane %v3060, 4
      %v3062 = vrot.slane %v2187, 5
      %v3063 = vsel %vm1322, %v3061, %v3062
      %v3064 = vrot.slane %v3062, 4
      %v3065 = vrot.slane %v2188, 5
      %v3066 = vsel %vm1322, %v3064, %v3065
      %v3067 = vrot.slane %v2913, 5
      %v3068 = vrot.slane %v3067, 4
      %v3069 = vrot.slane %v2190, 5
      %v3070 = vsel %vm1322, %v3068, %v3069
      %v3071 = vrot.slane %v3069, 4
      %v3072 = vrot.slane %v2191, 5
      %v3073 = vsel %vm1322, %v3071, %v3072
      %s3074 = scalar_lea.vmem %s212, 320
      %v3075 = vld [vmem:[%s3074] sm:$0xf]
      %v3076 = vld [vmem:[%s3074 + $0x4] sm:$0xf]
      %v3077 = vld [vmem:[%s3074 + $0x8] sm:$0xf]
      %v3078 = vld [vmem:[%s3074 + $0xc] sm:$0xf]
      %v3079 = vld [vmem:[%s3074 + $0x10] sm:$0xf]
      %v3080 = vld [vmem:[%s3074 + $0x14] sm:$0xf]
      %v3081 = vld [vmem:[%s3074 + $0x18] sm:$0xf]
      %v3082 = vld [vmem:[%s3074 + $0x1c] sm:$0xf]
      %v3083 = vld [vmem:[%s3074 + $0x20] sm:$0xf]
      %v3084 = vld [vmem:[%s3074 + $0x24] sm:$0xf]
      %v3085 = vld [vmem:[%s3074 + $0x28] sm:$0xf]
      %v3086 = vld [vmem:[%s3074 + $0x2c] sm:$0xf]
      %v3087 = vld [vmem:[%s3074 + $0x30] sm:$0xf]
      %v3088 = vld [vmem:[%s3074 + $0x34] sm:$0xf]
      %v3089 = vld [vmem:[%s3074 + $0x38] sm:$0xf]
      %v3090 = vld [vmem:[%s3074 + $0x3c] sm:$0xf]
      %v3091 = vunpack.c.l.b16 %v2965
      %v3092 = vunpack.c.l.b16 %v2968
      %v3093 = vunpack.c.l.b16 %v2972
      %v3094 = vunpack.c.l.b16 %v2975
      %v3095 = vunpack.c.l.b16 %v2979
      %v3096 = vunpack.c.l.b16 %v2982
      %v3097 = vunpack.c.l.b16 %v2986
      %v3098 = vunpack.c.l.b16 %v2989
      %v3099 = vunpack.c.l.b16 %v2993
      %v3100 = vunpack.c.l.b16 %v2996
      %v3101 = vunpack.c.l.b16 %v3000
      %v3102 = vunpack.c.l.b16 %v3003
      %v3103 = vunpack.c.l.b16 %v3007
      %v3104 = vunpack.c.l.b16 %v3010
      %v3105 = vunpack.c.l.b16 %v3014
      %v3106 = vunpack.c.l.b16 %v3017
      %v3107 = vunpack.c.l.b16 %v3021
      %v3108 = vunpack.c.l.b16 %v3024
      %v3109 = vunpack.c.l.b16 %v3028
      %v3110 = vunpack.c.l.b16 %v3031
      %v3111 = vunpack.c.l.b16 %v3035
      %v3112 = vunpack.c.l.b16 %v3038
      %v3113 = vunpack.c.l.b16 %v3042
      %v3114 = vunpack.c.l.b16 %v3045
      %v3115 = vunpack.c.l.b16 %v3049
      %v3116 = vunpack.c.l.b16 %v3052
      %v3117 = vunpack.c.l.b16 %v3056
      %v3118 = vunpack.c.l.b16 %v3059
      %v3119 = vunpack.c.l.b16 %v3063
      %v3120 = vunpack.c.l.b16 %v3066
      %v3121 = vunpack.c.l.b16 %v3070
      %v3122 = vunpack.c.l.b16 %v3073
      %v3123 = vpack.c.b16 %v3092, %v3091
      %v3124 = vpack.c.b16 %v3094, %v3093
      %v3125 = vpack.c.b16 %v3096, %v3095
      %v3126 = vpack.c.b16 %v3098, %v3097
      %v3127 = vpack.c.b16 %v3100, %v3099
      %v3128 = vpack.c.b16 %v3102, %v3101
      %v3129 = vpack.c.b16 %v3104, %v3103
      %v3130 = vpack.c.b16 %v3106, %v3105
      %v3131 = vpack.c.b16 %v3108, %v3107
      %v3132 = vpack.c.b16 %v3110, %v3109
      %v3133 = vpack.c.b16 %v3112, %v3111
      %v3134 = vpack.c.b16 %v3114, %v3113
      %v3135 = vpack.c.b16 %v3116, %v3115
      %v3136 = vpack.c.b16 %v3118, %v3117
      %v3137 = vpack.c.b16 %v3120, %v3119
      %v3138 = vpack.c.b16 %v3122, %v3121
      %v3171 = vunpack.c.l.b16 %v3075
      %v3172 = vunpack.c.l.b16 %v3076
      %v3173 = vunpack.c.l.b16 %v3077
      %v3174 = vunpack.c.l.b16 %v3078
      %v3175 = vunpack.c.l.b16 %v3079
      %v3176 = vunpack.c.l.b16 %v3080
      %v3177 = vunpack.c.l.b16 %v3081
      %v3178 = vunpack.c.l.b16 %v3082
      %v3179 = vunpack.c.l.b16 %v3083
      %v3180 = vunpack.c.l.b16 %v3084
      %v3181 = vunpack.c.l.b16 %v3085
      %v3182 = vunpack.c.l.b16 %v3086
      %v3183 = vunpack.c.l.b16 %v3087
      %v3184 = vunpack.c.l.b16 %v3088
      %v3185 = vunpack.c.l.b16 %v3089
      %v3186 = vunpack.c.l.b16 %v3090
      %v3187 = vpack.c.b16 %v3172, %v3171
      %v3188 = vpack.c.b16 %v3174, %v3173
      %v3189 = vpack.c.b16 %v3176, %v3175
      %v3190 = vpack.c.b16 %v3178, %v3177
      %v3191 = vpack.c.b16 %v3180, %v3179
      %v3192 = vpack.c.b16 %v3182, %v3181
      %v3193 = vpack.c.b16 %v3184, %v3183
      %v3194 = vpack.c.b16 %v3186, %v3185
      %3203 = vmatprep.subr.bf16.mxu0 0
      %3204 = vmatpush1.bf16.msra.mxu0 %v3187
      %3205 = vmatprep.subr.bf16.mxu0 0
      %3206 = vmatpush1.bf16.msra.mxu0 %v3188
      %3207 = vmatprep.subr.bf16.mxu0 0
      %3208 = vmatpush1.bf16.msra.mxu0 %v3189
      %3209 = vmatprep.subr.bf16.mxu0 0
      %3210 = vmatpush1.bf16.msra.mxu0 %v3190
      %3211 = vmatprep.subr.bf16.mxu0 0
      %3212 = vmatpush1.bf16.msra.mxu0 %v3191
      %3213 = vmatprep.subr.bf16.mxu0 0
      %3214 = vmatpush1.bf16.msra.mxu0 %v3192
      %3215 = vmatprep.subr.bf16.mxu0 0
      %3216 = vmatpush1.bf16.msra.mxu0 %v3193
      %3217 = vmatprep.subr.bf16.mxu0 0
      %3218 = vmatpush1.bf16.msra.mxu0 %v3194
      %3219 = vmatprep.subr.bf16.mxu0 0
      %3220 = vmatpush1.bf16.msra.mxu0 0
      %3221 = vmatprep.subr.bf16.mxu0 0
      %3222 = vmatpush1.bf16.msra.mxu0 0
      %3223 = vmatprep.subr.bf16.mxu0 0
      %3224 = vmatpush1.bf16.msra.mxu0 0
      %3225 = vmatprep.subr.bf16.mxu0 0
      %3226 = vmatpush1.bf16.msra.mxu0 0
      %3227 = vmatprep.subr.bf16.mxu0 0
      %3228 = vmatpush1.bf16.msra.mxu0 0
      %3229 = vmatprep.subr.bf16.mxu0 0
      %3230 = vmatpush1.bf16.msra.mxu0 0
      %3231 = vmatprep.subr.bf16.mxu0 0
      %3232 = vmatpush1.bf16.msra.mxu0 0
      %3233 = vmatprep.subr.bf16.mxu0 0
      %3234 = vmatpush1.bf16.msra.mxu0 0
      %3235 = vmatprep.mubr.bf16.mxu0 0
      %3236 = vmatmul.mubr.bf16.gmra.mrb[0].mxu0 %v3123
      %v3237 = vpop.f32.mrb[0].mxu0
      %v3238 = vadd.f32 0.0, %v3237
      %v3239 = vpop.f32.mrb[0].mxu0
      %v3240 = vpop.f32.mrb[0].mxu0
      %v3241 = vadd.f32 0.0, %v3240
      %v3242 = vpop.f32.mrb[0].mxu0
      %3243 = vmatprep.mubr.bf16.mxu0 0
      %3244 = vmatmul.mubr.bf16.gmra.mrb[0].mxu0 %v3124
      %v3245 = vpop.f32.mrb[0].mxu0
      %v3246 = vadd.f32 0.0, %v3245
      %v3247 = vpop.f32.mrb[0].mxu0
      %v3248 = vpop.f32.mrb[0].mxu0
      %v3249 = vadd.f32 0.0, %v3248
      %v3250 = vpop.f32.mrb[0].mxu0
      %3251 = vmatprep.mubr.bf16.mxu0 0
      %3252 = vmatmul.mubr.bf16.gmra.mrb[0].mxu0 %v3125
      %v3253 = vpop.f32.mrb[0].mxu0
      %v3254 = vadd.f32 0.0, %v3253
      %v3255 = vpop.f32.mrb[0].mxu0
      %v3256 = vpop.f32.mrb[0].mxu0
      %v3257 = vadd.f32 0.0, %v3256
      %v3258 = vpop.f32.mrb[0].mxu0
      %3259 = vmatprep.mubr.bf16.mxu0 0
      %3260 = vmatmul.mubr.bf16.gmra.mrb[0].mxu0 %v3126
      %v3261 = vpop.f32.mrb[0].mxu0
      %v3262 = vadd.f32 0.0, %v3261
      %v3263 = vpop.f32.mrb[0].mxu0
      %v3264 = vpop.f32.mrb[0].mxu0
      %v3265 = vadd.f32 0.0, %v3264
      %v3266 = vpop.f32.mrb[0].mxu0
      %3267 = vmatprep.mubr.bf16.mxu0 0
      %3268 = vmatmul.mubr.bf16.gmra.mrb[0].mxu0 %v3127
      %v3269 = vpop.f32.mrb[0].mxu0
      %v3270 = vadd.f32 0.0, %v3269
      %v3271 = vpop.f32.mrb[0].mxu0
      %v3272 = vpop.f32.mrb[0].mxu0
      %v3273 = vadd.f32 0.0, %v3272
      %v3274 = vpop.f32.mrb[0].mxu0
      %3275 = vmatprep.mubr.bf16.mxu0 0
      %3276 = vmatmul.mubr.bf16.gmra.mrb[0].mxu0 %v3128
      %v3277 = vpop.f32.mrb[0].mxu0
      %v3278 = vadd.f32 0.0, %v3277
      %v3279 = vpop.f32.mrb[0].mxu0
      %v3280 = vpop.f32.mrb[0].mxu0
      %v3281 = vadd.f32 0.0, %v3280
      %v3282 = vpop.f32.mrb[0].mxu0
      %3283 = vmatprep.mubr.bf16.mxu0 0
      %3284 = vmatmul.mubr.bf16.gmra.mrb[0].mxu0 %v3129
      %v3285 = vpop.f32.mrb[0].mxu0
      %v3286 = vadd.f32 0.0, %v3285
      %v3287 = vpop.f32.mrb[0].mxu0
      %v3288 = vpop.f32.mrb[0].mxu0
      %v3289 = vadd.f32 0.0, %v3288
      %v3290 = vpop.f32.mrb[0].mxu0
      %3291 = vmatprep.mubr.bf16.mxu0 0
      %3292 = vmatmul.mubr.bf16.gmra.mrb[0].mxu0 %v3130
      %v3293 = vpop.f32.mrb[0].mxu0
      %v3294 = vadd.f32 0.0, %v3293
      %v3295 = vpop.f32.mrb[0].mxu0
      %v3296 = vpop.f32.mrb[0].mxu0
      %v3297 = vadd.f32 0.0, %v3296
      %v3298 = vpop.f32.mrb[0].mxu0
      %3299 = vmatprep.mubr.bf16.mxu0 0
      %3300 = vmatmul.mubr.bf16.gmra.mrb[0].mxu0 %v3131
      %v3301 = vpop.f32.mrb[0].mxu0
      %v3302 = vadd.f32 0.0, %v3301
      %v3303 = vpop.f32.mrb[0].mxu0
      %v3304 = vpop.f32.mrb[0].mxu0
      %v3305 = vadd.f32 0.0, %v3304
      %v3306 = vpop.f32.mrb[0].mxu0
      %3307 = vmatprep.mubr.bf16.mxu0 0
      %3308 = vmatmul.mubr.bf16.gmra.mrb[0].mxu0 %v3132
      %v3309 = vpop.f32.mrb[0].mxu0
      %v3310 = vadd.f32 0.0, %v3309
      %v3311 = vpop.f32.mrb[0].mxu0
      %v3312 = vpop.f32.mrb[0].mxu0
      %v3313 = vadd.f32 0.0, %v3312
      %v3314 = vpop.f32.mrb[0].mxu0
      %3315 = vmatprep.mubr.bf16.mxu0 0
      %3316 = vmatmul.mubr.bf16.gmra.mrb[0].mxu0 %v3133
      %v3317 = vpop.f32.mrb[0].mxu0
      %v3318 = vadd.f32 0.0, %v3317
      %v3319 = vpop.f32.mrb[0].mxu0
      %v3320 = vpop.f32.mrb[0].mxu0
      %v3321 = vadd.f32 0.0, %v3320
      %v3322 = vpop.f32.mrb[0].mxu0
      %3323 = vmatprep.mubr.bf16.mxu0 0
      %3324 = vmatmul.mubr.bf16.gmra.mrb[0].mxu0 %v3134
      %v3325 = vpop.f32.mrb[0].mxu0
      %v3326 = vadd.f32 0.0, %v3325
      %v3327 = vpop.f32.mrb[0].mxu0
      %v3328 = vpop.f32.mrb[0].mxu0
      %v3329 = vadd.f32 0.0, %v3328
      %v3330 = vpop.f32.mrb[0].mxu0
      %3331 = vmatprep.mubr.bf16.mxu0 0
      %3332 = vmatmul.mubr.bf16.gmra.mrb[0].mxu0 %v3135
      %v3333 = vpop.f32.mrb[0].mxu0
      %v3334 = vadd.f32 0.0, %v3333
      %v3335 = vpop.f32.mrb[0].mxu0
      %v3336 = vpop.f32.mrb[0].mxu0
      %v3337 = vadd.f32 0.0, %v3336
      %v3338 = vpop.f32.mrb[0].mxu0
      %3339 = vmatprep.mubr.bf16.mxu0 0
      %3340 = vmatmul.mubr.bf16.gmra.mrb[0].mxu0 %v3136
      %v3341 = vpop.f32.mrb[0].mxu0
      %v3342 = vadd.f32 0.0, %v3341
      %v3343 = vpop.f32.mrb[0].mxu0
      %v3344 = vpop.f32.mrb[0].mxu0
      %v3345 = vadd.f32 0.0, %v3344
      %v3346 = vpop.f32.mrb[0].mxu0
      %3347 = vmatprep.mubr.bf16.mxu0 0
      %3348 = vmatmul.mubr.bf16.gmra.mrb[0].mxu0 %v3137
      %v3349 = vpop.f32.mrb[0].mxu0
      %v3350 = vadd.f32 0.0, %v3349
      %v3351 = vpop.f32.mrb[0].mxu0
      %v3352 = vpop.f32.mrb[0].mxu0
      %v3353 = vadd.f32 0.0, %v3352
      %v3354 = vpop.f32.mrb[0].mxu0
      %3355 = vmatprep.mubr.bf16.mxu0 0
      %3356 = vmatmul.mubr.bf16.gmra.mrb[0].mxu0 %v3138
      %v3357 = vpop.f32.mrb[0].mxu0
      %v3358 = vadd.f32 0.0, %v3357
      %v3359 = vpop.f32.mrb[0].mxu0
      %v3360 = vpop.f32.mrb[0].mxu0
      %v3361 = vadd.f32 0.0, %v3360
      %v3362 = vpop.f32.mrb[0].mxu0
      %3363 = vdwg.mxu0
      %v3364 = vadd.f32 %v2866, %v3238
      %v3365 = vadd.f32 %v2867, %v3241
      %v3366 = vadd.f32 %v2868, %v3246
      %v3367 = vadd.f32 %v2869, %v3249
      %v3368 = vadd.f32 %v2870, %v3254
      %v3369 = vadd.f32 %v2871, %v3257
      %v3370 = vadd.f32 %v2872, %v3262
      %v3371 = vadd.f32 %v2873, %v3265
      %v3372 = vadd.f32 %v2874, %v3270
      %v3373 = vadd.f32 %v2875, %v3273
      %v3374 = vadd.f32 %v2876, %v3278
      %v3375 = vadd.f32 %v2877, %v3281
      %v3376 = vadd.f32 %v2878, %v3286
      %v3377 = vadd.f32 %v2879, %v3289
      %v3378 = vadd.f32 %v2880, %v3294
      %v3379 = vadd.f32 %v2881, %v3297
      %v3380 = vadd.f32 %v2882, %v3302
      %v3381 = vadd.f32 %v2883, %v3305
      %v3382 = vadd.f32 %v2884, %v3310
      %v3383 = vadd.f32 %v2885, %v3313
      %v3384 = vadd.f32 %v2886, %v3318
      %v3385 = vadd.f32 %v2887, %v3321
      %v3386 = vadd.f32 %v2888, %v3326
      %v3387 = vadd.f32 %v2889, %v3329
      %v3388 = vadd.f32 %v2890, %v3334
      %v3389 = vadd.f32 %v2891, %v3337
      %v3390 = vadd.f32 %v2892, %v3342
      %v3391 = vadd.f32 %v2893, %v3345
      %v3392 = vadd.f32 %v2894, %v3350
      %v3393 = vadd.f32 %v2895, %v3353
      %v3394 = vadd.f32 %v2896, %v3358
      %v3395 = vadd.f32 %v2897, %v3361
      %s3396 = scalar_lea.vmem %s208, 24
      %v3397 = vld [vmem:[%s3396] sm:$0xf]
      %v3398 = vld [vmem:[%s3396 + $0x4] sm:$0xf]
      %v3399 = vld [vmem:[%s3396 + $0xc] sm:$0xf]
      %v3400 = vld [vmem:[%s3396 + $0x10] sm:$0xf]
      %v3401 = vld [vmem:[%s3396 + $0x18] sm:$0xf]
      %v3402 = vld [vmem:[%s3396 + $0x1c] sm:$0xf]
      %v3403 = vld [vmem:[%s3396 + $0x24] sm:$0xf]
      %v3404 = vld [vmem:[%s3396 + $0x28] sm:$0xf]
      %v3405 = vld [vmem:[%s3396 + $0x30] sm:$0xf]
      %v3406 = vld [vmem:[%s3396 + $0x34] sm:$0xf]
      %v3407 = vld [vmem:[%s3396 + $0x3c] sm:$0xf]
      %v3408 = vld [vmem:[%s3396 + $0x40] sm:$0xf]
      %v3409 = vld [vmem:[%s3396 + $0x48] sm:$0xf]
      %v3410 = vld [vmem:[%s3396 + $0x4c] sm:$0xf]
      %v3411 = vld [vmem:[%s3396 + $0x54] sm:$0xf]
      %v3412 = vld [vmem:[%s3396 + $0x58] sm:$0xf]
      %v3413 = vld [vmem:[%s3396 + $0x60] sm:$0xf]
      %v3414 = vld [vmem:[%s3396 + $0x64] sm:$0xf]
      %v3415 = vld [vmem:[%s3396 + $0x6c] sm:$0xf]
      %v3416 = vld [vmem:[%s3396 + $0x70] sm:$0xf]
      %v3417 = vld [vmem:[%s3396 + $0x78] sm:$0xf]
      %v3418 = vld [vmem:[%s3396 + $0x7c] sm:$0xf]
      %v3419 = vld [vmem:[%s3396 + $0x84] sm:$0xf]
      %v3420 = vld [vmem:[%s3396 + $0x88] sm:$0xf]
      %v3421 = vld [vmem:[%s3396 + $0x90] sm:$0xf]
      %v3422 = vld [vmem:[%s3396 + $0x94] sm:$0xf]
      %v3423 = vld [vmem:[%s3396 + $0x9c] sm:$0xf]
      %v3424 = vld [vmem:[%s3396 + $0xa0] sm:$0xf]
      %v3425 = vld [vmem:[%s3396 + $0xa8] sm:$0xf]
      %v3426 = vld [vmem:[%s3396 + $0xac] sm:$0xf]
      %v3427 = vld [vmem:[%s3396 + $0xb4] sm:$0xf]
      %v3428 = vld [vmem:[%s3396 + $0xb8] sm:$0xf]
      %s3429 = scalar_lea.vmem %s212, 384
      %v3430 = vld [vmem:[%s3429] sm:$0xf]
      %v3431 = vld [vmem:[%s3429 + $0x4] sm:$0xf]
      %v3432 = vld [vmem:[%s3429 + $0x8] sm:$0xf]
      %v3433 = vld [vmem:[%s3429 + $0xc] sm:$0xf]
      %v3434 = vld [vmem:[%s3429 + $0x10] sm:$0xf]
      %v3435 = vld [vmem:[%s3429 + $0x14] sm:$0xf]
      %v3436 = vld [vmem:[%s3429 + $0x18] sm:$0xf]
      %v3437 = vld [vmem:[%s3429 + $0x1c] sm:$0xf]
      %v3438 = vld [vmem:[%s3429 + $0x20] sm:$0xf]
      %v3439 = vld [vmem:[%s3429 + $0x24] sm:$0xf]
      %v3440 = vld [vmem:[%s3429 + $0x28] sm:$0xf]
      %v3441 = vld [vmem:[%s3429 + $0x2c] sm:$0xf]
      %v3442 = vld [vmem:[%s3429 + $0x30] sm:$0xf]
      %v3443 = vld [vmem:[%s3429 + $0x34] sm:$0xf]
      %v3444 = vld [vmem:[%s3429 + $0x38] sm:$0xf]
      %v3445 = vld [vmem:[%s3429 + $0x3c] sm:$0xf]
      %v3478 = vunpack.c.l.b16 %v3397
      %v3479 = vunpack.c.l.b16 %v3398
      %v3480 = vunpack.c.l.b16 %v3399
      %v3481 = vunpack.c.l.b16 %v3400
      %v3482 = vunpack.c.l.b16 %v3401
      %v3483 = vunpack.c.l.b16 %v3402
      %v3484 = vunpack.c.l.b16 %v3403
      %v3485 = vunpack.c.l.b16 %v3404
      %v3486 = vunpack.c.l.b16 %v3405
      %v3487 = vunpack.c.l.b16 %v3406
      %v3488 = vunpack.c.l.b16 %v3407
      %v3489 = vunpack.c.l.b16 %v3408
      %v3490 = vunpack.c.l.b16 %v3409
      %v3491 = vunpack.c.l.b16 %v3410
      %v3492 = vunpack.c.l.b16 %v3411
      %v3493 = vunpack.c.l.b16 %v3412
      %v3494 = vunpack.c.l.b16 %v3413
      %v3495 = vunpack.c.l.b16 %v3414
      %v3496 = vunpack.c.l.b16 %v3415
      %v3497 = vunpack.c.l.b16 %v3416
      %v3498 = vunpack.c.l.b16 %v3417
      %v3499 = vunpack.c.l.b16 %v3418
      %v3500 = vunpack.c.l.b16 %v3419
      %v3501 = vunpack.c.l.b16 %v3420
      %v3502 = vunpack.c.l.b16 %v3421
      %v3503 = vunpack.c.l.b16 %v3422
      %v3504 = vunpack.c.l.b16 %v3423
      %v3505 = vunpack.c.l.b16 %v3424
      %v3506 = vunpack.c.l.b16 %v3425
      %v3507 = vunpack.c.l.b16 %v3426
      %v3508 = vunpack.c.l.b16 %v3427
      %v3509 = vunpack.c.l.b16 %v3428
      %v3510 = vpack.c.b16 %v3479, %v3478
      %v3511 = vpack.c.b16 %v3481, %v3480
      %v3512 = vpack.c.b16 %v3483, %v3482
      %v3513 = vpack.c.b16 %v3485, %v3484
      %v3514 = vpack.c.b16 %v3487, %v3486
      %v3515 = vpack.c.b16 %v3489, %v3488
      %v3516 = vpack.c.b16 %v3491, %v3490
      %v3517 = vpack.c.b16 %v3493, %v3492
      %v3518 = vpack.c.b16 %v3495, %v3494
      %v3519 = vpack.c.b16 %v3497, %v3496
      %v3520 = vpack.c.b16 %v3499, %v3498
      %v3521 = vpack.c.b16 %v3501, %v3500
      %v3522 = vpack.c.b16 %v3503, %v3502
      %v3523 = vpack.c.b16 %v3505, %v3504
      %v3524 = vpack.c.b16 %v3507, %v3506
      %v3525 = vpack.c.b16 %v3509, %v3508
      %v3558 = vunpack.c.l.b16 %v3430
      %v3559 = vunpack.c.l.b16 %v3431
      %v3560 = vunpack.c.l.b16 %v3432
      %v3561 = vunpack.c.l.b16 %v3433
      %v3562 = vunpack.c.l.b16 %v3434
      %v3563 = vunpack.c.l.b16 %v3435
      %v3564 = vunpack.c.l.b16 %v3436
      %v3565 = vunpack.c.l.b16 %v3437
      %v3566 = vunpack.c.l.b16 %v3438
      %v3567 = vunpack.c.l.b16 %v3439
      %v3568 = vunpack.c.l.b16 %v3440
      %v3569 = vunpack.c.l.b16 %v3441
      %v3570 = vunpack.c.l.b16 %v3442
      %v3571 = vunpack.c.l.b16 %v3443
      %v3572 = vunpack.c.l.b16 %v3444
      %v3573 = vunpack.c.l.b16 %v3445
      %v3574 = vpack.c.b16 %v3559, %v3558
      %v3575 = vpack.c.b16 %v3561, %v3560
      %v3576 = vpack.c.b16 %v3563, %v3562
      %v3577 = vpack.c.b16 %v3565, %v3564
      %v3578 = vpack.c.b16 %v3567, %v3566
      %v3579 = vpack.c.b16 %v3569, %v3568
      %v3580 = vpack.c.b16 %v3571, %v3570
      %v3581 = vpack.c.b16 %v3573, %v3572
      %3590 = vmatprep.subr.bf16.mxu0 0
      %3591 = vmatpush1.bf16.msra.mxu0 %v3574
      %3592 = vmatprep.subr.bf16.mxu0 0
      %3593 = vmatpush1.bf16.msra.mxu0 %v3575
      %3594 = vmatprep.subr.bf16.mxu0 0
      %3595 = vmatpush1.bf16.msra.mxu0 %v3576
      %3596 = vmatprep.subr.bf16.mxu0 0
      %3597 = vmatpush1.bf16.msra.mxu0 %v3577
      %3598 = vmatprep.subr.bf16.mxu0 0
      %3599 = vmatpush1.bf16.msra.mxu0 %v3578
      %3600 = vmatprep.subr.bf16.mxu0 0
      %3601 = vmatpush1.bf16.msra.mxu0 %v3579
      %3602 = vmatprep.subr.bf16.mxu0 0
      %3603 = vmatpush1.bf16.msra.mxu0 %v3580
      %3604 = vmatprep.subr.bf16.mxu0 0
      %3605 = vmatpush1.bf16.msra.mxu0 %v3581
      %3606 = vmatprep.subr.bf16.mxu0 0
      %3607 = vmatpush1.bf16.msra.mxu0 0
      %3608 = vmatprep.subr.bf16.mxu0 0
      %3609 = vmatpush1.bf16.msra.mxu0 0
      %3610 = vmatprep.subr.bf16.mxu0 0
      %3611 = vmatpush1.bf16.msra.mxu0 0
      %3612 = vmatprep.subr.bf16.mxu0 0
      %3613 = vmatpush1.bf16.msra.mxu0 0
      %3614 = vmatprep.subr.bf16.mxu0 0
      %3615 = vmatpush1.bf16.msra.mxu0 0
      %3616 = vmatprep.subr.bf16.mxu0 0
      %3617 = vmatpush1.bf16.msra.mxu0 0
      %3618 = vmatprep.subr.bf16.mxu0 0
      %3619 = vmatpush1.bf16.msra.mxu0 0
      %3620 = vmatprep.subr.bf16.mxu0 0
      %3621 = vmatpush1.bf16.msra.mxu0 0
      %3622 = vmatprep.mubr.bf16.mxu0 0
      %3623 = vmatmul.mubr.bf16.gmra.mrb[0].mxu0 %v3510
      %v3624 = vpop.f32.mrb[0].mxu0
      %v3625 = vadd.f32 0.0, %v3624
      %v3626 = vpop.f32.mrb[0].mxu0
      %v3627 = vpop.f32.mrb[0].mxu0
      %v3628 = vadd.f32 0.0, %v3627
      %v3629 = vpop.f32.mrb[0].mxu0
      %3630 = vmatprep.mubr.bf16.mxu0 0
      %3631 = vmatmul.mubr.bf16.gmra.mrb[0].mxu0 %v3511
      %v3632 = vpop.f32.mrb[0].mxu0
      %v3633 = vadd.f32 0.0, %v3632
      %v3634 = vpop.f32.mrb[0].mxu0
      %v3635 = vpop.f32.mrb[0].mxu0
      %v3636 = vadd.f32 0.0, %v3635
      %v3637 = vpop.f32.mrb[0].mxu0
      %3638 = vmatprep.mubr.bf16.mxu0 0
      %3639 = vmatmul.mubr.bf16.gmra.mrb[0].mxu0 %v3512
      %v3640 = vpop.f32.mrb[0].mxu0
      %v3641 = vadd.f32 0.0, %v3640
      %v3642 = vpop.f32.mrb[0].mxu0
      %v3643 = vpop.f32.mrb[0].mxu0
      %v3644 = vadd.f32 0.0, %v3643
      %v3645 = vpop.f32.mrb[0].mxu0
      %3646 = vmatprep.mubr.bf16.mxu0 0
      %3647 = vmatmul.mubr.bf16.gmra.mrb[0].mxu0 %v3513
      %v3648 = vpop.f32.mrb[0].mxu0
      %v3649 = vadd.f32 0.0, %v3648
      %v3650 = vpop.f32.mrb[0].mxu0
      %v3651 = vpop.f32.mrb[0].mxu0
      %v3652 = vadd.f32 0.0, %v3651
      %v3653 = vpop.f32.mrb[0].mxu0
      %3654 = vmatprep.mubr.bf16.mxu0 0
      %3655 = vmatmul.mubr.bf16.gmra.mrb[0].mxu0 %v3514
      %v3656 = vpop.f32.mrb[0].mxu0
      %v3657 = vadd.f32 0.0, %v3656
      %v3658 = vpop.f32.mrb[0].mxu0
      %v3659 = vpop.f32.mrb[0].mxu0
      %v3660 = vadd.f32 0.0, %v3659
      %v3661 = vpop.f32.mrb[0].mxu0
      %3662 = vmatprep.mubr.bf16.mxu0 0
      %3663 = vmatmul.mubr.bf16.gmra.mrb[0].mxu0 %v3515
      %v3664 = vpop.f32.mrb[0].mxu0
      %v3665 = vadd.f32 0.0, %v3664
      %v3666 = vpop.f32.mrb[0].mxu0
      %v3667 = vpop.f32.mrb[0].mxu0
      %v3668 = vadd.f32 0.0, %v3667
      %v3669 = vpop.f32.mrb[0].mxu0
      %3670 = vmatprep.mubr.bf16.mxu0 0
      %3671 = vmatmul.mubr.bf16.gmra.mrb[0].mxu0 %v3516
      %v3672 = vpop.f32.mrb[0].mxu0
      %v3673 = vadd.f32 0.0, %v3672
      %v3674 = vpop.f32.mrb[0].mxu0
      %v3675 = vpop.f32.mrb[0].mxu0
      %v3676 = vadd.f32 0.0, %v3675
      %v3677 = vpop.f32.mrb[0].mxu0
      %3678 = vmatprep.mubr.bf16.mxu0 0
      %3679 = vmatmul.mubr.bf16.gmra.mrb[0].mxu0 %v3517
      %v3680 = vpop.f32.mrb[0].mxu0
      %v3681 = vadd.f32 0.0, %v3680
      %v3682 = vpop.f32.mrb[0].mxu0
      %v3683 = vpop.f32.mrb[0].mxu0
      %v3684 = vadd.f32 0.0, %v3683
      %v3685 = vpop.f32.mrb[0].mxu0
      %3686 = vmatprep.mubr.bf16.mxu0 0
      %3687 = vmatmul.mubr.bf16.gmra.mrb[0].mxu0 %v3518
      %v3688 = vpop.f32.mrb[0].mxu0
      %v3689 = vadd.f32 0.0, %v3688
      %v3690 = vpop.f32.mrb[0].mxu0
      %v3691 = vpop.f32.mrb[0].mxu0
      %v3692 = vadd.f32 0.0, %v3691
      %v3693 = vpop.f32.mrb[0].mxu0
      %3694 = vmatprep.mubr.bf16.mxu0 0
      %3695 = vmatmul.mubr.bf16.gmra.mrb[0].mxu0 %v3519
      %v3696 = vpop.f32.mrb[0].mxu0
      %v3697 = vadd.f32 0.0, %v3696
      %v3698 = vpop.f32.mrb[0].mxu0
      %v3699 = vpop.f32.mrb[0].mxu0
      %v3700 = vadd.f32 0.0, %v3699
      %v3701 = vpop.f32.mrb[0].mxu0
      %3702 = vmatprep.mubr.bf16.mxu0 0
      %3703 = vmatmul.mubr.bf16.gmra.mrb[0].mxu0 %v3520
      %v3704 = vpop.f32.mrb[0].mxu0
      %v3705 = vadd.f32 0.0, %v3704
      %v3706 = vpop.f32.mrb[0].mxu0
      %v3707 = vpop.f32.mrb[0].mxu0
      %v3708 = vadd.f32 0.0, %v3707
      %v3709 = vpop.f32.mrb[0].mxu0
      %3710 = vmatprep.mubr.bf16.mxu0 0
      %3711 = vmatmul.mubr.bf16.gmra.mrb[0].mxu0 %v3521
      %v3712 = vpop.f32.mrb[0].mxu0
      %v3713 = vadd.f32 0.0, %v3712
      %v3714 = vpop.f32.mrb[0].mxu0
      %v3715 = vpop.f32.mrb[0].mxu0
      %v3716 = vadd.f32 0.0, %v3715
      %v3717 = vpop.f32.mrb[0].mxu0
      %3718 = vmatprep.mubr.bf16.mxu0 0
      %3719 = vmatmul.mubr.bf16.gmra.mrb[0].mxu0 %v3522
      %v3720 = vpop.f32.mrb[0].mxu0
      %v3721 = vadd.f32 0.0, %v3720
      %v3722 = vpop.f32.mrb[0].mxu0
      %v3723 = vpop.f32.mrb[0].mxu0
      %v3724 = vadd.f32 0.0, %v3723
      %v3725 = vpop.f32.mrb[0].mxu0
      %3726 = vmatprep.mubr.bf16.mxu0 0
      %3727 = vmatmul.mubr.bf16.gmra.mrb[0].mxu0 %v3523
      %v3728 = vpop.f32.mrb[0].mxu0
      %v3729 = vadd.f32 0.0, %v3728
      %v3730 = vpop.f32.mrb[0].mxu0
      %v3731 = vpop.f32.mrb[0].mxu0
      %v3732 = vadd.f32 0.0, %v3731
      %v3733 = vpop.f32.mrb[0].mxu0
      %3734 = vmatprep.mubr.bf16.mxu0 0
      %3735 = vmatmul.mubr.bf16.gmra.mrb[0].mxu0 %v3524
      %v3736 = vpop.f32.mrb[0].mxu0
      %v3737 = vadd.f32 0.0, %v3736
      %v3738 = vpop.f32.mrb[0].mxu0
      %v3739 = vpop.f32.mrb[0].mxu0
      %v3740 = vadd.f32 0.0, %v3739
      %v3741 = vpop.f32.mrb[0].mxu0
      %3742 = vmatprep.mubr.bf16.mxu0 0
      %3743 = vmatmul.mubr.bf16.gmra.mrb[0].mxu0 %v3525
      %v3744 = vpop.f32.mrb[0].mxu0
      %v3745 = vadd.f32 0.0, %v3744
      %v3746 = vpop.f32.mrb[0].mxu0
      %v3747 = vpop.f32.mrb[0].mxu0
      %v3748 = vadd.f32 0.0, %v3747
      %v3749 = vpop.f32.mrb[0].mxu0
      %3750 = vdwg.mxu0
      %v3751 = vadd.f32 %v3364, %v3625
      %v3752 = vadd.f32 %v3365, %v3628
      %v3753 = vadd.f32 %v3366, %v3633
      %v3754 = vadd.f32 %v3367, %v3636
      %v3755 = vadd.f32 %v3368, %v3641
      %v3756 = vadd.f32 %v3369, %v3644
      %v3757 = vadd.f32 %v3370, %v3649
      %v3758 = vadd.f32 %v3371, %v3652
      %v3759 = vadd.f32 %v3372, %v3657
      %v3760 = vadd.f32 %v3373, %v3660
      %v3761 = vadd.f32 %v3374, %v3665
      %v3762 = vadd.f32 %v3375, %v3668
      %v3763 = vadd.f32 %v3376, %v3673
      %v3764 = vadd.f32 %v3377, %v3676
      %v3765 = vadd.f32 %v3378, %v3681
      %v3766 = vadd.f32 %v3379, %v3684
      %v3767 = vadd.f32 %v3380, %v3689
      %v3768 = vadd.f32 %v3381, %v3692
      %v3769 = vadd.f32 %v3382, %v3697
      %v3770 = vadd.f32 %v3383, %v3700
      %v3771 = vadd.f32 %v3384, %v3705
      %v3772 = vadd.f32 %v3385, %v3708
      %v3773 = vadd.f32 %v3386, %v3713
      %v3774 = vadd.f32 %v3387, %v3716
      %v3775 = vadd.f32 %v3388, %v3721
      %v3776 = vadd.f32 %v3389, %v3724
      %v3777 = vadd.f32 %v3390, %v3729
      %v3778 = vadd.f32 %v3391, %v3732
      %v3779 = vadd.f32 %v3392, %v3737
      %v3780 = vadd.f32 %v3393, %v3740
      %v3781 = vadd.f32 %v3394, %v3745
      %v3782 = vadd.f32 %v3395, %v3748
      %v3783 = vld [vmem:[%s3396] sm:$0xf]
      %v3784 = vld [vmem:[%s3396 + $0x4] sm:$0xf]
      %v3785 = vld [vmem:[%s3396 + $0x8] sm:$0x1]
      %v3786 = vld [vmem:[%s3396 + $0xc] sm:$0xf]
      %v3787 = vld [vmem:[%s3396 + $0x10] sm:$0xf]
      %v3788 = vld [vmem:[%s3396 + $0x14] sm:$0x1]
      %v3789 = vld [vmem:[%s3396 + $0x18] sm:$0xf]
      %v3790 = vld [vmem:[%s3396 + $0x1c] sm:$0xf]
      %v3791 = vld [vmem:[%s3396 + $0x20] sm:$0x1]
      %v3792 = vld [vmem:[%s3396 + $0x24] sm:$0xf]
      %v3793 = vld [vmem:[%s3396 + $0x28] sm:$0xf]
      %v3794 = vld [vmem:[%s3396 + $0x2c] sm:$0x1]
      %v3795 = vld [vmem:[%s3396 + $0x30] sm:$0xf]
      %v3796 = vld [vmem:[%s3396 + $0x34] sm:$0xf]
      %v3797 = vld [vmem:[%s3396 + $0x38] sm:$0x1]
      %v3798 = vld [vmem:[%s3396 + $0x3c] sm:$0xf]
      %v3799 = vld [vmem:[%s3396 + $0x40] sm:$0xf]
      %v3800 = vld [vmem:[%s3396 + $0x44] sm:$0x1]
      %v3801 = vld [vmem:[%s3396 + $0x48] sm:$0xf]
      %v3802 = vld [vmem:[%s3396 + $0x4c] sm:$0xf]
      %v3803 = vld [vmem:[%s3396 + $0x50] sm:$0x1]
      %v3804 = vld [vmem:[%s3396 + $0x54] sm:$0xf]
      %v3805 = vld [vmem:[%s3396 + $0x58] sm:$0xf]
      %v3806 = vld [vmem:[%s3396 + $0x5c] sm:$0x1]
      %v3807 = vld [vmem:[%s3396 + $0x60] sm:$0xf]
      %v3808 = vld [vmem:[%s3396 + $0x64] sm:$0xf]
      %v3809 = vld [vmem:[%s3396 + $0x68] sm:$0x1]
      %v3810 = vld [vmem:[%s3396 + $0x6c] sm:$0xf]
      %v3811 = vld [vmem:[%s3396 + $0x70] sm:$0xf]
      %v3812 = vld [vmem:[%s3396 + $0x74] sm:$0x1]
      %v3813 = vld [vmem:[%s3396 + $0x78] sm:$0xf]
      %v3814 = vld [vmem:[%s3396 + $0x7c] sm:$0xf]
      %v3815 = vld [vmem:[%s3396 + $0x80] sm:$0x1]
      %v3816 = vld [vmem:[%s3396 + $0x84] sm:$0xf]
      %v3817 = vld [vmem:[%s3396 + $0x88] sm:$0xf]
      %v3818 = vld [vmem:[%s3396 + $0x8c] sm:$0x1]
      %v3819 = vld [vmem:[%s3396 + $0x90] sm:$0xf]
      %v3820 = vld [vmem:[%s3396 + $0x94] sm:$0xf]
      %v3821 = vld [vmem:[%s3396 + $0x98] sm:$0x1]
      %v3822 = vld [vmem:[%s3396 + $0x9c] sm:$0xf]
      %v3823 = vld [vmem:[%s3396 + $0xa0] sm:$0xf]
      %v3824 = vld [vmem:[%s3396 + $0xa4] sm:$0x1]
      %v3825 = vld [vmem:[%s3396 + $0xa8] sm:$0xf]
      %v3826 = vld [vmem:[%s3396 + $0xac] sm:$0xf]
      %v3827 = vld [vmem:[%s3396 + $0xb0] sm:$0x1]
      %v3828 = vld [vmem:[%s3396 + $0xb4] sm:$0xf]
      %v3829 = vld [vmem:[%s3396 + $0xb8] sm:$0xf]
      %v3830 = vld [vmem:[%s3396 + $0xbc] sm:$0x1]
      %v3832 = vshrl.u32 %v3783, 16
      %v3834 = vrot.slane %v3832, 4
      %v3835 = vshll.u32 %v3783, 16
      %v3837 = vrot.slane %v3835, 5
      %v3838 = vor.u32 %v3834, %v3837
      %v3839 = vrot.slane %v3838, 4
      %v3841 = vshll.u32 %v3784, 16
      %v3843 = vrot.slane %v3841, 5
      %v3844 = vsel %vm292, %v3839, %v3843
      %v3845 = vshrl.u32 %v3784, 16
      %v3847 = vrot.slane %v3845, 4
      %v3848 = vor.u32 %v3847, %v3843
      %v3849 = vrot.slane %v3848, 4
      %v3851 = vshll.u32 %v3785, 16
      %v3853 = vrot.slane %v3851, 5
      %v3854 = vsel %vm292, %v3849, %v3853
      %v3856 = vshrl.u32 %v3786, 16
      %v3858 = vrot.slane %v3856, 4
      %v3859 = vshll.u32 %v3786, 16
      %v3861 = vrot.slane %v3859, 5
      %v3862 = vor.u32 %v3858, %v3861
      %v3863 = vrot.slane %v3862, 4
      %v3865 = vshll.u32 %v3787, 16
      %v3867 = vrot.slane %v3865, 5
      %v3868 = vsel %vm292, %v3863, %v3867
      %v3869 = vshrl.u32 %v3787, 16
      %v3871 = vrot.slane %v3869, 4
      %v3872 = vor.u32 %v3871, %v3867
      %v3873 = vrot.slane %v3872, 4
      %v3875 = vshll.u32 %v3788, 16
      %v3877 = vrot.slane %v3875, 5
      %v3878 = vsel %vm292, %v3873, %v3877
      %v3880 = vshrl.u32 %v3789, 16
      %v3882 = vrot.slane %v3880, 4
      %v3883 = vshll.u32 %v3789, 16
      %v3885 = vrot.slane %v3883, 5
      %v3886 = vor.u32 %v3882, %v3885
      %v3887 = vrot.slane %v3886, 4
      %v3889 = vshll.u32 %v3790, 16
      %v3891 = vrot.slane %v3889, 5
      %v3892 = vsel %vm292, %v3887, %v3891
      %v3893 = vshrl.u32 %v3790, 16
      %v3895 = vrot.slane %v3893, 4
      %v3896 = vor.u32 %v3895, %v3891
      %v3897 = vrot.slane %v3896, 4
      %v3899 = vshll.u32 %v3791, 16
      %v3901 = vrot.slane %v3899, 5
      %v3902 = vsel %vm292, %v3897, %v3901
      %v3904 = vshrl.u32 %v3792, 16
      %v3906 = vrot.slane %v3904, 4
      %v3907 = vshll.u32 %v3792, 16
      %v3909 = vrot.slane %v3907, 5
      %v3910 = vor.u32 %v3906, %v3909
      %v3911 = vrot.slane %v3910, 4
      %v3913 = vshll.u32 %v3793, 16
      %v3915 = vrot.slane %v3913, 5
      %v3916 = vsel %vm292, %v3911, %v3915
      %v3917 = vshrl.u32 %v3793, 16
      %v3919 = vrot.slane %v3917, 4
      %v3920 = vor.u32 %v3919, %v3915
      %v3921 = vrot.slane %v3920, 4
      %v3923 = vshll.u32 %v3794, 16
      %v3925 = vrot.slane %v3923, 5
      %v3926 = vsel %vm292, %v3921, %v3925
      %v3928 = vshrl.u32 %v3795, 16
      %v3930 = vrot.slane %v3928, 4
      %v3931 = vshll.u32 %v3795, 16
      %v3933 = vrot.slane %v3931, 5
      %v3934 = vor.u32 %v3930, %v3933
      %v3935 = vrot.slane %v3934, 4
      %v3937 = vshll.u32 %v3796, 16
      %v3939 = vrot.slane %v3937, 5
      %v3940 = vsel %vm292, %v3935, %v3939
      %v3941 = vshrl.u32 %v3796, 16
      %v3943 = vrot.slane %v3941, 4
      %v3944 = vor.u32 %v3943, %v3939
      %v3945 = vrot.slane %v3944, 4
      %v3947 = vshll.u32 %v3797, 16
      %v3949 = vrot.slane %v3947, 5
      %v3950 = vsel %vm292, %v3945, %v3949
      %v3952 = vshrl.u32 %v3798, 16
      %v3954 = vrot.slane %v3952, 4
      %v3955 = vshll.u32 %v3798, 16
      %v3957 = vrot.slane %v3955, 5
      %v3958 = vor.u32 %v3954, %v3957
      %v3959 = vrot.slane %v3958, 4
      %v3961 = vshll.u32 %v3799, 16
      %v3963 = vrot.slane %v3961, 5
      %v3964 = vsel %vm292, %v3959, %v3963
      %v3965 = vshrl.u32 %v3799, 16
      %v3967 = vrot.slane %v3965, 4
      %v3968 = vor.u32 %v3967, %v3963
      %v3969 = vrot.slane %v3968, 4
      %v3971 = vshll.u32 %v3800, 16
      %v3973 = vrot.slane %v3971, 5
      %v3974 = vsel %vm292, %v3969, %v3973
      %v3976 = vshrl.u32 %v3801, 16
      %v3978 = vrot.slane %v3976, 4
      %v3979 = vshll.u32 %v3801, 16
      %v3981 = vrot.slane %v3979, 5
      %v3982 = vor.u32 %v3978, %v3981
      %v3983 = vrot.slane %v3982, 4
      %v3985 = vshll.u32 %v3802, 16
      %v3987 = vrot.slane %v3985, 5
      %v3988 = vsel %vm292, %v3983, %v3987
      %v3989 = vshrl.u32 %v3802, 16
      %v3991 = vrot.slane %v3989, 4
      %v3992 = vor.u32 %v3991, %v3987
      %v3993 = vrot.slane %v3992, 4
      %v3995 = vshll.u32 %v3803, 16
      %v3997 = vrot.slane %v3995, 5
      %v3998 = vsel %vm292, %v3993, %v3997
      %v4000 = vshrl.u32 %v3804, 16
      %v4002 = vrot.slane %v4000, 4
      %v4003 = vshll.u32 %v3804, 16
      %v4005 = vrot.slane %v4003, 5
      %v4006 = vor.u32 %v4002, %v4005
      %v4007 = vrot.slane %v4006, 4
      %v4009 = vshll.u32 %v3805, 16
      %v4011 = vrot.slane %v4009, 5
      %v4012 = vsel %vm292, %v4007, %v4011
      %v4013 = vshrl.u32 %v3805, 16
      %v4015 = vrot.slane %v4013, 4
      %v4016 = vor.u32 %v4015, %v4011
      %v4017 = vrot.slane %v4016, 4
      %v4019 = vshll.u32 %v3806, 16
      %v4021 = vrot.slane %v4019, 5
      %v4022 = vsel %vm292, %v4017, %v4021
      %v4024 = vshrl.u32 %v3807, 16
      %v4026 = vrot.slane %v4024, 4
      %v4027 = vshll.u32 %v3807, 16
      %v4029 = vrot.slane %v4027, 5
      %v4030 = vor.u32 %v4026, %v4029
      %v4031 = vrot.slane %v4030, 4
      %v4033 = vshll.u32 %v3808, 16
      %v4035 = vrot.slane %v4033, 5
      %v4036 = vsel %vm292, %v4031, %v4035
      %v4037 = vshrl.u32 %v3808, 16
      %v4039 = vrot.slane %v4037, 4
      %v4040 = vor.u32 %v4039, %v4035
      %v4041 = vrot.slane %v4040, 4
      %v4043 = vshll.u32 %v3809, 16
      %v4045 = vrot.slane %v4043, 5
      %v4046 = vsel %vm292, %v4041, %v4045
      %v4048 = vshrl.u32 %v3810, 16
      %v4050 = vrot.slane %v4048, 4
      %v4051 = vshll.u32 %v3810, 16
      %v4053 = vrot.slane %v4051, 5
      %v4054 = vor.u32 %v4050, %v4053
      %v4055 = vrot.slane %v4054, 4
      %v4057 = vshll.u32 %v3811, 16
      %v4059 = vrot.slane %v4057, 5
      %v4060 = vsel %vm292, %v4055, %v4059
      %v4061 = vshrl.u32 %v3811, 16
      %v4063 = vrot.slane %v4061, 4
      %v4064 = vor.u32 %v4063, %v4059
      %v4065 = vrot.slane %v4064, 4
      %v4067 = vshll.u32 %v3812, 16
      %v4069 = vrot.slane %v4067, 5
      %v4070 = vsel %vm292, %v4065, %v4069
      %v4072 = vshrl.u32 %v3813, 16
      %v4074 = vrot.slane %v4072, 4
      %v4075 = vshll.u32 %v3813, 16
      %v4077 = vrot.slane %v4075, 5
      %v4078 = vor.u32 %v4074, %v4077
      %v4079 = vrot.slane %v4078, 4
      %v4081 = vshll.u32 %v3814, 16
      %v4083 = vrot.slane %v4081, 5
      %v4084 = vsel %vm292, %v4079, %v4083
      %v4085 = vshrl.u32 %v3814, 16
      %v4087 = vrot.slane %v4085, 4
      %v4088 = vor.u32 %v4087, %v4083
      %v4089 = vrot.slane %v4088, 4
      %v4091 = vshll.u32 %v3815, 16
      %v4093 = vrot.slane %v4091, 5
      %v4094 = vsel %vm292, %v4089, %v4093
      %v4096 = vshrl.u32 %v3816, 16
      %v4098 = vrot.slane %v4096, 4
      %v4099 = vshll.u32 %v3816, 16
      %v4101 = vrot.slane %v4099, 5
      %v4102 = vor.u32 %v4098, %v4101
      %v4103 = vrot.slane %v4102, 4
      %v4105 = vshll.u32 %v3817, 16
      %v4107 = vrot.slane %v4105, 5
      %v4108 = vsel %vm292, %v4103, %v4107
      %v4109 = vshrl.u32 %v3817, 16
      %v4111 = vrot.slane %v4109, 4
      %v4112 = vor.u32 %v4111, %v4107
      %v4113 = vrot.slane %v4112, 4
      %v4115 = vshll.u32 %v3818, 16
      %v4117 = vrot.slane %v4115, 5
      %v4118 = vsel %vm292, %v4113, %v4117
      %v4120 = vshrl.u32 %v3819, 16
      %v4122 = vrot.slane %v4120, 4
      %v4123 = vshll.u32 %v3819, 16
      %v4125 = vrot.slane %v4123, 5
      %v4126 = vor.u32 %v4122, %v4125
      %v4127 = vrot.slane %v4126, 4
      %v4129 = vshll.u32 %v3820, 16
      %v4131 = vrot.slane %v4129, 5
      %v4132 = vsel %vm292, %v4127, %v4131
      %v4133 = vshrl.u32 %v3820, 16
      %v4135 = vrot.slane %v4133, 4
      %v4136 = vor.u32 %v4135, %v4131
      %v4137 = vrot.slane %v4136, 4
      %v4139 = vshll.u32 %v3821, 16
      %v4141 = vrot.slane %v4139, 5
      %v4142 = vsel %vm292, %v4137, %v4141
      %v4144 = vshrl.u32 %v3822, 16
      %v4146 = vrot.slane %v4144, 4
      %v4147 = vshll.u32 %v3822, 16
      %v4149 = vrot.slane %v4147, 5
      %v4150 = vor.u32 %v4146, %v4149
      %v4151 = vrot.slane %v4150, 4
      %v4153 = vshll.u32 %v3823, 16
      %v4155 = vrot.slane %v4153, 5
      %v4156 = vsel %vm292, %v4151, %v4155
      %v4157 = vshrl.u32 %v3823, 16
      %v4159 = vrot.slane %v4157, 4
      %v4160 = vor.u32 %v4159, %v4155
      %v4161 = vrot.slane %v4160, 4
      %v4163 = vshll.u32 %v3824, 16
      %v4165 = vrot.slane %v4163, 5
      %v4166 = vsel %vm292, %v4161, %v4165
      %v4168 = vshrl.u32 %v3825, 16
      %v4170 = vrot.slane %v4168, 4
      %v4171 = vshll.u32 %v3825, 16
      %v4173 = vrot.slane %v4171, 5
      %v4174 = vor.u32 %v4170, %v4173
      %v4175 = vrot.slane %v4174, 4
      %v4177 = vshll.u32 %v3826, 16
      %v4179 = vrot.slane %v4177, 5
      %v4180 = vsel %vm292, %v4175, %v4179
      %v4181 = vshrl.u32 %v3826, 16
      %v4183 = vrot.slane %v4181, 4
      %v4184 = vor.u32 %v4183, %v4179
      %v4185 = vrot.slane %v4184, 4
      %v4187 = vshll.u32 %v3827, 16
      %v4189 = vrot.slane %v4187, 5
      %v4190 = vsel %vm292, %v4185, %v4189
      %v4192 = vshrl.u32 %v3828, 16
      %v4194 = vrot.slane %v4192, 4
      %v4195 = vshll.u32 %v3828, 16
      %v4197 = vrot.slane %v4195, 5
      %v4198 = vor.u32 %v4194, %v4197
      %v4199 = vrot.slane %v4198, 4
      %v4201 = vshll.u32 %v3829, 16
      %v4203 = vrot.slane %v4201, 5
      %v4204 = vsel %vm292, %v4199, %v4203
      %v4205 = vshrl.u32 %v3829, 16
      %v4207 = vrot.slane %v4205, 4
      %v4208 = vor.u32 %v4207, %v4203
      %v4209 = vrot.slane %v4208, 4
      %v4211 = vshll.u32 %v3830, 16
      %v4213 = vrot.slane %v4211, 5
      %v4214 = vsel %vm292, %v4209, %v4213
      %s4215 = scalar_lea.vmem %s212, 448
      %v4216 = vld [vmem:[%s4215] sm:$0xf]
      %v4217 = vld [vmem:[%s4215 + $0x4] sm:$0xf]
      %v4218 = vld [vmem:[%s4215 + $0x8] sm:$0xf]
      %v4219 = vld [vmem:[%s4215 + $0xc] sm:$0xf]
      %v4220 = vld [vmem:[%s4215 + $0x10] sm:$0xf]
      %v4221 = vld [vmem:[%s4215 + $0x14] sm:$0xf]
      %v4222 = vld [vmem:[%s4215 + $0x18] sm:$0xf]
      %v4223 = vld [vmem:[%s4215 + $0x1c] sm:$0xf]
      %v4224 = vld [vmem:[%s4215 + $0x20] sm:$0xf]
      %v4225 = vld [vmem:[%s4215 + $0x24] sm:$0xf]
      %v4226 = vld [vmem:[%s4215 + $0x28] sm:$0xf]
      %v4227 = vld [vmem:[%s4215 + $0x2c] sm:$0xf]
      %v4228 = vld [vmem:[%s4215 + $0x30] sm:$0xf]
      %v4229 = vld [vmem:[%s4215 + $0x34] sm:$0xf]
      %v4230 = vld [vmem:[%s4215 + $0x38] sm:$0xf]
      %v4231 = vld [vmem:[%s4215 + $0x3c] sm:$0xf]
      %v4232 = vunpack.c.l.b16 %v3844
      %v4233 = vunpack.c.l.b16 %v3854
      %v4234 = vunpack.c.l.b16 %v3868
      %v4235 = vunpack.c.l.b16 %v3878
      %v4236 = vunpack.c.l.b16 %v3892
      %v4237 = vunpack.c.l.b16 %v3902
      %v4238 = vunpack.c.l.b16 %v3916
      %v4239 = vunpack.c.l.b16 %v3926
      %v4240 = vunpack.c.l.b16 %v3940
      %v4241 = vunpack.c.l.b16 %v3950
      %v4242 = vunpack.c.l.b16 %v3964
      %v4243 = vunpack.c.l.b16 %v3974
      %v4244 = vunpack.c.l.b16 %v3988
      %v4245 = vunpack.c.l.b16 %v3998
      %v4246 = vunpack.c.l.b16 %v4012
      %v4247 = vunpack.c.l.b16 %v4022
      %v4248 = vunpack.c.l.b16 %v4036
      %v4249 = vunpack.c.l.b16 %v4046
      %v4250 = vunpack.c.l.b16 %v4060
      %v4251 = vunpack.c.l.b16 %v4070
      %v4252 = vunpack.c.l.b16 %v4084
      %v4253 = vunpack.c.l.b16 %v4094
      %v4254 = vunpack.c.l.b16 %v4108
      %v4255 = vunpack.c.l.b16 %v4118
      %v4256 = vunpack.c.l.b16 %v4132
      %v4257 = vunpack.c.l.b16 %v4142
      %v4258 = vunpack.c.l.b16 %v4156
      %v4259 = vunpack.c.l.b16 %v4166
      %v4260 = vunpack.c.l.b16 %v4180
      %v4261 = vunpack.c.l.b16 %v4190
      %v4262 = vunpack.c.l.b16 %v4204
      %v4263 = vunpack.c.l.b16 %v4214
      %v4264 = vpack.c.b16 %v4233, %v4232
      %v4265 = vpack.c.b16 %v4235, %v4234
      %v4266 = vpack.c.b16 %v4237, %v4236
      %v4267 = vpack.c.b16 %v4239, %v4238
      %v4268 = vpack.c.b16 %v4241, %v4240
      %v4269 = vpack.c.b16 %v4243, %v4242
      %v4270 = vpack.c.b16 %v4245, %v4244
      %v4271 = vpack.c.b16 %v4247, %v4246
      %v4272 = vpack.c.b16 %v4249, %v4248
      %v4273 = vpack.c.b16 %v4251, %v4250
      %v4274 = vpack.c.b16 %v4253, %v4252
      %v4275 = vpack.c.b16 %v4255, %v4254
      %v4276 = vpack.c.b16 %v4257, %v4256
      %v4277 = vpack.c.b16 %v4259, %v4258
      %v4278 = vpack.c.b16 %v4261, %v4260
      %v4279 = vpack.c.b16 %v4263, %v4262
      %v4312 = vunpack.c.l.b16 %v4216
      %v4313 = vunpack.c.l.b16 %v4217
      %v4314 = vunpack.c.l.b16 %v4218
      %v4315 = vunpack.c.l.b16 %v4219
      %v4316 = vunpack.c.l.b16 %v4220
      %v4317 = vunpack.c.l.b16 %v4221
      %v4318 = vunpack.c.l.b16 %v4222
      %v4319 = vunpack.c.l.b16 %v4223
      %v4320 = vunpack.c.l.b16 %v4224
      %v4321 = vunpack.c.l.b16 %v4225
      %v4322 = vunpack.c.l.b16 %v4226
      %v4323 = vunpack.c.l.b16 %v4227
      %v4324 = vunpack.c.l.b16 %v4228
      %v4325 = vunpack.c.l.b16 %v4229
      %v4326 = vunpack.c.l.b16 %v4230
      %v4327 = vunpack.c.l.b16 %v4231
      %v4328 = vpack.c.b16 %v4313, %v4312
      %v4329 = vpack.c.b16 %v4315, %v4314
      %v4330 = vpack.c.b16 %v4317, %v4316
      %v4331 = vpack.c.b16 %v4319, %v4318
      %v4332 = vpack.c.b16 %v4321, %v4320
      %v4333 = vpack.c.b16 %v4323, %v4322
      %v4334 = vpack.c.b16 %v4325, %v4324
      %v4335 = vpack.c.b16 %v4327, %v4326
      %4344 = vmatprep.subr.bf16.mxu0 0
      %4345 = vmatpush1.bf16.msra.mxu0 %v4328
      %4346 = vmatprep.subr.bf16.mxu0 0
      %4347 = vmatpush1.bf16.msra.mxu0 %v4329
      %4348 = vmatprep.subr.bf16.mxu0 0
      %4349 = vmatpush1.bf16.msra.mxu0 %v4330
      %4350 = vmatprep.subr.bf16.mxu0 0
      %4351 = vmatpush1.bf16.msra.mxu0 %v4331
      %4352 = vmatprep.subr.bf16.mxu0 0
      %4353 = vmatpush1.bf16.msra.mxu0 %v4332
      %4354 = vmatprep.subr.bf16.mxu0 0
      %4355 = vmatpush1.bf16.msra.mxu0 %v4333
      %4356 = vmatprep.subr.bf16.mxu0 0
      %4357 = vmatpush1.bf16.msra.mxu0 %v4334
      %4358 = vmatprep.subr.bf16.mxu0 0
      %4359 = vmatpush1.bf16.msra.mxu0 %v4335
      %4360 = vmatprep.subr.bf16.mxu0 0
      %4361 = vmatpush1.bf16.msra.mxu0 0
      %4362 = vmatprep.subr.bf16.mxu0 0
      %4363 = vmatpush1.bf16.msra.mxu0 0
      %4364 = vmatprep.subr.bf16.mxu0 0
      %4365 = vmatpush1.bf16.msra.mxu0 0
      %4366 = vmatprep.subr.bf16.mxu0 0
      %4367 = vmatpush1.bf16.msra.mxu0 0
      %4368 = vmatprep.subr.bf16.mxu0 0
      %4369 = vmatpush1.bf16.msra.mxu0 0
      %4370 = vmatprep.subr.bf16.mxu0 0
      %4371 = vmatpush1.bf16.msra.mxu0 0
      %4372 = vmatprep.subr.bf16.mxu0 0
      %4373 = vmatpush1.bf16.msra.mxu0 0
      %4374 = vmatprep.subr.bf16.mxu0 0
      %4375 = vmatpush1.bf16.msra.mxu0 0
      %4376 = vmatprep.mubr.bf16.mxu0 0
      %4377 = vmatmul.mubr.bf16.gmra.mrb[0].mxu0 %v4264
      %v4378 = vpop.f32.mrb[0].mxu0
      %v4379 = vadd.f32 0.0, %v4378
      %v4380 = vpop.f32.mrb[0].mxu0
      %v4381 = vpop.f32.mrb[0].mxu0
      %v4382 = vadd.f32 0.0, %v4381
      %v4383 = vpop.f32.mrb[0].mxu0
      %4384 = vmatprep.mubr.bf16.mxu0 0
      %4385 = vmatmul.mubr.bf16.gmra.mrb[0].mxu0 %v4265
      %v4386 = vpop.f32.mrb[0].mxu0
      %v4387 = vadd.f32 0.0, %v4386
      %v4388 = vpop.f32.mrb[0].mxu0
      %v4389 = vpop.f32.mrb[0].mxu0
      %v4390 = vadd.f32 0.0, %v4389
      %v4391 = vpop.f32.mrb[0].mxu0
      %4392 = vmatprep.mubr.bf16.mxu0 0
      %4393 = vmatmul.mubr.bf16.gmra.mrb[0].mxu0 %v4266
      %v4394 = vpop.f32.mrb[0].mxu0
      %v4395 = vadd.f32 0.0, %v4394
      %v4396 = vpop.f32.mrb[0].mxu0
      %v4397 = vpop.f32.mrb[0].mxu0
      %v4398 = vadd.f32 0.0, %v4397
      %v4399 = vpop.f32.mrb[0].mxu0
      %4400 = vmatprep.mubr.bf16.mxu0 0
      %4401 = vmatmul.mubr.bf16.gmra.mrb[0].mxu0 %v4267
      %v4402 = vpop.f32.mrb[0].mxu0
      %v4403 = vadd.f32 0.0, %v4402
      %v4404 = vpop.f32.mrb[0].mxu0
      %v4405 = vpop.f32.mrb[0].mxu0
      %v4406 = vadd.f32 0.0, %v4405
      %v4407 = vpop.f32.mrb[0].mxu0
      %4408 = vmatprep.mubr.bf16.mxu0 0
      %4409 = vmatmul.mubr.bf16.gmra.mrb[0].mxu0 %v4268
      %v4410 = vpop.f32.mrb[0].mxu0
      %v4411 = vadd.f32 0.0, %v4410
      %v4412 = vpop.f32.mrb[0].mxu0
      %v4413 = vpop.f32.mrb[0].mxu0
      %v4414 = vadd.f32 0.0, %v4413
      %v4415 = vpop.f32.mrb[0].mxu0
      %4416 = vmatprep.mubr.bf16.mxu0 0
      %4417 = vmatmul.mubr.bf16.gmra.mrb[0].mxu0 %v4269
      %v4418 = vpop.f32.mrb[0].mxu0
      %v4419 = vadd.f32 0.0, %v4418
      %v4420 = vpop.f32.mrb[0].mxu0
      %v4421 = vpop.f32.mrb[0].mxu0
      %v4422 = vadd.f32 0.0, %v4421
      %v4423 = vpop.f32.mrb[0].mxu0
      %4424 = vmatprep.mubr.bf16.mxu0 0
      %4425 = vmatmul.mubr.bf16.gmra.mrb[0].mxu0 %v4270
      %v4426 = vpop.f32.mrb[0].mxu0
      %v4427 = vadd.f32 0.0, %v4426
      %v4428 = vpop.f32.mrb[0].mxu0
      %v4429 = vpop.f32.mrb[0].mxu0
      %v4430 = vadd.f32 0.0, %v4429
      %v4431 = vpop.f32.mrb[0].mxu0
      %4432 = vmatprep.mubr.bf16.mxu0 0
      %4433 = vmatmul.mubr.bf16.gmra.mrb[0].mxu0 %v4271
      %v4434 = vpop.f32.mrb[0].mxu0
      %v4435 = vadd.f32 0.0, %v4434
      %v4436 = vpop.f32.mrb[0].mxu0
      %v4437 = vpop.f32.mrb[0].mxu0
      %v4438 = vadd.f32 0.0, %v4437
      %v4439 = vpop.f32.mrb[0].mxu0
      %4440 = vmatprep.mubr.bf16.mxu0 0
      %4441 = vmatmul.mubr.bf16.gmra.mrb[0].mxu0 %v4272
      %v4442 = vpop.f32.mrb[0].mxu0
      %v4443 = vadd.f32 0.0, %v4442
      %v4444 = vpop.f32.mrb[0].mxu0
      %v4445 = vpop.f32.mrb[0].mxu0
      %v4446 = vadd.f32 0.0, %v4445
      %v4447 = vpop.f32.mrb[0].mxu0
      %4448 = vmatprep.mubr.bf16.mxu0 0
      %4449 = vmatmul.mubr.bf16.gmra.mrb[0].mxu0 %v4273
      %v4450 = vpop.f32.mrb[0].mxu0
      %v4451 = vadd.f32 0.0, %v4450
      %v4452 = vpop.f32.mrb[0].mxu0
      %v4453 = vpop.f32.mrb[0].mxu0
      %v4454 = vadd.f32 0.0, %v4453
      %v4455 = vpop.f32.mrb[0].mxu0
      %4456 = vmatprep.mubr.bf16.mxu0 0
      %4457 = vmatmul.mubr.bf16.gmra.mrb[0].mxu0 %v4274
      %v4458 = vpop.f32.mrb[0].mxu0
      %v4459 = vadd.f32 0.0, %v4458
      %v4460 = vpop.f32.mrb[0].mxu0
      %v4461 = vpop.f32.mrb[0].mxu0
      %v4462 = vadd.f32 0.0, %v4461
      %v4463 = vpop.f32.mrb[0].mxu0
      %4464 = vmatprep.mubr.bf16.mxu0 0
      %4465 = vmatmul.mubr.bf16.gmra.mrb[0].mxu0 %v4275
      %v4466 = vpop.f32.mrb[0].mxu0
      %v4467 = vadd.f32 0.0, %v4466
      %v4468 = vpop.f32.mrb[0].mxu0
      %v4469 = vpop.f32.mrb[0].mxu0
      %v4470 = vadd.f32 0.0, %v4469
      %v4471 = vpop.f32.mrb[0].mxu0
      %4472 = vmatprep.mubr.bf16.mxu0 0
      %4473 = vmatmul.mubr.bf16.gmra.mrb[0].mxu0 %v4276
      %v4474 = vpop.f32.mrb[0].mxu0
      %v4475 = vadd.f32 0.0, %v4474
      %v4476 = vpop.f32.mrb[0].mxu0
      %v4477 = vpop.f32.mrb[0].mxu0
      %v4478 = vadd.f32 0.0, %v4477
      %v4479 = vpop.f32.mrb[0].mxu0
      %4480 = vmatprep.mubr.bf16.mxu0 0
      %4481 = vmatmul.mubr.bf16.gmra.mrb[0].mxu0 %v4277
      %v4482 = vpop.f32.mrb[0].mxu0
      %v4483 = vadd.f32 0.0, %v4482
      %v4484 = vpop.f32.mrb[0].mxu0
      %v4485 = vpop.f32.mrb[0].mxu0
      %v4486 = vadd.f32 0.0, %v4485
      %v4487 = vpop.f32.mrb[0].mxu0
      %4488 = vmatprep.mubr.bf16.mxu0 0
      %4489 = vmatmul.mubr.bf16.gmra.mrb[0].mxu0 %v4278
      %v4490 = vpop.f32.mrb[0].mxu0
      %v4491 = vadd.f32 0.0, %v4490
      %v4492 = vpop.f32.mrb[0].mxu0
      %v4493 = vpop.f32.mrb[0].mxu0
      %v4494 = vadd.f32 0.0, %v4493
      %v4495 = vpop.f32.mrb[0].mxu0
      %4496 = vmatprep.mubr.bf16.mxu0 0
      %4497 = vmatmul.mubr.bf16.gmra.mrb[0].mxu0 %v4279
      %v4498 = vpop.f32.mrb[0].mxu0
      %v4499 = vadd.f32 0.0, %v4498
      %v4500 = vpop.f32.mrb[0].mxu0
      %v4501 = vpop.f32.mrb[0].mxu0
      %v4502 = vadd.f32 0.0, %v4501
      %v4503 = vpop.f32.mrb[0].mxu0
      %4504 = vdwg.mxu0
      %v4505 = vadd.f32 %v3751, %v4379
      %v4506 = vadd.f32 %v3752, %v4382
      %v4507 = vadd.f32 %v3753, %v4387
      %v4508 = vadd.f32 %v3754, %v4390
      %v4509 = vadd.f32 %v3755, %v4395
      %v4510 = vadd.f32 %v3756, %v4398
      %v4511 = vadd.f32 %v3757, %v4403
      %v4512 = vadd.f32 %v3758, %v4406
      %v4513 = vadd.f32 %v3759, %v4411
      %v4514 = vadd.f32 %v3760, %v4414
      %v4515 = vadd.f32 %v3761, %v4419
      %v4516 = vadd.f32 %v3762, %v4422
      %v4517 = vadd.f32 %v3763, %v4427
      %v4518 = vadd.f32 %v3764, %v4430
      %v4519 = vadd.f32 %v3765, %v4435
      %v4520 = vadd.f32 %v3766, %v4438
      %v4521 = vadd.f32 %v3767, %v4443
      %v4522 = vadd.f32 %v3768, %v4446
      %v4523 = vadd.f32 %v3769, %v4451
      %v4524 = vadd.f32 %v3770, %v4454
      %v4525 = vadd.f32 %v3771, %v4459
      %v4526 = vadd.f32 %v3772, %v4462
      %v4527 = vadd.f32 %v3773, %v4467
      %v4528 = vadd.f32 %v3774, %v4470
      %v4529 = vadd.f32 %v3775, %v4475
      %v4530 = vadd.f32 %v3776, %v4478
      %v4531 = vadd.f32 %v3777, %v4483
      %v4532 = vadd.f32 %v3778, %v4486
      %v4533 = vadd.f32 %v3779, %v4491
      %v4534 = vadd.f32 %v3780, %v4494
      %v4535 = vadd.f32 %v3781, %v4499
      %v4536 = vadd.f32 %v3782, %v4502
      %v4537 = vld [vmem:[%s3396] sm:$0xe]
      %v4538 = vld [vmem:[%s3396 + $0xc] sm:$0xe]
      %v4539 = vld [vmem:[%s3396 + $0x18] sm:$0xe]
      %v4540 = vld [vmem:[%s3396 + $0x24] sm:$0xe]
      %v4541 = vld [vmem:[%s3396 + $0x30] sm:$0xe]
      %v4542 = vld [vmem:[%s3396 + $0x3c] sm:$0xe]
      %v4543 = vld [vmem:[%s3396 + $0x48] sm:$0xe]
      %v4544 = vld [vmem:[%s3396 + $0x54] sm:$0xe]
      %v4545 = vld [vmem:[%s3396 + $0x60] sm:$0xe]
      %v4546 = vld [vmem:[%s3396 + $0x6c] sm:$0xe]
      %v4547 = vld [vmem:[%s3396 + $0x78] sm:$0xe]
      %v4548 = vld [vmem:[%s3396 + $0x84] sm:$0xe]
      %v4549 = vld [vmem:[%s3396 + $0x90] sm:$0xe]
      %v4550 = vld [vmem:[%s3396 + $0x9c] sm:$0xe]
      %v4551 = vld [vmem:[%s3396 + $0xa8] sm:$0xe]
      %v4552 = vld [vmem:[%s3396 + $0xb4] sm:$0xe]
      %v4601 = vrot.slane %v4537, 5
      %v4602 = vrot.slane %v4601, 4
      %v4603 = vrot.slane %v3784, 5
      %v4604 = vsel %vm1322, %v4602, %v4603
      %v4605 = vrot.slane %v4603, 4
      %v4606 = vrot.slane %v3785, 5
      %v4607 = vsel %vm1322, %v4605, %v4606
      %v4608 = vrot.slane %v4538, 5
      %v4609 = vrot.slane %v4608, 4
      %v4610 = vrot.slane %v3787, 5
      %v4611 = vsel %vm1322, %v4609, %v4610
      %v4612 = vrot.slane %v4610, 4
      %v4613 = vrot.slane %v3788, 5
      %v4614 = vsel %vm1322, %v4612, %v4613
      %v4615 = vrot.slane %v4539, 5
      %v4616 = vrot.slane %v4615, 4
      %v4617 = vrot.slane %v3790, 5
      %v4618 = vsel %vm1322, %v4616, %v4617
      %v4619 = vrot.slane %v4617, 4
      %v4620 = vrot.slane %v3791, 5
      %v4621 = vsel %vm1322, %v4619, %v4620
      %v4622 = vrot.slane %v4540, 5
      %v4623 = vrot.slane %v4622, 4
      %v4624 = vrot.slane %v3793, 5
      %v4625 = vsel %vm1322, %v4623, %v4624
      %v4626 = vrot.slane %v4624, 4
      %v4627 = vrot.slane %v3794, 5
      %v4628 = vsel %vm1322, %v4626, %v4627
      %v4629 = vrot.slane %v4541, 5
      %v4630 = vrot.slane %v4629, 4
      %v4631 = vrot.slane %v3796, 5
      %v4632 = vsel %vm1322, %v4630, %v4631
      %v4633 = vrot.slane %v4631, 4
      %v4634 = vrot.slane %v3797, 5
      %v4635 = vsel %vm1322, %v4633, %v4634
      %v4636 = vrot.slane %v4542, 5
      %v4637 = vrot.slane %v4636, 4
      %v4638 = vrot.slane %v3799, 5
      %v4639 = vsel %vm1322, %v4637, %v4638
      %v4640 = vrot.slane %v4638, 4
      %v4641 = vrot.slane %v3800, 5
      %v4642 = vsel %vm1322, %v4640, %v4641
      %v4643 = vrot.slane %v4543, 5
      %v4644 = vrot.slane %v4643, 4
      %v4645 = vrot.slane %v3802, 5
      %v4646 = vsel %vm1322, %v4644, %v4645
      %v4647 = vrot.slane %v4645, 4
      %v4648 = vrot.slane %v3803, 5
      %v4649 = vsel %vm1322, %v4647, %v4648
      %v4650 = vrot.slane %v4544, 5
      %v4651 = vrot.slane %v4650, 4
      %v4652 = vrot.slane %v3805, 5
      %v4653 = vsel %vm1322, %v4651, %v4652
      %v4654 = vrot.slane %v4652, 4
      %v4655 = vrot.slane %v3806, 5
      %v4656 = vsel %vm1322, %v4654, %v4655
      %v4657 = vrot.slane %v4545, 5
      %v4658 = vrot.slane %v4657, 4
      %v4659 = vrot.slane %v3808, 5
      %v4660 = vsel %vm1322, %v4658, %v4659
      %v4661 = vrot.slane %v4659, 4
      %v4662 = vrot.slane %v3809, 5
      %v4663 = vsel %vm1322, %v4661, %v4662
      %v4664 = vrot.slane %v4546, 5
      %v4665 = vrot.slane %v4664, 4
      %v4666 = vrot.slane %v3811, 5
      %v4667 = vsel %vm1322, %v4665, %v4666
      %v4668 = vrot.slane %v4666, 4
      %v4669 = vrot.slane %v3812, 5
      %v4670 = vsel %vm1322, %v4668, %v4669
      %v4671 = vrot.slane %v4547, 5
      %v4672 = vrot.slane %v4671, 4
      %v4673 = vrot.slane %v3814, 5
      %v4674 = vsel %vm1322, %v4672, %v4673
      %v4675 = vrot.slane %v4673, 4
      %v4676 = vrot.slane %v3815, 5
      %v4677 = vsel %vm1322, %v4675, %v4676
      %v4678 = vrot.slane %v4548, 5
      %v4679 = vrot.slane %v4678, 4
      %v4680 = vrot.slane %v3817, 5
      %v4681 = vsel %vm1322, %v4679, %v4680
      %v4682 = vrot.slane %v4680, 4
      %v4683 = vrot.slane %v3818, 5
      %v4684 = vsel %vm1322, %v4682, %v4683
      %v4685 = vrot.slane %v4549, 5
      %v4686 = vrot.slane %v4685, 4
      %v4687 = vrot.slane %v3820, 5
      %v4688 = vsel %vm1322, %v4686, %v4687
      %v4689 = vrot.slane %v4687, 4
      %v4690 = vrot.slane %v3821, 5
      %v4691 = vsel %vm1322, %v4689, %v4690
      %v4692 = vrot.slane %v4550, 5
      %v4693 = vrot.slane %v4692, 4
      %v4694 = vrot.slane %v3823, 5
      %v4695 = vsel %vm1322, %v4693, %v4694
      %v4696 = vrot.slane %v4694, 4
      %v4697 = vrot.slane %v3824, 5
      %v4698 = vsel %vm1322, %v4696, %v4697
      %v4699 = vrot.slane %v4551, 5
      %v4700 = vrot.slane %v4699, 4
      %v4701 = vrot.slane %v3826, 5
      %v4702 = vsel %vm1322, %v4700, %v4701
      %v4703 = vrot.slane %v4701, 4
      %v4704 = vrot.slane %v3827, 5
      %v4705 = vsel %vm1322, %v4703, %v4704
      %v4706 = vrot.slane %v4552, 5
      %v4707 = vrot.slane %v4706, 4
      %v4708 = vrot.slane %v3829, 5
      %v4709 = vsel %vm1322, %v4707, %v4708
      %v4710 = vrot.slane %v4708, 4
      %v4711 = vrot.slane %v3830, 5
      %v4712 = vsel %vm1322, %v4710, %v4711
      %s4713 = scalar_lea.vmem %s212, 512
      %v4714 = vld [vmem:[%s4713] sm:$0xf]
      %v4715 = vld [vmem:[%s4713 + $0x4] sm:$0xf]
      %v4716 = vld [vmem:[%s4713 + $0x8] sm:$0xf]
      %v4717 = vld [vmem:[%s4713 + $0xc] sm:$0xf]
      %v4718 = vld [vmem:[%s4713 + $0x10] sm:$0xf]
      %v4719 = vld [vmem:[%s4713 + $0x14] sm:$0xf]
      %v4720 = vld [vmem:[%s4713 + $0x18] sm:$0xf]
      %v4721 = vld [vmem:[%s4713 + $0x1c] sm:$0xf]
      %v4722 = vld [vmem:[%s4713 + $0x20] sm:$0xf]
      %v4723 = vld [vmem:[%s4713 + $0x24] sm:$0xf]
      %v4724 = vld [vmem:[%s4713 + $0x28] sm:$0xf]
      %v4725 = vld [vmem:[%s4713 + $0x2c] sm:$0xf]
      %v4726 = vld [vmem:[%s4713 + $0x30] sm:$0xf]
      %v4727 = vld [vmem:[%s4713 + $0x34] sm:$0xf]
      %v4728 = vld [vmem:[%s4713 + $0x38] sm:$0xf]
      %v4729 = vld [vmem:[%s4713 + $0x3c] sm:$0xf]
      %v4730 = vunpack.c.l.b16 %v4604
      %v4731 = vunpack.c.l.b16 %v4607
      %v4732 = vunpack.c.l.b16 %v4611
      %v4733 = vunpack.c.l.b16 %v4614
      %v4734 = vunpack.c.l.b16 %v4618
      %v4735 = vunpack.c.l.b16 %v4621
      %v4736 = vunpack.c.l.b16 %v4625
      %v4737 = vunpack.c.l.b16 %v4628
      %v4738 = vunpack.c.l.b16 %v4632
      %v4739 = vunpack.c.l.b16 %v4635
      %v4740 = vunpack.c.l.b16 %v4639
      %v4741 = vunpack.c.l.b16 %v4642
      %v4742 = vunpack.c.l.b16 %v4646
      %v4743 = vunpack.c.l.b16 %v4649
      %v4744 = vunpack.c.l.b16 %v4653
      %v4745 = vunpack.c.l.b16 %v4656
      %v4746 = vunpack.c.l.b16 %v4660
      %v4747 = vunpack.c.l.b16 %v4663
      %v4748 = vunpack.c.l.b16 %v4667
      %v4749 = vunpack.c.l.b16 %v4670
      %v4750 = vunpack.c.l.b16 %v4674
      %v4751 = vunpack.c.l.b16 %v4677
      %v4752 = vunpack.c.l.b16 %v4681
      %v4753 = vunpack.c.l.b16 %v4684
      %v4754 = vunpack.c.l.b16 %v4688
      %v4755 = vunpack.c.l.b16 %v4691
      %v4756 = vunpack.c.l.b16 %v4695
      %v4757 = vunpack.c.l.b16 %v4698
      %v4758 = vunpack.c.l.b16 %v4702
      %v4759 = vunpack.c.l.b16 %v4705
      %v4760 = vunpack.c.l.b16 %v4709
      %v4761 = vunpack.c.l.b16 %v4712
      %v4762 = vpack.c.b16 %v4731, %v4730
      %v4763 = vpack.c.b16 %v4733, %v4732
      %v4764 = vpack.c.b16 %v4735, %v4734
      %v4765 = vpack.c.b16 %v4737, %v4736
      %v4766 = vpack.c.b16 %v4739, %v4738
      %v4767 = vpack.c.b16 %v4741, %v4740
      %v4768 = vpack.c.b16 %v4743, %v4742
      %v4769 = vpack.c.b16 %v4745, %v4744
      %v4770 = vpack.c.b16 %v4747, %v4746
      %v4771 = vpack.c.b16 %v4749, %v4748
      %v4772 = vpack.c.b16 %v4751, %v4750
      %v4773 = vpack.c.b16 %v4753, %v4752
      %v4774 = vpack.c.b16 %v4755, %v4754
      %v4775 = vpack.c.b16 %v4757, %v4756
      %v4776 = vpack.c.b16 %v4759, %v4758
      %v4777 = vpack.c.b16 %v4761, %v4760
      %v4810 = vunpack.c.l.b16 %v4714
      %v4811 = vunpack.c.l.b16 %v4715
      %v4812 = vunpack.c.l.b16 %v4716
      %v4813 = vunpack.c.l.b16 %v4717
      %v4814 = vunpack.c.l.b16 %v4718
      %v4815 = vunpack.c.l.b16 %v4719
      %v4816 = vunpack.c.l.b16 %v4720
      %v4817 = vunpack.c.l.b16 %v4721
      %v4818 = vunpack.c.l.b16 %v4722
      %v4819 = vunpack.c.l.b16 %v4723
      %v4820 = vunpack.c.l.b16 %v4724
      %v4821 = vunpack.c.l.b16 %v4725
      %v4822 = vunpack.c.l.b16 %v4726
      %v4823 = vunpack.c.l.b16 %v4727
      %v4824 = vunpack.c.l.b16 %v4728
      %v4825 = vunpack.c.l.b16 %v4729
      %v4826 = vpack.c.b16 %v4811, %v4810
      %v4827 = vpack.c.b16 %v4813, %v4812
      %v4828 = vpack.c.b16 %v4815, %v4814
      %v4829 = vpack.c.b16 %v4817, %v4816
      %v4830 = vpack.c.b16 %v4819, %v4818
      %v4831 = vpack.c.b16 %v4821, %v4820
      %v4832 = vpack.c.b16 %v4823, %v4822
      %v4833 = vpack.c.b16 %v4825, %v4824
      %4842 = vmatprep.subr.bf16.mxu0 0
      %4843 = vmatpush1.bf16.msra.mxu0 %v4826
      %4844 = vmatprep.subr.bf16.mxu0 0
      %4845 = vmatpush1.bf16.msra.mxu0 %v4827
      %4846 = vmatprep.subr.bf16.mxu0 0
      %4847 = vmatpush1.bf16.msra.mxu0 %v4828
      %4848 = vmatprep.subr.bf16.mxu0 0
      %4849 = vmatpush1.bf16.msra.mxu0 %v4829
      %4850 = vmatprep.subr.bf16.mxu0 0
      %4851 = vmatpush1.bf16.msra.mxu0 %v4830
      %4852 = vmatprep.subr.bf16.mxu0 0
      %4853 = vmatpush1.bf16.msra.mxu0 %v4831
      %4854 = vmatprep.subr.bf16.mxu0 0
      %4855 = vmatpush1.bf16.msra.mxu0 %v4832
      %4856 = vmatprep.subr.bf16.mxu0 0
      %4857 = vmatpush1.bf16.msra.mxu0 %v4833
      %4858 = vmatprep.subr.bf16.mxu0 0
      %4859 = vmatpush1.bf16.msra.mxu0 0
      %4860 = vmatprep.subr.bf16.mxu0 0
      %4861 = vmatpush1.bf16.msra.mxu0 0
      %4862 = vmatprep.subr.bf16.mxu0 0
      %4863 = vmatpush1.bf16.msra.mxu0 0
      %4864 = vmatprep.subr.bf16.mxu0 0
      %4865 = vmatpush1.bf16.msra.mxu0 0
      %4866 = vmatprep.subr.bf16.mxu0 0
      %4867 = vmatpush1.bf16.msra.mxu0 0
      %4868 = vmatprep.subr.bf16.mxu0 0
      %4869 = vmatpush1.bf16.msra.mxu0 0
      %4870 = vmatprep.subr.bf16.mxu0 0
      %4871 = vmatpush1.bf16.msra.mxu0 0
      %4872 = vmatprep.subr.bf16.mxu0 0
      %4873 = vmatpush1.bf16.msra.mxu0 0
      %4874 = vmatprep.mubr.bf16.mxu0 0
      %4875 = vmatmul.mubr.bf16.gmra.mrb[0].mxu0 %v4762
      %v4876 = vpop.f32.mrb[0].mxu0
      %v4877 = vadd.f32 0.0, %v4876
      %v4878 = vpop.f32.mrb[0].mxu0
      %v4879 = vpop.f32.mrb[0].mxu0
      %v4880 = vadd.f32 0.0, %v4879
      %v4881 = vpop.f32.mrb[0].mxu0
      %4882 = vmatprep.mubr.bf16.mxu0 0
      %4883 = vmatmul.mubr.bf16.gmra.mrb[0].mxu0 %v4763
      %v4884 = vpop.f32.mrb[0].mxu0
      %v4885 = vadd.f32 0.0, %v4884
      %v4886 = vpop.f32.mrb[0].mxu0
      %v4887 = vpop.f32.mrb[0].mxu0
      %v4888 = vadd.f32 0.0, %v4887
      %v4889 = vpop.f32.mrb[0].mxu0
      %4890 = vmatprep.mubr.bf16.mxu0 0
      %4891 = vmatmul.mubr.bf16.gmra.mrb[0].mxu0 %v4764
      %v4892 = vpop.f32.mrb[0].mxu0
      %v4893 = vadd.f32 0.0, %v4892
      %v4894 = vpop.f32.mrb[0].mxu0
      %v4895 = vpop.f32.mrb[0].mxu0
      %v4896 = vadd.f32 0.0, %v4895
      %v4897 = vpop.f32.mrb[0].mxu0
      %4898 = vmatprep.mubr.bf16.mxu0 0
      %4899 = vmatmul.mubr.bf16.gmra.mrb[0].mxu0 %v4765
      %v4900 = vpop.f32.mrb[0].mxu0
      %v4901 = vadd.f32 0.0, %v4900
      %v4902 = vpop.f32.mrb[0].mxu0
      %v4903 = vpop.f32.mrb[0].mxu0
      %v4904 = vadd.f32 0.0, %v4903
      %v4905 = vpop.f32.mrb[0].mxu0
      %4906 = vmatprep.mubr.bf16.mxu0 0
      %4907 = vmatmul.mubr.bf16.gmra.mrb[0].mxu0 %v4766
      %v4908 = vpop.f32.mrb[0].mxu0
      %v4909 = vadd.f32 0.0, %v4908
      %v4910 = vpop.f32.mrb[0].mxu0
      %v4911 = vpop.f32.mrb[0].mxu0
      %v4912 = vadd.f32 0.0, %v4911
      %v4913 = vpop.f32.mrb[0].mxu0
      %4914 = vmatprep.mubr.bf16.mxu0 0
      %4915 = vmatmul.mubr.bf16.gmra.mrb[0].mxu0 %v4767
      %v4916 = vpop.f32.mrb[0].mxu0
      %v4917 = vadd.f32 0.0, %v4916
      %v4918 = vpop.f32.mrb[0].mxu0
      %v4919 = vpop.f32.mrb[0].mxu0
      %v4920 = vadd.f32 0.0, %v4919
      %v4921 = vpop.f32.mrb[0].mxu0
      %4922 = vmatprep.mubr.bf16.mxu0 0
      %4923 = vmatmul.mubr.bf16.gmra.mrb[0].mxu0 %v4768
      %v4924 = vpop.f32.mrb[0].mxu0
      %v4925 = vadd.f32 0.0, %v4924
      %v4926 = vpop.f32.mrb[0].mxu0
      %v4927 = vpop.f32.mrb[0].mxu0
      %v4928 = vadd.f32 0.0, %v4927
      %v4929 = vpop.f32.mrb[0].mxu0
      %4930 = vmatprep.mubr.bf16.mxu0 0
      %4931 = vmatmul.mubr.bf16.gmra.mrb[0].mxu0 %v4769
      %v4932 = vpop.f32.mrb[0].mxu0
      %v4933 = vadd.f32 0.0, %v4932
      %v4934 = vpop.f32.mrb[0].mxu0
      %v4935 = vpop.f32.mrb[0].mxu0
      %v4936 = vadd.f32 0.0, %v4935
      %v4937 = vpop.f32.mrb[0].mxu0
      %4938 = vmatprep.mubr.bf16.mxu0 0
      %4939 = vmatmul.mubr.bf16.gmra.mrb[0].mxu0 %v4770
      %v4940 = vpop.f32.mrb[0].mxu0
      %v4941 = vadd.f32 0.0, %v4940
      %v4942 = vpop.f32.mrb[0].mxu0
      %v4943 = vpop.f32.mrb[0].mxu0
      %v4944 = vadd.f32 0.0, %v4943
      %v4945 = vpop.f32.mrb[0].mxu0
      %4946 = vmatprep.mubr.bf16.mxu0 0
      %4947 = vmatmul.mubr.bf16.gmra.mrb[0].mxu0 %v4771
      %v4948 = vpop.f32.mrb[0].mxu0
      %v4949 = vadd.f32 0.0, %v4948
      %v4950 = vpop.f32.mrb[0].mxu0
      %v4951 = vpop.f32.mrb[0].mxu0
      %v4952 = vadd.f32 0.0, %v4951
      %v4953 = vpop.f32.mrb[0].mxu0
      %4954 = vmatprep.mubr.bf16.mxu0 0
      %4955 = vmatmul.mubr.bf16.gmra.mrb[0].mxu0 %v4772
      %v4956 = vpop.f32.mrb[0].mxu0
      %v4957 = vadd.f32 0.0, %v4956
      %v4958 = vpop.f32.mrb[0].mxu0
      %v4959 = vpop.f32.mrb[0].mxu0
      %v4960 = vadd.f32 0.0, %v4959
      %v4961 = vpop.f32.mrb[0].mxu0
      %4962 = vmatprep.mubr.bf16.mxu0 0
      %4963 = vmatmul.mubr.bf16.gmra.mrb[0].mxu0 %v4773
      %v4964 = vpop.f32.mrb[0].mxu0
      %v4965 = vadd.f32 0.0, %v4964
      %v4966 = vpop.f32.mrb[0].mxu0
      %v4967 = vpop.f32.mrb[0].mxu0
      %v4968 = vadd.f32 0.0, %v4967
      %v4969 = vpop.f32.mrb[0].mxu0
      %4970 = vmatprep.mubr.bf16.mxu0 0
      %4971 = vmatmul.mubr.bf16.gmra.mrb[0].mxu0 %v4774
      %v4972 = vpop.f32.mrb[0].mxu0
      %v4973 = vadd.f32 0.0, %v4972
      %v4974 = vpop.f32.mrb[0].mxu0
      %v4975 = vpop.f32.mrb[0].mxu0
      %v4976 = vadd.f32 0.0, %v4975
      %v4977 = vpop.f32.mrb[0].mxu0
      %4978 = vmatprep.mubr.bf16.mxu0 0
      %4979 = vmatmul.mubr.bf16.gmra.mrb[0].mxu0 %v4775
      %v4980 = vpop.f32.mrb[0].mxu0
      %v4981 = vadd.f32 0.0, %v4980
      %v4982 = vpop.f32.mrb[0].mxu0
      %v4983 = vpop.f32.mrb[0].mxu0
      %v4984 = vadd.f32 0.0, %v4983
      %v4985 = vpop.f32.mrb[0].mxu0
      %4986 = vmatprep.mubr.bf16.mxu0 0
      %4987 = vmatmul.mubr.bf16.gmra.mrb[0].mxu0 %v4776
      %v4988 = vpop.f32.mrb[0].mxu0
      %v4989 = vadd.f32 0.0, %v4988
      %v4990 = vpop.f32.mrb[0].mxu0
      %v4991 = vpop.f32.mrb[0].mxu0
      %v4992 = vadd.f32 0.0, %v4991
      %v4993 = vpop.f32.mrb[0].mxu0
      %4994 = vmatprep.mubr.bf16.mxu0 0
      %4995 = vmatmul.mubr.bf16.gmra.mrb[0].mxu0 %v4777
      %v4996 = vpop.f32.mrb[0].mxu0
      %v4997 = vadd.f32 0.0, %v4996
      %v4998 = vpop.f32.mrb[0].mxu0
      %v4999 = vpop.f32.mrb[0].mxu0
      %v5000 = vadd.f32 0.0, %v4999
      %v5001 = vpop.f32.mrb[0].mxu0
      %5002 = vdwg.mxu0
      %v5003 = vadd.f32 %v4505, %v4877
      %v5004 = vadd.f32 %v4506, %v4880
      %v5005 = vadd.f32 %v4507, %v4885
      %v5006 = vadd.f32 %v4508, %v4888
      %v5007 = vadd.f32 %v4509, %v4893
      %v5008 = vadd.f32 %v4510, %v4896
      %v5009 = vadd.f32 %v4511, %v4901
      %v5010 = vadd.f32 %v4512, %v4904
      %v5011 = vadd.f32 %v4513, %v4909
      %v5012 = vadd.f32 %v4514, %v4912
      %v5013 = vadd.f32 %v4515, %v4917
      %v5014 = vadd.f32 %v4516, %v4920
      %v5015 = vadd.f32 %v4517, %v4925
      %v5016 = vadd.f32 %v4518, %v4928
      %v5017 = vadd.f32 %v4519, %v4933
      %v5018 = vadd.f32 %v4520, %v4936
      %v5019 = vadd.f32 %v4521, %v4941
      %v5020 = vadd.f32 %v4522, %v4944
      %v5021 = vadd.f32 %v4523, %v4949
      %v5022 = vadd.f32 %v4524, %v4952
      %v5023 = vadd.f32 %v4525, %v4957
      %v5024 = vadd.f32 %v4526, %v4960
      %v5025 = vadd.f32 %v4527, %v4965
      %v5026 = vadd.f32 %v4528, %v4968
      %v5027 = vadd.f32 %v4529, %v4973
      %v5028 = vadd.f32 %v4530, %v4976
      %v5029 = vadd.f32 %v4531, %v4981
      %v5030 = vadd.f32 %v4532, %v4984
      %v5031 = vadd.f32 %v4533, %v4989
      %v5032 = vadd.f32 %v4534, %v4992
      %v5033 = vadd.f32 %v4535, %v4997
      %v5034 = vadd.f32 %v4536, %v5000
      %v5035 = vld [vmem:[%s216] sm:$0x1]
      %v5036 = vlaneseq
      %v5037 = vshrl.u32 %v5036, 7
      %v5038 = vsub.s32 0, %v5037
      %v5039 = vrot.slane %v5035, %v5038
      %v5040 = vmul.f32 %v5003, %v5039
      %v5041 = vmul.f32 %v5004, %v5039
      %v5042 = vmul.f32 %v5005, %v5039
      %v5043 = vmul.f32 %v5006, %v5039
      %v5044 = vmul.f32 %v5007, %v5039
      %v5045 = vmul.f32 %v5008, %v5039
      %v5046 = vmul.f32 %v5009, %v5039
      %v5047 = vmul.f32 %v5010, %v5039
      %v5048 = vmul.f32 %v5011, %v5039
      %v5049 = vmul.f32 %v5012, %v5039
      %v5050 = vmul.f32 %v5013, %v5039
      %v5051 = vmul.f32 %v5014, %v5039
      %v5052 = vmul.f32 %v5015, %v5039
      %v5053 = vmul.f32 %v5016, %v5039
      %v5054 = vmul.f32 %v5017, %v5039
      %v5055 = vmul.f32 %v5018, %v5039
      %v5056 = vmul.f32 %v5019, %v5039
      %v5057 = vmul.f32 %v5020, %v5039
      %v5058 = vmul.f32 %v5021, %v5039
      %v5059 = vmul.f32 %v5022, %v5039
      %v5060 = vmul.f32 %v5023, %v5039
      %v5061 = vmul.f32 %v5024, %v5039
      %v5062 = vmul.f32 %v5025, %v5039
      %v5063 = vmul.f32 %v5026, %v5039
      %v5064 = vmul.f32 %v5027, %v5039
      %v5065 = vmul.f32 %v5028, %v5039
      %v5066 = vmul.f32 %v5029, %v5039
      %v5067 = vmul.f32 %v5030, %v5039
      %v5068 = vmul.f32 %v5031, %v5039
      %v5069 = vmul.f32 %v5032, %v5039
      %v5070 = vmul.f32 %v5033, %v5039
      %v5071 = vmul.f32 %v5034, %v5039
      %v5072 = vld [vmem:[%s216 + $0x1] sm:$0x1]
      %v5073 = vlaneseq
      %v5074 = vshrl.u32 %v5073, 7
      %v5075 = vsub.s32 0, %v5074
      %v5076 = vrot.slane %v5072, %v5075
      %v5077 = vadd.f32 %v5040, %v5076
      %v5078 = vadd.f32 %v5041, %v5076
      %v5079 = vadd.f32 %v5042, %v5076
      %v5080 = vadd.f32 %v5043, %v5076
      %v5081 = vadd.f32 %v5044, %v5076
      %v5082 = vadd.f32 %v5045, %v5076
      %v5083 = vadd.f32 %v5046, %v5076
      %v5084 = vadd.f32 %v5047, %v5076
      %v5085 = vadd.f32 %v5048, %v5076
      %v5086 = vadd.f32 %v5049, %v5076
      %v5087 = vadd.f32 %v5050, %v5076
      %v5088 = vadd.f32 %v5051, %v5076
      %v5089 = vadd.f32 %v5052, %v5076
      %v5090 = vadd.f32 %v5053, %v5076
      %v5091 = vadd.f32 %v5054, %v5076
      %v5092 = vadd.f32 %v5055, %v5076
      %v5093 = vadd.f32 %v5056, %v5076
      %v5094 = vadd.f32 %v5057, %v5076
      %v5095 = vadd.f32 %v5058, %v5076
      %v5096 = vadd.f32 %v5059, %v5076
      %v5097 = vadd.f32 %v5060, %v5076
      %v5098 = vadd.f32 %v5061, %v5076
      %v5099 = vadd.f32 %v5062, %v5076
      %v5100 = vadd.f32 %v5063, %v5076
      %v5101 = vadd.f32 %v5064, %v5076
      %v5102 = vadd.f32 %v5065, %v5076
      %v5103 = vadd.f32 %v5066, %v5076
      %v5104 = vadd.f32 %v5067, %v5076
      %v5105 = vadd.f32 %v5068, %v5076
      %v5106 = vadd.f32 %v5069, %v5076
      %v5107 = vadd.f32 %v5070, %v5076
      %v5108 = vadd.f32 %v5071, %v5076
      %v5109 = vmax.f32 %v5077, 0.0
      %v5110 = vmax.f32 %v5078, 0.0
      %v5111 = vmax.f32 %v5079, 0.0
      %v5112 = vmax.f32 %v5080, 0.0
      %v5113 = vmax.f32 %v5081, 0.0
      %v5114 = vmax.f32 %v5082, 0.0
      %v5115 = vmax.f32 %v5083, 0.0
      %v5116 = vmax.f32 %v5084, 0.0
      %v5117 = vmax.f32 %v5085, 0.0
      %v5118 = vmax.f32 %v5086, 0.0
      %v5119 = vmax.f32 %v5087, 0.0
      %v5120 = vmax.f32 %v5088, 0.0
      %v5121 = vmax.f32 %v5089, 0.0
      %v5122 = vmax.f32 %v5090, 0.0
      %v5123 = vmax.f32 %v5091, 0.0
      %v5124 = vmax.f32 %v5092, 0.0
      %v5125 = vmax.f32 %v5093, 0.0
      %v5126 = vmax.f32 %v5094, 0.0
      %v5127 = vmax.f32 %v5095, 0.0
      %v5128 = vmax.f32 %v5096, 0.0
      %v5129 = vmax.f32 %v5097, 0.0
      %v5130 = vmax.f32 %v5098, 0.0
      %v5131 = vmax.f32 %v5099, 0.0
      %v5132 = vmax.f32 %v5100, 0.0
      %v5133 = vmax.f32 %v5101, 0.0
      %v5134 = vmax.f32 %v5102, 0.0
      %v5135 = vmax.f32 %v5103, 0.0
      %v5136 = vmax.f32 %v5104, 0.0
      %v5137 = vmax.f32 %v5105, 0.0
      %v5138 = vmax.f32 %v5106, 0.0
      %v5139 = vmax.f32 %v5107, 0.0
      %v5140 = vmax.f32 %v5108, 0.0
      %v5141 = vpack.c.bf16 %v5110, %v5109
      %v5142 = vpack.c.bf16 %v5112, %v5111
      %v5143 = vpack.c.bf16 %v5114, %v5113
      %v5144 = vpack.c.bf16 %v5116, %v5115
      %v5145 = vpack.c.bf16 %v5118, %v5117
      %v5146 = vpack.c.bf16 %v5120, %v5119
      %v5147 = vpack.c.bf16 %v5122, %v5121
      %v5148 = vpack.c.bf16 %v5124, %v5123
      %v5149 = vpack.c.bf16 %v5126, %v5125
      %v5150 = vpack.c.bf16 %v5128, %v5127
      %v5151 = vpack.c.bf16 %v5130, %v5129
      %v5152 = vpack.c.bf16 %v5132, %v5131
      %v5153 = vpack.c.bf16 %v5134, %v5133
      %v5154 = vpack.c.bf16 %v5136, %v5135
      %v5155 = vpack.c.bf16 %v5138, %v5137
      %v5156 = vpack.c.bf16 %v5140, %v5139
      %v5173 = vunpack.c.l.b16 %v5141
      %v5174 = vunpack.c.h.b16 %v5141
      %v5175 = vunpack.c.l.b16 %v5142
      %v5176 = vunpack.c.h.b16 %v5142
      %v5177 = vunpack.c.l.b16 %v5143
      %v5178 = vunpack.c.h.b16 %v5143
      %v5179 = vunpack.c.l.b16 %v5144
      %v5180 = vunpack.c.h.b16 %v5144
      %v5181 = vunpack.c.l.b16 %v5145
      %v5182 = vunpack.c.h.b16 %v5145
      %v5183 = vunpack.c.l.b16 %v5146
      %v5184 = vunpack.c.h.b16 %v5146
      %v5185 = vunpack.c.l.b16 %v5147
      %v5186 = vunpack.c.h.b16 %v5147
      %v5187 = vunpack.c.l.b16 %v5148
      %v5188 = vunpack.c.h.b16 %v5148
      %v5189 = vunpack.c.l.b16 %v5149
      %v5190 = vunpack.c.h.b16 %v5149
      %v5191 = vunpack.c.l.b16 %v5150
      %v5192 = vunpack.c.h.b16 %v5150
      %v5193 = vunpack.c.l.b16 %v5151
      %v5194 = vunpack.c.h.b16 %v5151
      %v5195 = vunpack.c.l.b16 %v5152
      %v5196 = vunpack.c.h.b16 %v5152
      %v5197 = vunpack.c.l.b16 %v5153
      %v5198 = vunpack.c.h.b16 %v5153
      %v5199 = vunpack.c.l.b16 %v5154
      %v5200 = vunpack.c.h.b16 %v5154
      %v5201 = vunpack.c.l.b16 %v5155
      %v5202 = vunpack.c.h.b16 %v5155
      %v5203 = vunpack.c.l.b16 %v5156
      %v5204 = vunpack.c.h.b16 %v5156
      %v5205 = vpack.c.b16 %v5173, %v5173
      %v5206 = vpack.c.b16 %v5174, %v5174
      %v5207 = vpack.c.b16 %v5175, %v5175
      %v5208 = vpack.c.b16 %v5176, %v5176
      %v5209 = vpack.c.b16 %v5177, %v5177
      %v5210 = vpack.c.b16 %v5178, %v5178
      %v5211 = vpack.c.b16 %v5179, %v5179
      %v5212 = vpack.c.b16 %v5180, %v5180
      %v5213 = vpack.c.b16 %v5181, %v5181
      %v5214 = vpack.c.b16 %v5182, %v5182
      %v5215 = vpack.c.b16 %v5183, %v5183
      %v5216 = vpack.c.b16 %v5184, %v5184
      %v5217 = vpack.c.b16 %v5185, %v5185
      %v5218 = vpack.c.b16 %v5186, %v5186
      %v5219 = vpack.c.b16 %v5187, %v5187
      %v5220 = vpack.c.b16 %v5188, %v5188
      %v5221 = vpack.c.b16 %v5189, %v5189
      %v5222 = vpack.c.b16 %v5190, %v5190
      %v5223 = vpack.c.b16 %v5191, %v5191
      %v5224 = vpack.c.b16 %v5192, %v5192
      %v5225 = vpack.c.b16 %v5193, %v5193
      %v5226 = vpack.c.b16 %v5194, %v5194
      %v5227 = vpack.c.b16 %v5195, %v5195
      %v5228 = vpack.c.b16 %v5196, %v5196
      %v5229 = vpack.c.b16 %v5197, %v5197
      %v5230 = vpack.c.b16 %v5198, %v5198
      %v5231 = vpack.c.b16 %v5199, %v5199
      %v5232 = vpack.c.b16 %v5200, %v5200
      %v5233 = vpack.c.b16 %v5201, %v5201
      %v5234 = vpack.c.b16 %v5202, %v5202
      %v5235 = vpack.c.b16 %v5203, %v5203
      %v5236 = vpack.c.b16 %v5204, %v5204
      %5269 = vst [vmem:[%s224] sm:$0xf] %v5205
      %5270 = vst [vmem:[%s224 + $0x4] sm:$0xf] %v5206
      %5271 = vst [vmem:[%s224 + $0x8] sm:$0xf] %v5207
      %5272 = vst [vmem:[%s224 + $0xc] sm:$0xf] %v5208
      %5273 = vst [vmem:[%s224 + $0x10] sm:$0xf] %v5209
      %5274 = vst [vmem:[%s224 + $0x14] sm:$0xf] %v5210
      %5275 = vst [vmem:[%s224 + $0x18] sm:$0xf] %v5211
      %5276 = vst [vmem:[%s224 + $0x1c] sm:$0xf] %v5212
      %5277 = vst [vmem:[%s224 + $0x20] sm:$0xf] %v5213
      %5278 = vst [vmem:[%s224 + $0x24] sm:$0xf] %v5214
      %5279 = vst [vmem:[%s224 + $0x28] sm:$0xf] %v5215
      %5280 = vst [vmem:[%s224 + $0x2c] sm:$0xf] %v5216
      %5281 = vst [vmem:[%s224 + $0x30] sm:$0xf] %v5217
      %5282 = vst [vmem:[%s224 + $0x34] sm:$0xf] %v5218
      %5283 = vst [vmem:[%s224 + $0x38] sm:$0xf] %v5219
      %5284 = vst [vmem:[%s224 + $0x3c] sm:$0xf] %v5220
      %5285 = vst [vmem:[%s224 + $0x40] sm:$0xf] %v5221
      %5286 = vst [vmem:[%s224 + $0x44] sm:$0xf] %v5222
      %5287 = vst [vmem:[%s224 + $0x48] sm:$0xf] %v5223
      %5288 = vst [vmem:[%s224 + $0x4c] sm:$0xf] %v5224
      %5289 = vst [vmem:[%s224 + $0x50] sm:$0xf] %v5225
      %5290 = vst [vmem:[%s224 + $0x54] sm:$0xf] %v5226
      %5291 = vst [vmem:[%s224 + $0x58] sm:$0xf] %v5227
      %5292 = vst [vmem:[%s224 + $0x5c] sm:$0xf] %v5228
      %5293 = vst [vmem:[%s224 + $0x60] sm:$0xf] %v5229
      %5294 = vst [vmem:[%s224 + $0x64] sm:$0xf] %v5230
      %5295 = vst [vmem:[%s224 + $0x68] sm:$0xf] %v5231
      %5296 = vst [vmem:[%s224 + $0x6c] sm:$0xf] %v5232
      %5297 = vst [vmem:[%s224 + $0x70] sm:$0xf] %v5233
      %5298 = vst [vmem:[%s224 + $0x74] sm:$0xf] %v5234
      %5299 = vst [vmem:[%s224 + $0x78] sm:$0xf] %v5235
      %5300 = vst [vmem:[%s224 + $0x7c] sm:$0xf] %v5236
      %p5301 = scmp.lt.s32.totalorder %s18, 1
      %s5302 = scalar_select %p5301, %s18, 1
      %p5303 = scmp.lt.s32.totalorder %s19, 0
      %s5304 = scalar_select %p5303, %s19, 0
      %s5305 = smul.addr %s5302, 32
      %s5306 = sadd.s32 %s5304, %s5305
      %s5307 = smul.addr %s5306, 4
      %s5308 = scalar_lea.vmem %s3, %s5307
      // Predicated region
      $region33: #{_lambda_.4} parent=31 // pred_check
        %p5309 = pneg %p124
      $region34: #{_lambda_.4} parent=31 // pred_check_branch
        %5311 = sbr.rel (%p5309) target = $region36
      $region35: #{_lambda_.4} parent=31 // pred_region
        _
      $region36: #{_lambda_.4} parent=31 // pred_fallthru
        _
    $region32: #{_lambda_.4} parent=5 // pred_fallthru
      _
    %p5312 = scmp.le.s32.totalorder 2, %s9
    // Predicated region
    $region37: #{_lambda_.4} parent=5 // pred_check
      %p5313 = pneg %p5312
    $region38: #{_lambda_.4} parent=5 // pred_check_branch
      %5315 = sbr.rel (%p5313) target = $region40
    $region39: #{_lambda_.4} parent=5 // pred_region
      %s5316 = ssub.s32 %s9, 2
      // Predicated region
      $region41: #{_lambda_.4} parent=39 // pred_check
        %p5317 = pneg %p130
      $region42: #{_lambda_.4} parent=39 // pred_check_branch
        %5319 = sbr.rel (%p5317) target = $region44
      $region43: #{_lambda_.4} parent=39 // pred_region
        %p5320 = scmp.lt.s32.totalorder %s20, 1
        %s5321 = scalar_select %p5320, %s20, 1
        %p5322 = scmp.lt.s32.totalorder %s21, 0
        %s5323 = scalar_select %p5322, %s21, 0
        %s5324 = smul.addr %s5321, 32
        %s5325 = sadd.s32 %s5323, %s5324
        %s5326 = smul.addr %s5325, 4
        %s5327 = scalar_lea.vmem %s3, %s5326
      $region44: #{_lambda_.4} parent=39 // pred_fallthru
        _
    $region40: #{_lambda_.4} parent=5 // pred_fallthru
      _
  $region6: #{_lambda_.4} parent=0 // loop_footer
    %s13 = sadd.s32 1, %s9
  $region7: #{_lambda_.4} parent=0 // loop_footer_branch
    %8 = sbr.rel target = $region3
  $region8: #{_lambda_.4} parent=0 // loop_exit
    _

</llo_original>
